<compile_context>
chip_gen: v5e
topology: v5e:2x2
jax: 0.10.0
libtpu: 0.0.40
codegen_flags: <defaults>
</compile_context>

<pallas_src>
import functools

import jax
import jax.numpy as jnp
from jax.experimental import pallas as pl
from jax.experimental.pallas import tpu as pltpu


# ----------------------------------------------------------------------------
# Small helpers
# ----------------------------------------------------------------------------
def _round_up(x, m):
    return ((x + m - 1) // m) * m


def _cpad(c):
    # bf16 sublane tile is 16 -> pad internal channel counts to multiples of 16
    # so every sublane slice / store in the kernels is tile aligned.
    return _round_up(c, 16)


def _depth_tile(d):
    for t in range(min(d, 8), 0, -1):
        if d % t == 0:
            return t
    return 1


def _plane_dims(h, w):
    hp, wp = h + 2, w + 2
    l2 = hp * wp
    l2p = _round_up(l2, 128)                 # lane-dense output width
    l2h = _round_up(l2p + 2 * wp + 2, 128)   # halo'd input plane width
    return hp, wp, l2, l2p, l2h


def _interior_mask(h, w):
    hp, wp, l2, l2p, _ = _plane_dims(h, w)
    idx = jnp.arange(l2p, dtype=jnp.int32)
    row, col = idx // wp, idx % wp
    interior = ((idx < l2) & (row >= 1) & (row <= hp - 2)
                & (col >= 1) & (col <= wp - 2))
    return interior.astype(jnp.float32).reshape(1, l2p)


def _to_conv_input(x_ndchw):
    """(N, D, Cp, H, W) float -> (N, D+2, Cp, L2h) bf16 halo-padded conv layout."""
    n, d, cp, h, w = x_ndchw.shape
    _, wp, l2, _, l2h = _plane_dims(h, w)
    off = wp + 1
    xp = jnp.pad(x_ndchw, ((0, 0), (1, 1), (0, 0), (1, 1), (1, 1)))
    xp = xp.reshape(n, d + 2, cp, l2)
    xp = jnp.pad(xp, ((0, 0), (0, 0), (0, 0), (off, l2h - l2 - off)))
    return xp.astype(jnp.bfloat16)


def _compiler_params(semantics, block_bytes):
    # Derived (double-buffer + slack) rather than hardcoded, so it also fits
    # v7x's 64 MiB VMEM; usage here is tiny, so the floor dominates.
    vmem = int(min(96 * 1024 * 1024, max(16 * 1024 * 1024, 3 * block_bytes)))
    return pltpu.CompilerParams(dimension_semantics=semantics,
                                vmem_limit_bytes=vmem)


# ----------------------------------------------------------------------------
# Pallas kernels
# ----------------------------------------------------------------------------
def _conv_stats_kernel(x_ref, w_ref, mask_ref, y_ref, stat_ref, op_ref, *,
                       td, wp, l2p, cp_in):
    """3x3x3 conv for one (n, depth-block); taps folded into the MXU K dim.

    x_ref:   (Dp, Cp_in, L2h) bf16 halo-padded planes (VMEM-resident per n).
    w_ref:   (Cp_out, 27*Cp_in) bf16, columns ordered (kd, kh, kw, cin).
    mask_ref:(1, L2p) f32 interior mask (zero on ring / lane-pad tail).
    y_ref:   (TD, Cp_out, L2p) bf16 conv output rows of this depth block.
    stat_ref:(Cp_out, 2) f32 accumulated (sum, sumsq) BN partials for this n.
    op_ref:  ((TD+2)*9*Cp_in, L2p) bf16 scratch of shifted tap operands.
    """
    db = pl.program_id(1)
    k9 = 9 * cp_in

    # Build the shifted-tap operand for the TD+2 padded planes of this depth
    # block once.  Row layout (plane, kh, kw, cin) makes the operand of output
    # row `od` the contiguous window op_ref[od*k9 : od*k9 + 3*k9].
    for p in range(td + 2):
        plane = x_ref[db * td + p]                       # (Cp_in, L2h)
        for kh in range(3):
            for kw in range(3):
                s = kh * wp + kw                          # static lane offset
                r0 = (p * 9 + kh * 3 + kw) * cp_in        # multiple of 16
                op_ref[r0:r0 + cp_in, :] = plane[:, s:s + l2p]

    @pl.when(db == 0)
    def _():
        stat_ref[...] = jnp.zeros_like(stat_ref)

    w = w_ref[...]
    mask = mask_ref[...]
    cp_out = y_ref.shape[1]
    s1 = jnp.zeros((cp_out, 1), jnp.float32)
    s2 = jnp.zeros((cp_out, 1), jnp.float32)
    for od in range(td):
        op = op_ref[od * k9:(od + 3) * k9, :]             # (27*Cp_in, L2p)
        acc = jnp.dot(w, op, preferred_element_type=jnp.float32)
        y_ref[od] = acc.astype(y_ref.dtype)
        m = acc * mask                                    # zero ring / tail
        s1 = s1 + jnp.sum(m, axis=1, keepdims=True)
        s2 = s2 + jnp.sum(m * m, axis=1, keepdims=True)
    stat_ref[:, 0:1] = stat_ref[:, 0:1] + s1
    stat_ref[:, 1:2] = stat_ref[:, 1:2] + s2


def _bn_relu_pack_kernel(y_ref, scale_ref, shift_ref, mask_ref, o_ref, *,
                         wp, l2p):
    """BN(train)+ReLU emitted bf16 directly in the next conv's halo layout."""
    o_ref[...] = jnp.zeros(o_ref.shape, o_ref.dtype)      # zero halo / D-pad
    scale = scale_ref[...]
    shift = shift_ref[...]
    mask = mask_ref[...]
    off = wp + 1
    for d in range(y_ref.shape[0]):
        a = jnp.maximum(y_ref[d].astype(jnp.float32) * scale + shift, 0.0) * mask
        o_ref[d + 1, :, off:off + l2p] = a.astype(o_ref.dtype)


def _bn_relu_kernel(y_ref, scale_ref, shift_ref, o_ref):
    """BN(train)+ReLU, plain lane-dense (Cp, L2p) f32 output (skip / pooling)."""
    scale = scale_ref[...]
    shift = shift_ref[...]
    for d in range(y_ref.shape[0]):
        o_ref[d] = jnp.maximum(y_ref[d].astype(jnp.float32) * scale + shift, 0.0)


# ----------------------------------------------------------------------------
# Conv3d + BatchNorm3d(train) + ReLU for one layer
# ----------------------------------------------------------------------------
def _conv_bn_relu_layer(xh, weight, gamma, beta, *, n, d, h, w, pack_next,
                        eps=1e-5):
    """xh: (N, D+2, Cp_in, L2h) bf16 conv-input layout.
       weight: (Cout, Cin, 3, 3, 3) PyTorch layout.  Conv bias is intentionally
       omitted (exactly cancelled by the training-mode BatchNorm that follows).

    Returns (N, D+2, Cp_out, L2h) bf16 (pack_next=True, next conv's layout)
         or (N, D,   Cp_out, L2p) f32  (pack_next=False).
    """
    cout, cin = weight.shape[0], weight.shape[1]
    cp_in, cp_out = _cpad(cin), _cpad(cout)
    hp, wp, l2, l2p, l2h = _plane_dims(h, w)
    dp = d + 2
    assert xh.shape == (n, dp, cp_in, l2h), (xh.shape, (n, dp, cp_in, l2h))

    # Weights -> (Cp_out, 27*Cp_in) bf16, columns ordered (kd, kh, kw, cin).
    wt = jnp.transpose(weight, (0, 2, 3, 4, 1))            # (Cout,3,3,3,Cin)
    wt = jnp.pad(wt, ((0, cp_out - cout), (0, 0), (0, 0), (0, 0),
                      (0, cp_in - cin)))
    w2d = wt.reshape(cp_out, 27 * cp_in).astype(jnp.bfloat16)

    mask = _interior_mask(h, w)

    td = _depth_tile(d)
    n_db = d // td

    conv = functools.partial(_conv_stats_kernel, td=td, wp=wp, l2p=l2p,
                             cp_in=cp_in)
    conv_bytes = (dp * cp_in * l2h * 2 + cp_out * 27 * cp_in * 2 + l2p * 4
                  + td * cp_out * l2p * 2 + cp_out * 2 * 4
                  + (td + 2) * 9 * cp_in * l2p * 2)
    y, stats = pl.pallas_call(
        conv,
        out_shape=(jax.ShapeDtypeStruct((n, d, cp_out, l2p), jnp.bfloat16),
                   jax.ShapeDtypeStruct((n, cp_out, 2), jnp.float32)),
        grid=(n, n_db),
        in_specs=[
            # Constant block index over the depth axis -> VMEM-resident per n.
            pl.BlockSpec((None, dp, cp_in, l2h), lambda i, j: (i, 0, 0, 0)),
            pl.BlockSpec((cp_out, 27 * cp_in), lambda i, j: (0, 0)),
            pl.BlockSpec((1, l2p), lambda i, j: (0, 0)),
        ],
        out_specs=[
            pl.BlockSpec((None, td, cp_out, l2p), lambda i, j: (i, j, 0, 0)),
            # Same block index across db -> stats accumulate in VMEM.
            pl.BlockSpec((None, cp_out, 2), lambda i, j: (i, 0, 0)),
        ],
        scratch_shapes=[pltpu.VMEM(((td + 2) * 9 * cp_in, l2p), jnp.bfloat16)],
        compiler_params=_compiler_params(("parallel", "arbitrary"), conv_bytes),
    )(xh, w2d, mask)

    # BatchNorm3d training-mode batch statistics from the in-kernel partials.
    # TODO(synk): E[x^2]-E[x]^2 in f32 is cancellation-prone for large means;
    # fine for this forward pass.
    cnt = float(n * d * h * w)
    gsum = jnp.sum(stats[:, :, 0], axis=0)
    gsq = jnp.sum(stats[:, :, 1], axis=0)
    mean = gsum / cnt
    var = jnp.maximum(gsq / cnt - mean * mean, 0.0)
    gamma_p = jnp.pad(gamma, (0, cp_out - cout))
    beta_p = jnp.pad(beta, (0, cp_out - cout))
    inv = gamma_p / jnp.sqrt(var + eps)
    scale = inv.reshape(cp_out, 1).astype(jnp.float32)
    shift = (beta_p - mean * inv).reshape(cp_out, 1).astype(jnp.float32)

    if pack_next:
        bn = functools.partial(_bn_relu_pack_kernel, wp=wp, l2p=l2p)
        bn_bytes = (d * cp_out * l2p * 2 + dp * cp_out * l2h * 2
                    + l2p * 4 + cp_out * 8)
        return pl.pallas_call(
            bn,
            out_shape=jax.ShapeDtypeStruct((n, dp, cp_out, l2h), jnp.bfloat16),
            grid=(n,),
            in_specs=[
                pl.BlockSpec((None, d, cp_out, l2p), lambda i: (i, 0, 0, 0)),
                pl.BlockSpec((cp_out, 1), lambda i: (0, 0)),
                pl.BlockSpec((cp_out, 1), lambda i: (0, 0)),
                pl.BlockSpec((1, l2p), lambda i: (0, 0)),
            ],
            out_specs=pl.BlockSpec((None, dp, cp_out, l2h),
                                   lambda i: (i, 0, 0, 0)),
            compiler_params=_compiler_params(("parallel",), bn_bytes),
        )(y, scale, shift, mask)

    bn_bytes = d * cp_out * l2p * (2 + 4) + cp_out * 8
    return pl.pallas_call(
        _bn_relu_kernel,
        out_shape=jax.ShapeDtypeStruct((n, d, cp_out, l2p), jnp.float32),
        grid=(n,),
        in_specs=[
            pl.BlockSpec((None, d, cp_out, l2p), lambda i: (i, 0, 0, 0)),
            pl.BlockSpec((cp_out, 1), lambda i: (0, 0)),
            pl.BlockSpec((cp_out, 1), lambda i: (0, 0)),
        ],
        out_specs=pl.BlockSpec((None, d, cp_out, l2p), lambda i: (i, 0, 0, 0)),
        compiler_params=_compiler_params(("parallel",), bn_bytes),
    )(y, scale, shift)


# ----------------------------------------------------------------------------
# Encoder blocks / forward
# ----------------------------------------------------------------------------
def _encoder_block(xh, p, *, n, d, h, w):
    # conv1 -> BN -> ReLU, emitted straight into conv2's halo-padded bf16 layout.
    xh2 = _conv_bn_relu_layer(xh, p["w1"], p["g1"], p["be1"],
                              n=n, d=d, h=h, w=w, pack_next=True)
    # conv2 -> BN -> ReLU, plain (N, D, Cp, L2p) f32 for skip / pooling.
    a = _conv_bn_relu_layer(xh2, p["w2"], p["g2"], p["be2"],
                            n=n, d=d, h=h, w=w, pack_next=False)
    cout = p["w2"].shape[0]
    cp = a.shape[2]
    hp, wp, l2, _, _ = _plane_dims(h, w)
    act = a[..., :l2].reshape(n, d, cp, hp, wp)[:, :, :, 1:-1, 1:-1]
    skip = jnp.transpose(act[:, :, :cout], (0, 2, 1, 3, 4))        # NCDHW
    # TODO(synk): MaxPool3d((1,2,2)) and the block-boundary re-layout stay as
    # cheap XLA glue; they are negligible next to the conv kernels.
    pooled = act.reshape(n, d, cp, h // 2, 2, w // 2, 2).max(axis=(4, 6))
    return pooled, skip


def encoder3d_forward(x_ncdhw, params):
    """Encoder3D.forward.  Input and outputs use the PyTorch NCDHW layout."""
    n, c, d, h, w = x_ncdhw.shape
    cp = _cpad(c)
    x = jnp.transpose(x_ncdhw, (0, 2, 1, 3, 4))                    # NDCHW
    x = jnp.pad(x, ((0, 0), (0, 0), (0, cp - c), (0, 0), (0, 0)))
    xh = _to_conv_input(x)
    features = []
    pooled = None
    for i, p in enumerate(params):
        pooled, skip = _encoder_block(xh, p, n=n, d=d, h=h, w=w)
        features.append(skip)
        h, w = h // 2, w // 2
        if i + 1 < len(params):
            xh = _to_conv_input(pooled)
    cout_last = params[-1]["w2"].shape[0]
    out = jnp.transpose(pooled[:, :, :cout_last], (0, 2, 1, 3, 4))  # NCDHW
    return out, features


# ----------------------------------------------------------------------------
# Deterministic parameter construction (PyTorch-default-style uniform init)
# ----------------------------------------------------------------------------
def make_params(in_channels, base_filters, depth, key):
    params = []
    cin = in_channels
    for i in range(depth):
        cout = base_filters * (2 ** i)
        blk = {}
        for j, (ci, co) in enumerate([(cin, cout), (cout, cout)], start=1):
            key, kw_ = jax.random.split(key)
            fan_in = ci * 27
            bound = 1.0 / jnp.sqrt(fan_in)
            blk[f"w{j}"] = jax.random.uniform(
                kw_, (co, ci, 3, 3, 3), jnp.float32, -bound, bound)
            # Conv bias is mathematically inert before training-mode BN.
            blk[f"g{j}"] = jnp.ones((co,), jnp.float32)
            blk[f"be{j}"] = jnp.zeros((co,), jnp.float32)
        params.append(blk)
        cin = cout
    return params


# ----------------------------------------------------------------------------
# Pure-JAX reference (for numerical sanity checking only)
# ----------------------------------------------------------------------------
def _reference_forward(x_ncdhw, params, eps=1e-5):
    x = x_ncdhw
    feats = []
    for p in params:
        for j in (1, 2):
            y = jax.lax.conv_general_dilated(
                x, p[f"w{j}"], window_strides=(1, 1, 1), padding="SAME",
                dimension_numbers=("NCDHW", "OIDHW", "NCDHW"))
            mean = y.mean(axis=(0, 2, 3, 4), keepdims=True)
            var = y.var(axis=(0, 2, 3, 4), keepdims=True)
            g = p[f"g{j}"].reshape(1, -1, 1, 1, 1)
            b = p[f"be{j}"].reshape(1, -1, 1, 1, 1)
            x = jnp.maximum((y - mean) / jnp.sqrt(var + eps) * g + b, 0.0)
        feats.append(x)
        nn_, cc, dd, hh, ww = x.shape
        x = x.reshape(nn_, cc, dd, hh // 2, 2, ww // 2, 2).max(axis=(4, 6))
    return x, feats


# ----------------------------------------------------------------------------
if __name__ == "__main__":
    key = jax.random.PRNGKey(0)
    kx, kp = jax.random.split(key)

    # Small config: batch=2, in_channels=2, base_filters=4, depth=2.
    N, C, D, H, W = 2, 2, 4, 16, 16
    x = jax.random.normal(kx, (N, C, D, H, W), jnp.float32)
    params = make_params(in_channels=C, base_filters=4, depth=2, key=kp)

    fwd = jax.jit(encoder3d_forward)
    out, features = fwd(x, params)
    out = jax.block_until_ready(out)
    features = [jax.block_until_ready(f) for f in features]

    # Shapes implied by the PyTorch module.
    assert out.shape == (N, 8, D, H // 4, W // 4), out.shape
    assert features[0].shape == (N, 4, D, H, W), features[0].shape
    assert features[1].shape == (N, 8, D, H // 2, W // 2), features[1].shape

    # Numerical sanity vs. a pure-JAX f32 reference (bf16 matmul operands and
    # bf16 inter-layer activations -> loose tolerance, intentional).
    ref_out, ref_feats = _reference_forward(x, params)
    tol = 0.3
    assert float(jnp.max(jnp.abs(out - ref_out))) < tol
    for f, rf in zip(features, ref_feats):
        assert float(jnp.max(jnp.abs(f - rf))) < tol

    print("KERNEL_OK")
</pallas_src>

<mosaic_0001>
module attributes {stable_mosaic.version = 11 : i64} {
  func.func @_conv_stats_kernel(%arg0: i32, %arg1: i32, %arg2: memref<1x6x16x512xbf16, #tpu.memory_space<vmem>>, %arg3: memref<16x432xbf16, #tpu.memory_space<vmem>>, %arg4: memref<1x384xf32, #tpu.memory_space<vmem>>, %arg5: memref<1x4x16x384xbf16, #tpu.memory_space<vmem>>, %arg6: memref<1x16x2xf32, #tpu.memory_space<vmem>>, %arg7: memref<864x384xbf16, #tpu.memory_space<vmem>>) attributes {dimension_semantics = [#tpu.dimension_semantics<parallel>, #tpu.dimension_semantics<arbitrary>], iteration_bounds = array<i64: 2, 1>, scalar_prefetch = 0 : i64, scratch_operands = 1 : i64, tpu.core_type = #tpu.core_type<tc>, window_params = [{transform_indices = @transform_0, window_bounds = array<i64: 1, 6, 16, 512>}, {pipeline_mode = #tpu.pipeline_mode<synchronous>, transform_indices = @transform_1, window_bounds = array<i64: 16, 432>}, {pipeline_mode = #tpu.pipeline_mode<synchronous>, transform_indices = @transform_2, window_bounds = array<i64: 1, 384>}, {transform_indices = @transform_3, window_bounds = array<i64: 1, 4, 16, 384>}, {transform_indices = @transform_4, window_bounds = array<i64: 1, 16, 2>}]} {
    %c4_i32 = arith.constant 4 : i32
    %0 = arith.muli %arg1, %c4_i32 : i32
    %c0_i32 = arith.constant 0 : i32
    %1 = arith.addi %0, %c0_i32 : i32
    %c0 = arith.constant 0 : index
    %2 = arith.index_cast %1 : i32 to index
    %c0_0 = arith.constant 0 : index
    %c0_1 = arith.constant 0 : index
    %3 = vector.load %arg2[%c0, %2, %c0_0, %c0_1] : memref<1x6x16x512xbf16, #tpu.memory_space<vmem>>, vector<1x1x16x512xbf16>
    %4 = vector.shape_cast %3 : vector<1x1x16x512xbf16> to vector<16x512xbf16>
    %5 = vector.extract_strided_slice %4 {offsets = [0, 0], sizes = [16, 384], strides = [1, 1]} : vector<16x512xbf16> to vector<16x384xbf16>
    %c0_2 = arith.constant 0 : index
    %c0_3 = arith.constant 0 : index
    %6 = vector.load %arg7[%c0_2, %c0_3] : memref<864x384xbf16, #tpu.memory_space<vmem>>, vector<16x384xbf16>
    tpu.vector_store %arg7[%c0_2, %c0_3], %5 {strides = array<i32>} : memref<864x384xbf16, #tpu.memory_space<vmem>>, vector<16x384xbf16>,
    %7 = vector.extract_strided_slice %4 {offsets = [0, 1], sizes = [16, 384], strides = [1, 1]} : vector<16x512xbf16> to vector<16x384xbf16>
    %c16 = arith.constant 16 : index
    %c0_4 = arith.constant 0 : index
    %8 = vector.load %arg7[%c16, %c0_4] : memref<864x384xbf16, #tpu.memory_space<vmem>>, vector<16x384xbf16>
    tpu.vector_store %arg7[%c16, %c0_4], %7 {strides = array<i32>} : memref<864x384xbf16, #tpu.memory_space<vmem>>, vector<16x384xbf16>,
    %9 = vector.extract_strided_slice %4 {offsets = [0, 2], sizes = [16, 384], strides = [1, 1]} : vector<16x512xbf16> to vector<16x384xbf16>
    %c32 = arith.constant 32 : index
    %c0_5 = arith.constant 0 : index
    %10 = vector.load %arg7[%c32, %c0_5] : memref<864x384xbf16, #tpu.memory_space<vmem>>, vector<16x384xbf16>
    tpu.vector_store %arg7[%c32, %c0_5], %9 {strides = array<i32>} : memref<864x384xbf16, #tpu.memory_space<vmem>>, vector<16x384xbf16>,
    %11 = vector.extract_strided_slice %4 {offsets = [0, 18], sizes = [16, 384], strides = [1, 1]} : vector<16x512xbf16> to vector<16x384xbf16>
    %c48 = arith.constant 48 : index
    %c0_6 = arith.constant 0 : index
    %12 = vector.load %arg7[%c48, %c0_6] : memref<864x384xbf16, #tpu.memory_space<vmem>>, vector<16x384xbf16>
    tpu.vector_store %arg7[%c48, %c0_6], %11 {strides = array<i32>} : memref<864x384xbf16, #tpu.memory_space<vmem>>, vector<16x384xbf16>,
    %13 = vector.extract_strided_slice %4 {offsets = [0, 19], sizes = [16, 384], strides = [1, 1]} : vector<16x512xbf16> to vector<16x384xbf16>
    %c64 = arith.constant 64 : index
    %c0_7 = arith.constant 0 : index
    %14 = vector.load %arg7[%c64, %c0_7] : memref<864x384xbf16, #tpu.memory_space<vmem>>, vector<16x384xbf16>
    tpu.vector_store %arg7[%c64, %c0_7], %13 {strides = array<i32>} : memref<864x384xbf16, #tpu.memory_space<vmem>>, vector<16x384xbf16>,
    %15 = vector.extract_strided_slice %4 {offsets = [0, 20], sizes = [16, 384], strides = [1, 1]} : vector<16x512xbf16> to vector<16x384xbf16>
    %c80 = arith.constant 80 : index
    %c0_8 = arith.constant 0 : index
    %16 = vector.load %arg7[%c80, %c0_8] : memref<864x384xbf16, #tpu.memory_space<vmem>>, vector<16x384xbf16>
    tpu.vector_store %arg7[%c80, %c0_8], %15 {strides = array<i32>} : memref<864x384xbf16, #tpu.memory_space<vmem>>, vector<16x384xbf16>,
    %17 = vector.extract_strided_slice %4 {offsets = [0, 36], sizes = [16, 384], strides = [1, 1]} : vector<16x512xbf16> to vector<16x384xbf16>
    %c96 = arith.constant 96 : index
    %c0_9 = arith.constant 0 : index
    %18 = vector.load %arg7[%c96, %c0_9] : memref<864x384xbf16, #tpu.memory_space<vmem>>, vector<16x384xbf16>
    tpu.vector_store %arg7[%c96, %c0_9], %17 {strides = array<i32>} : memref<864x384xbf16, #tpu.memory_space<vmem>>, vector<16x384xbf16>,
    %19 = vector.extract_strided_slice %4 {offsets = [0, 37], sizes = [16, 384], strides = [1, 1]} : vector<16x512xbf16> to vector<16x384xbf16>
    %c112 = arith.constant 112 : index
    %c0_10 = arith.constant 0 : index
    %20 = vector.load %arg7[%c112, %c0_10] : memref<864x384xbf16, #tpu.memory_space<vmem>>, vector<16x384xbf16>
    tpu.vector_store %arg7[%c112, %c0_10], %19 {strides = array<i32>} : memref<864x384xbf16, #tpu.memory_space<vmem>>, vector<16x384xbf16>,
    %21 = vector.extract_strided_slice %4 {offsets = [0, 38], sizes = [16, 384], strides = [1, 1]} : vector<16x512xbf16> to vector<16x384xbf16>
    %c128 = arith.constant 128 : index
    %c0_11 = arith.constant 0 : index
    %22 = vector.load %arg7[%c128, %c0_11] : memref<864x384xbf16, #tpu.memory_space<vmem>>, vector<16x384xbf16>
    tpu.vector_store %arg7[%c128, %c0_11], %21 {strides = array<i32>} : memref<864x384xbf16, #tpu.memory_space<vmem>>, vector<16x384xbf16>,
    %c4_i32_12 = arith.constant 4 : i32
    %23 = arith.muli %arg1, %c4_i32_12 : i32
    %c1_i32 = arith.constant 1 : i32
    %24 = arith.addi %23, %c1_i32 : i32
    %c0_13 = arith.constant 0 : index
    %25 = arith.index_cast %24 : i32 to index
    %c0_14 = arith.constant 0 : index
    %c0_15 = arith.constant 0 : index
    %26 = vector.load %arg2[%c0_13, %25, %c0_14, %c0_15] : memref<1x6x16x512xbf16, #tpu.memory_space<vmem>>, vector<1x1x16x512xbf16>
    %27 = vector.shape_cast %26 : vector<1x1x16x512xbf16> to vector<16x512xbf16>
    %28 = vector.extract_strided_slice %27 {offsets = [0, 0], sizes = [16, 384], strides = [1, 1]} : vector<16x512xbf16> to vector<16x384xbf16>
    %c144 = arith.constant 144 : index
    %c0_16 = arith.constant 0 : index
    %29 = vector.load %arg7[%c144, %c0_16] : memref<864x384xbf16, #tpu.memory_space<vmem>>, vector<16x384xbf16>
    tpu.vector_store %arg7[%c144, %c0_16], %28 {strides = array<i32>} : memref<864x384xbf16, #tpu.memory_space<vmem>>, vector<16x384xbf16>,
    %30 = vector.extract_strided_slice %27 {offsets = [0, 1], sizes = [16, 384], strides = [1, 1]} : vector<16x512xbf16> to vector<16x384xbf16>
    %c160 = arith.constant 160 : index
    %c0_17 = arith.constant 0 : index
    %31 = vector.load %arg7[%c160, %c0_17] : memref<864x384xbf16, #tpu.memory_space<vmem>>, vector<16x384xbf16>
    tpu.vector_store %arg7[%c160, %c0_17], %30 {strides = array<i32>} : memref<864x384xbf16, #tpu.memory_space<vmem>>, vector<16x384xbf16>,
    %32 = vector.extract_strided_slice %27 {offsets = [0, 2], sizes = [16, 384], strides = [1, 1]} : vector<16x512xbf16> to vector<16x384xbf16>
    %c176 = arith.constant 176 : index
    %c0_18 = arith.constant 0 : index
    %33 = vector.load %arg7[%c176, %c0_18] : memref<864x384xbf16, #tpu.memory_space<vmem>>, vector<16x384xbf16>
    tpu.vector_store %arg7[%c176, %c0_18], %32 {strides = array<i32>} : memref<864x384xbf16, #tpu.memory_space<vmem>>, vector<16x384xbf16>,
    %34 = vector.extract_strided_slice %27 {offsets = [0, 18], sizes = [16, 384], strides = [1, 1]} : vector<16x512xbf16> to vector<16x384xbf16>
    %c192 = arith.constant 192 : index
    %c0_19 = arith.constant 0 : index
    %35 = vector.load %arg7[%c192, %c0_19] : memref<864x384xbf16, #tpu.memory_space<vmem>>, vector<16x384xbf16>
    tpu.vector_store %arg7[%c192, %c0_19], %34 {strides = array<i32>} : memref<864x384xbf16, #tpu.memory_space<vmem>>, vector<16x384xbf16>,
    %36 = vector.extract_strided_slice %27 {offsets = [0, 19], sizes = [16, 384], strides = [1, 1]} : vector<16x512xbf16> to vector<16x384xbf16>
    %c208 = arith.constant 208 : index
    %c0_20 = arith.constant 0 : index
    %37 = vector.load %arg7[%c208, %c0_20] : memref<864x384xbf16, #tpu.memory_space<vmem>>, vector<16x384xbf16>
    tpu.vector_store %arg7[%c208, %c0_20], %36 {strides = array<i32>} : memref<864x384xbf16, #tpu.memory_space<vmem>>, vector<16x384xbf16>,
    %38 = vector.extract_strided_slice %27 {offsets = [0, 20], sizes = [16, 384], strides = [1, 1]} : vector<16x512xbf16> to vector<16x384xbf16>
    %c224 = arith.constant 224 : index
    %c0_21 = arith.constant 0 : index
    %39 = vector.load %arg7[%c224, %c0_21] : memref<864x384xbf16, #tpu.memory_space<vmem>>, vector<16x384xbf16>
    tpu.vector_store %arg7[%c224, %c0_21], %38 {strides = array<i32>} : memref<864x384xbf16, #tpu.memory_space<vmem>>, vector<16x384xbf16>,
    %40 = vector.extract_strided_slice %27 {offsets = [0, 36], sizes = [16, 384], strides = [1, 1]} : vector<16x512xbf16> to vector<16x384xbf16>
    %c240 = arith.constant 240 : index
    %c0_22 = arith.constant 0 : index
    %41 = vector.load %arg7[%c240, %c0_22] : memref<864x384xbf16, #tpu.memory_space<vmem>>, vector<16x384xbf16>
    tpu.vector_store %arg7[%c240, %c0_22], %40 {strides = array<i32>} : memref<864x384xbf16, #tpu.memory_space<vmem>>, vector<16x384xbf16>,
    %42 = vector.extract_strided_slice %27 {offsets = [0, 37], sizes = [16, 384], strides = [1, 1]} : vector<16x512xbf16> to vector<16x384xbf16>
    %c256 = arith.constant 256 : index
    %c0_23 = arith.constant 0 : index
    %43 = vector.load %arg7[%c256, %c0_23] : memref<864x384xbf16, #tpu.memory_space<vmem>>, vector<16x384xbf16>
    tpu.vector_store %arg7[%c256, %c0_23], %42 {strides = array<i32>} : memref<864x384xbf16, #tpu.memory_space<vmem>>, vector<16x384xbf16>,
    %44 = vector.extract_strided_slice %27 {offsets = [0, 38], sizes = [16, 384], strides = [1, 1]} : vector<16x512xbf16> to vector<16x384xbf16>
    %c272 = arith.constant 272 : index
    %c0_24 = arith.constant 0 : index
    %45 = vector.load %arg7[%c272, %c0_24] : memref<864x384xbf16, #tpu.memory_space<vmem>>, vector<16x384xbf16>
    tpu.vector_store %arg7[%c272, %c0_24], %44 {strides = array<i32>} : memref<864x384xbf16, #tpu.memory_space<vmem>>, vector<16x384xbf16>,
    %c4_i32_25 = arith.constant 4 : i32
    %46 = arith.muli %arg1, %c4_i32_25 : i32
    %c2_i32 = arith.constant 2 : i32
    %47 = arith.addi %46, %c2_i32 : i32
    %c0_26 = arith.constant 0 : index
    %48 = arith.index_cast %47 : i32 to index
    %c0_27 = arith.constant 0 : index
    %c0_28 = arith.constant 0 : index
    %49 = vector.load %arg2[%c0_26, %48, %c0_27, %c0_28] : memref<1x6x16x512xbf16, #tpu.memory_space<vmem>>, vector<1x1x16x512xbf16>
    %50 = vector.shape_cast %49 : vector<1x1x16x512xbf16> to vector<16x512xbf16>
    %51 = vector.extract_strided_slice %50 {offsets = [0, 0], sizes = [16, 384], strides = [1, 1]} : vector<16x512xbf16> to vector<16x384xbf16>
    %c288 = arith.constant 288 : index
    %c0_29 = arith.constant 0 : index
    %52 = vector.load %arg7[%c288, %c0_29] : memref<864x384xbf16, #tpu.memory_space<vmem>>, vector<16x384xbf16>
    tpu.vector_store %arg7[%c288, %c0_29], %51 {strides = array<i32>} : memref<864x384xbf16, #tpu.memory_space<vmem>>, vector<16x384xbf16>,
    %53 = vector.extract_strided_slice %50 {offsets = [0, 1], sizes = [16, 384], strides = [1, 1]} : vector<16x512xbf16> to vector<16x384xbf16>
    %c304 = arith.constant 304 : index
    %c0_30 = arith.constant 0 : index
    %54 = vector.load %arg7[%c304, %c0_30] : memref<864x384xbf16, #tpu.memory_space<vmem>>, vector<16x384xbf16>
    tpu.vector_store %arg7[%c304, %c0_30], %53 {strides = array<i32>} : memref<864x384xbf16, #tpu.memory_space<vmem>>, vector<16x384xbf16>,
    %55 = vector.extract_strided_slice %50 {offsets = [0, 2], sizes = [16, 384], strides = [1, 1]} : vector<16x512xbf16> to vector<16x384xbf16>
    %c320 = arith.constant 320 : index
    %c0_31 = arith.constant 0 : index
    %56 = vector.load %arg7[%c320, %c0_31] : memref<864x384xbf16, #tpu.memory_space<vmem>>, vector<16x384xbf16>
    tpu.vector_store %arg7[%c320, %c0_31], %55 {strides = array<i32>} : memref<864x384xbf16, #tpu.memory_space<vmem>>, vector<16x384xbf16>,
    %57 = vector.extract_strided_slice %50 {offsets = [0, 18], sizes = [16, 384], strides = [1, 1]} : vector<16x512xbf16> to vector<16x384xbf16>
    %c336 = arith.constant 336 : index
    %c0_32 = arith.constant 0 : index
    %58 = vector.load %arg7[%c336, %c0_32] : memref<864x384xbf16, #tpu.memory_space<vmem>>, vector<16x384xbf16>
    tpu.vector_store %arg7[%c336, %c0_32], %57 {strides = array<i32>} : memref<864x384xbf16, #tpu.memory_space<vmem>>, vector<16x384xbf16>,
    %59 = vector.extract_strided_slice %50 {offsets = [0, 19], sizes = [16, 384], strides = [1, 1]} : vector<16x512xbf16> to vector<16x384xbf16>
    %c352 = arith.constant 352 : index
    %c0_33 = arith.constant 0 : index
    %60 = vector.load %arg7[%c352, %c0_33] : memref<864x384xbf16, #tpu.memory_space<vmem>>, vector<16x384xbf16>
    tpu.vector_store %arg7[%c352, %c0_33], %59 {strides = array<i32>} : memref<864x384xbf16, #tpu.memory_space<vmem>>, vector<16x384xbf16>,
    %61 = vector.extract_strided_slice %50 {offsets = [0, 20], sizes = [16, 384], strides = [1, 1]} : vector<16x512xbf16> to vector<16x384xbf16>
    %c368 = arith.constant 368 : index
    %c0_34 = arith.constant 0 : index
    %62 = vector.load %arg7[%c368, %c0_34] : memref<864x384xbf16, #tpu.memory_space<vmem>>, vector<16x384xbf16>
    tpu.vector_store %arg7[%c368, %c0_34], %61 {strides = array<i32>} : memref<864x384xbf16, #tpu.memory_space<vmem>>, vector<16x384xbf16>,
    %63 = vector.extract_strided_slice %50 {offsets = [0, 36], sizes = [16, 384], strides = [1, 1]} : vector<16x512xbf16> to vector<16x384xbf16>
    %c384 = arith.constant 384 : index
    %c0_35 = arith.constant 0 : index
    %64 = vector.load %arg7[%c384, %c0_35] : memref<864x384xbf16, #tpu.memory_space<vmem>>, vector<16x384xbf16>
    tpu.vector_store %arg7[%c384, %c0_35], %63 {strides = array<i32>} : memref<864x384xbf16, #tpu.memory_space<vmem>>, vector<16x384xbf16>,
    %65 = vector.extract_strided_slice %50 {offsets = [0, 37], sizes = [16, 384], strides = [1, 1]} : vector<16x512xbf16> to vector<16x384xbf16>
    %c400 = arith.constant 400 : index
    %c0_36 = arith.constant 0 : index
    %66 = vector.load %arg7[%c400, %c0_36] : memref<864x384xbf16, #tpu.memory_space<vmem>>, vector<16x384xbf16>
    tpu.vector_store %arg7[%c400, %c0_36], %65 {strides = array<i32>} : memref<864x384xbf16, #tpu.memory_space<vmem>>, vector<16x384xbf16>,
    %67 = vector.extract_strided_slice %50 {offsets = [0, 38], sizes = [16, 384], strides = [1, 1]} : vector<16x512xbf16> to vector<16x384xbf16>
    %c416 = arith.constant 416 : index
    %c0_37 = arith.constant 0 : index
    %68 = vector.load %arg7[%c416, %c0_37] : memref<864x384xbf16, #tpu.memory_space<vmem>>, vector<16x384xbf16>
    tpu.vector_store %arg7[%c416, %c0_37], %67 {strides = array<i32>} : memref<864x384xbf16, #tpu.memory_space<vmem>>, vector<16x384xbf16>,
    %c4_i32_38 = arith.constant 4 : i32
    %69 = arith.muli %arg1, %c4_i32_38 : i32
    %c3_i32 = arith.constant 3 : i32
    %70 = arith.addi %69, %c3_i32 : i32
    %c0_39 = arith.constant 0 : index
    %71 = arith.index_cast %70 : i32 to index
    %c0_40 = arith.constant 0 : index
    %c0_41 = arith.constant 0 : index
    %72 = vector.load %arg2[%c0_39, %71, %c0_40, %c0_41] : memref<1x6x16x512xbf16, #tpu.memory_space<vmem>>, vector<1x1x16x512xbf16>
    %73 = vector.shape_cast %72 : vector<1x1x16x512xbf16> to vector<16x512xbf16>
    %74 = vector.extract_strided_slice %73 {offsets = [0, 0], sizes = [16, 384], strides = [1, 1]} : vector<16x512xbf16> to vector<16x384xbf16>
    %c432 = arith.constant 432 : index
    %c0_42 = arith.constant 0 : index
    %75 = vector.load %arg7[%c432, %c0_42] : memref<864x384xbf16, #tpu.memory_space<vmem>>, vector<16x384xbf16>
    tpu.vector_store %arg7[%c432, %c0_42], %74 {strides = array<i32>} : memref<864x384xbf16, #tpu.memory_space<vmem>>, vector<16x384xbf16>,
    %76 = vector.extract_strided_slice %73 {offsets = [0, 1], sizes = [16, 384], strides = [1, 1]} : vector<16x512xbf16> to vector<16x384xbf16>
    %c448 = arith.constant 448 : index
    %c0_43 = arith.constant 0 : index
    %77 = vector.load %arg7[%c448, %c0_43] : memref<864x384xbf16, #tpu.memory_space<vmem>>, vector<16x384xbf16>
    tpu.vector_store %arg7[%c448, %c0_43], %76 {strides = array<i32>} : memref<864x384xbf16, #tpu.memory_space<vmem>>, vector<16x384xbf16>,
    %78 = vector.extract_strided_slice %73 {offsets = [0, 2], sizes = [16, 384], strides = [1, 1]} : vector<16x512xbf16> to vector<16x384xbf16>
    %c464 = arith.constant 464 : index
    %c0_44 = arith.constant 0 : index
    %79 = vector.load %arg7[%c464, %c0_44] : memref<864x384xbf16, #tpu.memory_space<vmem>>, vector<16x384xbf16>
    tpu.vector_store %arg7[%c464, %c0_44], %78 {strides = array<i32>} : memref<864x384xbf16, #tpu.memory_space<vmem>>, vector<16x384xbf16>,
    %80 = vector.extract_strided_slice %73 {offsets = [0, 18], sizes = [16, 384], strides = [1, 1]} : vector<16x512xbf16> to vector<16x384xbf16>
    %c480 = arith.constant 480 : index
    %c0_45 = arith.constant 0 : index
    %81 = vector.load %arg7[%c480, %c0_45] : memref<864x384xbf16, #tpu.memory_space<vmem>>, vector<16x384xbf16>
    tpu.vector_store %arg7[%c480, %c0_45], %80 {strides = array<i32>} : memref<864x384xbf16, #tpu.memory_space<vmem>>, vector<16x384xbf16>,
    %82 = vector.extract_strided_slice %73 {offsets = [0, 19], sizes = [16, 384], strides = [1, 1]} : vector<16x512xbf16> to vector<16x384xbf16>
    %c496 = arith.constant 496 : index
    %c0_46 = arith.constant 0 : index
    %83 = vector.load %arg7[%c496, %c0_46] : memref<864x384xbf16, #tpu.memory_space<vmem>>, vector<16x384xbf16>
    tpu.vector_store %arg7[%c496, %c0_46], %82 {strides = array<i32>} : memref<864x384xbf16, #tpu.memory_space<vmem>>, vector<16x384xbf16>,
    %84 = vector.extract_strided_slice %73 {offsets = [0, 20], sizes = [16, 384], strides = [1, 1]} : vector<16x512xbf16> to vector<16x384xbf16>
    %c512 = arith.constant 512 : index
    %c0_47 = arith.constant 0 : index
    %85 = vector.load %arg7[%c512, %c0_47] : memref<864x384xbf16, #tpu.memory_space<vmem>>, vector<16x384xbf16>
    tpu.vector_store %arg7[%c512, %c0_47], %84 {strides = array<i32>} : memref<864x384xbf16, #tpu.memory_space<vmem>>, vector<16x384xbf16>,
    %86 = vector.extract_strided_slice %73 {offsets = [0, 36], sizes = [16, 384], strides = [1, 1]} : vector<16x512xbf16> to vector<16x384xbf16>
    %c528 = arith.constant 528 : index
    %c0_48 = arith.constant 0 : index
    %87 = vector.load %arg7[%c528, %c0_48] : memref<864x384xbf16, #tpu.memory_space<vmem>>, vector<16x384xbf16>
    tpu.vector_store %arg7[%c528, %c0_48], %86 {strides = array<i32>} : memref<864x384xbf16, #tpu.memory_space<vmem>>, vector<16x384xbf16>,
    %88 = vector.extract_strided_slice %73 {offsets = [0, 37], sizes = [16, 384], strides = [1, 1]} : vector<16x512xbf16> to vector<16x384xbf16>
    %c544 = arith.constant 544 : index
    %c0_49 = arith.constant 0 : index
    %89 = vector.load %arg7[%c544, %c0_49] : memref<864x384xbf16, #tpu.memory_space<vmem>>, vector<16x384xbf16>
    tpu.vector_store %arg7[%c544, %c0_49], %88 {strides = array<i32>} : memref<864x384xbf16, #tpu.memory_space<vmem>>, vector<16x384xbf16>,
    %90 = vector.extract_strided_slice %73 {offsets = [0, 38], sizes = [16, 384], strides = [1, 1]} : vector<16x512xbf16> to vector<16x384xbf16>
    %c560 = arith.constant 560 : index
    %c0_50 = arith.constant 0 : index
    %91 = vector.load %arg7[%c560, %c0_50] : memref<864x384xbf16, #tpu.memory_space<vmem>>, vector<16x384xbf16>
    tpu.vector_store %arg7[%c560, %c0_50], %90 {strides = array<i32>} : memref<864x384xbf16, #tpu.memory_space<vmem>>, vector<16x384xbf16>,
    %c4_i32_51 = arith.constant 4 : i32
    %92 = arith.muli %arg1, %c4_i32_51 : i32
    %c4_i32_52 = arith.constant 4 : i32
    %93 = arith.addi %92, %c4_i32_52 : i32
    %c0_53 = arith.constant 0 : index
    %94 = arith.index_cast %93 : i32 to index
    %c0_54 = arith.constant 0 : index
    %c0_55 = arith.constant 0 : index
    %95 = vector.load %arg2[%c0_53, %94, %c0_54, %c0_55] : memref<1x6x16x512xbf16, #tpu.memory_space<vmem>>, vector<1x1x16x512xbf16>
    %96 = vector.shape_cast %95 : vector<1x1x16x512xbf16> to vector<16x512xbf16>
    %97 = vector.extract_strided_slice %96 {offsets = [0, 0], sizes = [16, 384], strides = [1, 1]} : vector<16x512xbf16> to vector<16x384xbf16>
    %c576 = arith.constant 576 : index
    %c0_56 = arith.constant 0 : index
    %98 = vector.load %arg7[%c576, %c0_56] : memref<864x384xbf16, #tpu.memory_space<vmem>>, vector<16x384xbf16>
    tpu.vector_store %arg7[%c576, %c0_56], %97 {strides = array<i32>} : memref<864x384xbf16, #tpu.memory_space<vmem>>, vector<16x384xbf16>,
    %99 = vector.extract_strided_slice %96 {offsets = [0, 1], sizes = [16, 384], strides = [1, 1]} : vector<16x512xbf16> to vector<16x384xbf16>
    %c592 = arith.constant 592 : index
    %c0_57 = arith.constant 0 : index
    %100 = vector.load %arg7[%c592, %c0_57] : memref<864x384xbf16, #tpu.memory_space<vmem>>, vector<16x384xbf16>
    tpu.vector_store %arg7[%c592, %c0_57], %99 {strides = array<i32>} : memref<864x384xbf16, #tpu.memory_space<vmem>>, vector<16x384xbf16>,
    %101 = vector.extract_strided_slice %96 {offsets = [0, 2], sizes = [16, 384], strides = [1, 1]} : vector<16x512xbf16> to vector<16x384xbf16>
    %c608 = arith.constant 608 : index
    %c0_58 = arith.constant 0 : index
    %102 = vector.load %arg7[%c608, %c0_58] : memref<864x384xbf16, #tpu.memory_space<vmem>>, vector<16x384xbf16>
    tpu.vector_store %arg7[%c608, %c0_58], %101 {strides = array<i32>} : memref<864x384xbf16, #tpu.memory_space<vmem>>, vector<16x384xbf16>,
    %103 = vector.extract_strided_slice %96 {offsets = [0, 18], sizes = [16, 384], strides = [1, 1]} : vector<16x512xbf16> to vector<16x384xbf16>
    %c624 = arith.constant 624 : index
    %c0_59 = arith.constant 0 : index
    %104 = vector.load %arg7[%c624, %c0_59] : memref<864x384xbf16, #tpu.memory_space<vmem>>, vector<16x384xbf16>
    tpu.vector_store %arg7[%c624, %c0_59], %103 {strides = array<i32>} : memref<864x384xbf16, #tpu.memory_space<vmem>>, vector<16x384xbf16>,
    %105 = vector.extract_strided_slice %96 {offsets = [0, 19], sizes = [16, 384], strides = [1, 1]} : vector<16x512xbf16> to vector<16x384xbf16>
    %c640 = arith.constant 640 : index
    %c0_60 = arith.constant 0 : index
    %106 = vector.load %arg7[%c640, %c0_60] : memref<864x384xbf16, #tpu.memory_space<vmem>>, vector<16x384xbf16>
    tpu.vector_store %arg7[%c640, %c0_60], %105 {strides = array<i32>} : memref<864x384xbf16, #tpu.memory_space<vmem>>, vector<16x384xbf16>,
    %107 = vector.extract_strided_slice %96 {offsets = [0, 20], sizes = [16, 384], strides = [1, 1]} : vector<16x512xbf16> to vector<16x384xbf16>
    %c656 = arith.constant 656 : index
    %c0_61 = arith.constant 0 : index
    %108 = vector.load %arg7[%c656, %c0_61] : memref<864x384xbf16, #tpu.memory_space<vmem>>, vector<16x384xbf16>
    tpu.vector_store %arg7[%c656, %c0_61], %107 {strides = array<i32>} : memref<864x384xbf16, #tpu.memory_space<vmem>>, vector<16x384xbf16>,
    %109 = vector.extract_strided_slice %96 {offsets = [0, 36], sizes = [16, 384], strides = [1, 1]} : vector<16x512xbf16> to vector<16x384xbf16>
    %c672 = arith.constant 672 : index
    %c0_62 = arith.constant 0 : index
    %110 = vector.load %arg7[%c672, %c0_62] : memref<864x384xbf16, #tpu.memory_space<vmem>>, vector<16x384xbf16>
    tpu.vector_store %arg7[%c672, %c0_62], %109 {strides = array<i32>} : memref<864x384xbf16, #tpu.memory_space<vmem>>, vector<16x384xbf16>,
    %111 = vector.extract_strided_slice %96 {offsets = [0, 37], sizes = [16, 384], strides = [1, 1]} : vector<16x512xbf16> to vector<16x384xbf16>
    %c688 = arith.constant 688 : index
    %c0_63 = arith.constant 0 : index
    %112 = vector.load %arg7[%c688, %c0_63] : memref<864x384xbf16, #tpu.memory_space<vmem>>, vector<16x384xbf16>
    tpu.vector_store %arg7[%c688, %c0_63], %111 {strides = array<i32>} : memref<864x384xbf16, #tpu.memory_space<vmem>>, vector<16x384xbf16>,
    %113 = vector.extract_strided_slice %96 {offsets = [0, 38], sizes = [16, 384], strides = [1, 1]} : vector<16x512xbf16> to vector<16x384xbf16>
    %c704 = arith.constant 704 : index
    %c0_64 = arith.constant 0 : index
    %114 = vector.load %arg7[%c704, %c0_64] : memref<864x384xbf16, #tpu.memory_space<vmem>>, vector<16x384xbf16>
    tpu.vector_store %arg7[%c704, %c0_64], %113 {strides = array<i32>} : memref<864x384xbf16, #tpu.memory_space<vmem>>, vector<16x384xbf16>,
    %c4_i32_65 = arith.constant 4 : i32
    %115 = arith.muli %arg1, %c4_i32_65 : i32
    %c5_i32 = arith.constant 5 : i32
    %116 = arith.addi %115, %c5_i32 : i32
    %c0_66 = arith.constant 0 : index
    %117 = arith.index_cast %116 : i32 to index
    %c0_67 = arith.constant 0 : index
    %c0_68 = arith.constant 0 : index
    %118 = vector.load %arg2[%c0_66, %117, %c0_67, %c0_68] : memref<1x6x16x512xbf16, #tpu.memory_space<vmem>>, vector<1x1x16x512xbf16>
    %119 = vector.shape_cast %118 : vector<1x1x16x512xbf16> to vector<16x512xbf16>
    %120 = vector.extract_strided_slice %119 {offsets = [0, 0], sizes = [16, 384], strides = [1, 1]} : vector<16x512xbf16> to vector<16x384xbf16>
    %c720 = arith.constant 720 : index
    %c0_69 = arith.constant 0 : index
    %121 = vector.load %arg7[%c720, %c0_69] : memref<864x384xbf16, #tpu.memory_space<vmem>>, vector<16x384xbf16>
    tpu.vector_store %arg7[%c720, %c0_69], %120 {strides = array<i32>} : memref<864x384xbf16, #tpu.memory_space<vmem>>, vector<16x384xbf16>,
    %122 = vector.extract_strided_slice %119 {offsets = [0, 1], sizes = [16, 384], strides = [1, 1]} : vector<16x512xbf16> to vector<16x384xbf16>
    %c736 = arith.constant 736 : index
    %c0_70 = arith.constant 0 : index
    %123 = vector.load %arg7[%c736, %c0_70] : memref<864x384xbf16, #tpu.memory_space<vmem>>, vector<16x384xbf16>
    tpu.vector_store %arg7[%c736, %c0_70], %122 {strides = array<i32>} : memref<864x384xbf16, #tpu.memory_space<vmem>>, vector<16x384xbf16>,
    %124 = vector.extract_strided_slice %119 {offsets = [0, 2], sizes = [16, 384], strides = [1, 1]} : vector<16x512xbf16> to vector<16x384xbf16>
    %c752 = arith.constant 752 : index
    %c0_71 = arith.constant 0 : index
    %125 = vector.load %arg7[%c752, %c0_71] : memref<864x384xbf16, #tpu.memory_space<vmem>>, vector<16x384xbf16>
    tpu.vector_store %arg7[%c752, %c0_71], %124 {strides = array<i32>} : memref<864x384xbf16, #tpu.memory_space<vmem>>, vector<16x384xbf16>,
    %126 = vector.extract_strided_slice %119 {offsets = [0, 18], sizes = [16, 384], strides = [1, 1]} : vector<16x512xbf16> to vector<16x384xbf16>
    %c768 = arith.constant 768 : index
    %c0_72 = arith.constant 0 : index
    %127 = vector.load %arg7[%c768, %c0_72] : memref<864x384xbf16, #tpu.memory_space<vmem>>, vector<16x384xbf16>
    tpu.vector_store %arg7[%c768, %c0_72], %126 {strides = array<i32>} : memref<864x384xbf16, #tpu.memory_space<vmem>>, vector<16x384xbf16>,
    %128 = vector.extract_strided_slice %119 {offsets = [0, 19], sizes = [16, 384], strides = [1, 1]} : vector<16x512xbf16> to vector<16x384xbf16>
    %c784 = arith.constant 784 : index
    %c0_73 = arith.constant 0 : index
    %129 = vector.load %arg7[%c784, %c0_73] : memref<864x384xbf16, #tpu.memory_space<vmem>>, vector<16x384xbf16>
    tpu.vector_store %arg7[%c784, %c0_73], %128 {strides = array<i32>} : memref<864x384xbf16, #tpu.memory_space<vmem>>, vector<16x384xbf16>,
    %130 = vector.extract_strided_slice %119 {offsets = [0, 20], sizes = [16, 384], strides = [1, 1]} : vector<16x512xbf16> to vector<16x384xbf16>
    %c800 = arith.constant 800 : index
    %c0_74 = arith.constant 0 : index
    %131 = vector.load %arg7[%c800, %c0_74] : memref<864x384xbf16, #tpu.memory_space<vmem>>, vector<16x384xbf16>
    tpu.vector_store %arg7[%c800, %c0_74], %130 {strides = array<i32>} : memref<864x384xbf16, #tpu.memory_space<vmem>>, vector<16x384xbf16>,
    %132 = vector.extract_strided_slice %119 {offsets = [0, 36], sizes = [16, 384], strides = [1, 1]} : vector<16x512xbf16> to vector<16x384xbf16>
    %c816 = arith.constant 816 : index
    %c0_75 = arith.constant 0 : index
    %133 = vector.load %arg7[%c816, %c0_75] : memref<864x384xbf16, #tpu.memory_space<vmem>>, vector<16x384xbf16>
    tpu.vector_store %arg7[%c816, %c0_75], %132 {strides = array<i32>} : memref<864x384xbf16, #tpu.memory_space<vmem>>, vector<16x384xbf16>,
    %134 = vector.extract_strided_slice %119 {offsets = [0, 37], sizes = [16, 384], strides = [1, 1]} : vector<16x512xbf16> to vector<16x384xbf16>
    %c832 = arith.constant 832 : index
    %c0_76 = arith.constant 0 : index
    %135 = vector.load %arg7[%c832, %c0_76] : memref<864x384xbf16, #tpu.memory_space<vmem>>, vector<16x384xbf16>
    tpu.vector_store %arg7[%c832, %c0_76], %134 {strides = array<i32>} : memref<864x384xbf16, #tpu.memory_space<vmem>>, vector<16x384xbf16>,
    %136 = vector.extract_strided_slice %119 {offsets = [0, 38], sizes = [16, 384], strides = [1, 1]} : vector<16x512xbf16> to vector<16x384xbf16>
    %c848 = arith.constant 848 : index
    %c0_77 = arith.constant 0 : index
    %137 = vector.load %arg7[%c848, %c0_77] : memref<864x384xbf16, #tpu.memory_space<vmem>>, vector<16x384xbf16>
    tpu.vector_store %arg7[%c848, %c0_77], %136 {strides = array<i32>} : memref<864x384xbf16, #tpu.memory_space<vmem>>, vector<16x384xbf16>,
    %c0_i32_78 = arith.constant 0 : i32
    %138 = arith.cmpi eq, %arg1, %c0_i32_78 : i32
    %139 = arith.extui %138 : i1 to i32
    %c0_i32_79 = arith.constant 0 : i32
    %140 = arith.cmpi ne, %139, %c0_i32_79 : i32
    scf.if %140 {
      %cst_130 = arith.constant 0.000000e+00 : f32
      %217 = vector.broadcast %cst_130 : f32 to vector<16x2xf32>
      %c0_131 = arith.constant 0 : index
      %c0_132 = arith.constant 0 : index
      %c0_133 = arith.constant 0 : index
      %218 = vector.load %arg6[%c0_131, %c0_132, %c0_133] : memref<1x16x2xf32, #tpu.memory_space<vmem>>, vector<1x16x2xf32>
      %219 = vector.shape_cast %218 : vector<1x16x2xf32> to vector<16x2xf32>
      %220 = vector.shape_cast %217 : vector<16x2xf32> to vector<1x16x2xf32>
      tpu.vector_store %arg6[%c0_131, %c0_132, %c0_133], %220 {strides = array<i32>} : memref<1x16x2xf32, #tpu.memory_space<vmem>>, vector<1x16x2xf32>,
    } else {
    }
    %c0_80 = arith.constant 0 : index
    %c0_81 = arith.constant 0 : index
    %141 = vector.load %arg3[%c0_80, %c0_81] : memref<16x432xbf16, #tpu.memory_space<vmem>>, vector<16x432xbf16>
    %c0_82 = arith.constant 0 : index
    %c0_83 = arith.constant 0 : index
    %142 = vector.load %arg4[%c0_82, %c0_83] : memref<1x384xf32, #tpu.memory_space<vmem>>, vector<1x384xf32>
    %cst = arith.constant 0.000000e+00 : f32
    %143 = vector.broadcast %cst : f32 to vector<16x1xf32>
    %cst_84 = arith.constant 0.000000e+00 : f32
    %144 = vector.broadcast %cst_84 : f32 to vector<16x1xf32>
    %c0_85 = arith.constant 0 : index
    %c0_86 = arith.constant 0 : index
    %145 = vector.load %arg7[%c0_85, %c0_86] : memref<864x384xbf16, #tpu.memory_space<vmem>>, vector<432x384xbf16>
    %cst_87 = arith.constant dense<0.000000e+00> : vector<16x384xf32>
    %146 = tpu.matmul %141, %145, %cst_87 {dimension_numbers = #tpu.dot_dimension_numbers<[1], [0], [0], [1], [0, 0, 1, 1], [], []>} : vector<16x432xbf16>, vector<432x384xbf16>, vector<16x384xf32> -> vector<16x384xf32>
    %147 = arith.truncf %146 : vector<16x384xf32> to vector<16x384xbf16>
    %c0_88 = arith.constant 0 : index
    %c0_89 = arith.constant 0 : index
    %c0_90 = arith.constant 0 : index
    %c0_91 = arith.constant 0 : index
    %148 = vector.load %arg5[%c0_88, %c0_89, %c0_90, %c0_91] : memref<1x4x16x384xbf16, #tpu.memory_space<vmem>>, vector<1x1x16x384xbf16>
    %149 = vector.shape_cast %148 : vector<1x1x16x384xbf16> to vector<16x384xbf16>
    %150 = vector.shape_cast %147 : vector<16x384xbf16> to vector<1x1x16x384xbf16>
    tpu.vector_store %arg5[%c0_88, %c0_89, %c0_90, %c0_91], %150 {strides = array<i32>} : memref<1x4x16x384xbf16, #tpu.memory_space<vmem>>, vector<1x1x16x384xbf16>,
    %151 = vector.broadcast %142 : vector<1x384xf32> to vector<16x384xf32>
    %152 = arith.mulf %146, %151 : vector<16x384xf32>
    %cst_92 = arith.constant dense<0.000000e+00> : vector<16xf32>
    %153 = vector.multi_reduction <add>, %152, %cst_92 [1] : vector<16x384xf32> to vector<16xf32>
    %154 = vector.shape_cast %153 : vector<16xf32> to vector<16x1xf32>
    %155 = arith.addf %143, %154 : vector<16x1xf32>
    %156 = arith.mulf %152, %152 : vector<16x384xf32>
    %cst_93 = arith.constant dense<0.000000e+00> : vector<16xf32>
    %157 = vector.multi_reduction <add>, %156, %cst_93 [1] : vector<16x384xf32> to vector<16xf32>
    %158 = vector.shape_cast %157 : vector<16xf32> to vector<16x1xf32>
    %159 = arith.addf %144, %158 : vector<16x1xf32>
    %c144_94 = arith.constant 144 : index
    %c0_95 = arith.constant 0 : index
    %160 = vector.load %arg7[%c144_94, %c0_95] : memref<864x384xbf16, #tpu.memory_space<vmem>>, vector<432x384xbf16>
    %cst_96 = arith.constant dense<0.000000e+00> : vector<16x384xf32>
    %161 = tpu.matmul %141, %160, %cst_96 {dimension_numbers = #tpu.dot_dimension_numbers<[1], [0], [0], [1], [0, 0, 1, 1], [], []>} : vector<16x432xbf16>, vector<432x384xbf16>, vector<16x384xf32> -> vector<16x384xf32>
    %162 = arith.truncf %161 : vector<16x384xf32> to vector<16x384xbf16>
    %c0_97 = arith.constant 0 : index
    %c1 = arith.constant 1 : index
    %c0_98 = arith.constant 0 : index
    %c0_99 = arith.constant 0 : index
    %163 = vector.load %arg5[%c0_97, %c1, %c0_98, %c0_99] : memref<1x4x16x384xbf16, #tpu.memory_space<vmem>>, vector<1x1x16x384xbf16>
    %164 = vector.shape_cast %163 : vector<1x1x16x384xbf16> to vector<16x384xbf16>
    %165 = vector.shape_cast %162 : vector<16x384xbf16> to vector<1x1x16x384xbf16>
    tpu.vector_store %arg5[%c0_97, %c1, %c0_98, %c0_99], %165 {strides = array<i32>} : memref<1x4x16x384xbf16, #tpu.memory_space<vmem>>, vector<1x1x16x384xbf16>,
    %166 = vector.broadcast %142 : vector<1x384xf32> to vector<16x384xf32>
    %167 = arith.mulf %161, %166 : vector<16x384xf32>
    %cst_100 = arith.constant dense<0.000000e+00> : vector<16xf32>
    %168 = vector.multi_reduction <add>, %167, %cst_100 [1] : vector<16x384xf32> to vector<16xf32>
    %169 = vector.shape_cast %168 : vector<16xf32> to vector<16x1xf32>
    %170 = arith.addf %155, %169 : vector<16x1xf32>
    %171 = arith.mulf %167, %167 : vector<16x384xf32>
    %cst_101 = arith.constant dense<0.000000e+00> : vector<16xf32>
    %172 = vector.multi_reduction <add>, %171, %cst_101 [1] : vector<16x384xf32> to vector<16xf32>
    %173 = vector.shape_cast %172 : vector<16xf32> to vector<16x1xf32>
    %174 = arith.addf %159, %173 : vector<16x1xf32>
    %c288_102 = arith.constant 288 : index
    %c0_103 = arith.constant 0 : index
    %175 = vector.load %arg7[%c288_102, %c0_103] : memref<864x384xbf16, #tpu.memory_space<vmem>>, vector<432x384xbf16>
    %cst_104 = arith.constant dense<0.000000e+00> : vector<16x384xf32>
    %176 = tpu.matmul %141, %175, %cst_104 {dimension_numbers = #tpu.dot_dimension_numbers<[1], [0], [0], [1], [0, 0, 1, 1], [], []>} : vector<16x432xbf16>, vector<432x384xbf16>, vector<16x384xf32> -> vector<16x384xf32>
    %177 = arith.truncf %176 : vector<16x384xf32> to vector<16x384xbf16>
    %c0_105 = arith.constant 0 : index
    %c2 = arith.constant 2 : index
    %c0_106 = arith.constant 0 : index
    %c0_107 = arith.constant 0 : index
    %178 = vector.load %arg5[%c0_105, %c2, %c0_106, %c0_107] : memref<1x4x16x384xbf16, #tpu.memory_space<vmem>>, vector<1x1x16x384xbf16>
    %179 = vector.shape_cast %178 : vector<1x1x16x384xbf16> to vector<16x384xbf16>
    %180 = vector.shape_cast %177 : vector<16x384xbf16> to vector<1x1x16x384xbf16>
    tpu.vector_store %arg5[%c0_105, %c2, %c0_106, %c0_107], %180 {strides = array<i32>} : memref<1x4x16x384xbf16, #tpu.memory_space<vmem>>, vector<1x1x16x384xbf16>,
    %181 = vector.broadcast %142 : vector<1x384xf32> to vector<16x384xf32>
    %182 = arith.mulf %176, %181 : vector<16x384xf32>
    %cst_108 = arith.constant dense<0.000000e+00> : vector<16xf32>
    %183 = vector.multi_reduction <add>, %182, %cst_108 [1] : vector<16x384xf32> to vector<16xf32>
    %184 = vector.shape_cast %183 : vector<16xf32> to vector<16x1xf32>
    %185 = arith.addf %170, %184 : vector<16x1xf32>
    %186 = arith.mulf %182, %182 : vector<16x384xf32>
    %cst_109 = arith.constant dense<0.000000e+00> : vector<16xf32>
    %187 = vector.multi_reduction <add>, %186, %cst_109 [1] : vector<16x384xf32> to vector<16xf32>
    %188 = vector.shape_cast %187 : vector<16xf32> to vector<16x1xf32>
    %189 = arith.addf %174, %188 : vector<16x1xf32>
    %c432_110 = arith.constant 432 : index
    %c0_111 = arith.constant 0 : index
    %190 = vector.load %arg7[%c432_110, %c0_111] : memref<864x384xbf16, #tpu.memory_space<vmem>>, vector<432x384xbf16>
    %cst_112 = arith.constant dense<0.000000e+00> : vector<16x384xf32>
    %191 = tpu.matmul %141, %190, %cst_112 {dimension_numbers = #tpu.dot_dimension_numbers<[1], [0], [0], [1], [0, 0, 1, 1], [], []>} : vector<16x432xbf16>, vector<432x384xbf16>, vector<16x384xf32> -> vector<16x384xf32>
    %192 = arith.truncf %191 : vector<16x384xf32> to vector<16x384xbf16>
    %c0_113 = arith.constant 0 : index
    %c3 = arith.constant 3 : index
    %c0_114 = arith.constant 0 : index
    %c0_115 = arith.constant 0 : index
    %193 = vector.load %arg5[%c0_113, %c3, %c0_114, %c0_115] : memref<1x4x16x384xbf16, #tpu.memory_space<vmem>>, vector<1x1x16x384xbf16>
    %194 = vector.shape_cast %193 : vector<1x1x16x384xbf16> to vector<16x384xbf16>
    %195 = vector.shape_cast %192 : vector<16x384xbf16> to vector<1x1x16x384xbf16>
    tpu.vector_store %arg5[%c0_113, %c3, %c0_114, %c0_115], %195 {strides = array<i32>} : memref<1x4x16x384xbf16, #tpu.memory_space<vmem>>, vector<1x1x16x384xbf16>,
    %196 = vector.broadcast %142 : vector<1x384xf32> to vector<16x384xf32>
    %197 = arith.mulf %191, %196 : vector<16x384xf32>
    %cst_116 = arith.constant dense<0.000000e+00> : vector<16xf32>
    %198 = vector.multi_reduction <add>, %197, %cst_116 [1] : vector<16x384xf32> to vector<16xf32>
    %199 = vector.shape_cast %198 : vector<16xf32> to vector<16x1xf32>
    %200 = arith.addf %185, %199 : vector<16x1xf32>
    %201 = arith.mulf %197, %197 : vector<16x384xf32>
    %cst_117 = arith.constant dense<0.000000e+00> : vector<16xf32>
    %202 = vector.multi_reduction <add>, %201, %cst_117 [1] : vector<16x384xf32> to vector<16xf32>
    %203 = vector.shape_cast %202 : vector<16xf32> to vector<16x1xf32>
    %204 = arith.addf %189, %203 : vector<16x1xf32>
    %c0_118 = arith.constant 0 : index
    %c0_119 = arith.constant 0 : index
    %c0_120 = arith.constant 0 : index
    %205 = vector.load %arg6[%c0_118, %c0_119, %c0_120] : memref<1x16x2xf32, #tpu.memory_space<vmem>>, vector<1x16x1xf32>
    %206 = vector.shape_cast %205 : vector<1x16x1xf32> to vector<16x1xf32>
    %207 = arith.addf %206, %200 : vector<16x1xf32>
    %c0_121 = arith.constant 0 : index
    %c0_122 = arith.constant 0 : index
    %c0_123 = arith.constant 0 : index
    %208 = vector.load %arg6[%c0_121, %c0_122, %c0_123] : memref<1x16x2xf32, #tpu.memory_space<vmem>>, vector<1x16x1xf32>
    %209 = vector.shape_cast %208 : vector<1x16x1xf32> to vector<16x1xf32>
    %210 = vector.shape_cast %207 : vector<16x1xf32> to vector<1x16x1xf32>
    tpu.vector_store %arg6[%c0_121, %c0_122, %c0_123], %210 {strides = array<i32>} : memref<1x16x2xf32, #tpu.memory_space<vmem>>, vector<1x16x1xf32>,
    %c0_124 = arith.constant 0 : index
    %c0_125 = arith.constant 0 : index
    %c1_126 = arith.constant 1 : index
    %211 = vector.load %arg6[%c0_124, %c0_125, %c1_126] : memref<1x16x2xf32, #tpu.memory_space<vmem>>, vector<1x16x1xf32>
    %212 = vector.shape_cast %211 : vector<1x16x1xf32> to vector<16x1xf32>
    %213 = arith.addf %212, %204 : vector<16x1xf32>
    %c0_127 = arith.constant 0 : index
    %c0_128 = arith.constant 0 : index
    %c1_129 = arith.constant 1 : index
    %214 = vector.load %arg6[%c0_127, %c0_128, %c1_129] : memref<1x16x2xf32, #tpu.memory_space<vmem>>, vector<1x16x1xf32>
    %215 = vector.shape_cast %214 : vector<1x16x1xf32> to vector<16x1xf32>
    %216 = vector.shape_cast %213 : vector<16x1xf32> to vector<1x16x1xf32>
    tpu.vector_store %arg6[%c0_127, %c0_128, %c1_129], %216 {strides = array<i32>} : memref<1x16x2xf32, #tpu.memory_space<vmem>>, vector<1x16x1xf32>,
    return
  }
  func.func @transform_0(%arg0: i32, %arg1: i32) -> (i32, i32, i32, i32) {
    %c0_i32 = arith.constant 0 : i32
    %c0_i32_0 = arith.constant 0 : i32
    %c0_i32_1 = arith.constant 0 : i32
    %c0_i32_2 = arith.constant 0 : i32
    return %arg0, %c0_i32, %c0_i32_0, %c0_i32_1 : i32, i32, i32, i32
  }
  func.func @transform_1(%arg0: i32, %arg1: i32) -> (i32, i32) {
    %c0_i32 = arith.constant 0 : i32
    %c0_i32_0 = arith.constant 0 : i32
    %c0_i32_1 = arith.constant 0 : i32
    return %c0_i32, %c0_i32_0 : i32, i32
  }
  func.func @transform_2(%arg0: i32, %arg1: i32) -> (i32, i32) {
    %c0_i32 = arith.constant 0 : i32
    %c0_i32_0 = arith.constant 0 : i32
    %c0_i32_1 = arith.constant 0 : i32
    return %c0_i32, %c0_i32_0 : i32, i32
  }
  func.func @transform_3(%arg0: i32, %arg1: i32) -> (i32, i32, i32, i32) {
    %c0_i32 = arith.constant 0 : i32
    %c0_i32_0 = arith.constant 0 : i32
    %c0_i32_1 = arith.constant 0 : i32
    return %arg0, %arg1, %c0_i32, %c0_i32_0 : i32, i32, i32, i32
  }
  func.func @transform_4(%arg0: i32, %arg1: i32) -> (i32, i32, i32) {
    %c0_i32 = arith.constant 0 : i32
    %c0_i32_0 = arith.constant 0 : i32
    %c0_i32_1 = arith.constant 0 : i32
    return %arg0, %c0_i32, %c0_i32_0 : i32, i32, i32
  }
}

module attributes {stable_mosaic.version = 11 : i64} {
  func.func @_bn_relu_kernel(%arg0: i32, %arg1: memref<1x4x16x384xbf16, #tpu.memory_space<vmem>>, %arg2: memref<16x1xf32, #tpu.memory_space<vmem>>, %arg3: memref<16x1xf32, #tpu.memory_space<vmem>>, %arg4: memref<1x4x16x384xf32, #tpu.memory_space<vmem>>) attributes {dimension_semantics = [#tpu.dimension_semantics<parallel>], iteration_bounds = array<i64: 2>, scalar_prefetch = 0 : i64, scratch_operands = 0 : i64, tpu.core_type = #tpu.core_type<tc>, window_params = [{transform_indices = @transform_0, window_bounds = array<i64: 1, 4, 16, 384>}, {pipeline_mode = #tpu.pipeline_mode<synchronous>, transform_indices = @transform_1, window_bounds = array<i64: 16, 1>}, {pipeline_mode = #tpu.pipeline_mode<synchronous>, transform_indices = @transform_2, window_bounds = array<i64: 16, 1>}, {transform_indices = @transform_3, window_bounds = array<i64: 1, 4, 16, 384>}]} {
    %c0 = arith.constant 0 : index
    %c0_0 = arith.constant 0 : index
    %0 = vector.load %arg2[%c0, %c0_0] : memref<16x1xf32, #tpu.memory_space<vmem>>, vector<16x1xf32>
    %c0_1 = arith.constant 0 : index
    %c0_2 = arith.constant 0 : index
    %1 = vector.load %arg3[%c0_1, %c0_2] : memref<16x1xf32, #tpu.memory_space<vmem>>, vector<16x1xf32>
    %c0_3 = arith.constant 0 : index
    %c0_4 = arith.constant 0 : index
    %c0_5 = arith.constant 0 : index
    %c0_6 = arith.constant 0 : index
    %2 = vector.load %arg1[%c0_3, %c0_4, %c0_5, %c0_6] : memref<1x4x16x384xbf16, #tpu.memory_space<vmem>>, vector<1x1x16x384xbf16>
    %3 = vector.shape_cast %2 : vector<1x1x16x384xbf16> to vector<16x384xbf16>
    %4 = arith.extf %3 : vector<16x384xbf16> to vector<16x384xf32>
    %5 = vector.broadcast %0 : vector<16x1xf32> to vector<16x384xf32>
    %6 = arith.mulf %4, %5 : vector<16x384xf32>
    %7 = vector.broadcast %1 : vector<16x1xf32> to vector<16x384xf32>
    %8 = arith.addf %6, %7 : vector<16x384xf32>
    %cst = arith.constant 0.000000e+00 : f32
    %9 = vector.broadcast %cst : f32 to vector<16x384xf32>
    %10 = arith.maximumf %8, %9 : vector<16x384xf32>
    %c0_7 = arith.constant 0 : index
    %c0_8 = arith.constant 0 : index
    %c0_9 = arith.constant 0 : index
    %c0_10 = arith.constant 0 : index
    %11 = vector.load %arg4[%c0_7, %c0_8, %c0_9, %c0_10] : memref<1x4x16x384xf32, #tpu.memory_space<vmem>>, vector<1x1x16x384xf32>
    %12 = vector.shape_cast %11 : vector<1x1x16x384xf32> to vector<16x384xf32>
    %13 = vector.shape_cast %10 : vector<16x384xf32> to vector<1x1x16x384xf32>
    tpu.vector_store %arg4[%c0_7, %c0_8, %c0_9, %c0_10], %13 {strides = array<i32>} : memref<1x4x16x384xf32, #tpu.memory_space<vmem>>, vector<1x1x16x384xf32>,
    %c0_11 = arith.constant 0 : index
    %c1 = arith.constant 1 : index
    %c0_12 = arith.constant 0 : index
    %c0_13 = arith.constant 0 : index
    %14 = vector.load %arg1[%c0_11, %c1, %c0_12, %c0_13] : memref<1x4x16x384xbf16, #tpu.memory_space<vmem>>, vector<1x1x16x384xbf16>
    %15 = vector.shape_cast %14 : vector<1x1x16x384xbf16> to vector<16x384xbf16>
    %16 = arith.extf %15 : vector<16x384xbf16> to vector<16x384xf32>
    %17 = vector.broadcast %0 : vector<16x1xf32> to vector<16x384xf32>
    %18 = arith.mulf %16, %17 : vector<16x384xf32>
    %19 = vector.broadcast %1 : vector<16x1xf32> to vector<16x384xf32>
    %20 = arith.addf %18, %19 : vector<16x384xf32>
    %cst_14 = arith.constant 0.000000e+00 : f32
    %21 = vector.broadcast %cst_14 : f32 to vector<16x384xf32>
    %22 = arith.maximumf %20, %21 : vector<16x384xf32>
    %c0_15 = arith.constant 0 : index
    %c1_16 = arith.constant 1 : index
    %c0_17 = arith.constant 0 : index
    %c0_18 = arith.constant 0 : index
    %23 = vector.load %arg4[%c0_15, %c1_16, %c0_17, %c0_18] : memref<1x4x16x384xf32, #tpu.memory_space<vmem>>, vector<1x1x16x384xf32>
    %24 = vector.shape_cast %23 : vector<1x1x16x384xf32> to vector<16x384xf32>
    %25 = vector.shape_cast %22 : vector<16x384xf32> to vector<1x1x16x384xf32>
    tpu.vector_store %arg4[%c0_15, %c1_16, %c0_17, %c0_18], %25 {strides = array<i32>} : memref<1x4x16x384xf32, #tpu.memory_space<vmem>>, vector<1x1x16x384xf32>,
    %c0_19 = arith.constant 0 : index
    %c2 = arith.constant 2 : index
    %c0_20 = arith.constant 0 : index
    %c0_21 = arith.constant 0 : index
    %26 = vector.load %arg1[%c0_19, %c2, %c0_20, %c0_21] : memref<1x4x16x384xbf16, #tpu.memory_space<vmem>>, vector<1x1x16x384xbf16>
    %27 = vector.shape_cast %26 : vector<1x1x16x384xbf16> to vector<16x384xbf16>
    %28 = arith.extf %27 : vector<16x384xbf16> to vector<16x384xf32>
    %29 = vector.broadcast %0 : vector<16x1xf32> to vector<16x384xf32>
    %30 = arith.mulf %28, %29 : vector<16x384xf32>
    %31 = vector.broadcast %1 : vector<16x1xf32> to vector<16x384xf32>
    %32 = arith.addf %30, %31 : vector<16x384xf32>
    %cst_22 = arith.constant 0.000000e+00 : f32
    %33 = vector.broadcast %cst_22 : f32 to vector<16x384xf32>
    %34 = arith.maximumf %32, %33 : vector<16x384xf32>
    %c0_23 = arith.constant 0 : index
    %c2_24 = arith.constant 2 : index
    %c0_25 = arith.constant 0 : index
    %c0_26 = arith.constant 0 : index
    %35 = vector.load %arg4[%c0_23, %c2_24, %c0_25, %c0_26] : memref<1x4x16x384xf32, #tpu.memory_space<vmem>>, vector<1x1x16x384xf32>
    %36 = vector.shape_cast %35 : vector<1x1x16x384xf32> to vector<16x384xf32>
    %37 = vector.shape_cast %34 : vector<16x384xf32> to vector<1x1x16x384xf32>
    tpu.vector_store %arg4[%c0_23, %c2_24, %c0_25, %c0_26], %37 {strides = array<i32>} : memref<1x4x16x384xf32, #tpu.memory_space<vmem>>, vector<1x1x16x384xf32>,
    %c0_27 = arith.constant 0 : index
    %c3 = arith.constant 3 : index
    %c0_28 = arith.constant 0 : index
    %c0_29 = arith.constant 0 : index
    %38 = vector.load %arg1[%c0_27, %c3, %c0_28, %c0_29] : memref<1x4x16x384xbf16, #tpu.memory_space<vmem>>, vector<1x1x16x384xbf16>
    %39 = vector.shape_cast %38 : vector<1x1x16x384xbf16> to vector<16x384xbf16>
    %40 = arith.extf %39 : vector<16x384xbf16> to vector<16x384xf32>
    %41 = vector.broadcast %0 : vector<16x1xf32> to vector<16x384xf32>
    %42 = arith.mulf %40, %41 : vector<16x384xf32>
    %43 = vector.broadcast %1 : vector<16x1xf32> to vector<16x384xf32>
    %44 = arith.addf %42, %43 : vector<16x384xf32>
    %cst_30 = arith.constant 0.000000e+00 : f32
    %45 = vector.broadcast %cst_30 : f32 to vector<16x384xf32>
    %46 = arith.maximumf %44, %45 : vector<16x384xf32>
    %c0_31 = arith.constant 0 : index
    %c3_32 = arith.constant 3 : index
    %c0_33 = arith.constant 0 : index
    %c0_34 = arith.constant 0 : index
    %47 = vector.load %arg4[%c0_31, %c3_32, %c0_33, %c0_34] : memref<1x4x16x384xf32, #tpu.memory_space<vmem>>, vector<1x1x16x384xf32>
    %48 = vector.shape_cast %47 : vector<1x1x16x384xf32> to vector<16x384xf32>
    %49 = vector.shape_cast %46 : vector<16x384xf32> to vector<1x1x16x384xf32>
    tpu.vector_store %arg4[%c0_31, %c3_32, %c0_33, %c0_34], %49 {strides = array<i32>} : memref<1x4x16x384xf32, #tpu.memory_space<vmem>>, vector<1x1x16x384xf32>,
    return
  }
  func.func @transform_0(%arg0: i32) -> (i32, i32, i32, i32) {
    %c0_i32 = arith.constant 0 : i32
    %c0_i32_0 = arith.constant 0 : i32
    %c0_i32_1 = arith.constant 0 : i32
    %c0_i32_2 = arith.constant 0 : i32
    return %arg0, %c0_i32, %c0_i32_0, %c0_i32_1 : i32, i32, i32, i32
  }
  func.func @transform_1(%arg0: i32) -> (i32, i32) {
    %c0_i32 = arith.constant 0 : i32
    %c0_i32_0 = arith.constant 0 : i32
    %c0_i32_1 = arith.constant 0 : i32
    return %c0_i32, %c0_i32_0 : i32, i32
  }
  func.func @transform_2(%arg0: i32) -> (i32, i32) {
    %c0_i32 = arith.constant 0 : i32
    %c0_i32_0 = arith.constant 0 : i32
    %c0_i32_1 = arith.constant 0 : i32
    return %c0_i32, %c0_i32_0 : i32, i32
  }
  func.func @transform_3(%arg0: i32) -> (i32, i32, i32, i32) {
    %c0_i32 = arith.constant 0 : i32
    %c0_i32_0 = arith.constant 0 : i32
    %c0_i32_1 = arith.constant 0 : i32
    %c0_i32_2 = arith.constant 0 : i32
    return %arg0, %c0_i32, %c0_i32_0, %c0_i32_1 : i32, i32, i32, i32
  }
}

module attributes {stable_mosaic.version = 11 : i64} {
  func.func @_bn_relu_pack_kernel(%arg0: i32, %arg1: memref<1x4x16x384xbf16, #tpu.memory_space<vmem>>, %arg2: memref<16x1xf32, #tpu.memory_space<vmem>>, %arg3: memref<16x1xf32, #tpu.memory_space<vmem>>, %arg4: memref<1x384xf32, #tpu.memory_space<vmem>>, %arg5: memref<1x6x16x512xbf16, #tpu.memory_space<vmem>>) attributes {dimension_semantics = [#tpu.dimension_semantics<parallel>], iteration_bounds = array<i64: 2>, scalar_prefetch = 0 : i64, scratch_operands = 0 : i64, tpu.core_type = #tpu.core_type<tc>, window_params = [{transform_indices = @transform_0, window_bounds = array<i64: 1, 4, 16, 384>}, {pipeline_mode = #tpu.pipeline_mode<synchronous>, transform_indices = @transform_1, window_bounds = array<i64: 16, 1>}, {pipeline_mode = #tpu.pipeline_mode<synchronous>, transform_indices = @transform_2, window_bounds = array<i64: 16, 1>}, {pipeline_mode = #tpu.pipeline_mode<synchronous>, transform_indices = @transform_3, window_bounds = array<i64: 1, 384>}, {transform_indices = @transform_4, window_bounds = array<i64: 1, 6, 16, 512>}]} {
    %cst = arith.constant 0.000000e+00 : bf16
    %0 = vector.broadcast %cst : bf16 to vector<6x16x512xbf16>
    %c0 = arith.constant 0 : index
    %c0_0 = arith.constant 0 : index
    %c0_1 = arith.constant 0 : index
    %c0_2 = arith.constant 0 : index
    %1 = vector.load %arg5[%c0, %c0_0, %c0_1, %c0_2] : memref<1x6x16x512xbf16, #tpu.memory_space<vmem>>, vector<1x6x16x512xbf16>
    %2 = vector.shape_cast %1 : vector<1x6x16x512xbf16> to vector<6x16x512xbf16>
    %3 = vector.shape_cast %0 : vector<6x16x512xbf16> to vector<1x6x16x512xbf16>
    tpu.vector_store %arg5[%c0, %c0_0, %c0_1, %c0_2], %3 {strides = array<i32>} : memref<1x6x16x512xbf16, #tpu.memory_space<vmem>>, vector<1x6x16x512xbf16>,
    %c0_3 = arith.constant 0 : index
    %c0_4 = arith.constant 0 : index
    %4 = vector.load %arg2[%c0_3, %c0_4] : memref<16x1xf32, #tpu.memory_space<vmem>>, vector<16x1xf32>
    %c0_5 = arith.constant 0 : index
    %c0_6 = arith.constant 0 : index
    %5 = vector.load %arg3[%c0_5, %c0_6] : memref<16x1xf32, #tpu.memory_space<vmem>>, vector<16x1xf32>
    %c0_7 = arith.constant 0 : index
    %c0_8 = arith.constant 0 : index
    %6 = vector.load %arg4[%c0_7, %c0_8] : memref<1x384xf32, #tpu.memory_space<vmem>>, vector<1x384xf32>
    %c0_9 = arith.constant 0 : index
    %c0_10 = arith.constant 0 : index
    %c0_11 = arith.constant 0 : index
    %c0_12 = arith.constant 0 : index
    %7 = vector.load %arg1[%c0_9, %c0_10, %c0_11, %c0_12] : memref<1x4x16x384xbf16, #tpu.memory_space<vmem>>, vector<1x1x16x384xbf16>
    %8 = vector.shape_cast %7 : vector<1x1x16x384xbf16> to vector<16x384xbf16>
    %9 = arith.extf %8 : vector<16x384xbf16> to vector<16x384xf32>
    %10 = vector.broadcast %4 : vector<16x1xf32> to vector<16x384xf32>
    %11 = arith.mulf %9, %10 : vector<16x384xf32>
    %12 = vector.broadcast %5 : vector<16x1xf32> to vector<16x384xf32>
    %13 = arith.addf %11, %12 : vector<16x384xf32>
    %cst_13 = arith.constant 0.000000e+00 : f32
    %14 = vector.broadcast %cst_13 : f32 to vector<16x384xf32>
    %15 = arith.maximumf %13, %14 : vector<16x384xf32>
    %16 = vector.broadcast %6 : vector<1x384xf32> to vector<16x384xf32>
    %17 = arith.mulf %15, %16 : vector<16x384xf32>
    %18 = arith.truncf %17 : vector<16x384xf32> to vector<16x384xbf16>
    %c0_14 = arith.constant 0 : index
    %c1 = arith.constant 1 : index
    %c0_15 = arith.constant 0 : index
    %c19 = arith.constant 19 : index
    %19 = vector.load %arg5[%c0_14, %c1, %c0_15, %c19] : memref<1x6x16x512xbf16, #tpu.memory_space<vmem>>, vector<1x1x16x384xbf16>
    %20 = vector.shape_cast %19 : vector<1x1x16x384xbf16> to vector<16x384xbf16>
    %21 = vector.shape_cast %18 : vector<16x384xbf16> to vector<1x1x16x384xbf16>
    tpu.vector_store %arg5[%c0_14, %c1, %c0_15, %c19], %21 {strides = array<i32>} : memref<1x6x16x512xbf16, #tpu.memory_space<vmem>>, vector<1x1x16x384xbf16>,
    %c0_16 = arith.constant 0 : index
    %c1_17 = arith.constant 1 : index
    %c0_18 = arith.constant 0 : index
    %c0_19 = arith.constant 0 : index
    %22 = vector.load %arg1[%c0_16, %c1_17, %c0_18, %c0_19] : memref<1x4x16x384xbf16, #tpu.memory_space<vmem>>, vector<1x1x16x384xbf16>
    %23 = vector.shape_cast %22 : vector<1x1x16x384xbf16> to vector<16x384xbf16>
    %24 = arith.extf %23 : vector<16x384xbf16> to vector<16x384xf32>
    %25 = vector.broadcast %4 : vector<16x1xf32> to vector<16x384xf32>
    %26 = arith.mulf %24, %25 : vector<16x384xf32>
    %27 = vector.broadcast %5 : vector<16x1xf32> to vector<16x384xf32>
    %28 = arith.addf %26, %27 : vector<16x384xf32>
    %cst_20 = arith.constant 0.000000e+00 : f32
    %29 = vector.broadcast %cst_20 : f32 to vector<16x384xf32>
    %30 = arith.maximumf %28, %29 : vector<16x384xf32>
    %31 = vector.broadcast %6 : vector<1x384xf32> to vector<16x384xf32>
    %32 = arith.mulf %30, %31 : vector<16x384xf32>
    %33 = arith.truncf %32 : vector<16x384xf32> to vector<16x384xbf16>
    %c0_21 = arith.constant 0 : index
    %c2 = arith.constant 2 : index
    %c0_22 = arith.constant 0 : index
    %c19_23 = arith.constant 19 : index
    %34 = vector.load %arg5[%c0_21, %c2, %c0_22, %c19_23] : memref<1x6x16x512xbf16, #tpu.memory_space<vmem>>, vector<1x1x16x384xbf16>
    %35 = vector.shape_cast %34 : vector<1x1x16x384xbf16> to vector<16x384xbf16>
    %36 = vector.shape_cast %33 : vector<16x384xbf16> to vector<1x1x16x384xbf16>
    tpu.vector_store %arg5[%c0_21, %c2, %c0_22, %c19_23], %36 {strides = array<i32>} : memref<1x6x16x512xbf16, #tpu.memory_space<vmem>>, vector<1x1x16x384xbf16>,
    %c0_24 = arith.constant 0 : index
    %c2_25 = arith.constant 2 : index
    %c0_26 = arith.constant 0 : index
    %c0_27 = arith.constant 0 : index
    %37 = vector.load %arg1[%c0_24, %c2_25, %c0_26, %c0_27] : memref<1x4x16x384xbf16, #tpu.memory_space<vmem>>, vector<1x1x16x384xbf16>
    %38 = vector.shape_cast %37 : vector<1x1x16x384xbf16> to vector<16x384xbf16>
    %39 = arith.extf %38 : vector<16x384xbf16> to vector<16x384xf32>
    %40 = vector.broadcast %4 : vector<16x1xf32> to vector<16x384xf32>
    %41 = arith.mulf %39, %40 : vector<16x384xf32>
    %42 = vector.broadcast %5 : vector<16x1xf32> to vector<16x384xf32>
    %43 = arith.addf %41, %42 : vector<16x384xf32>
    %cst_28 = arith.constant 0.000000e+00 : f32
    %44 = vector.broadcast %cst_28 : f32 to vector<16x384xf32>
    %45 = arith.maximumf %43, %44 : vector<16x384xf32>
    %46 = vector.broadcast %6 : vector<1x384xf32> to vector<16x384xf32>
    %47 = arith.mulf %45, %46 : vector<16x384xf32>
    %48 = arith.truncf %47 : vector<16x384xf32> to vector<16x384xbf16>
    %c0_29 = arith.constant 0 : index
    %c3 = arith.constant 3 : index
    %c0_30 = arith.constant 0 : index
    %c19_31 = arith.constant 19 : index
    %49 = vector.load %arg5[%c0_29, %c3, %c0_30, %c19_31] : memref<1x6x16x512xbf16, #tpu.memory_space<vmem>>, vector<1x1x16x384xbf16>
    %50 = vector.shape_cast %49 : vector<1x1x16x384xbf16> to vector<16x384xbf16>
    %51 = vector.shape_cast %48 : vector<16x384xbf16> to vector<1x1x16x384xbf16>
    tpu.vector_store %arg5[%c0_29, %c3, %c0_30, %c19_31], %51 {strides = array<i32>} : memref<1x6x16x512xbf16, #tpu.memory_space<vmem>>, vector<1x1x16x384xbf16>,
    %c0_32 = arith.constant 0 : index
    %c3_33 = arith.constant 3 : index
    %c0_34 = arith.constant 0 : index
    %c0_35 = arith.constant 0 : index
    %52 = vector.load %arg1[%c0_32, %c3_33, %c0_34, %c0_35] : memref<1x4x16x384xbf16, #tpu.memory_space<vmem>>, vector<1x1x16x384xbf16>
    %53 = vector.shape_cast %52 : vector<1x1x16x384xbf16> to vector<16x384xbf16>
    %54 = arith.extf %53 : vector<16x384xbf16> to vector<16x384xf32>
    %55 = vector.broadcast %4 : vector<16x1xf32> to vector<16x384xf32>
    %56 = arith.mulf %54, %55 : vector<16x384xf32>
    %57 = vector.broadcast %5 : vector<16x1xf32> to vector<16x384xf32>
    %58 = arith.addf %56, %57 : vector<16x384xf32>
    %cst_36 = arith.constant 0.000000e+00 : f32
    %59 = vector.broadcast %cst_36 : f32 to vector<16x384xf32>
    %60 = arith.maximumf %58, %59 : vector<16x384xf32>
    %61 = vector.broadcast %6 : vector<1x384xf32> to vector<16x384xf32>
    %62 = arith.mulf %60, %61 : vector<16x384xf32>
    %63 = arith.truncf %62 : vector<16x384xf32> to vector<16x384xbf16>
    %c0_37 = arith.constant 0 : index
    %c4 = arith.constant 4 : index
    %c0_38 = arith.constant 0 : index
    %c19_39 = arith.constant 19 : index
    %64 = vector.load %arg5[%c0_37, %c4, %c0_38, %c19_39] : memref<1x6x16x512xbf16, #tpu.memory_space<vmem>>, vector<1x1x16x384xbf16>
    %65 = vector.shape_cast %64 : vector<1x1x16x384xbf16> to vector<16x384xbf16>
    %66 = vector.shape_cast %63 : vector<16x384xbf16> to vector<1x1x16x384xbf16>
    tpu.vector_store %arg5[%c0_37, %c4, %c0_38, %c19_39], %66 {strides = array<i32>} : memref<1x6x16x512xbf16, #tpu.memory_space<vmem>>, vector<1x1x16x384xbf16>,
    return
  }
  func.func @transform_0(%arg0: i32) -> (i32, i32, i32, i32) {
    %c0_i32 = arith.constant 0 : i32
    %c0_i32_0 = arith.constant 0 : i32
    %c0_i32_1 = arith.constant 0 : i32
    %c0_i32_2 = arith.constant 0 : i32
    return %arg0, %c0_i32, %c0_i32_0, %c0_i32_1 : i32, i32, i32, i32
  }
  func.func @transform_1(%arg0: i32) -> (i32, i32) {
    %c0_i32 = arith.constant 0 : i32
    %c0_i32_0 = arith.constant 0 : i32
    %c0_i32_1 = arith.constant 0 : i32
    return %c0_i32, %c0_i32_0 : i32, i32
  }
  func.func @transform_2(%arg0: i32) -> (i32, i32) {
    %c0_i32 = arith.constant 0 : i32
    %c0_i32_0 = arith.constant 0 : i32
    %c0_i32_1 = arith.constant 0 : i32
    return %c0_i32, %c0_i32_0 : i32, i32
  }
  func.func @transform_3(%arg0: i32) -> (i32, i32) {
    %c0_i32 = arith.constant 0 : i32
    %c0_i32_0 = arith.constant 0 : i32
    %c0_i32_1 = arith.constant 0 : i32
    return %c0_i32, %c0_i32_0 : i32, i32
  }
  func.func @transform_4(%arg0: i32) -> (i32, i32, i32, i32) {
    %c0_i32 = arith.constant 0 : i32
    %c0_i32_0 = arith.constant 0 : i32
    %c0_i32_1 = arith.constant 0 : i32
    %c0_i32_2 = arith.constant 0 : i32
    return %arg0, %c0_i32, %c0_i32_0, %c0_i32_1 : i32, i32, i32, i32
  }
}

module attributes {stable_mosaic.version = 11 : i64} {
  func.func @_conv_stats_kernel(%arg0: i32, %arg1: i32, %arg2: memref<1x6x16x256xbf16, #tpu.memory_space<vmem>>, %arg3: memref<16x432xbf16, #tpu.memory_space<vmem>>, %arg4: memref<1x128xf32, #tpu.memory_space<vmem>>, %arg5: memref<1x4x16x128xbf16, #tpu.memory_space<vmem>>, %arg6: memref<1x16x2xf32, #tpu.memory_space<vmem>>, %arg7: memref<864x128xbf16, #tpu.memory_space<vmem>>) attributes {dimension_semantics = [#tpu.dimension_semantics<parallel>, #tpu.dimension_semantics<arbitrary>], iteration_bounds = array<i64: 2, 1>, scalar_prefetch = 0 : i64, scratch_operands = 1 : i64, tpu.core_type = #tpu.core_type<tc>, window_params = [{transform_indices = @transform_0, window_bounds = array<i64: 1, 6, 16, 256>}, {pipeline_mode = #tpu.pipeline_mode<synchronous>, transform_indices = @transform_1, window_bounds = array<i64: 16, 432>}, {pipeline_mode = #tpu.pipeline_mode<synchronous>, transform_indices = @transform_2, window_bounds = array<i64: 1, 128>}, {transform_indices = @transform_3, window_bounds = array<i64: 1, 4, 16, 128>}, {transform_indices = @transform_4, window_bounds = array<i64: 1, 16, 2>}]} {
    %c4_i32 = arith.constant 4 : i32
    %0 = arith.muli %arg1, %c4_i32 : i32
    %c0_i32 = arith.constant 0 : i32
    %1 = arith.addi %0, %c0_i32 : i32
    %c0 = arith.constant 0 : index
    %2 = arith.index_cast %1 : i32 to index
    %c0_0 = arith.constant 0 : index
    %c0_1 = arith.constant 0 : index
    %3 = vector.load %arg2[%c0, %2, %c0_0, %c0_1] : memref<1x6x16x256xbf16, #tpu.memory_space<vmem>>, vector<1x1x16x256xbf16>
    %4 = vector.shape_cast %3 : vector<1x1x16x256xbf16> to vector<16x256xbf16>
    %5 = vector.extract_strided_slice %4 {offsets = [0, 0], sizes = [16, 128], strides = [1, 1]} : vector<16x256xbf16> to vector<16x128xbf16>
    %c0_2 = arith.constant 0 : index
    %c0_3 = arith.constant 0 : index
    %6 = vector.load %arg7[%c0_2, %c0_3] : memref<864x128xbf16, #tpu.memory_space<vmem>>, vector<16x128xbf16>
    tpu.vector_store %arg7[%c0_2, %c0_3], %5 {strides = array<i32>} : memref<864x128xbf16, #tpu.memory_space<vmem>>, vector<16x128xbf16>,
    %7 = vector.extract_strided_slice %4 {offsets = [0, 1], sizes = [16, 128], strides = [1, 1]} : vector<16x256xbf16> to vector<16x128xbf16>
    %c16 = arith.constant 16 : index
    %c0_4 = arith.constant 0 : index
    %8 = vector.load %arg7[%c16, %c0_4] : memref<864x128xbf16, #tpu.memory_space<vmem>>, vector<16x128xbf16>
    tpu.vector_store %arg7[%c16, %c0_4], %7 {strides = array<i32>} : memref<864x128xbf16, #tpu.memory_space<vmem>>, vector<16x128xbf16>,
    %9 = vector.extract_strided_slice %4 {offsets = [0, 2], sizes = [16, 128], strides = [1, 1]} : vector<16x256xbf16> to vector<16x128xbf16>
    %c32 = arith.constant 32 : index
    %c0_5 = arith.constant 0 : index
    %10 = vector.load %arg7[%c32, %c0_5] : memref<864x128xbf16, #tpu.memory_space<vmem>>, vector<16x128xbf16>
    tpu.vector_store %arg7[%c32, %c0_5], %9 {strides = array<i32>} : memref<864x128xbf16, #tpu.memory_space<vmem>>, vector<16x128xbf16>,
    %11 = vector.extract_strided_slice %4 {offsets = [0, 10], sizes = [16, 128], strides = [1, 1]} : vector<16x256xbf16> to vector<16x128xbf16>
    %c48 = arith.constant 48 : index
    %c0_6 = arith.constant 0 : index
    %12 = vector.load %arg7[%c48, %c0_6] : memref<864x128xbf16, #tpu.memory_space<vmem>>, vector<16x128xbf16>
    tpu.vector_store %arg7[%c48, %c0_6], %11 {strides = array<i32>} : memref<864x128xbf16, #tpu.memory_space<vmem>>, vector<16x128xbf16>,
    %13 = vector.extract_strided_slice %4 {offsets = [0, 11], sizes = [16, 128], strides = [1, 1]} : vector<16x256xbf16> to vector<16x128xbf16>
    %c64 = arith.constant 64 : index
    %c0_7 = arith.constant 0 : index
    %14 = vector.load %arg7[%c64, %c0_7] : memref<864x128xbf16, #tpu.memory_space<vmem>>, vector<16x128xbf16>
    tpu.vector_store %arg7[%c64, %c0_7], %13 {strides = array<i32>} : memref<864x128xbf16, #tpu.memory_space<vmem>>, vector<16x128xbf16>,
    %15 = vector.extract_strided_slice %4 {offsets = [0, 12], sizes = [16, 128], strides = [1, 1]} : vector<16x256xbf16> to vector<16x128xbf16>
    %c80 = arith.constant 80 : index
    %c0_8 = arith.constant 0 : index
    %16 = vector.load %arg7[%c80, %c0_8] : memref<864x128xbf16, #tpu.memory_space<vmem>>, vector<16x128xbf16>
    tpu.vector_store %arg7[%c80, %c0_8], %15 {strides = array<i32>} : memref<864x128xbf16, #tpu.memory_space<vmem>>, vector<16x128xbf16>,
    %17 = vector.extract_strided_slice %4 {offsets = [0, 20], sizes = [16, 128], strides = [1, 1]} : vector<16x256xbf16> to vector<16x128xbf16>
    %c96 = arith.constant 96 : index
    %c0_9 = arith.constant 0 : index
    %18 = vector.load %arg7[%c96, %c0_9] : memref<864x128xbf16, #tpu.memory_space<vmem>>, vector<16x128xbf16>
    tpu.vector_store %arg7[%c96, %c0_9], %17 {strides = array<i32>} : memref<864x128xbf16, #tpu.memory_space<vmem>>, vector<16x128xbf16>,
    %19 = vector.extract_strided_slice %4 {offsets = [0, 21], sizes = [16, 128], strides = [1, 1]} : vector<16x256xbf16> to vector<16x128xbf16>
    %c112 = arith.constant 112 : index
    %c0_10 = arith.constant 0 : index
    %20 = vector.load %arg7[%c112, %c0_10] : memref<864x128xbf16, #tpu.memory_space<vmem>>, vector<16x128xbf16>
    tpu.vector_store %arg7[%c112, %c0_10], %19 {strides = array<i32>} : memref<864x128xbf16, #tpu.memory_space<vmem>>, vector<16x128xbf16>,
    %21 = vector.extract_strided_slice %4 {offsets = [0, 22], sizes = [16, 128], strides = [1, 1]} : vector<16x256xbf16> to vector<16x128xbf16>
    %c128 = arith.constant 128 : index
    %c0_11 = arith.constant 0 : index
    %22 = vector.load %arg7[%c128, %c0_11] : memref<864x128xbf16, #tpu.memory_space<vmem>>, vector<16x128xbf16>
    tpu.vector_store %arg7[%c128, %c0_11], %21 {strides = array<i32>} : memref<864x128xbf16, #tpu.memory_space<vmem>>, vector<16x128xbf16>,
    %c4_i32_12 = arith.constant 4 : i32
    %23 = arith.muli %arg1, %c4_i32_12 : i32
    %c1_i32 = arith.constant 1 : i32
    %24 = arith.addi %23, %c1_i32 : i32
    %c0_13 = arith.constant 0 : index
    %25 = arith.index_cast %24 : i32 to index
    %c0_14 = arith.constant 0 : index
    %c0_15 = arith.constant 0 : index
    %26 = vector.load %arg2[%c0_13, %25, %c0_14, %c0_15] : memref<1x6x16x256xbf16, #tpu.memory_space<vmem>>, vector<1x1x16x256xbf16>
    %27 = vector.shape_cast %26 : vector<1x1x16x256xbf16> to vector<16x256xbf16>
    %28 = vector.extract_strided_slice %27 {offsets = [0, 0], sizes = [16, 128], strides = [1, 1]} : vector<16x256xbf16> to vector<16x128xbf16>
    %c144 = arith.constant 144 : index
    %c0_16 = arith.constant 0 : index
    %29 = vector.load %arg7[%c144, %c0_16] : memref<864x128xbf16, #tpu.memory_space<vmem>>, vector<16x128xbf16>
    tpu.vector_store %arg7[%c144, %c0_16], %28 {strides = array<i32>} : memref<864x128xbf16, #tpu.memory_space<vmem>>, vector<16x128xbf16>,
    %30 = vector.extract_strided_slice %27 {offsets = [0, 1], sizes = [16, 128], strides = [1, 1]} : vector<16x256xbf16> to vector<16x128xbf16>
    %c160 = arith.constant 160 : index
    %c0_17 = arith.constant 0 : index
    %31 = vector.load %arg7[%c160, %c0_17] : memref<864x128xbf16, #tpu.memory_space<vmem>>, vector<16x128xbf16>
    tpu.vector_store %arg7[%c160, %c0_17], %30 {strides = array<i32>} : memref<864x128xbf16, #tpu.memory_space<vmem>>, vector<16x128xbf16>,
    %32 = vector.extract_strided_slice %27 {offsets = [0, 2], sizes = [16, 128], strides = [1, 1]} : vector<16x256xbf16> to vector<16x128xbf16>
    %c176 = arith.constant 176 : index
    %c0_18 = arith.constant 0 : index
    %33 = vector.load %arg7[%c176, %c0_18] : memref<864x128xbf16, #tpu.memory_space<vmem>>, vector<16x128xbf16>
    tpu.vector_store %arg7[%c176, %c0_18], %32 {strides = array<i32>} : memref<864x128xbf16, #tpu.memory_space<vmem>>, vector<16x128xbf16>,
    %34 = vector.extract_strided_slice %27 {offsets = [0, 10], sizes = [16, 128], strides = [1, 1]} : vector<16x256xbf16> to vector<16x128xbf16>
    %c192 = arith.constant 192 : index
    %c0_19 = arith.constant 0 : index
    %35 = vector.load %arg7[%c192, %c0_19] : memref<864x128xbf16, #tpu.memory_space<vmem>>, vector<16x128xbf16>
    tpu.vector_store %arg7[%c192, %c0_19], %34 {strides = array<i32>} : memref<864x128xbf16, #tpu.memory_space<vmem>>, vector<16x128xbf16>,
    %36 = vector.extract_strided_slice %27 {offsets = [0, 11], sizes = [16, 128], strides = [1, 1]} : vector<16x256xbf16> to vector<16x128xbf16>
    %c208 = arith.constant 208 : index
    %c0_20 = arith.constant 0 : index
    %37 = vector.load %arg7[%c208, %c0_20] : memref<864x128xbf16, #tpu.memory_space<vmem>>, vector<16x128xbf16>
    tpu.vector_store %arg7[%c208, %c0_20], %36 {strides = array<i32>} : memref<864x128xbf16, #tpu.memory_space<vmem>>, vector<16x128xbf16>,
    %38 = vector.extract_strided_slice %27 {offsets = [0, 12], sizes = [16, 128], strides = [1, 1]} : vector<16x256xbf16> to vector<16x128xbf16>
    %c224 = arith.constant 224 : index
    %c0_21 = arith.constant 0 : index
    %39 = vector.load %arg7[%c224, %c0_21] : memref<864x128xbf16, #tpu.memory_space<vmem>>, vector<16x128xbf16>
    tpu.vector_store %arg7[%c224, %c0_21], %38 {strides = array<i32>} : memref<864x128xbf16, #tpu.memory_space<vmem>>, vector<16x128xbf16>,
    %40 = vector.extract_strided_slice %27 {offsets = [0, 20], sizes = [16, 128], strides = [1, 1]} : vector<16x256xbf16> to vector<16x128xbf16>
    %c240 = arith.constant 240 : index
    %c0_22 = arith.constant 0 : index
    %41 = vector.load %arg7[%c240, %c0_22] : memref<864x128xbf16, #tpu.memory_space<vmem>>, vector<16x128xbf16>
    tpu.vector_store %arg7[%c240, %c0_22], %40 {strides = array<i32>} : memref<864x128xbf16, #tpu.memory_space<vmem>>, vector<16x128xbf16>,
    %42 = vector.extract_strided_slice %27 {offsets = [0, 21], sizes = [16, 128], strides = [1, 1]} : vector<16x256xbf16> to vector<16x128xbf16>
    %c256 = arith.constant 256 : index
    %c0_23 = arith.constant 0 : index
    %43 = vector.load %arg7[%c256, %c0_23] : memref<864x128xbf16, #tpu.memory_space<vmem>>, vector<16x128xbf16>
    tpu.vector_store %arg7[%c256, %c0_23], %42 {strides = array<i32>} : memref<864x128xbf16, #tpu.memory_space<vmem>>, vector<16x128xbf16>,
    %44 = vector.extract_strided_slice %27 {offsets = [0, 22], sizes = [16, 128], strides = [1, 1]} : vector<16x256xbf16> to vector<16x128xbf16>
    %c272 = arith.constant 272 : index
    %c0_24 = arith.constant 0 : index
    %45 = vector.load %arg7[%c272, %c0_24] : memref<864x128xbf16, #tpu.memory_space<vmem>>, vector<16x128xbf16>
    tpu.vector_store %arg7[%c272, %c0_24], %44 {strides = array<i32>} : memref<864x128xbf16, #tpu.memory_space<vmem>>, vector<16x128xbf16>,
    %c4_i32_25 = arith.constant 4 : i32
    %46 = arith.muli %arg1, %c4_i32_25 : i32
    %c2_i32 = arith.constant 2 : i32
    %47 = arith.addi %46, %c2_i32 : i32
    %c0_26 = arith.constant 0 : index
    %48 = arith.index_cast %47 : i32 to index
    %c0_27 = arith.constant 0 : index
    %c0_28 = arith.constant 0 : index
    %49 = vector.load %arg2[%c0_26, %48, %c0_27, %c0_28] : memref<1x6x16x256xbf16, #tpu.memory_space<vmem>>, vector<1x1x16x256xbf16>
    %50 = vector.shape_cast %49 : vector<1x1x16x256xbf16> to vector<16x256xbf16>
    %51 = vector.extract_strided_slice %50 {offsets = [0, 0], sizes = [16, 128], strides = [1, 1]} : vector<16x256xbf16> to vector<16x128xbf16>
    %c288 = arith.constant 288 : index
    %c0_29 = arith.constant 0 : index
    %52 = vector.load %arg7[%c288, %c0_29] : memref<864x128xbf16, #tpu.memory_space<vmem>>, vector<16x128xbf16>
    tpu.vector_store %arg7[%c288, %c0_29], %51 {strides = array<i32>} : memref<864x128xbf16, #tpu.memory_space<vmem>>, vector<16x128xbf16>,
    %53 = vector.extract_strided_slice %50 {offsets = [0, 1], sizes = [16, 128], strides = [1, 1]} : vector<16x256xbf16> to vector<16x128xbf16>
    %c304 = arith.constant 304 : index
    %c0_30 = arith.constant 0 : index
    %54 = vector.load %arg7[%c304, %c0_30] : memref<864x128xbf16, #tpu.memory_space<vmem>>, vector<16x128xbf16>
    tpu.vector_store %arg7[%c304, %c0_30], %53 {strides = array<i32>} : memref<864x128xbf16, #tpu.memory_space<vmem>>, vector<16x128xbf16>,
    %55 = vector.extract_strided_slice %50 {offsets = [0, 2], sizes = [16, 128], strides = [1, 1]} : vector<16x256xbf16> to vector<16x128xbf16>
    %c320 = arith.constant 320 : index
    %c0_31 = arith.constant 0 : index
    %56 = vector.load %arg7[%c320, %c0_31] : memref<864x128xbf16, #tpu.memory_space<vmem>>, vector<16x128xbf16>
    tpu.vector_store %arg7[%c320, %c0_31], %55 {strides = array<i32>} : memref<864x128xbf16, #tpu.memory_space<vmem>>, vector<16x128xbf16>,
    %57 = vector.extract_strided_slice %50 {offsets = [0, 10], sizes = [16, 128], strides = [1, 1]} : vector<16x256xbf16> to vector<16x128xbf16>
    %c336 = arith.constant 336 : index
    %c0_32 = arith.constant 0 : index
    %58 = vector.load %arg7[%c336, %c0_32] : memref<864x128xbf16, #tpu.memory_space<vmem>>, vector<16x128xbf16>
    tpu.vector_store %arg7[%c336, %c0_32], %57 {strides = array<i32>} : memref<864x128xbf16, #tpu.memory_space<vmem>>, vector<16x128xbf16>,
    %59 = vector.extract_strided_slice %50 {offsets = [0, 11], sizes = [16, 128], strides = [1, 1]} : vector<16x256xbf16> to vector<16x128xbf16>
    %c352 = arith.constant 352 : index
    %c0_33 = arith.constant 0 : index
    %60 = vector.load %arg7[%c352, %c0_33] : memref<864x128xbf16, #tpu.memory_space<vmem>>, vector<16x128xbf16>
    tpu.vector_store %arg7[%c352, %c0_33], %59 {strides = array<i32>} : memref<864x128xbf16, #tpu.memory_space<vmem>>, vector<16x128xbf16>,
    %61 = vector.extract_strided_slice %50 {offsets = [0, 12], sizes = [16, 128], strides = [1, 1]} : vector<16x256xbf16> to vector<16x128xbf16>
    %c368 = arith.constant 368 : index
    %c0_34 = arith.constant 0 : index
    %62 = vector.load %arg7[%c368, %c0_34] : memref<864x128xbf16, #tpu.memory_space<vmem>>, vector<16x128xbf16>
    tpu.vector_store %arg7[%c368, %c0_34], %61 {strides = array<i32>} : memref<864x128xbf16, #tpu.memory_space<vmem>>, vector<16x128xbf16>,
    %63 = vector.extract_strided_slice %50 {offsets = [0, 20], sizes = [16, 128], strides = [1, 1]} : vector<16x256xbf16> to vector<16x128xbf16>
    %c384 = arith.constant 384 : index
    %c0_35 = arith.constant 0 : index
    %64 = vector.load %arg7[%c384, %c0_35] : memref<864x128xbf16, #tpu.memory_space<vmem>>, vector<16x128xbf16>
    tpu.vector_store %arg7[%c384, %c0_35], %63 {strides = array<i32>} : memref<864x128xbf16, #tpu.memory_space<vmem>>, vector<16x128xbf16>,
    %65 = vector.extract_strided_slice %50 {offsets = [0, 21], sizes = [16, 128], strides = [1, 1]} : vector<16x256xbf16> to vector<16x128xbf16>
    %c400 = arith.constant 400 : index
    %c0_36 = arith.constant 0 : index
    %66 = vector.load %arg7[%c400, %c0_36] : memref<864x128xbf16, #tpu.memory_space<vmem>>, vector<16x128xbf16>
    tpu.vector_store %arg7[%c400, %c0_36], %65 {strides = array<i32>} : memref<864x128xbf16, #tpu.memory_space<vmem>>, vector<16x128xbf16>,
    %67 = vector.extract_strided_slice %50 {offsets = [0, 22], sizes = [16, 128], strides = [1, 1]} : vector<16x256xbf16> to vector<16x128xbf16>
    %c416 = arith.constant 416 : index
    %c0_37 = arith.constant 0 : index
    %68 = vector.load %arg7[%c416, %c0_37] : memref<864x128xbf16, #tpu.memory_space<vmem>>, vector<16x128xbf16>
    tpu.vector_store %arg7[%c416, %c0_37], %67 {strides = array<i32>} : memref<864x128xbf16, #tpu.memory_space<vmem>>, vector<16x128xbf16>,
    %c4_i32_38 = arith.constant 4 : i32
    %69 = arith.muli %arg1, %c4_i32_38 : i32
    %c3_i32 = arith.constant 3 : i32
    %70 = arith.addi %69, %c3_i32 : i32
    %c0_39 = arith.constant 0 : index
    %71 = arith.index_cast %70 : i32 to index
    %c0_40 = arith.constant 0 : index
    %c0_41 = arith.constant 0 : index
    %72 = vector.load %arg2[%c0_39, %71, %c0_40, %c0_41] : memref<1x6x16x256xbf16, #tpu.memory_space<vmem>>, vector<1x1x16x256xbf16>
    %73 = vector.shape_cast %72 : vector<1x1x16x256xbf16> to vector<16x256xbf16>
    %74 = vector.extract_strided_slice %73 {offsets = [0, 0], sizes = [16, 128], strides = [1, 1]} : vector<16x256xbf16> to vector<16x128xbf16>
    %c432 = arith.constant 432 : index
    %c0_42 = arith.constant 0 : index
    %75 = vector.load %arg7[%c432, %c0_42] : memref<864x128xbf16, #tpu.memory_space<vmem>>, vector<16x128xbf16>
    tpu.vector_store %arg7[%c432, %c0_42], %74 {strides = array<i32>} : memref<864x128xbf16, #tpu.memory_space<vmem>>, vector<16x128xbf16>,
    %76 = vector.extract_strided_slice %73 {offsets = [0, 1], sizes = [16, 128], strides = [1, 1]} : vector<16x256xbf16> to vector<16x128xbf16>
    %c448 = arith.constant 448 : index
    %c0_43 = arith.constant 0 : index
    %77 = vector.load %arg7[%c448, %c0_43] : memref<864x128xbf16, #tpu.memory_space<vmem>>, vector<16x128xbf16>
    tpu.vector_store %arg7[%c448, %c0_43], %76 {strides = array<i32>} : memref<864x128xbf16, #tpu.memory_space<vmem>>, vector<16x128xbf16>,
    %78 = vector.extract_strided_slice %73 {offsets = [0, 2], sizes = [16, 128], strides = [1, 1]} : vector<16x256xbf16> to vector<16x128xbf16>
    %c464 = arith.constant 464 : index
    %c0_44 = arith.constant 0 : index
    %79 = vector.load %arg7[%c464, %c0_44] : memref<864x128xbf16, #tpu.memory_space<vmem>>, vector<16x128xbf16>
    tpu.vector_store %arg7[%c464, %c0_44], %78 {strides = array<i32>} : memref<864x128xbf16, #tpu.memory_space<vmem>>, vector<16x128xbf16>,
    %80 = vector.extract_strided_slice %73 {offsets = [0, 10], sizes = [16, 128], strides = [1, 1]} : vector<16x256xbf16> to vector<16x128xbf16>
    %c480 = arith.constant 480 : index
    %c0_45 = arith.constant 0 : index
    %81 = vector.load %arg7[%c480, %c0_45] : memref<864x128xbf16, #tpu.memory_space<vmem>>, vector<16x128xbf16>
    tpu.vector_store %arg7[%c480, %c0_45], %80 {strides = array<i32>} : memref<864x128xbf16, #tpu.memory_space<vmem>>, vector<16x128xbf16>,
    %82 = vector.extract_strided_slice %73 {offsets = [0, 11], sizes = [16, 128], strides = [1, 1]} : vector<16x256xbf16> to vector<16x128xbf16>
    %c496 = arith.constant 496 : index
    %c0_46 = arith.constant 0 : index
    %83 = vector.load %arg7[%c496, %c0_46] : memref<864x128xbf16, #tpu.memory_space<vmem>>, vector<16x128xbf16>
    tpu.vector_store %arg7[%c496, %c0_46], %82 {strides = array<i32>} : memref<864x128xbf16, #tpu.memory_space<vmem>>, vector<16x128xbf16>,
    %84 = vector.extract_strided_slice %73 {offsets = [0, 12], sizes = [16, 128], strides = [1, 1]} : vector<16x256xbf16> to vector<16x128xbf16>
    %c512 = arith.constant 512 : index
    %c0_47 = arith.constant 0 : index
    %85 = vector.load %arg7[%c512, %c0_47] : memref<864x128xbf16, #tpu.memory_space<vmem>>, vector<16x128xbf16>
    tpu.vector_store %arg7[%c512, %c0_47], %84 {strides = array<i32>} : memref<864x128xbf16, #tpu.memory_space<vmem>>, vector<16x128xbf16>,
    %86 = vector.extract_strided_slice %73 {offsets = [0, 20], sizes = [16, 128], strides = [1, 1]} : vector<16x256xbf16> to vector<16x128xbf16>
    %c528 = arith.constant 528 : index
    %c0_48 = arith.constant 0 : index
    %87 = vector.load %arg7[%c528, %c0_48] : memref<864x128xbf16, #tpu.memory_space<vmem>>, vector<16x128xbf16>
    tpu.vector_store %arg7[%c528, %c0_48], %86 {strides = array<i32>} : memref<864x128xbf16, #tpu.memory_space<vmem>>, vector<16x128xbf16>,
    %88 = vector.extract_strided_slice %73 {offsets = [0, 21], sizes = [16, 128], strides = [1, 1]} : vector<16x256xbf16> to vector<16x128xbf16>
    %c544 = arith.constant 544 : index
    %c0_49 = arith.constant 0 : index
    %89 = vector.load %arg7[%c544, %c0_49] : memref<864x128xbf16, #tpu.memory_space<vmem>>, vector<16x128xbf16>
    tpu.vector_store %arg7[%c544, %c0_49], %88 {strides = array<i32>} : memref<864x128xbf16, #tpu.memory_space<vmem>>, vector<16x128xbf16>,
    %90 = vector.extract_strided_slice %73 {offsets = [0, 22], sizes = [16, 128], strides = [1, 1]} : vector<16x256xbf16> to vector<16x128xbf16>
    %c560 = arith.constant 560 : index
    %c0_50 = arith.constant 0 : index
    %91 = vector.load %arg7[%c560, %c0_50] : memref<864x128xbf16, #tpu.memory_space<vmem>>, vector<16x128xbf16>
    tpu.vector_store %arg7[%c560, %c0_50], %90 {strides = array<i32>} : memref<864x128xbf16, #tpu.memory_space<vmem>>, vector<16x128xbf16>,
    %c4_i32_51 = arith.constant 4 : i32
    %92 = arith.muli %arg1, %c4_i32_51 : i32
    %c4_i32_52 = arith.constant 4 : i32
    %93 = arith.addi %92, %c4_i32_52 : i32
    %c0_53 = arith.constant 0 : index
    %94 = arith.index_cast %93 : i32 to index
    %c0_54 = arith.constant 0 : index
    %c0_55 = arith.constant 0 : index
    %95 = vector.load %arg2[%c0_53, %94, %c0_54, %c0_55] : memref<1x6x16x256xbf16, #tpu.memory_space<vmem>>, vector<1x1x16x256xbf16>
    %96 = vector.shape_cast %95 : vector<1x1x16x256xbf16> to vector<16x256xbf16>
    %97 = vector.extract_strided_slice %96 {offsets = [0, 0], sizes = [16, 128], strides = [1, 1]} : vector<16x256xbf16> to vector<16x128xbf16>
    %c576 = arith.constant 576 : index
    %c0_56 = arith.constant 0 : index
    %98 = vector.load %arg7[%c576, %c0_56] : memref<864x128xbf16, #tpu.memory_space<vmem>>, vector<16x128xbf16>
    tpu.vector_store %arg7[%c576, %c0_56], %97 {strides = array<i32>} : memref<864x128xbf16, #tpu.memory_space<vmem>>, vector<16x128xbf16>,
    %99 = vector.extract_strided_slice %96 {offsets = [0, 1], sizes = [16, 128], strides = [1, 1]} : vector<16x256xbf16> to vector<16x128xbf16>
    %c592 = arith.constant 592 : index
    %c0_57 = arith.constant 0 : index
    %100 = vector.load %arg7[%c592, %c0_57] : memref<864x128xbf16, #tpu.memory_space<vmem>>, vector<16x128xbf16>
    tpu.vector_store %arg7[%c592, %c0_57], %99 {strides = array<i32>} : memref<864x128xbf16, #tpu.memory_space<vmem>>, vector<16x128xbf16>,
    %101 = vector.extract_strided_slice %96 {offsets = [0, 2], sizes = [16, 128], strides = [1, 1]} : vector<16x256xbf16> to vector<16x128xbf16>
    %c608 = arith.constant 608 : index
    %c0_58 = arith.constant 0 : index
    %102 = vector.load %arg7[%c608, %c0_58] : memref<864x128xbf16, #tpu.memory_space<vmem>>, vector<16x128xbf16>
    tpu.vector_store %arg7[%c608, %c0_58], %101 {strides = array<i32>} : memref<864x128xbf16, #tpu.memory_space<vmem>>, vector<16x128xbf16>,
    %103 = vector.extract_strided_slice %96 {offsets = [0, 10], sizes = [16, 128], strides = [1, 1]} : vector<16x256xbf16> to vector<16x128xbf16>
    %c624 = arith.constant 624 : index
    %c0_59 = arith.constant 0 : index
    %104 = vector.load %arg7[%c624, %c0_59] : memref<864x128xbf16, #tpu.memory_space<vmem>>, vector<16x128xbf16>
    tpu.vector_store %arg7[%c624, %c0_59], %103 {strides = array<i32>} : memref<864x128xbf16, #tpu.memory_space<vmem>>, vector<16x128xbf16>,
    %105 = vector.extract_strided_slice %96 {offsets = [0, 11], sizes = [16, 128], strides = [1, 1]} : vector<16x256xbf16> to vector<16x128xbf16>
    %c640 = arith.constant 640 : index
    %c0_60 = arith.constant 0 : index
    %106 = vector.load %arg7[%c640, %c0_60] : memref<864x128xbf16, #tpu.memory_space<vmem>>, vector<16x128xbf16>
    tpu.vector_store %arg7[%c640, %c0_60], %105 {strides = array<i32>} : memref<864x128xbf16, #tpu.memory_space<vmem>>, vector<16x128xbf16>,
    %107 = vector.extract_strided_slice %96 {offsets = [0, 12], sizes = [16, 128], strides = [1, 1]} : vector<16x256xbf16> to vector<16x128xbf16>
    %c656 = arith.constant 656 : index
    %c0_61 = arith.constant 0 : index
    %108 = vector.load %arg7[%c656, %c0_61] : memref<864x128xbf16, #tpu.memory_space<vmem>>, vector<16x128xbf16>
    tpu.vector_store %arg7[%c656, %c0_61], %107 {strides = array<i32>} : memref<864x128xbf16, #tpu.memory_space<vmem>>, vector<16x128xbf16>,
    %109 = vector.extract_strided_slice %96 {offsets = [0, 20], sizes = [16, 128], strides = [1, 1]} : vector<16x256xbf16> to vector<16x128xbf16>
    %c672 = arith.constant 672 : index
    %c0_62 = arith.constant 0 : index
    %110 = vector.load %arg7[%c672, %c0_62] : memref<864x128xbf16, #tpu.memory_space<vmem>>, vector<16x128xbf16>
    tpu.vector_store %arg7[%c672, %c0_62], %109 {strides = array<i32>} : memref<864x128xbf16, #tpu.memory_space<vmem>>, vector<16x128xbf16>,
    %111 = vector.extract_strided_slice %96 {offsets = [0, 21], sizes = [16, 128], strides = [1, 1]} : vector<16x256xbf16> to vector<16x128xbf16>
    %c688 = arith.constant 688 : index
    %c0_63 = arith.constant 0 : index
    %112 = vector.load %arg7[%c688, %c0_63] : memref<864x128xbf16, #tpu.memory_space<vmem>>, vector<16x128xbf16>
    tpu.vector_store %arg7[%c688, %c0_63], %111 {strides = array<i32>} : memref<864x128xbf16, #tpu.memory_space<vmem>>, vector<16x128xbf16>,
    %113 = vector.extract_strided_slice %96 {offsets = [0, 22], sizes = [16, 128], strides = [1, 1]} : vector<16x256xbf16> to vector<16x128xbf16>
    %c704 = arith.constant 704 : index
    %c0_64 = arith.constant 0 : index
    %114 = vector.load %arg7[%c704, %c0_64] : memref<864x128xbf16, #tpu.memory_space<vmem>>, vector<16x128xbf16>
    tpu.vector_store %arg7[%c704, %c0_64], %113 {strides = array<i32>} : memref<864x128xbf16, #tpu.memory_space<vmem>>, vector<16x128xbf16>,
    %c4_i32_65 = arith.constant 4 : i32
    %115 = arith.muli %arg1, %c4_i32_65 : i32
    %c5_i32 = arith.constant 5 : i32
    %116 = arith.addi %115, %c5_i32 : i32
    %c0_66 = arith.constant 0 : index
    %117 = arith.index_cast %116 : i32 to index
    %c0_67 = arith.constant 0 : index
    %c0_68 = arith.constant 0 : index
    %118 = vector.load %arg2[%c0_66, %117, %c0_67, %c0_68] : memref<1x6x16x256xbf16, #tpu.memory_space<vmem>>, vector<1x1x16x256xbf16>
    %119 = vector.shape_cast %118 : vector<1x1x16x256xbf16> to vector<16x256xbf16>
    %120 = vector.extract_strided_slice %119 {offsets = [0, 0], sizes = [16, 128], strides = [1, 1]} : vector<16x256xbf16> to vector<16x128xbf16>
    %c720 = arith.constant 720 : index
    %c0_69 = arith.constant 0 : index
    %121 = vector.load %arg7[%c720, %c0_69] : memref<864x128xbf16, #tpu.memory_space<vmem>>, vector<16x128xbf16>
    tpu.vector_store %arg7[%c720, %c0_69], %120 {strides = array<i32>} : memref<864x128xbf16, #tpu.memory_space<vmem>>, vector<16x128xbf16>,
    %122 = vector.extract_strided_slice %119 {offsets = [0, 1], sizes = [16, 128], strides = [1, 1]} : vector<16x256xbf16> to vector<16x128xbf16>
    %c736 = arith.constant 736 : index
    %c0_70 = arith.constant 0 : index
    %123 = vector.load %arg7[%c736, %c0_70] : memref<864x128xbf16, #tpu.memory_space<vmem>>, vector<16x128xbf16>
    tpu.vector_store %arg7[%c736, %c0_70], %122 {strides = array<i32>} : memref<864x128xbf16, #tpu.memory_space<vmem>>, vector<16x128xbf16>,
    %124 = vector.extract_strided_slice %119 {offsets = [0, 2], sizes = [16, 128], strides = [1, 1]} : vector<16x256xbf16> to vector<16x128xbf16>
    %c752 = arith.constant 752 : index
    %c0_71 = arith.constant 0 : index
    %125 = vector.load %arg7[%c752, %c0_71] : memref<864x128xbf16, #tpu.memory_space<vmem>>, vector<16x128xbf16>
    tpu.vector_store %arg7[%c752, %c0_71], %124 {strides = array<i32>} : memref<864x128xbf16, #tpu.memory_space<vmem>>, vector<16x128xbf16>,
    %126 = vector.extract_strided_slice %119 {offsets = [0, 10], sizes = [16, 128], strides = [1, 1]} : vector<16x256xbf16> to vector<16x128xbf16>
    %c768 = arith.constant 768 : index
    %c0_72 = arith.constant 0 : index
    %127 = vector.load %arg7[%c768, %c0_72] : memref<864x128xbf16, #tpu.memory_space<vmem>>, vector<16x128xbf16>
    tpu.vector_store %arg7[%c768, %c0_72], %126 {strides = array<i32>} : memref<864x128xbf16, #tpu.memory_space<vmem>>, vector<16x128xbf16>,
    %128 = vector.extract_strided_slice %119 {offsets = [0, 11], sizes = [16, 128], strides = [1, 1]} : vector<16x256xbf16> to vector<16x128xbf16>
    %c784 = arith.constant 784 : index
    %c0_73 = arith.constant 0 : index
    %129 = vector.load %arg7[%c784, %c0_73] : memref<864x128xbf16, #tpu.memory_space<vmem>>, vector<16x128xbf16>
    tpu.vector_store %arg7[%c784, %c0_73], %128 {strides = array<i32>} : memref<864x128xbf16, #tpu.memory_space<vmem>>, vector<16x128xbf16>,
    %130 = vector.extract_strided_slice %119 {offsets = [0, 12], sizes = [16, 128], strides = [1, 1]} : vector<16x256xbf16> to vector<16x128xbf16>
    %c800 = arith.constant 800 : index
    %c0_74 = arith.constant 0 : index
    %131 = vector.load %arg7[%c800, %c0_74] : memref<864x128xbf16, #tpu.memory_space<vmem>>, vector<16x128xbf16>
    tpu.vector_store %arg7[%c800, %c0_74], %130 {strides = array<i32>} : memref<864x128xbf16, #tpu.memory_space<vmem>>, vector<16x128xbf16>,
    %132 = vector.extract_strided_slice %119 {offsets = [0, 20], sizes = [16, 128], strides = [1, 1]} : vector<16x256xbf16> to vector<16x128xbf16>
    %c816 = arith.constant 816 : index
    %c0_75 = arith.constant 0 : index
    %133 = vector.load %arg7[%c816, %c0_75] : memref<864x128xbf16, #tpu.memory_space<vmem>>, vector<16x128xbf16>
    tpu.vector_store %arg7[%c816, %c0_75], %132 {strides = array<i32>} : memref<864x128xbf16, #tpu.memory_space<vmem>>, vector<16x128xbf16>,
    %134 = vector.extract_strided_slice %119 {offsets = [0, 21], sizes = [16, 128], strides = [1, 1]} : vector<16x256xbf16> to vector<16x128xbf16>
    %c832 = arith.constant 832 : index
    %c0_76 = arith.constant 0 : index
    %135 = vector.load %arg7[%c832, %c0_76] : memref<864x128xbf16, #tpu.memory_space<vmem>>, vector<16x128xbf16>
    tpu.vector_store %arg7[%c832, %c0_76], %134 {strides = array<i32>} : memref<864x128xbf16, #tpu.memory_space<vmem>>, vector<16x128xbf16>,
    %136 = vector.extract_strided_slice %119 {offsets = [0, 22], sizes = [16, 128], strides = [1, 1]} : vector<16x256xbf16> to vector<16x128xbf16>
    %c848 = arith.constant 848 : index
    %c0_77 = arith.constant 0 : index
    %137 = vector.load %arg7[%c848, %c0_77] : memref<864x128xbf16, #tpu.memory_space<vmem>>, vector<16x128xbf16>
    tpu.vector_store %arg7[%c848, %c0_77], %136 {strides = array<i32>} : memref<864x128xbf16, #tpu.memory_space<vmem>>, vector<16x128xbf16>,
    %c0_i32_78 = arith.constant 0 : i32
    %138 = arith.cmpi eq, %arg1, %c0_i32_78 : i32
    %139 = arith.extui %138 : i1 to i32
    %c0_i32_79 = arith.constant 0 : i32
    %140 = arith.cmpi ne, %139, %c0_i32_79 : i32
    scf.if %140 {
      %cst_130 = arith.constant 0.000000e+00 : f32
      %217 = vector.broadcast %cst_130 : f32 to vector<16x2xf32>
      %c0_131 = arith.constant 0 : index
      %c0_132 = arith.constant 0 : index
      %c0_133 = arith.constant 0 : index
      %218 = vector.load %arg6[%c0_131, %c0_132, %c0_133] : memref<1x16x2xf32, #tpu.memory_space<vmem>>, vector<1x16x2xf32>
      %219 = vector.shape_cast %218 : vector<1x16x2xf32> to vector<16x2xf32>
      %220 = vector.shape_cast %217 : vector<16x2xf32> to vector<1x16x2xf32>
      tpu.vector_store %arg6[%c0_131, %c0_132, %c0_133], %220 {strides = array<i32>} : memref<1x16x2xf32, #tpu.memory_space<vmem>>, vector<1x16x2xf32>,
    } else {
    }
    %c0_80 = arith.constant 0 : index
    %c0_81 = arith.constant 0 : index
    %141 = vector.load %arg3[%c0_80, %c0_81] : memref<16x432xbf16, #tpu.memory_space<vmem>>, vector<16x432xbf16>
    %c0_82 = arith.constant 0 : index
    %c0_83 = arith.constant 0 : index
    %142 = vector.load %arg4[%c0_82, %c0_83] : memref<1x128xf32, #tpu.memory_space<vmem>>, vector<1x128xf32>
    %cst = arith.constant 0.000000e+00 : f32
    %143 = vector.broadcast %cst : f32 to vector<16x1xf32>
    %cst_84 = arith.constant 0.000000e+00 : f32
    %144 = vector.broadcast %cst_84 : f32 to vector<16x1xf32>
    %c0_85 = arith.constant 0 : index
    %c0_86 = arith.constant 0 : index
    %145 = vector.load %arg7[%c0_85, %c0_86] : memref<864x128xbf16, #tpu.memory_space<vmem>>, vector<432x128xbf16>
    %cst_87 = arith.constant dense<0.000000e+00> : vector<16x128xf32>
    %146 = tpu.matmul %141, %145, %cst_87 {dimension_numbers = #tpu.dot_dimension_numbers<[1], [0], [0], [1], [0, 0, 1, 1], [], []>} : vector<16x432xbf16>, vector<432x128xbf16>, vector<16x128xf32> -> vector<16x128xf32>
    %147 = arith.truncf %146 : vector<16x128xf32> to vector<16x128xbf16>
    %c0_88 = arith.constant 0 : index
    %c0_89 = arith.constant 0 : index
    %c0_90 = arith.constant 0 : index
    %c0_91 = arith.constant 0 : index
    %148 = vector.load %arg5[%c0_88, %c0_89, %c0_90, %c0_91] : memref<1x4x16x128xbf16, #tpu.memory_space<vmem>>, vector<1x1x16x128xbf16>
    %149 = vector.shape_cast %148 : vector<1x1x16x128xbf16> to vector<16x128xbf16>
    %150 = vector.shape_cast %147 : vector<16x128xbf16> to vector<1x1x16x128xbf16>
    tpu.vector_store %arg5[%c0_88, %c0_89, %c0_90, %c0_91], %150 {strides = array<i32>} : memref<1x4x16x128xbf16, #tpu.memory_space<vmem>>, vector<1x1x16x128xbf16>,
    %151 = vector.broadcast %142 : vector<1x128xf32> to vector<16x128xf32>
    %152 = arith.mulf %146, %151 : vector<16x128xf32>
    %cst_92 = arith.constant dense<0.000000e+00> : vector<16xf32>
    %153 = vector.multi_reduction <add>, %152, %cst_92 [1] : vector<16x128xf32> to vector<16xf32>
    %154 = vector.shape_cast %153 : vector<16xf32> to vector<16x1xf32>
    %155 = arith.addf %143, %154 : vector<16x1xf32>
    %156 = arith.mulf %152, %152 : vector<16x128xf32>
    %cst_93 = arith.constant dense<0.000000e+00> : vector<16xf32>
    %157 = vector.multi_reduction <add>, %156, %cst_93 [1] : vector<16x128xf32> to vector<16xf32>
    %158 = vector.shape_cast %157 : vector<16xf32> to vector<16x1xf32>
    %159 = arith.addf %144, %158 : vector<16x1xf32>
    %c144_94 = arith.constant 144 : index
    %c0_95 = arith.constant 0 : index
    %160 = vector.load %arg7[%c144_94, %c0_95] : memref<864x128xbf16, #tpu.memory_space<vmem>>, vector<432x128xbf16>
    %cst_96 = arith.constant dense<0.000000e+00> : vector<16x128xf32>
    %161 = tpu.matmul %141, %160, %cst_96 {dimension_numbers = #tpu.dot_dimension_numbers<[1], [0], [0], [1], [0, 0, 1, 1], [], []>} : vector<16x432xbf16>, vector<432x128xbf16>, vector<16x128xf32> -> vector<16x128xf32>
    %162 = arith.truncf %161 : vector<16x128xf32> to vector<16x128xbf16>
    %c0_97 = arith.constant 0 : index
    %c1 = arith.constant 1 : index
    %c0_98 = arith.constant 0 : index
    %c0_99 = arith.constant 0 : index
    %163 = vector.load %arg5[%c0_97, %c1, %c0_98, %c0_99] : memref<1x4x16x128xbf16, #tpu.memory_space<vmem>>, vector<1x1x16x128xbf16>
    %164 = vector.shape_cast %163 : vector<1x1x16x128xbf16> to vector<16x128xbf16>
    %165 = vector.shape_cast %162 : vector<16x128xbf16> to vector<1x1x16x128xbf16>
    tpu.vector_store %arg5[%c0_97, %c1, %c0_98, %c0_99], %165 {strides = array<i32>} : memref<1x4x16x128xbf16, #tpu.memory_space<vmem>>, vector<1x1x16x128xbf16>,
    %166 = vector.broadcast %142 : vector<1x128xf32> to vector<16x128xf32>
    %167 = arith.mulf %161, %166 : vector<16x128xf32>
    %cst_100 = arith.constant dense<0.000000e+00> : vector<16xf32>
    %168 = vector.multi_reduction <add>, %167, %cst_100 [1] : vector<16x128xf32> to vector<16xf32>
    %169 = vector.shape_cast %168 : vector<16xf32> to vector<16x1xf32>
    %170 = arith.addf %155, %169 : vector<16x1xf32>
    %171 = arith.mulf %167, %167 : vector<16x128xf32>
    %cst_101 = arith.constant dense<0.000000e+00> : vector<16xf32>
    %172 = vector.multi_reduction <add>, %171, %cst_101 [1] : vector<16x128xf32> to vector<16xf32>
    %173 = vector.shape_cast %172 : vector<16xf32> to vector<16x1xf32>
    %174 = arith.addf %159, %173 : vector<16x1xf32>
    %c288_102 = arith.constant 288 : index
    %c0_103 = arith.constant 0 : index
    %175 = vector.load %arg7[%c288_102, %c0_103] : memref<864x128xbf16, #tpu.memory_space<vmem>>, vector<432x128xbf16>
    %cst_104 = arith.constant dense<0.000000e+00> : vector<16x128xf32>
    %176 = tpu.matmul %141, %175, %cst_104 {dimension_numbers = #tpu.dot_dimension_numbers<[1], [0], [0], [1], [0, 0, 1, 1], [], []>} : vector<16x432xbf16>, vector<432x128xbf16>, vector<16x128xf32> -> vector<16x128xf32>
    %177 = arith.truncf %176 : vector<16x128xf32> to vector<16x128xbf16>
    %c0_105 = arith.constant 0 : index
    %c2 = arith.constant 2 : index
    %c0_106 = arith.constant 0 : index
    %c0_107 = arith.constant 0 : index
    %178 = vector.load %arg5[%c0_105, %c2, %c0_106, %c0_107] : memref<1x4x16x128xbf16, #tpu.memory_space<vmem>>, vector<1x1x16x128xbf16>
    %179 = vector.shape_cast %178 : vector<1x1x16x128xbf16> to vector<16x128xbf16>
    %180 = vector.shape_cast %177 : vector<16x128xbf16> to vector<1x1x16x128xbf16>
    tpu.vector_store %arg5[%c0_105, %c2, %c0_106, %c0_107], %180 {strides = array<i32>} : memref<1x4x16x128xbf16, #tpu.memory_space<vmem>>, vector<1x1x16x128xbf16>,
    %181 = vector.broadcast %142 : vector<1x128xf32> to vector<16x128xf32>
    %182 = arith.mulf %176, %181 : vector<16x128xf32>
    %cst_108 = arith.constant dense<0.000000e+00> : vector<16xf32>
    %183 = vector.multi_reduction <add>, %182, %cst_108 [1] : vector<16x128xf32> to vector<16xf32>
    %184 = vector.shape_cast %183 : vector<16xf32> to vector<16x1xf32>
    %185 = arith.addf %170, %184 : vector<16x1xf32>
    %186 = arith.mulf %182, %182 : vector<16x128xf32>
    %cst_109 = arith.constant dense<0.000000e+00> : vector<16xf32>
    %187 = vector.multi_reduction <add>, %186, %cst_109 [1] : vector<16x128xf32> to vector<16xf32>
    %188 = vector.shape_cast %187 : vector<16xf32> to vector<16x1xf32>
    %189 = arith.addf %174, %188 : vector<16x1xf32>
    %c432_110 = arith.constant 432 : index
    %c0_111 = arith.constant 0 : index
    %190 = vector.load %arg7[%c432_110, %c0_111] : memref<864x128xbf16, #tpu.memory_space<vmem>>, vector<432x128xbf16>
    %cst_112 = arith.constant dense<0.000000e+00> : vector<16x128xf32>
    %191 = tpu.matmul %141, %190, %cst_112 {dimension_numbers = #tpu.dot_dimension_numbers<[1], [0], [0], [1], [0, 0, 1, 1], [], []>} : vector<16x432xbf16>, vector<432x128xbf16>, vector<16x128xf32> -> vector<16x128xf32>
    %192 = arith.truncf %191 : vector<16x128xf32> to vector<16x128xbf16>
    %c0_113 = arith.constant 0 : index
    %c3 = arith.constant 3 : index
    %c0_114 = arith.constant 0 : index
    %c0_115 = arith.constant 0 : index
    %193 = vector.load %arg5[%c0_113, %c3, %c0_114, %c0_115] : memref<1x4x16x128xbf16, #tpu.memory_space<vmem>>, vector<1x1x16x128xbf16>
    %194 = vector.shape_cast %193 : vector<1x1x16x128xbf16> to vector<16x128xbf16>
    %195 = vector.shape_cast %192 : vector<16x128xbf16> to vector<1x1x16x128xbf16>
    tpu.vector_store %arg5[%c0_113, %c3, %c0_114, %c0_115], %195 {strides = array<i32>} : memref<1x4x16x128xbf16, #tpu.memory_space<vmem>>, vector<1x1x16x128xbf16>,
    %196 = vector.broadcast %142 : vector<1x128xf32> to vector<16x128xf32>
    %197 = arith.mulf %191, %196 : vector<16x128xf32>
    %cst_116 = arith.constant dense<0.000000e+00> : vector<16xf32>
    %198 = vector.multi_reduction <add>, %197, %cst_116 [1] : vector<16x128xf32> to vector<16xf32>
    %199 = vector.shape_cast %198 : vector<16xf32> to vector<16x1xf32>
    %200 = arith.addf %185, %199 : vector<16x1xf32>
    %201 = arith.mulf %197, %197 : vector<16x128xf32>
    %cst_117 = arith.constant dense<0.000000e+00> : vector<16xf32>
    %202 = vector.multi_reduction <add>, %201, %cst_117 [1] : vector<16x128xf32> to vector<16xf32>
    %203 = vector.shape_cast %202 : vector<16xf32> to vector<16x1xf32>
    %204 = arith.addf %189, %203 : vector<16x1xf32>
    %c0_118 = arith.constant 0 : index
    %c0_119 = arith.constant 0 : index
    %c0_120 = arith.constant 0 : index
    %205 = vector.load %arg6[%c0_118, %c0_119, %c0_120] : memref<1x16x2xf32, #tpu.memory_space<vmem>>, vector<1x16x1xf32>
    %206 = vector.shape_cast %205 : vector<1x16x1xf32> to vector<16x1xf32>
    %207 = arith.addf %206, %200 : vector<16x1xf32>
    %c0_121 = arith.constant 0 : index
    %c0_122 = arith.constant 0 : index
    %c0_123 = arith.constant 0 : index
    %208 = vector.load %arg6[%c0_121, %c0_122, %c0_123] : memref<1x16x2xf32, #tpu.memory_space<vmem>>, vector<1x16x1xf32>
    %209 = vector.shape_cast %208 : vector<1x16x1xf32> to vector<16x1xf32>
    %210 = vector.shape_cast %207 : vector<16x1xf32> to vector<1x16x1xf32>
    tpu.vector_store %arg6[%c0_121, %c0_122, %c0_123], %210 {strides = array<i32>} : memref<1x16x2xf32, #tpu.memory_space<vmem>>, vector<1x16x1xf32>,
    %c0_124 = arith.constant 0 : index
    %c0_125 = arith.constant 0 : index
    %c1_126 = arith.constant 1 : index
    %211 = vector.load %arg6[%c0_124, %c0_125, %c1_126] : memref<1x16x2xf32, #tpu.memory_space<vmem>>, vector<1x16x1xf32>
    %212 = vector.shape_cast %211 : vector<1x16x1xf32> to vector<16x1xf32>
    %213 = arith.addf %212, %204 : vector<16x1xf32>
    %c0_127 = arith.constant 0 : index
    %c0_128 = arith.constant 0 : index
    %c1_129 = arith.constant 1 : index
    %214 = vector.load %arg6[%c0_127, %c0_128, %c1_129] : memref<1x16x2xf32, #tpu.memory_space<vmem>>, vector<1x16x1xf32>
    %215 = vector.shape_cast %214 : vector<1x16x1xf32> to vector<16x1xf32>
    %216 = vector.shape_cast %213 : vector<16x1xf32> to vector<1x16x1xf32>
    tpu.vector_store %arg6[%c0_127, %c0_128, %c1_129], %216 {strides = array<i32>} : memref<1x16x2xf32, #tpu.memory_space<vmem>>, vector<1x16x1xf32>,
    return
  }
  func.func @transform_0(%arg0: i32, %arg1: i32) -> (i32, i32, i32, i32) {
    %c0_i32 = arith.constant 0 : i32
    %c0_i32_0 = arith.constant 0 : i32
    %c0_i32_1 = arith.constant 0 : i32
    %c0_i32_2 = arith.constant 0 : i32
    return %arg0, %c0_i32, %c0_i32_0, %c0_i32_1 : i32, i32, i32, i32
  }
  func.func @transform_1(%arg0: i32, %arg1: i32) -> (i32, i32) {
    %c0_i32 = arith.constant 0 : i32
    %c0_i32_0 = arith.constant 0 : i32
    %c0_i32_1 = arith.constant 0 : i32
    return %c0_i32, %c0_i32_0 : i32, i32
  }
  func.func @transform_2(%arg0: i32, %arg1: i32) -> (i32, i32) {
    %c0_i32 = arith.constant 0 : i32
    %c0_i32_0 = arith.constant 0 : i32
    %c0_i32_1 = arith.constant 0 : i32
    return %c0_i32, %c0_i32_0 : i32, i32
  }
  func.func @transform_3(%arg0: i32, %arg1: i32) -> (i32, i32, i32, i32) {
    %c0_i32 = arith.constant 0 : i32
    %c0_i32_0 = arith.constant 0 : i32
    %c0_i32_1 = arith.constant 0 : i32
    return %arg0, %arg1, %c0_i32, %c0_i32_0 : i32, i32, i32, i32
  }
  func.func @transform_4(%arg0: i32, %arg1: i32) -> (i32, i32, i32) {
    %c0_i32 = arith.constant 0 : i32
    %c0_i32_0 = arith.constant 0 : i32
    %c0_i32_1 = arith.constant 0 : i32
    return %arg0, %c0_i32, %c0_i32_0 : i32, i32, i32
  }
}

module attributes {stable_mosaic.version = 11 : i64} {
  func.func @_bn_relu_pack_kernel(%arg0: i32, %arg1: memref<1x4x16x128xbf16, #tpu.memory_space<vmem>>, %arg2: memref<16x1xf32, #tpu.memory_space<vmem>>, %arg3: memref<16x1xf32, #tpu.memory_space<vmem>>, %arg4: memref<1x128xf32, #tpu.memory_space<vmem>>, %arg5: memref<1x6x16x256xbf16, #tpu.memory_space<vmem>>) attributes {dimension_semantics = [#tpu.dimension_semantics<parallel>], iteration_bounds = array<i64: 2>, scalar_prefetch = 0 : i64, scratch_operands = 0 : i64, tpu.core_type = #tpu.core_type<tc>, window_params = [{transform_indices = @transform_0, window_bounds = array<i64: 1, 4, 16, 128>}, {pipeline_mode = #tpu.pipeline_mode<synchronous>, transform_indices = @transform_1, window_bounds = array<i64: 16, 1>}, {pipeline_mode = #tpu.pipeline_mode<synchronous>, transform_indices = @transform_2, window_bounds = array<i64: 16, 1>}, {pipeline_mode = #tpu.pipeline_mode<synchronous>, transform_indices = @transform_3, window_bounds = array<i64: 1, 128>}, {transform_indices = @transform_4, window_bounds = array<i64: 1, 6, 16, 256>}]} {
    %cst = arith.constant 0.000000e+00 : bf16
    %0 = vector.broadcast %cst : bf16 to vector<6x16x256xbf16>
    %c0 = arith.constant 0 : index
    %c0_0 = arith.constant 0 : index
    %c0_1 = arith.constant 0 : index
    %c0_2 = arith.constant 0 : index
    %1 = vector.load %arg5[%c0, %c0_0, %c0_1, %c0_2] : memref<1x6x16x256xbf16, #tpu.memory_space<vmem>>, vector<1x6x16x256xbf16>
    %2 = vector.shape_cast %1 : vector<1x6x16x256xbf16> to vector<6x16x256xbf16>
    %3 = vector.shape_cast %0 : vector<6x16x256xbf16> to vector<1x6x16x256xbf16>
    tpu.vector_store %arg5[%c0, %c0_0, %c0_1, %c0_2], %3 {strides = array<i32>} : memref<1x6x16x256xbf16, #tpu.memory_space<vmem>>, vector<1x6x16x256xbf16>,
    %c0_3 = arith.constant 0 : index
    %c0_4 = arith.constant 0 : index
    %4 = vector.load %arg2[%c0_3, %c0_4] : memref<16x1xf32, #tpu.memory_space<vmem>>, vector<16x1xf32>
    %c0_5 = arith.constant 0 : index
    %c0_6 = arith.constant 0 : index
    %5 = vector.load %arg3[%c0_5, %c0_6] : memref<16x1xf32, #tpu.memory_space<vmem>>, vector<16x1xf32>
    %c0_7 = arith.constant 0 : index
    %c0_8 = arith.constant 0 : index
    %6 = vector.load %arg4[%c0_7, %c0_8] : memref<1x128xf32, #tpu.memory_space<vmem>>, vector<1x128xf32>
    %c0_9 = arith.constant 0 : index
    %c0_10 = arith.constant 0 : index
    %c0_11 = arith.constant 0 : index
    %c0_12 = arith.constant 0 : index
    %7 = vector.load %arg1[%c0_9, %c0_10, %c0_11, %c0_12] : memref<1x4x16x128xbf16, #tpu.memory_space<vmem>>, vector<1x1x16x128xbf16>
    %8 = vector.shape_cast %7 : vector<1x1x16x128xbf16> to vector<16x128xbf16>
    %9 = arith.extf %8 : vector<16x128xbf16> to vector<16x128xf32>
    %10 = vector.broadcast %4 : vector<16x1xf32> to vector<16x128xf32>
    %11 = arith.mulf %9, %10 : vector<16x128xf32>
    %12 = vector.broadcast %5 : vector<16x1xf32> to vector<16x128xf32>
    %13 = arith.addf %11, %12 : vector<16x128xf32>
    %cst_13 = arith.constant 0.000000e+00 : f32
    %14 = vector.broadcast %cst_13 : f32 to vector<16x128xf32>
    %15 = arith.maximumf %13, %14 : vector<16x128xf32>
    %16 = vector.broadcast %6 : vector<1x128xf32> to vector<16x128xf32>
    %17 = arith.mulf %15, %16 : vector<16x128xf32>
    %18 = arith.truncf %17 : vector<16x128xf32> to vector<16x128xbf16>
    %c0_14 = arith.constant 0 : index
    %c1 = arith.constant 1 : index
    %c0_15 = arith.constant 0 : index
    %c11 = arith.constant 11 : index
    %19 = vector.load %arg5[%c0_14, %c1, %c0_15, %c11] : memref<1x6x16x256xbf16, #tpu.memory_space<vmem>>, vector<1x1x16x128xbf16>
    %20 = vector.shape_cast %19 : vector<1x1x16x128xbf16> to vector<16x128xbf16>
    %21 = vector.shape_cast %18 : vector<16x128xbf16> to vector<1x1x16x128xbf16>
    tpu.vector_store %arg5[%c0_14, %c1, %c0_15, %c11], %21 {strides = array<i32>} : memref<1x6x16x256xbf16, #tpu.memory_space<vmem>>, vector<1x1x16x128xbf16>,
    %c0_16 = arith.constant 0 : index
    %c1_17 = arith.constant 1 : index
    %c0_18 = arith.constant 0 : index
    %c0_19 = arith.constant 0 : index
    %22 = vector.load %arg1[%c0_16, %c1_17, %c0_18, %c0_19] : memref<1x4x16x128xbf16, #tpu.memory_space<vmem>>, vector<1x1x16x128xbf16>
    %23 = vector.shape_cast %22 : vector<1x1x16x128xbf16> to vector<16x128xbf16>
    %24 = arith.extf %23 : vector<16x128xbf16> to vector<16x128xf32>
    %25 = vector.broadcast %4 : vector<16x1xf32> to vector<16x128xf32>
    %26 = arith.mulf %24, %25 : vector<16x128xf32>
    %27 = vector.broadcast %5 : vector<16x1xf32> to vector<16x128xf32>
    %28 = arith.addf %26, %27 : vector<16x128xf32>
    %cst_20 = arith.constant 0.000000e+00 : f32
    %29 = vector.broadcast %cst_20 : f32 to vector<16x128xf32>
    %30 = arith.maximumf %28, %29 : vector<16x128xf32>
    %31 = vector.broadcast %6 : vector<1x128xf32> to vector<16x128xf32>
    %32 = arith.mulf %30, %31 : vector<16x128xf32>
    %33 = arith.truncf %32 : vector<16x128xf32> to vector<16x128xbf16>
    %c0_21 = arith.constant 0 : index
    %c2 = arith.constant 2 : index
    %c0_22 = arith.constant 0 : index
    %c11_23 = arith.constant 11 : index
    %34 = vector.load %arg5[%c0_21, %c2, %c0_22, %c11_23] : memref<1x6x16x256xbf16, #tpu.memory_space<vmem>>, vector<1x1x16x128xbf16>
    %35 = vector.shape_cast %34 : vector<1x1x16x128xbf16> to vector<16x128xbf16>
    %36 = vector.shape_cast %33 : vector<16x128xbf16> to vector<1x1x16x128xbf16>
    tpu.vector_store %arg5[%c0_21, %c2, %c0_22, %c11_23], %36 {strides = array<i32>} : memref<1x6x16x256xbf16, #tpu.memory_space<vmem>>, vector<1x1x16x128xbf16>,
    %c0_24 = arith.constant 0 : index
    %c2_25 = arith.constant 2 : index
    %c0_26 = arith.constant 0 : index
    %c0_27 = arith.constant 0 : index
    %37 = vector.load %arg1[%c0_24, %c2_25, %c0_26, %c0_27] : memref<1x4x16x128xbf16, #tpu.memory_space<vmem>>, vector<1x1x16x128xbf16>
    %38 = vector.shape_cast %37 : vector<1x1x16x128xbf16> to vector<16x128xbf16>
    %39 = arith.extf %38 : vector<16x128xbf16> to vector<16x128xf32>
    %40 = vector.broadcast %4 : vector<16x1xf32> to vector<16x128xf32>
    %41 = arith.mulf %39, %40 : vector<16x128xf32>
    %42 = vector.broadcast %5 : vector<16x1xf32> to vector<16x128xf32>
    %43 = arith.addf %41, %42 : vector<16x128xf32>
    %cst_28 = arith.constant 0.000000e+00 : f32
    %44 = vector.broadcast %cst_28 : f32 to vector<16x128xf32>
    %45 = arith.maximumf %43, %44 : vector<16x128xf32>
    %46 = vector.broadcast %6 : vector<1x128xf32> to vector<16x128xf32>
    %47 = arith.mulf %45, %46 : vector<16x128xf32>
    %48 = arith.truncf %47 : vector<16x128xf32> to vector<16x128xbf16>
    %c0_29 = arith.constant 0 : index
    %c3 = arith.constant 3 : index
    %c0_30 = arith.constant 0 : index
    %c11_31 = arith.constant 11 : index
    %49 = vector.load %arg5[%c0_29, %c3, %c0_30, %c11_31] : memref<1x6x16x256xbf16, #tpu.memory_space<vmem>>, vector<1x1x16x128xbf16>
    %50 = vector.shape_cast %49 : vector<1x1x16x128xbf16> to vector<16x128xbf16>
    %51 = vector.shape_cast %48 : vector<16x128xbf16> to vector<1x1x16x128xbf16>
    tpu.vector_store %arg5[%c0_29, %c3, %c0_30, %c11_31], %51 {strides = array<i32>} : memref<1x6x16x256xbf16, #tpu.memory_space<vmem>>, vector<1x1x16x128xbf16>,
    %c0_32 = arith.constant 0 : index
    %c3_33 = arith.constant 3 : index
    %c0_34 = arith.constant 0 : index
    %c0_35 = arith.constant 0 : index
    %52 = vector.load %arg1[%c0_32, %c3_33, %c0_34, %c0_35] : memref<1x4x16x128xbf16, #tpu.memory_space<vmem>>, vector<1x1x16x128xbf16>
    %53 = vector.shape_cast %52 : vector<1x1x16x128xbf16> to vector<16x128xbf16>
    %54 = arith.extf %53 : vector<16x128xbf16> to vector<16x128xf32>
    %55 = vector.broadcast %4 : vector<16x1xf32> to vector<16x128xf32>
    %56 = arith.mulf %54, %55 : vector<16x128xf32>
    %57 = vector.broadcast %5 : vector<16x1xf32> to vector<16x128xf32>
    %58 = arith.addf %56, %57 : vector<16x128xf32>
    %cst_36 = arith.constant 0.000000e+00 : f32
    %59 = vector.broadcast %cst_36 : f32 to vector<16x128xf32>
    %60 = arith.maximumf %58, %59 : vector<16x128xf32>
    %61 = vector.broadcast %6 : vector<1x128xf32> to vector<16x128xf32>
    %62 = arith.mulf %60, %61 : vector<16x128xf32>
    %63 = arith.truncf %62 : vector<16x128xf32> to vector<16x128xbf16>
    %c0_37 = arith.constant 0 : index
    %c4 = arith.constant 4 : index
    %c0_38 = arith.constant 0 : index
    %c11_39 = arith.constant 11 : index
    %64 = vector.load %arg5[%c0_37, %c4, %c0_38, %c11_39] : memref<1x6x16x256xbf16, #tpu.memory_space<vmem>>, vector<1x1x16x128xbf16>
    %65 = vector.shape_cast %64 : vector<1x1x16x128xbf16> to vector<16x128xbf16>
    %66 = vector.shape_cast %63 : vector<16x128xbf16> to vector<1x1x16x128xbf16>
    tpu.vector_store %arg5[%c0_37, %c4, %c0_38, %c11_39], %66 {strides = array<i32>} : memref<1x6x16x256xbf16, #tpu.memory_space<vmem>>, vector<1x1x16x128xbf16>,
    return
  }
  func.func @transform_0(%arg0: i32) -> (i32, i32, i32, i32) {
    %c0_i32 = arith.constant 0 : i32
    %c0_i32_0 = arith.constant 0 : i32
    %c0_i32_1 = arith.constant 0 : i32
    %c0_i32_2 = arith.constant 0 : i32
    return %arg0, %c0_i32, %c0_i32_0, %c0_i32_1 : i32, i32, i32, i32
  }
  func.func @transform_1(%arg0: i32) -> (i32, i32) {
    %c0_i32 = arith.constant 0 : i32
    %c0_i32_0 = arith.constant 0 : i32
    %c0_i32_1 = arith.constant 0 : i32
    return %c0_i32, %c0_i32_0 : i32, i32
  }
  func.func @transform_2(%arg0: i32) -> (i32, i32) {
    %c0_i32 = arith.constant 0 : i32
    %c0_i32_0 = arith.constant 0 : i32
    %c0_i32_1 = arith.constant 0 : i32
    return %c0_i32, %c0_i32_0 : i32, i32
  }
  func.func @transform_3(%arg0: i32) -> (i32, i32) {
    %c0_i32 = arith.constant 0 : i32
    %c0_i32_0 = arith.constant 0 : i32
    %c0_i32_1 = arith.constant 0 : i32
    return %c0_i32, %c0_i32_0 : i32, i32
  }
  func.func @transform_4(%arg0: i32) -> (i32, i32, i32, i32) {
    %c0_i32 = arith.constant 0 : i32
    %c0_i32_0 = arith.constant 0 : i32
    %c0_i32_1 = arith.constant 0 : i32
    %c0_i32_2 = arith.constant 0 : i32
    return %arg0, %c0_i32, %c0_i32_0, %c0_i32_1 : i32, i32, i32, i32
  }
}

module attributes {stable_mosaic.version = 11 : i64} {
  func.func @_bn_relu_kernel(%arg0: i32, %arg1: memref<1x4x16x128xbf16, #tpu.memory_space<vmem>>, %arg2: memref<16x1xf32, #tpu.memory_space<vmem>>, %arg3: memref<16x1xf32, #tpu.memory_space<vmem>>, %arg4: memref<1x4x16x128xf32, #tpu.memory_space<vmem>>) attributes {dimension_semantics = [#tpu.dimension_semantics<parallel>], iteration_bounds = array<i64: 2>, scalar_prefetch = 0 : i64, scratch_operands = 0 : i64, tpu.core_type = #tpu.core_type<tc>, window_params = [{transform_indices = @transform_0, window_bounds = array<i64: 1, 4, 16, 128>}, {pipeline_mode = #tpu.pipeline_mode<synchronous>, transform_indices = @transform_1, window_bounds = array<i64: 16, 1>}, {pipeline_mode = #tpu.pipeline_mode<synchronous>, transform_indices = @transform_2, window_bounds = array<i64: 16, 1>}, {transform_indices = @transform_3, window_bounds = array<i64: 1, 4, 16, 128>}]} {
    %c0 = arith.constant 0 : index
    %c0_0 = arith.constant 0 : index
    %0 = vector.load %arg2[%c0, %c0_0] : memref<16x1xf32, #tpu.memory_space<vmem>>, vector<16x1xf32>
    %c0_1 = arith.constant 0 : index
    %c0_2 = arith.constant 0 : index
    %1 = vector.load %arg3[%c0_1, %c0_2] : memref<16x1xf32, #tpu.memory_space<vmem>>, vector<16x1xf32>
    %c0_3 = arith.constant 0 : index
    %c0_4 = arith.constant 0 : index
    %c0_5 = arith.constant 0 : index
    %c0_6 = arith.constant 0 : index
    %2 = vector.load %arg1[%c0_3, %c0_4, %c0_5, %c0_6] : memref<1x4x16x128xbf16, #tpu.memory_space<vmem>>, vector<1x1x16x128xbf16>
    %3 = vector.shape_cast %2 : vector<1x1x16x128xbf16> to vector<16x128xbf16>
    %4 = arith.extf %3 : vector<16x128xbf16> to vector<16x128xf32>
    %5 = vector.broadcast %0 : vector<16x1xf32> to vector<16x128xf32>
    %6 = arith.mulf %4, %5 : vector<16x128xf32>
    %7 = vector.broadcast %1 : vector<16x1xf32> to vector<16x128xf32>
    %8 = arith.addf %6, %7 : vector<16x128xf32>
    %cst = arith.constant 0.000000e+00 : f32
    %9 = vector.broadcast %cst : f32 to vector<16x128xf32>
    %10 = arith.maximumf %8, %9 : vector<16x128xf32>
    %c0_7 = arith.constant 0 : index
    %c0_8 = arith.constant 0 : index
    %c0_9 = arith.constant 0 : index
    %c0_10 = arith.constant 0 : index
    %11 = vector.load %arg4[%c0_7, %c0_8, %c0_9, %c0_10] : memref<1x4x16x128xf32, #tpu.memory_space<vmem>>, vector<1x1x16x128xf32>
    %12 = vector.shape_cast %11 : vector<1x1x16x128xf32> to vector<16x128xf32>
    %13 = vector.shape_cast %10 : vector<16x128xf32> to vector<1x1x16x128xf32>
    tpu.vector_store %arg4[%c0_7, %c0_8, %c0_9, %c0_10], %13 {strides = array<i32>} : memref<1x4x16x128xf32, #tpu.memory_space<vmem>>, vector<1x1x16x128xf32>,
    %c0_11 = arith.constant 0 : index
    %c1 = arith.constant 1 : index
    %c0_12 = arith.constant 0 : index
    %c0_13 = arith.constant 0 : index
    %14 = vector.load %arg1[%c0_11, %c1, %c0_12, %c0_13] : memref<1x4x16x128xbf16, #tpu.memory_space<vmem>>, vector<1x1x16x128xbf16>
    %15 = vector.shape_cast %14 : vector<1x1x16x128xbf16> to vector<16x128xbf16>
    %16 = arith.extf %15 : vector<16x128xbf16> to vector<16x128xf32>
    %17 = vector.broadcast %0 : vector<16x1xf32> to vector<16x128xf32>
    %18 = arith.mulf %16, %17 : vector<16x128xf32>
    %19 = vector.broadcast %1 : vector<16x1xf32> to vector<16x128xf32>
    %20 = arith.addf %18, %19 : vector<16x128xf32>
    %cst_14 = arith.constant 0.000000e+00 : f32
    %21 = vector.broadcast %cst_14 : f32 to vector<16x128xf32>
    %22 = arith.maximumf %20, %21 : vector<16x128xf32>
    %c0_15 = arith.constant 0 : index
    %c1_16 = arith.constant 1 : index
    %c0_17 = arith.constant 0 : index
    %c0_18 = arith.constant 0 : index
    %23 = vector.load %arg4[%c0_15, %c1_16, %c0_17, %c0_18] : memref<1x4x16x128xf32, #tpu.memory_space<vmem>>, vector<1x1x16x128xf32>
    %24 = vector.shape_cast %23 : vector<1x1x16x128xf32> to vector<16x128xf32>
    %25 = vector.shape_cast %22 : vector<16x128xf32> to vector<1x1x16x128xf32>
    tpu.vector_store %arg4[%c0_15, %c1_16, %c0_17, %c0_18], %25 {strides = array<i32>} : memref<1x4x16x128xf32, #tpu.memory_space<vmem>>, vector<1x1x16x128xf32>,
    %c0_19 = arith.constant 0 : index
    %c2 = arith.constant 2 : index
    %c0_20 = arith.constant 0 : index
    %c0_21 = arith.constant 0 : index
    %26 = vector.load %arg1[%c0_19, %c2, %c0_20, %c0_21] : memref<1x4x16x128xbf16, #tpu.memory_space<vmem>>, vector<1x1x16x128xbf16>
    %27 = vector.shape_cast %26 : vector<1x1x16x128xbf16> to vector<16x128xbf16>
    %28 = arith.extf %27 : vector<16x128xbf16> to vector<16x128xf32>
    %29 = vector.broadcast %0 : vector<16x1xf32> to vector<16x128xf32>
    %30 = arith.mulf %28, %29 : vector<16x128xf32>
    %31 = vector.broadcast %1 : vector<16x1xf32> to vector<16x128xf32>
    %32 = arith.addf %30, %31 : vector<16x128xf32>
    %cst_22 = arith.constant 0.000000e+00 : f32
    %33 = vector.broadcast %cst_22 : f32 to vector<16x128xf32>
    %34 = arith.maximumf %32, %33 : vector<16x128xf32>
    %c0_23 = arith.constant 0 : index
    %c2_24 = arith.constant 2 : index
    %c0_25 = arith.constant 0 : index
    %c0_26 = arith.constant 0 : index
    %35 = vector.load %arg4[%c0_23, %c2_24, %c0_25, %c0_26] : memref<1x4x16x128xf32, #tpu.memory_space<vmem>>, vector<1x1x16x128xf32>
    %36 = vector.shape_cast %35 : vector<1x1x16x128xf32> to vector<16x128xf32>
    %37 = vector.shape_cast %34 : vector<16x128xf32> to vector<1x1x16x128xf32>
    tpu.vector_store %arg4[%c0_23, %c2_24, %c0_25, %c0_26], %37 {strides = array<i32>} : memref<1x4x16x128xf32, #tpu.memory_space<vmem>>, vector<1x1x16x128xf32>,
    %c0_27 = arith.constant 0 : index
    %c3 = arith.constant 3 : index
    %c0_28 = arith.constant 0 : index
    %c0_29 = arith.constant 0 : index
    %38 = vector.load %arg1[%c0_27, %c3, %c0_28, %c0_29] : memref<1x4x16x128xbf16, #tpu.memory_space<vmem>>, vector<1x1x16x128xbf16>
    %39 = vector.shape_cast %38 : vector<1x1x16x128xbf16> to vector<16x128xbf16>
    %40 = arith.extf %39 : vector<16x128xbf16> to vector<16x128xf32>
    %41 = vector.broadcast %0 : vector<16x1xf32> to vector<16x128xf32>
    %42 = arith.mulf %40, %41 : vector<16x128xf32>
    %43 = vector.broadcast %1 : vector<16x1xf32> to vector<16x128xf32>
    %44 = arith.addf %42, %43 : vector<16x128xf32>
    %cst_30 = arith.constant 0.000000e+00 : f32
    %45 = vector.broadcast %cst_30 : f32 to vector<16x128xf32>
    %46 = arith.maximumf %44, %45 : vector<16x128xf32>
    %c0_31 = arith.constant 0 : index
    %c3_32 = arith.constant 3 : index
    %c0_33 = arith.constant 0 : index
    %c0_34 = arith.constant 0 : index
    %47 = vector.load %arg4[%c0_31, %c3_32, %c0_33, %c0_34] : memref<1x4x16x128xf32, #tpu.memory_space<vmem>>, vector<1x1x16x128xf32>
    %48 = vector.shape_cast %47 : vector<1x1x16x128xf32> to vector<16x128xf32>
    %49 = vector.shape_cast %46 : vector<16x128xf32> to vector<1x1x16x128xf32>
    tpu.vector_store %arg4[%c0_31, %c3_32, %c0_33, %c0_34], %49 {strides = array<i32>} : memref<1x4x16x128xf32, #tpu.memory_space<vmem>>, vector<1x1x16x128xf32>,
    return
  }
  func.func @transform_0(%arg0: i32) -> (i32, i32, i32, i32) {
    %c0_i32 = arith.constant 0 : i32
    %c0_i32_0 = arith.constant 0 : i32
    %c0_i32_1 = arith.constant 0 : i32
    %c0_i32_2 = arith.constant 0 : i32
    return %arg0, %c0_i32, %c0_i32_0, %c0_i32_1 : i32, i32, i32, i32
  }
  func.func @transform_1(%arg0: i32) -> (i32, i32) {
    %c0_i32 = arith.constant 0 : i32
    %c0_i32_0 = arith.constant 0 : i32
    %c0_i32_1 = arith.constant 0 : i32
    return %c0_i32, %c0_i32_0 : i32, i32
  }
  func.func @transform_2(%arg0: i32) -> (i32, i32) {
    %c0_i32 = arith.constant 0 : i32
    %c0_i32_0 = arith.constant 0 : i32
    %c0_i32_1 = arith.constant 0 : i32
    return %c0_i32, %c0_i32_0 : i32, i32
  }
  func.func @transform_3(%arg0: i32) -> (i32, i32, i32, i32) {
    %c0_i32 = arith.constant 0 : i32
    %c0_i32_0 = arith.constant 0 : i32
    %c0_i32_1 = arith.constant 0 : i32
    %c0_i32_2 = arith.constant 0 : i32
    return %arg0, %c0_i32, %c0_i32_0, %c0_i32_1 : i32, i32, i32, i32
  }
}

</mosaic_0001>

<llo_original>
// kernel: encoder3d_forward.11
$region0: #{encoder3d_forward.11}
  #allocation0 [shape = 'u32[]', space=smem, size = 0x4, offset = 0x4, fixed_abs, tag = 'smem constant byte address 0x4 - core index']
  #allocation1 [shape = 'u32[72,128]{1,0:T(1,128)}', space=vmem, size = 0x9000, scoped, tag = 'internal scratch']
  %s0 = inlined_call_operand.vmem [shape: bf16[2,4,16,384], index: 0, kind: input, shape index: {}]
  %s1 = inlined_call_operand.vmem [shape: f32[16,1], index: 1, kind: input, shape index: {}]
  %s2 = inlined_call_operand.vmem [shape: f32[16,1], index: 2, kind: input, shape index: {}]
  %s3 = inlined_call_operand.vmem [shape: f32[2,4,16,384], index: 3, kind: output, shape index: {}]
  %s4 = sld [smem:[#allocation0]]
  $region45: #{encoder3d_forward.11} parent=0
    _
  %s6 = ssub.s32 1, %s4
  %s7 = scalar_select 0, %s6, %s4
  loop: start=0, step=1, limit=4
  $region2: #{encoder3d_forward.11} parent=0 // loop_pre_header
    _
  $region3: #{encoder3d_forward.11} parent=0 // loop_header
    %s9 = sphi 0, %s13
    %p10 = scmp.ge.s32.totalorder %s9, 4
    %s19 = sphi 0, %s21
    %s22 = sphi 0, %s19
    %s23 = sphi 0, %s22
    %s39 = sphi 0, %s23
    %s43 = sphi 0, %s43
    %s45 = sphi 0, %s43
    %s46 = sphi 0, %s45
    %s60 = sphi 0, %s46
    %s64 = sphi 0, %s64
    %s66 = sphi 0, %s64
    %s67 = sphi 0, %s66
    %s81 = sphi 0, %s67
    %s87 = sphi 0, %s89
    %s90 = sphi 0, %s87
    %s91 = sphi 0, %s90
    %s107 = sphi 0, %s91
  $region4: #{encoder3d_forward.11} parent=0 // loop_header_branch
    %12 = sbr.rel (%p10) target = $region8
  $region5: #{encoder3d_forward.11} parent=0 // loop_body
    %s14 = ssub.s32 %s9, 1
    %s15 = ssub.s32 %s9, 2
    %s16 = sadd.s32 %s9, 1
    %s17 = ssub.s32 %s9, %s16
    %p18 = scmp.eq.s32.totalorder %s17, 0
    %s20 = sadd.s32 %s19, 1
    %s21 = scalar_select %p18, %s19, %s20
    %p24 = pneg %p18
    %p25 = scmp.eq.s32.totalorder %s9, 1
    %p26 = por %p24, %p25
    %p27 = scmp.ne.s32.totalorder %s19, %s22
    %p28 = scmp.eq.s32.totalorder %s9, 0
    %p29 = por %p27, %p28
    %p30 = scmp.ne.s32.totalorder %s19, %s22
    %p31 = scmp.eq.s32.totalorder %s14, 1
    %p32 = por %p30, %p31
    %p33 = scmp.ne.s32.totalorder %s22, %s23
    %p34 = scmp.eq.s32.totalorder %s14, 0
    %p35 = por %p33, %p34
    %p36 = scmp.ne.s32.totalorder %s22, %s23
    %p37 = scmp.eq.s32.totalorder %s15, 1
    %p38 = por %p36, %p37
    %p40 = scmp.ne.s32.totalorder %s23, %s39
    %p41 = scmp.eq.s32.totalorder %s15, 0
    %p42 = por %p40, %p41
    %s44 = sadd.s32 %s43, 1
    %p47 = scmp.eq.s32.totalorder %s9, 1
    %p48 = scmp.ne.s32.totalorder %s43, %s45
    %p49 = scmp.eq.s32.totalorder %s9, 0
    %p50 = por %p48, %p49
    %p51 = scmp.ne.s32.totalorder %s43, %s45
    %p52 = scmp.eq.s32.totalorder %s14, 1
    %p53 = por %p51, %p52
    %p54 = scmp.ne.s32.totalorder %s45, %s46
    %p55 = scmp.eq.s32.totalorder %s14, 0
    %p56 = por %p54, %p55
    %p57 = scmp.ne.s32.totalorder %s45, %s46
    %p58 = scmp.eq.s32.totalorder %s15, 1
    %p59 = por %p57, %p58
    %p61 = scmp.ne.s32.totalorder %s46, %s60
    %p62 = scmp.eq.s32.totalorder %s15, 0
    %p63 = por %p61, %p62
    %s65 = sadd.s32 %s64, 1
    %p68 = scmp.eq.s32.totalorder %s9, 1
    %p69 = scmp.ne.s32.totalorder %s64, %s66
    %p70 = scmp.eq.s32.totalorder %s9, 0
    %p71 = por %p69, %p70
    %p72 = scmp.ne.s32.totalorder %s64, %s66
    %p73 = scmp.eq.s32.totalorder %s14, 1
    %p74 = por %p72, %p73
    %p75 = scmp.ne.s32.totalorder %s66, %s67
    %p76 = scmp.eq.s32.totalorder %s14, 0
    %p77 = por %p75, %p76
    %p78 = scmp.ne.s32.totalorder %s66, %s67
    %p79 = scmp.eq.s32.totalorder %s15, 1
    %p80 = por %p78, %p79
    %p82 = scmp.ne.s32.totalorder %s67, %s81
    %p83 = scmp.eq.s32.totalorder %s15, 0
    %p84 = por %p82, %p83
    %s85 = ssub.s32 %s9, %s16
    %p86 = scmp.eq.s32.totalorder %s85, 0
    %s88 = sadd.s32 %s87, 1
    %s89 = scalar_select %p86, %s87, %s88
    %p92 = pneg %p86
    %p93 = scmp.eq.s32.totalorder %s9, 1
    %p94 = por %p92, %p93
    %p95 = scmp.ne.s32.totalorder %s87, %s90
    %p96 = scmp.eq.s32.totalorder %s9, 0
    %p97 = por %p95, %p96
    %p98 = scmp.ne.s32.totalorder %s87, %s90
    %p99 = scmp.eq.s32.totalorder %s14, 1
    %p100 = por %p98, %p99
    %p101 = scmp.ne.s32.totalorder %s90, %s91
    %p102 = scmp.eq.s32.totalorder %s14, 0
    %p103 = por %p101, %p102
    %p104 = scmp.ne.s32.totalorder %s90, %s91
    %p105 = scmp.eq.s32.totalorder %s15, 1
    %p106 = por %p104, %p105
    %p108 = scmp.ne.s32.totalorder %s91, %s107
    %p109 = scmp.eq.s32.totalorder %s15, 0
    %p110 = por %p108, %p109
    %p111 = scmp.le.s32.totalorder 1, %s9
    %p112 = scmp.lt.s32.totalorder %s9, 3
    %p113 = pnand %p111, %p112
    %p114 = pneg %p113
    // Predicated region
    $region9: #{encoder3d_forward.11} parent=5 // pred_check
      _
    $region10: #{encoder3d_forward.11} parent=5 // pred_check_branch
      %116 = sbr.rel (%p113) target = $region12
    $region11: #{encoder3d_forward.11} parent=5 // pred_region
      %s117 = ssub.s32 %s9, 1
      // Predicated region
      $region13: #{encoder3d_forward.11} parent=11 // pred_check
        %p118 = pneg %p56
      $region14: #{encoder3d_forward.11} parent=11 // pred_check_branch
        %120 = sbr.rel (%p118) target = $region16
      $region15: #{encoder3d_forward.11} parent=11 // pred_region
        _
      $region16: #{encoder3d_forward.11} parent=11 // pred_fallthru
        _
      // Predicated region
      $region17: #{encoder3d_forward.11} parent=11 // pred_check
        %p121 = pneg %p77
      $region18: #{encoder3d_forward.11} parent=11 // pred_check_branch
        %123 = sbr.rel (%p121) target = $region20
      $region19: #{encoder3d_forward.11} parent=11 // pred_region
        _
      $region20: #{encoder3d_forward.11} parent=11 // pred_fallthru
        _
    $region12: #{encoder3d_forward.11} parent=5 // pred_fallthru
      _
    %p124 = scmp.lt.s32.totalorder %s9, 2
    // Predicated region
    $region21: #{encoder3d_forward.11} parent=5 // pred_check
      %p125 = pneg %p124
    $region22: #{encoder3d_forward.11} parent=5 // pred_check_branch
      %127 = sbr.rel (%p125) target = $region24
    $region23: #{encoder3d_forward.11} parent=5 // pred_region
      // Predicated region
      $region25: #{encoder3d_forward.11} parent=23 // pred_check
        %p128 = pneg %p29
      $region26: #{encoder3d_forward.11} parent=23 // pred_check_branch
        %130 = sbr.rel (%p128) target = $region28
      $region27: #{encoder3d_forward.11} parent=23 // pred_region
        %p131 = scmp.lt.s32.totalorder %s9, 1
        %s132 = scalar_select %p131, %s9, 1
        %s133 = smul.addr %s132, 24
        %s134 = smul.addr %s133, 4
        %s135 = scalar_lea.vmem %s0, %s134
      $region28: #{encoder3d_forward.11} parent=23 // pred_fallthru
        _
    $region24: #{encoder3d_forward.11} parent=5 // pred_fallthru
      _
    %p136 = scmp.le.s32.totalorder 1, %s9
    %p137 = scmp.lt.s32.totalorder %s9, 3
    %p138 = pnand %p136, %p137
    %p139 = pneg %p138
    // Predicated region
    $region29: #{encoder3d_forward.11} parent=5 // pred_check
      _
    $region30: #{encoder3d_forward.11} parent=5 // pred_check_branch
      %141 = sbr.rel (%p138) target = $region32
    $region31: #{encoder3d_forward.11} parent=5 // pred_region
      %s142 = ssub.s32 %s9, 1
      %p143 = scmp.lt.s32.totalorder %s14, 1
      %s144 = scalar_select %p143, %s14, 1
      %s145 = smul.addr %s144, 24
      %s146 = smul.addr %s145, 4
      %s147 = scalar_lea.vmem %s0, %s146
      %p148 = pneg %p35
      %p149 = pneg %p32
      %p150 = pneg %p56
      %p151 = pneg %p53
      %p152 = pneg %p77
      %p153 = pneg %p74
      %p154 = pneg %p103
      %p155 = pneg %p100
      %p156 = scmp.lt.s32.totalorder %s14, 1
      %s157 = scalar_select %p156, %s14, 1
      %s158 = smul.addr %s157, 24
      %s159 = smul.addr %s158, 8
      %s160 = scalar_lea.vmem %s3, %s159
      %p161 = scmp.lt.s32.totalorder %s14, 1
      %s162 = scalar_select %p161, %s14, 1
      %s163 = smul.addr %s162, 24
      %s164 = smul.addr %s163, 4
      %s165 = scalar_lea.vmem %s0, %s164
      %p166 = scmp.lt.s32.totalorder %s14, 1
      %s167 = scalar_select %p166, %s14, 1
      %s168 = smul.addr %s167, 24
      %s169 = smul.addr %s168, 8
      %s170 = scalar_lea.vmem %s3, %s169
      %v171 = vld [vmem:[%s1] sm:$0xff]
      %v172 = vld [vmem:[%s1 + $0x8] sm:$0xff]
      %v173 = vld [vmem:[%s2] sm:$0xff]
      %v174 = vld [vmem:[%s2 + $0x8] sm:$0xff]
      %v175 = vld [vmem:[%s165] sm:$0xff]
      %v176 = vld [vmem:[%s165 + $0x8] sm:$0xf]
      %v177 = vld [vmem:[%s165 + $0xc] sm:$0xff]
      %v178 = vld [vmem:[%s165 + $0x14] sm:$0xf]
      %v179 = vunpack.c.l.bf16 %v175
      %v180 = vunpack.c.h.bf16 %v175
      %v181 = vunpack.c.l.bf16 %v176
      %v182 = vunpack.c.l.bf16 %v177
      %v183 = vunpack.c.h.bf16 %v177
      %v184 = vunpack.c.l.bf16 %v178
      %186 = vset.pattern.permute.xlu0 0
      %187 = vperm.xlu0 %186, %v171
      %v188 = vpop.permute.xlu0 %187
      %191 = vset.pattern.permute.xlu0 0
      %192 = vperm.xlu0 %191, %v172
      %v193 = vpop.permute.xlu0 %192
      %v195 = vmul.f32 %v179, %v188
      %v196 = vmul.f32 %v180, %v188
      %v197 = vmul.f32 %v181, %v188
      %v198 = vmul.f32 %v182, %v193
      %v199 = vmul.f32 %v183, %v193
      %v200 = vmul.f32 %v184, %v193
      %202 = vset.pattern.permute.xlu0 0
      %203 = vperm.xlu0 %202, %v173
      %v204 = vpop.permute.xlu0 %203
      %207 = vset.pattern.permute.xlu0 0
      %208 = vperm.xlu0 %207, %v174
      %v209 = vpop.permute.xlu0 %208
      %v211 = vadd.f32 %v195, %v204
      %v212 = vadd.f32 %v196, %v204
      %v213 = vadd.f32 %v197, %v204
      %v214 = vadd.f32 %v198, %v209
      %v215 = vadd.f32 %v199, %v209
      %v216 = vadd.f32 %v200, %v209
      %v217 = vmax.f32 %v211, 0.0
      %v218 = vmax.f32 %v212, 0.0
      %v219 = vmax.f32 %v213, 0.0
      %v220 = vmax.f32 %v214, 0.0
      %v221 = vmax.f32 %v215, 0.0
      %v222 = vmax.f32 %v216, 0.0
      %223 = vst [vmem:[%s170] sm:$0xff] %v217
      %224 = vst [vmem:[%s170 + $0x8] sm:$0xff] %v218
      %225 = vst [vmem:[%s170 + $0x10] sm:$0xff] %v219
      %226 = vst [vmem:[%s170 + $0x18] sm:$0xff] %v220
      %227 = vst [vmem:[%s170 + $0x20] sm:$0xff] %v221
      %228 = vst [vmem:[%s170 + $0x28] sm:$0xff] %v222
      %s229 = scalar_lea.vmem %s165, 24
      %v230 = vld [vmem:[%s229] sm:$0xff]
      %v231 = vld [vmem:[%s229 + $0x8] sm:$0xf]
      %v232 = vld [vmem:[%s229 + $0xc] sm:$0xff]
      %v233 = vld [vmem:[%s229 + $0x14] sm:$0xf]
      %v234 = vunpack.c.l.bf16 %v230
      %v235 = vunpack.c.h.bf16 %v230
      %v236 = vunpack.c.l.bf16 %v231
      %v237 = vunpack.c.l.bf16 %v232
      %v238 = vunpack.c.h.bf16 %v232
      %v239 = vunpack.c.l.bf16 %v233
      %v240 = vmul.f32 %v234, %v188
      %v241 = vmul.f32 %v235, %v188
      %v242 = vmul.f32 %v236, %v188
      %v243 = vmul.f32 %v237, %v193
      %v244 = vmul.f32 %v238, %v193
      %v245 = vmul.f32 %v239, %v193
      %v246 = vadd.f32 %v240, %v204
      %v247 = vadd.f32 %v241, %v204
      %v248 = vadd.f32 %v242, %v204
      %v249 = vadd.f32 %v243, %v209
      %v250 = vadd.f32 %v244, %v209
      %v251 = vadd.f32 %v245, %v209
      %v252 = vmax.f32 %v246, 0.0
      %v253 = vmax.f32 %v247, 0.0
      %v254 = vmax.f32 %v248, 0.0
      %v255 = vmax.f32 %v249, 0.0
      %v256 = vmax.f32 %v250, 0.0
      %v257 = vmax.f32 %v251, 0.0
      %s258 = scalar_lea.vmem %s170, 48
      %259 = vst [vmem:[%s258] sm:$0xff] %v252
      %260 = vst [vmem:[%s258 + $0x8] sm:$0xff] %v253
      %261 = vst [vmem:[%s258 + $0x10] sm:$0xff] %v254
      %262 = vst [vmem:[%s258 + $0x18] sm:$0xff] %v255
      %263 = vst [vmem:[%s258 + $0x20] sm:$0xff] %v256
      %264 = vst [vmem:[%s258 + $0x28] sm:$0xff] %v257
      %s265 = scalar_lea.vmem %s165, 48
      %v266 = vld [vmem:[%s265] sm:$0xff]
      %v267 = vld [vmem:[%s265 + $0x8] sm:$0xf]
      %v268 = vld [vmem:[%s265 + $0xc] sm:$0xff]
      %v269 = vld [vmem:[%s265 + $0x14] sm:$0xf]
      %v270 = vunpack.c.l.bf16 %v266
      %v271 = vunpack.c.h.bf16 %v266
      %v272 = vunpack.c.l.bf16 %v267
      %v273 = vunpack.c.l.bf16 %v268
      %v274 = vunpack.c.h.bf16 %v268
      %v275 = vunpack.c.l.bf16 %v269
      %v276 = vmul.f32 %v270, %v188
      %v277 = vmul.f32 %v271, %v188
      %v278 = vmul.f32 %v272, %v188
      %v279 = vmul.f32 %v273, %v193
      %v280 = vmul.f32 %v274, %v193
      %v281 = vmul.f32 %v275, %v193
      %v282 = vadd.f32 %v276, %v204
      %v283 = vadd.f32 %v277, %v204
      %v284 = vadd.f32 %v278, %v204
      %v285 = vadd.f32 %v279, %v209
      %v286 = vadd.f32 %v280, %v209
      %v287 = vadd.f32 %v281, %v209
      %v288 = vmax.f32 %v282, 0.0
      %v289 = vmax.f32 %v283, 0.0
      %v290 = vmax.f32 %v284, 0.0
      %v291 = vmax.f32 %v285, 0.0
      %v292 = vmax.f32 %v286, 0.0
      %v293 = vmax.f32 %v287, 0.0
      %s294 = scalar_lea.vmem %s170, 96
      %295 = vst [vmem:[%s294] sm:$0xff] %v288
      %296 = vst [vmem:[%s294 + $0x8] sm:$0xff] %v289
      %297 = vst [vmem:[%s294 + $0x10] sm:$0xff] %v290
      %298 = vst [vmem:[%s294 + $0x18] sm:$0xff] %v291
      %299 = vst [vmem:[%s294 + $0x20] sm:$0xff] %v292
      %300 = vst [vmem:[%s294 + $0x28] sm:$0xff] %v293
      %s301 = scalar_lea.vmem %s165, 72
      %v302 = vld [vmem:[%s301] sm:$0xff]
      %v303 = vld [vmem:[%s301 + $0x8] sm:$0xf]
      %v304 = vld [vmem:[%s301 + $0xc] sm:$0xff]
      %v305 = vld [vmem:[%s301 + $0x14] sm:$0xf]
      %v306 = vunpack.c.l.bf16 %v302
      %v307 = vunpack.c.h.bf16 %v302
      %v308 = vunpack.c.l.bf16 %v303
      %v309 = vunpack.c.l.bf16 %v304
      %v310 = vunpack.c.h.bf16 %v304
      %v311 = vunpack.c.l.bf16 %v305
      %v312 = vmul.f32 %v306, %v188
      %v313 = vmul.f32 %v307, %v188
      %v314 = vmul.f32 %v308, %v188
      %v315 = vmul.f32 %v309, %v193
      %v316 = vmul.f32 %v310, %v193
      %v317 = vmul.f32 %v311, %v193
      %v318 = vadd.f32 %v312, %v204
      %v319 = vadd.f32 %v313, %v204
      %v320 = vadd.f32 %v314, %v204
      %v321 = vadd.f32 %v315, %v209
      %v322 = vadd.f32 %v316, %v209
      %v323 = vadd.f32 %v317, %v209
      %v324 = vmax.f32 %v318, 0.0
      %v325 = vmax.f32 %v319, 0.0
      %v326 = vmax.f32 %v320, 0.0
      %v327 = vmax.f32 %v321, 0.0
      %v328 = vmax.f32 %v322, 0.0
      %v329 = vmax.f32 %v323, 0.0
      %s330 = scalar_lea.vmem %s170, 144
      %331 = vst [vmem:[%s330] sm:$0xff] %v324
      %332 = vst [vmem:[%s330 + $0x8] sm:$0xff] %v325
      %333 = vst [vmem:[%s330 + $0x10] sm:$0xff] %v326
      %334 = vst [vmem:[%s330 + $0x18] sm:$0xff] %v327
      %335 = vst [vmem:[%s330 + $0x20] sm:$0xff] %v328
      %336 = vst [vmem:[%s330 + $0x28] sm:$0xff] %v329
      %p337 = scmp.lt.s32.totalorder %s14, 1
      %s338 = scalar_select %p337, %s14, 1
      %s339 = smul.addr %s338, 24
      %s340 = smul.addr %s339, 8
      %s341 = scalar_lea.vmem %s3, %s340
      // Predicated region
      $region33: #{encoder3d_forward.11} parent=31 // pred_check
        %p342 = pneg %p100
      $region34: #{encoder3d_forward.11} parent=31 // pred_check_branch
        %344 = sbr.rel (%p342) target = $region36
      $region35: #{encoder3d_forward.11} parent=31 // pred_region
        _
      $region36: #{encoder3d_forward.11} parent=31 // pred_fallthru
        _
    $region32: #{encoder3d_forward.11} parent=5 // pred_fallthru
      _
    %p345 = scmp.le.s32.totalorder 2, %s9
    // Predicated region
    $region37: #{encoder3d_forward.11} parent=5 // pred_check
      %p346 = pneg %p345
    $region38: #{encoder3d_forward.11} parent=5 // pred_check_branch
      %348 = sbr.rel (%p346) target = $region40
    $region39: #{encoder3d_forward.11} parent=5 // pred_region
      %s349 = ssub.s32 %s9, 2
      // Predicated region
      $region41: #{encoder3d_forward.11} parent=39 // pred_check
        %p350 = pneg %p106
      $region42: #{encoder3d_forward.11} parent=39 // pred_check_branch
        %352 = sbr.rel (%p350) target = $region44
      $region43: #{encoder3d_forward.11} parent=39 // pred_region
        %p353 = scmp.lt.s32.totalorder %s15, 1
        %s354 = scalar_select %p353, %s15, 1
        %s355 = smul.addr %s354, 24
        %s356 = smul.addr %s355, 8
        %s357 = scalar_lea.vmem %s3, %s356
      $region44: #{encoder3d_forward.11} parent=39 // pred_fallthru
        _
    $region40: #{encoder3d_forward.11} parent=5 // pred_fallthru
      _
  $region6: #{encoder3d_forward.11} parent=0 // loop_footer
    %s13 = sadd.s32 1, %s9
  $region7: #{encoder3d_forward.11} parent=0 // loop_footer_branch
    %8 = sbr.rel target = $region3
  $region8: #{encoder3d_forward.11} parent=0 // loop_exit
    _

// kernel: encoder3d_forward.9
$region0: #{encoder3d_forward.9}
  #allocation0 [shape = 'u32[]', space=smem, size = 0x4, offset = 0x4, fixed_abs, tag = 'smem constant byte address 0x4 - core index']
  #allocation1 [shape = 'u32[72,128]{1,0:T(1,128)}', space=vmem, size = 0x9000, scoped, tag = 'internal scratch']
  %s0 = inlined_call_operand.vmem [shape: bf16[2,4,16,384], index: 0, kind: input, shape index: {}]
  %s1 = inlined_call_operand.vmem [shape: f32[16,1], index: 1, kind: input, shape index: {}]
  %s2 = inlined_call_operand.vmem [shape: f32[16,1], index: 2, kind: input, shape index: {}]
  %s3 = inlined_call_operand.vmem [shape: f32[1,384], index: 3, kind: input, shape index: {}]
  %s4 = inlined_call_operand.vmem [shape: bf16[2,6,16,512], index: 4, kind: output, shape index: {}]
  %s5 = sld [smem:[#allocation0]]
  $region49: #{encoder3d_forward.9} parent=0
    _
  %s7 = ssub.s32 1, %s5
  %s8 = scalar_select 0, %s7, %s5
  loop: start=0, step=1, limit=4
  $region2: #{encoder3d_forward.9} parent=0 // loop_pre_header
    _
  $region3: #{encoder3d_forward.9} parent=0 // loop_header
    %s10 = sphi 0, %s14
    %p11 = scmp.ge.s32.totalorder %s10, 4
    %s20 = sphi 0, %s22
    %s23 = sphi 0, %s20
    %s24 = sphi 0, %s23
    %s40 = sphi 0, %s24
    %s44 = sphi 0, %s44
    %s46 = sphi 0, %s44
    %s47 = sphi 0, %s46
    %s61 = sphi 0, %s47
    %s65 = sphi 0, %s65
    %s67 = sphi 0, %s65
    %s68 = sphi 0, %s67
    %s82 = sphi 0, %s68
    %s86 = sphi 0, %s86
    %s88 = sphi 0, %s86
    %s89 = sphi 0, %s88
    %s103 = sphi 0, %s89
    %s109 = sphi 0, %s111
    %s112 = sphi 0, %s109
    %s113 = sphi 0, %s112
    %s129 = sphi 0, %s113
  $region4: #{encoder3d_forward.9} parent=0 // loop_header_branch
    %13 = sbr.rel (%p11) target = $region8
  $region5: #{encoder3d_forward.9} parent=0 // loop_body
    %s15 = ssub.s32 %s10, 1
    %s16 = ssub.s32 %s10, 2
    %s17 = sadd.s32 %s10, 1
    %s18 = ssub.s32 %s10, %s17
    %p19 = scmp.eq.s32.totalorder %s18, 0
    %s21 = sadd.s32 %s20, 1
    %s22 = scalar_select %p19, %s20, %s21
    %p25 = pneg %p19
    %p26 = scmp.eq.s32.totalorder %s10, 1
    %p27 = por %p25, %p26
    %p28 = scmp.ne.s32.totalorder %s20, %s23
    %p29 = scmp.eq.s32.totalorder %s10, 0
    %p30 = por %p28, %p29
    %p31 = scmp.ne.s32.totalorder %s20, %s23
    %p32 = scmp.eq.s32.totalorder %s15, 1
    %p33 = por %p31, %p32
    %p34 = scmp.ne.s32.totalorder %s23, %s24
    %p35 = scmp.eq.s32.totalorder %s15, 0
    %p36 = por %p34, %p35
    %p37 = scmp.ne.s32.totalorder %s23, %s24
    %p38 = scmp.eq.s32.totalorder %s16, 1
    %p39 = por %p37, %p38
    %p41 = scmp.ne.s32.totalorder %s24, %s40
    %p42 = scmp.eq.s32.totalorder %s16, 0
    %p43 = por %p41, %p42
    %s45 = sadd.s32 %s44, 1
    %p48 = scmp.eq.s32.totalorder %s10, 1
    %p49 = scmp.ne.s32.totalorder %s44, %s46
    %p50 = scmp.eq.s32.totalorder %s10, 0
    %p51 = por %p49, %p50
    %p52 = scmp.ne.s32.totalorder %s44, %s46
    %p53 = scmp.eq.s32.totalorder %s15, 1
    %p54 = por %p52, %p53
    %p55 = scmp.ne.s32.totalorder %s46, %s47
    %p56 = scmp.eq.s32.totalorder %s15, 0
    %p57 = por %p55, %p56
    %p58 = scmp.ne.s32.totalorder %s46, %s47
    %p59 = scmp.eq.s32.totalorder %s16, 1
    %p60 = por %p58, %p59
    %p62 = scmp.ne.s32.totalorder %s47, %s61
    %p63 = scmp.eq.s32.totalorder %s16, 0
    %p64 = por %p62, %p63
    %s66 = sadd.s32 %s65, 1
    %p69 = scmp.eq.s32.totalorder %s10, 1
    %p70 = scmp.ne.s32.totalorder %s65, %s67
    %p71 = scmp.eq.s32.totalorder %s10, 0
    %p72 = por %p70, %p71
    %p73 = scmp.ne.s32.totalorder %s65, %s67
    %p74 = scmp.eq.s32.totalorder %s15, 1
    %p75 = por %p73, %p74
    %p76 = scmp.ne.s32.totalorder %s67, %s68
    %p77 = scmp.eq.s32.totalorder %s15, 0
    %p78 = por %p76, %p77
    %p79 = scmp.ne.s32.totalorder %s67, %s68
    %p80 = scmp.eq.s32.totalorder %s16, 1
    %p81 = por %p79, %p80
    %p83 = scmp.ne.s32.totalorder %s68, %s82
    %p84 = scmp.eq.s32.totalorder %s16, 0
    %p85 = por %p83, %p84
    %s87 = sadd.s32 %s86, 1
    %p90 = scmp.eq.s32.totalorder %s10, 1
    %p91 = scmp.ne.s32.totalorder %s86, %s88
    %p92 = scmp.eq.s32.totalorder %s10, 0
    %p93 = por %p91, %p92
    %p94 = scmp.ne.s32.totalorder %s86, %s88
    %p95 = scmp.eq.s32.totalorder %s15, 1
    %p96 = por %p94, %p95
    %p97 = scmp.ne.s32.totalorder %s88, %s89
    %p98 = scmp.eq.s32.totalorder %s15, 0
    %p99 = por %p97, %p98
    %p100 = scmp.ne.s32.totalorder %s88, %s89
    %p101 = scmp.eq.s32.totalorder %s16, 1
    %p102 = por %p100, %p101
    %p104 = scmp.ne.s32.totalorder %s89, %s103
    %p105 = scmp.eq.s32.totalorder %s16, 0
    %p106 = por %p104, %p105
    %s107 = ssub.s32 %s10, %s17
    %p108 = scmp.eq.s32.totalorder %s107, 0
    %s110 = sadd.s32 %s109, 1
    %s111 = scalar_select %p108, %s109, %s110
    %p114 = pneg %p108
    %p115 = scmp.eq.s32.totalorder %s10, 1
    %p116 = por %p114, %p115
    %p117 = scmp.ne.s32.totalorder %s109, %s112
    %p118 = scmp.eq.s32.totalorder %s10, 0
    %p119 = por %p117, %p118
    %p120 = scmp.ne.s32.totalorder %s109, %s112
    %p121 = scmp.eq.s32.totalorder %s15, 1
    %p122 = por %p120, %p121
    %p123 = scmp.ne.s32.totalorder %s112, %s113
    %p124 = scmp.eq.s32.totalorder %s15, 0
    %p125 = por %p123, %p124
    %p126 = scmp.ne.s32.totalorder %s112, %s113
    %p127 = scmp.eq.s32.totalorder %s16, 1
    %p128 = por %p126, %p127
    %p130 = scmp.ne.s32.totalorder %s113, %s129
    %p131 = scmp.eq.s32.totalorder %s16, 0
    %p132 = por %p130, %p131
    %p133 = scmp.le.s32.totalorder 1, %s10
    %p134 = scmp.lt.s32.totalorder %s10, 3
    %p135 = pnand %p133, %p134
    %p136 = pneg %p135
    // Predicated region
    $region9: #{encoder3d_forward.9} parent=5 // pred_check
      _
    $region10: #{encoder3d_forward.9} parent=5 // pred_check_branch
      %138 = sbr.rel (%p135) target = $region12
    $region11: #{encoder3d_forward.9} parent=5 // pred_region
      %s139 = ssub.s32 %s10, 1
      // Predicated region
      $region13: #{encoder3d_forward.9} parent=11 // pred_check
        %p140 = pneg %p57
      $region14: #{encoder3d_forward.9} parent=11 // pred_check_branch
        %142 = sbr.rel (%p140) target = $region16
      $region15: #{encoder3d_forward.9} parent=11 // pred_region
        _
      $region16: #{encoder3d_forward.9} parent=11 // pred_fallthru
        _
      // Predicated region
      $region17: #{encoder3d_forward.9} parent=11 // pred_check
        %p143 = pneg %p78
      $region18: #{encoder3d_forward.9} parent=11 // pred_check_branch
        %145 = sbr.rel (%p143) target = $region20
      $region19: #{encoder3d_forward.9} parent=11 // pred_region
        _
      $region20: #{encoder3d_forward.9} parent=11 // pred_fallthru
        _
      // Predicated region
      $region21: #{encoder3d_forward.9} parent=11 // pred_check
        %p146 = pneg %p99
      $region22: #{encoder3d_forward.9} parent=11 // pred_check_branch
        %148 = sbr.rel (%p146) target = $region24
      $region23: #{encoder3d_forward.9} parent=11 // pred_region
        _
      $region24: #{encoder3d_forward.9} parent=11 // pred_fallthru
        _
    $region12: #{encoder3d_forward.9} parent=5 // pred_fallthru
      _
    %p149 = scmp.lt.s32.totalorder %s10, 2
    // Predicated region
    $region25: #{encoder3d_forward.9} parent=5 // pred_check
      %p150 = pneg %p149
    $region26: #{encoder3d_forward.9} parent=5 // pred_check_branch
      %152 = sbr.rel (%p150) target = $region28
    $region27: #{encoder3d_forward.9} parent=5 // pred_region
      // Predicated region
      $region29: #{encoder3d_forward.9} parent=27 // pred_check
        %p153 = pneg %p30
      $region30: #{encoder3d_forward.9} parent=27 // pred_check_branch
        %155 = sbr.rel (%p153) target = $region32
      $region31: #{encoder3d_forward.9} parent=27 // pred_region
        %p156 = scmp.lt.s32.totalorder %s10, 1
        %s157 = scalar_select %p156, %s10, 1
        %s158 = smul.addr %s157, 24
        %s159 = smul.addr %s158, 4
        %s160 = scalar_lea.vmem %s0, %s159
      $region32: #{encoder3d_forward.9} parent=27 // pred_fallthru
        _
    $region28: #{encoder3d_forward.9} parent=5 // pred_fallthru
      _
    %p161 = scmp.le.s32.totalorder 1, %s10
    %p162 = scmp.lt.s32.totalorder %s10, 3
    %p163 = pnand %p161, %p162
    %p164 = pneg %p163
    // Predicated region
    $region33: #{encoder3d_forward.9} parent=5 // pred_check
      _
    $region34: #{encoder3d_forward.9} parent=5 // pred_check_branch
      %166 = sbr.rel (%p163) target = $region36
    $region35: #{encoder3d_forward.9} parent=5 // pred_region
      %s167 = ssub.s32 %s10, 1
      %p168 = scmp.lt.s32.totalorder %s15, 1
      %s169 = scalar_select %p168, %s15, 1
      %s170 = smul.addr %s169, 24
      %s171 = smul.addr %s170, 4
      %s172 = scalar_lea.vmem %s0, %s171
      %p173 = pneg %p36
      %p174 = pneg %p33
      %p175 = pneg %p57
      %p176 = pneg %p54
      %p177 = pneg %p78
      %p178 = pneg %p75
      %p179 = pneg %p99
      %p180 = pneg %p96
      %p181 = pneg %p125
      %p182 = pneg %p122
      %p183 = scmp.lt.s32.totalorder %s15, 1
      %s184 = scalar_select %p183, %s15, 1
      %s185 = smul.addr %s184, 48
      %s186 = smul.addr %s185, 4
      %s187 = scalar_lea.vmem %s4, %s186
      %p188 = scmp.lt.s32.totalorder %s15, 1
      %s189 = scalar_select %p188, %s15, 1
      %s190 = smul.addr %s189, 24
      %s191 = smul.addr %s190, 4
      %s192 = scalar_lea.vmem %s0, %s191
      %p193 = scmp.lt.s32.totalorder %s15, 1
      %s194 = scalar_select %p193, %s15, 1
      %s195 = smul.addr %s194, 48
      %s196 = smul.addr %s195, 4
      %s197 = scalar_lea.vmem %s4, %s196
      %199 = vst [vmem:[%s197] sm:$0xff] 0
      %200 = vst [vmem:[%s197 + $0x8] sm:$0xff] 0
      %201 = vst [vmem:[%s197 + $0x10] sm:$0xff] 0
      %202 = vst [vmem:[%s197 + $0x18] sm:$0xff] 0
      %203 = vst [vmem:[%s197 + $0x20] sm:$0xff] 0
      %204 = vst [vmem:[%s197 + $0x28] sm:$0xff] 0
      %205 = vst [vmem:[%s197 + $0x30] sm:$0xff] 0
      %206 = vst [vmem:[%s197 + $0x38] sm:$0xff] 0
      %207 = vst [vmem:[%s197 + $0x40] sm:$0xff] 0
      %208 = vst [vmem:[%s197 + $0x48] sm:$0xff] 0
      %209 = vst [vmem:[%s197 + $0x50] sm:$0xff] 0
      %210 = vst [vmem:[%s197 + $0x58] sm:$0xff] 0
      %211 = vst [vmem:[%s197 + $0x60] sm:$0xff] 0
      %212 = vst [vmem:[%s197 + $0x68] sm:$0xff] 0
      %213 = vst [vmem:[%s197 + $0x70] sm:$0xff] 0
      %214 = vst [vmem:[%s197 + $0x78] sm:$0xff] 0
      %215 = vst [vmem:[%s197 + $0x80] sm:$0xff] 0
      %216 = vst [vmem:[%s197 + $0x88] sm:$0xff] 0
      %217 = vst [vmem:[%s197 + $0x90] sm:$0xff] 0
      %218 = vst [vmem:[%s197 + $0x98] sm:$0xff] 0
      %219 = vst [vmem:[%s197 + $0xa0] sm:$0xff] 0
      %220 = vst [vmem:[%s197 + $0xa8] sm:$0xff] 0
      %221 = vst [vmem:[%s197 + $0xb0] sm:$0xff] 0
      %222 = vst [vmem:[%s197 + $0xb8] sm:$0xff] 0
      %v223 = vld [vmem:[%s1] sm:$0xff]
      %v224 = vld [vmem:[%s1 + $0x8] sm:$0xff]
      %v225 = vld [vmem:[%s2] sm:$0xff]
      %v226 = vld [vmem:[%s2 + $0x8] sm:$0xff]
      %v227 = vld [vmem:[%s3] sm:$0x7]
      %v228 = vld [vmem:[%s192] sm:$0xff]
      %v229 = vld [vmem:[%s192 + $0x8] sm:$0xf]
      %v230 = vld [vmem:[%s192 + $0xc] sm:$0xff]
      %v231 = vld [vmem:[%s192 + $0x14] sm:$0xf]
      %v232 = vunpack.c.l.bf16 %v228
      %v233 = vunpack.c.h.bf16 %v228
      %v234 = vunpack.c.l.bf16 %v229
      %v235 = vunpack.c.l.bf16 %v230
      %v236 = vunpack.c.h.bf16 %v230
      %v237 = vunpack.c.l.bf16 %v231
      %239 = vset.pattern.permute.xlu0 0
      %240 = vperm.xlu0 %239, %v223
      %v241 = vpop.permute.xlu0 %240
      %244 = vset.pattern.permute.xlu0 0
      %245 = vperm.xlu0 %244, %v224
      %v246 = vpop.permute.xlu0 %245
      %v248 = vmul.f32 %v232, %v241
      %v249 = vmul.f32 %v233, %v241
      %v250 = vmul.f32 %v234, %v241
      %v251 = vmul.f32 %v235, %v246
      %v252 = vmul.f32 %v236, %v246
      %v253 = vmul.f32 %v237, %v246
      %255 = vset.pattern.permute.xlu0 0
      %256 = vperm.xlu0 %255, %v225
      %v257 = vpop.permute.xlu0 %256
      %260 = vset.pattern.permute.xlu0 0
      %261 = vperm.xlu0 %260, %v226
      %v262 = vpop.permute.xlu0 %261
      %v264 = vadd.f32 %v248, %v257
      %v265 = vadd.f32 %v249, %v257
      %v266 = vadd.f32 %v250, %v257
      %v267 = vadd.f32 %v251, %v262
      %v268 = vadd.f32 %v252, %v262
      %v269 = vadd.f32 %v253, %v262
      %v270 = vmax.f32 %v264, 0.0
      %v271 = vmax.f32 %v265, 0.0
      %v272 = vmax.f32 %v266, 0.0
      %v273 = vmax.f32 %v267, 0.0
      %v274 = vmax.f32 %v268, 0.0
      %v275 = vmax.f32 %v269, 0.0
      %v277 = vperm.slane %v227, 0
      %v278 = vperm.slane %v227, 1
      %v279 = vperm.slane %v227, 2
      %v283 = vmul.f32 %v270, %v277
      %v284 = vmul.f32 %v271, %v278
      %v285 = vmul.f32 %v272, %v279
      %v286 = vmul.f32 %v273, %v277
      %v287 = vmul.f32 %v274, %v278
      %v288 = vmul.f32 %v275, %v279
      %v289 = vpack.c.bf16 %v284, %v283
      %v290 = vpack.c.bf16 %v285, %v285
      %v291 = vpack.c.bf16 %v287, %v286
      %v292 = vpack.c.bf16 %v288, %v288
      %297 = vrot.lane.b32.xlu0 %v289, 19
      %v298 = vpop.permute.xlu0 %297
      %299 = vrot.lane.b32.xlu0 %v290, 19
      %v300 = vpop.permute.xlu0 %299
      %301 = vrot.lane.b32.xlu0 %v291, 19
      %v302 = vpop.permute.xlu0 %301
      %303 = vrot.lane.b32.xlu0 %v292, 19
      %v304 = vpop.permute.xlu0 %303
      %v305 = vrot.slane %v298, 4
      %v306 = vrot.slane %v300, 4
      %v307 = vrot.slane %v302, 4
      %v308 = vrot.slane %v304, 4
      %vm309 = vcmask 154624
      %v310 = vsel %vm309, %v305, %v298
      %vm311 = vcmask 1043456
      %v312 = vsel %vm311, %v305, %v306
      %v313 = vsel %vm309, %v312, %v300
      %v314 = vsel %vm309, %v307, %v302
      %v315 = vsel %vm311, %v307, %v308
      %v316 = vsel %vm309, %v315, %v304
      %s321 = scalar_lea.vmem %s197, 32
      %vm322 = vcmask 1043608
      %vm323 = vcmask 1047556
      %vm324 = vmor %vm323, %vm322
      %325 = vst.msk [vmem:[%s321] sm:$0xff] %vm324, %v310
      %vm326 = vcmask 1043456
      %vm327 = vcmask 154628
      %vm328 = vmor %vm327, %vm326
      %329 = vst.msk [vmem:[%s321 + $0x8] sm:$0xff] %vm328, %v313
      %330 = vst.msk [vmem:[%s321 + $0x10] sm:$0xff] %vm324, %v314
      %331 = vst.msk [vmem:[%s321 + $0x18] sm:$0xff] %vm328, %v316
      %s332 = scalar_lea.vmem %s192, 24
      %v333 = vld [vmem:[%s332] sm:$0xff]
      %v334 = vld [vmem:[%s332 + $0x8] sm:$0xf]
      %v335 = vld [vmem:[%s332 + $0xc] sm:$0xff]
      %v336 = vld [vmem:[%s332 + $0x14] sm:$0xf]
      %v337 = vunpack.c.l.bf16 %v333
      %v338 = vunpack.c.h.bf16 %v333
      %v339 = vunpack.c.l.bf16 %v334
      %v340 = vunpack.c.l.bf16 %v335
      %v341 = vunpack.c.h.bf16 %v335
      %v342 = vunpack.c.l.bf16 %v336
      %v343 = vmul.f32 %v337, %v241
      %v344 = vmul.f32 %v338, %v241
      %v345 = vmul.f32 %v339, %v241
      %v346 = vmul.f32 %v340, %v246
      %v347 = vmul.f32 %v341, %v246
      %v348 = vmul.f32 %v342, %v246
      %v349 = vadd.f32 %v343, %v257
      %v350 = vadd.f32 %v344, %v257
      %v351 = vadd.f32 %v345, %v257
      %v352 = vadd.f32 %v346, %v262
      %v353 = vadd.f32 %v347, %v262
      %v354 = vadd.f32 %v348, %v262
      %v355 = vmax.f32 %v349, 0.0
      %v356 = vmax.f32 %v350, 0.0
      %v357 = vmax.f32 %v351, 0.0
      %v358 = vmax.f32 %v352, 0.0
      %v359 = vmax.f32 %v353, 0.0
      %v360 = vmax.f32 %v354, 0.0
      %v361 = vmul.f32 %v355, %v277
      %v362 = vmul.f32 %v356, %v278
      %v363 = vmul.f32 %v357, %v279
      %v364 = vmul.f32 %v358, %v277
      %v365 = vmul.f32 %v359, %v278
      %v366 = vmul.f32 %v360, %v279
      %v367 = vpack.c.bf16 %v362, %v361
      %v368 = vpack.c.bf16 %v363, %v363
      %v369 = vpack.c.bf16 %v365, %v364
      %v370 = vpack.c.bf16 %v366, %v366
      %375 = vrot.lane.b32.xlu0 %v367, 19
      %v376 = vpop.permute.xlu0 %375
      %377 = vrot.lane.b32.xlu0 %v368, 19
      %v378 = vpop.permute.xlu0 %377
      %379 = vrot.lane.b32.xlu0 %v369, 19
      %v380 = vpop.permute.xlu0 %379
      %381 = vrot.lane.b32.xlu0 %v370, 19
      %v382 = vpop.permute.xlu0 %381
      %v383 = vrot.slane %v376, 4
      %v384 = vrot.slane %v378, 4
      %v385 = vrot.slane %v380, 4
      %v386 = vrot.slane %v382, 4
      %v387 = vsel %vm309, %v383, %v376
      %v388 = vsel %vm311, %v383, %v384
      %v389 = vsel %vm309, %v388, %v378
      %v390 = vsel %vm309, %v385, %v380
      %v391 = vsel %vm311, %v385, %v386
      %v392 = vsel %vm309, %v391, %v382
      %s397 = scalar_lea.vmem %s197, 64
      %398 = vst.msk [vmem:[%s397] sm:$0xff] %vm324, %v387
      %399 = vst.msk [vmem:[%s397 + $0x8] sm:$0xff] %vm328, %v389
      %400 = vst.msk [vmem:[%s397 + $0x10] sm:$0xff] %vm324, %v390
      %401 = vst.msk [vmem:[%s397 + $0x18] sm:$0xff] %vm328, %v392
      %s402 = scalar_lea.vmem %s192, 48
      %v403 = vld [vmem:[%s402] sm:$0xff]
      %v404 = vld [vmem:[%s402 + $0x8] sm:$0xf]
      %v405 = vld [vmem:[%s402 + $0xc] sm:$0xff]
      %v406 = vld [vmem:[%s402 + $0x14] sm:$0xf]
      %v407 = vunpack.c.l.bf16 %v403
      %v408 = vunpack.c.h.bf16 %v403
      %v409 = vunpack.c.l.bf16 %v404
      %v410 = vunpack.c.l.bf16 %v405
      %v411 = vunpack.c.h.bf16 %v405
      %v412 = vunpack.c.l.bf16 %v406
      %v413 = vmul.f32 %v407, %v241
      %v414 = vmul.f32 %v408, %v241
      %v415 = vmul.f32 %v409, %v241
      %v416 = vmul.f32 %v410, %v246
      %v417 = vmul.f32 %v411, %v246
      %v418 = vmul.f32 %v412, %v246
      %v419 = vadd.f32 %v413, %v257
      %v420 = vadd.f32 %v414, %v257
      %v421 = vadd.f32 %v415, %v257
      %v422 = vadd.f32 %v416, %v262
      %v423 = vadd.f32 %v417, %v262
      %v424 = vadd.f32 %v418, %v262
      %v425 = vmax.f32 %v419, 0.0
      %v426 = vmax.f32 %v420, 0.0
      %v427 = vmax.f32 %v421, 0.0
      %v428 = vmax.f32 %v422, 0.0
      %v429 = vmax.f32 %v423, 0.0
      %v430 = vmax.f32 %v424, 0.0
      %v431 = vmul.f32 %v425, %v277
      %v432 = vmul.f32 %v426, %v278
      %v433 = vmul.f32 %v427, %v279
      %v434 = vmul.f32 %v428, %v277
      %v435 = vmul.f32 %v429, %v278
      %v436 = vmul.f32 %v430, %v279
      %v437 = vpack.c.bf16 %v432, %v431
      %v438 = vpack.c.bf16 %v433, %v433
      %v439 = vpack.c.bf16 %v435, %v434
      %v440 = vpack.c.bf16 %v436, %v436
      %445 = vrot.lane.b32.xlu0 %v437, 19
      %v446 = vpop.permute.xlu0 %445
      %447 = vrot.lane.b32.xlu0 %v438, 19
      %v448 = vpop.permute.xlu0 %447
      %449 = vrot.lane.b32.xlu0 %v439, 19
      %v450 = vpop.permute.xlu0 %449
      %451 = vrot.lane.b32.xlu0 %v440, 19
      %v452 = vpop.permute.xlu0 %451
      %v453 = vrot.slane %v446, 4
      %v454 = vrot.slane %v448, 4
      %v455 = vrot.slane %v450, 4
      %v456 = vrot.slane %v452, 4
      %v457 = vsel %vm309, %v453, %v446
      %v458 = vsel %vm311, %v453, %v454
      %v459 = vsel %vm309, %v458, %v448
      %v460 = vsel %vm309, %v455, %v450
      %v461 = vsel %vm311, %v455, %v456
      %v462 = vsel %vm309, %v461, %v452
      %s467 = scalar_lea.vmem %s197, 96
      %468 = vst.msk [vmem:[%s467] sm:$0xff] %vm324, %v457
      %469 = vst.msk [vmem:[%s467 + $0x8] sm:$0xff] %vm328, %v459
      %470 = vst.msk [vmem:[%s467 + $0x10] sm:$0xff] %vm324, %v460
      %471 = vst.msk [vmem:[%s467 + $0x18] sm:$0xff] %vm328, %v462
      %s472 = scalar_lea.vmem %s192, 72
      %v473 = vld [vmem:[%s472] sm:$0xff]
      %v474 = vld [vmem:[%s472 + $0x8] sm:$0xf]
      %v475 = vld [vmem:[%s472 + $0xc] sm:$0xff]
      %v476 = vld [vmem:[%s472 + $0x14] sm:$0xf]
      %v477 = vunpack.c.l.bf16 %v473
      %v478 = vunpack.c.h.bf16 %v473
      %v479 = vunpack.c.l.bf16 %v474
      %v480 = vunpack.c.l.bf16 %v475
      %v481 = vunpack.c.h.bf16 %v475
      %v482 = vunpack.c.l.bf16 %v476
      %v483 = vmul.f32 %v477, %v241
      %v484 = vmul.f32 %v478, %v241
      %v485 = vmul.f32 %v479, %v241
      %v486 = vmul.f32 %v480, %v246
      %v487 = vmul.f32 %v481, %v246
      %v488 = vmul.f32 %v482, %v246
      %v489 = vadd.f32 %v483, %v257
      %v490 = vadd.f32 %v484, %v257
      %v491 = vadd.f32 %v485, %v257
      %v492 = vadd.f32 %v486, %v262
      %v493 = vadd.f32 %v487, %v262
      %v494 = vadd.f32 %v488, %v262
      %v495 = vmax.f32 %v489, 0.0
      %v496 = vmax.f32 %v490, 0.0
      %v497 = vmax.f32 %v491, 0.0
      %v498 = vmax.f32 %v492, 0.0
      %v499 = vmax.f32 %v493, 0.0
      %v500 = vmax.f32 %v494, 0.0
      %v501 = vmul.f32 %v495, %v277
      %v502 = vmul.f32 %v496, %v278
      %v503 = vmul.f32 %v497, %v279
      %v504 = vmul.f32 %v498, %v277
      %v505 = vmul.f32 %v499, %v278
      %v506 = vmul.f32 %v500, %v279
      %v507 = vpack.c.bf16 %v502, %v501
      %v508 = vpack.c.bf16 %v503, %v503
      %v509 = vpack.c.bf16 %v505, %v504
      %v510 = vpack.c.bf16 %v506, %v506
      %515 = vrot.lane.b32.xlu0 %v507, 19
      %v516 = vpop.permute.xlu0 %515
      %517 = vrot.lane.b32.xlu0 %v508, 19
      %v518 = vpop.permute.xlu0 %517
      %519 = vrot.lane.b32.xlu0 %v509, 19
      %v520 = vpop.permute.xlu0 %519
      %521 = vrot.lane.b32.xlu0 %v510, 19
      %v522 = vpop.permute.xlu0 %521
      %v523 = vrot.slane %v516, 4
      %v524 = vrot.slane %v518, 4
      %v525 = vrot.slane %v520, 4
      %v526 = vrot.slane %v522, 4
      %v527 = vsel %vm309, %v523, %v516
      %v528 = vsel %vm311, %v523, %v524
      %v529 = vsel %vm309, %v528, %v518
      %v530 = vsel %vm309, %v525, %v520
      %v531 = vsel %vm311, %v525, %v526
      %v532 = vsel %vm309, %v531, %v522
      %s537 = scalar_lea.vmem %s197, 128
      %538 = vst.msk [vmem:[%s537] sm:$0xff] %vm324, %v527
      %539 = vst.msk [vmem:[%s537 + $0x8] sm:$0xff] %vm328, %v529
      %540 = vst.msk [vmem:[%s537 + $0x10] sm:$0xff] %vm324, %v530
      %541 = vst.msk [vmem:[%s537 + $0x18] sm:$0xff] %vm328, %v532
      %p542 = scmp.lt.s32.totalorder %s15, 1
      %s543 = scalar_select %p542, %s15, 1
      %s544 = smul.addr %s543, 48
      %s545 = smul.addr %s544, 4
      %s546 = scalar_lea.vmem %s4, %s545
      // Predicated region
      $region37: #{encoder3d_forward.9} parent=35 // pred_check
        %p547 = pneg %p122
      $region38: #{encoder3d_forward.9} parent=35 // pred_check_branch
        %549 = sbr.rel (%p547) target = $region40
      $region39: #{encoder3d_forward.9} parent=35 // pred_region
        _
      $region40: #{encoder3d_forward.9} parent=35 // pred_fallthru
        _
    $region36: #{encoder3d_forward.9} parent=5 // pred_fallthru
      _
    %p550 = scmp.le.s32.totalorder 2, %s10
    // Predicated region
    $region41: #{encoder3d_forward.9} parent=5 // pred_check
      %p551 = pneg %p550
    $region42: #{encoder3d_forward.9} parent=5 // pred_check_branch
      %553 = sbr.rel (%p551) target = $region44
    $region43: #{encoder3d_forward.9} parent=5 // pred_region
      %s554 = ssub.s32 %s10, 2
      // Predicated region
      $region45: #{encoder3d_forward.9} parent=43 // pred_check
        %p555 = pneg %p128
      $region46: #{encoder3d_forward.9} parent=43 // pred_check_branch
        %557 = sbr.rel (%p555) target = $region48
      $region47: #{encoder3d_forward.9} parent=43 // pred_region
        %p558 = scmp.lt.s32.totalorder %s16, 1
        %s559 = scalar_select %p558, %s16, 1
        %s560 = smul.addr %s559, 48
        %s561 = smul.addr %s560, 4
        %s562 = scalar_lea.vmem %s4, %s561
      $region48: #{encoder3d_forward.9} parent=43 // pred_fallthru
        _
    $region44: #{encoder3d_forward.9} parent=5 // pred_fallthru
      _
  $region6: #{encoder3d_forward.9} parent=0 // loop_footer
    %s14 = sadd.s32 1, %s10
  $region7: #{encoder3d_forward.9} parent=0 // loop_footer_branch
    %9 = sbr.rel target = $region3
  $region8: #{encoder3d_forward.9} parent=0 // loop_exit
    _

// kernel: encoder3d_forward.8
$region0: #{encoder3d_forward.8}
  #allocation0 [shape = 'u32[]', space=smem, size = 0x4, offset = 0x4, fixed_abs, tag = 'smem constant byte address 0x4 - core index']
  #allocation1 [shape = 'u32[72,128]{1,0:T(1,128)}', space=vmem, size = 0x9000, scoped, tag = 'internal scratch']
  #allocation2 [shape = 'bf16[864,384]{1,0:T(8,128)(2,1)}', space=vmem, size = 0xa2000, scoped, tag = 'scratch operand']
  %s0 = inlined_call_operand.vmem [shape: bf16[2,6,16,512], index: 0, kind: input, shape index: {}]
  %s1 = inlined_call_operand.vmem [shape: bf16[16,432], index: 1, kind: input, shape index: {}]
  %s2 = inlined_call_operand.vmem [shape: f32[1,384], index: 2, kind: input, shape index: {}]
  %s3 = inlined_call_operand.vmem [shape: bf16[2,4,16,384], index: 3, kind: output, shape index: {0}]
  %s4 = inlined_call_operand.vmem [shape: f32[2,16,2], index: 4, kind: output, shape index: {1}]
  %5 = xla_tuple %s3, %s4
  %s6 = sld [smem:[#allocation0]]
  $region57: #{encoder3d_forward.8} parent=0
    _
  %s8 = ssub.s32 1, %s6
  %s9 = scalar_select 0, %s8, %s6
  loop: start=0, step=1, limit=4
  $region2: #{encoder3d_forward.8} parent=0 // loop_pre_header
    _
  $region3: #{encoder3d_forward.8} parent=0 // loop_header
    %s11 = sphi 0, %s15
    %p12 = scmp.ge.s32.totalorder %s11, 4
    %s18 = sphi 0, %s30
    %s19 = sphi 0, %s26
    %s20 = sphi 0, %s18
    %s21 = sphi 0, %s19
    %s22 = sphi 0, %s20
    %s23 = sphi 0, %s21
    %s33 = sphi 0, %s35
    %s36 = sphi 0, %s33
    %s37 = sphi 0, %s36
    %s53 = sphi 0, %s37
    %s57 = sphi 0, %s57
    %s59 = sphi 0, %s57
    %s60 = sphi 0, %s59
    %s74 = sphi 0, %s60
    %s78 = sphi 0, %s78
    %s80 = sphi 0, %s78
    %s81 = sphi 0, %s80
    %s95 = sphi 0, %s81
    %s103 = sphi 0, %s105
    %s106 = sphi 0, %s103
    %s107 = sphi 0, %s106
    %s123 = sphi 0, %s107
    %s129 = sphi 0, %s131
    %s132 = sphi 0, %s129
    %s133 = sphi 0, %s132
    %s149 = sphi 0, %s133
  $region4: #{encoder3d_forward.8} parent=0 // loop_header_branch
    %14 = sbr.rel (%p12) target = $region8
  $region5: #{encoder3d_forward.8} parent=0 // loop_body
    %s16 = ssub.s32 %s11, 1
    %s17 = ssub.s32 %s11, 2
    %s24 = sadd.s32 1, %s19
    %p25 = scmp.ge.s32.totalorder %s24, 1
    %s26 = scalar_select %p25, 0, %s24
    %s27 = sadd.s32 1, %s18
    %s28 = scalar_select %p25, %s27, %s18
    %p29 = scmp.ge.s32.totalorder %s28, 2
    %s30 = scalar_select %p29, 0, %s28
    %s31 = ssub.s32 %s18, %s30
    %p32 = scmp.eq.s32.totalorder %s31, 0
    %s34 = sadd.s32 %s33, 1
    %s35 = scalar_select %p32, %s33, %s34
    %p38 = pneg %p32
    %p39 = scmp.eq.s32.totalorder %s11, 1
    %p40 = por %p38, %p39
    %p41 = scmp.ne.s32.totalorder %s33, %s36
    %p42 = scmp.eq.s32.totalorder %s11, 0
    %p43 = por %p41, %p42
    %p44 = scmp.ne.s32.totalorder %s33, %s36
    %p45 = scmp.eq.s32.totalorder %s16, 1
    %p46 = por %p44, %p45
    %p47 = scmp.ne.s32.totalorder %s36, %s37
    %p48 = scmp.eq.s32.totalorder %s16, 0
    %p49 = por %p47, %p48
    %p50 = scmp.ne.s32.totalorder %s36, %s37
    %p51 = scmp.eq.s32.totalorder %s17, 1
    %p52 = por %p50, %p51
    %p54 = scmp.ne.s32.totalorder %s37, %s53
    %p55 = scmp.eq.s32.totalorder %s17, 0
    %p56 = por %p54, %p55
    %s58 = sadd.s32 %s57, 1
    %p61 = scmp.eq.s32.totalorder %s11, 1
    %p62 = scmp.ne.s32.totalorder %s57, %s59
    %p63 = scmp.eq.s32.totalorder %s11, 0
    %p64 = por %p62, %p63
    %p65 = scmp.ne.s32.totalorder %s57, %s59
    %p66 = scmp.eq.s32.totalorder %s16, 1
    %p67 = por %p65, %p66
    %p68 = scmp.ne.s32.totalorder %s59, %s60
    %p69 = scmp.eq.s32.totalorder %s16, 0
    %p70 = por %p68, %p69
    %p71 = scmp.ne.s32.totalorder %s59, %s60
    %p72 = scmp.eq.s32.totalorder %s17, 1
    %p73 = por %p71, %p72
    %p75 = scmp.ne.s32.totalorder %s60, %s74
    %p76 = scmp.eq.s32.totalorder %s17, 0
    %p77 = por %p75, %p76
    %s79 = sadd.s32 %s78, 1
    %p82 = scmp.eq.s32.totalorder %s11, 1
    %p83 = scmp.ne.s32.totalorder %s78, %s80
    %p84 = scmp.eq.s32.totalorder %s11, 0
    %p85 = por %p83, %p84
    %p86 = scmp.ne.s32.totalorder %s78, %s80
    %p87 = scmp.eq.s32.totalorder %s16, 1
    %p88 = por %p86, %p87
    %p89 = scmp.ne.s32.totalorder %s80, %s81
    %p90 = scmp.eq.s32.totalorder %s16, 0
    %p91 = por %p89, %p90
    %p92 = scmp.ne.s32.totalorder %s80, %s81
    %p93 = scmp.eq.s32.totalorder %s17, 1
    %p94 = por %p92, %p93
    %p96 = scmp.ne.s32.totalorder %s81, %s95
    %p97 = scmp.eq.s32.totalorder %s17, 0
    %p98 = por %p96, %p97
    %s99 = ssub.s32 %s18, %s30
    %s100 = ssub.s32 %s19, %s26
    %s101 = sor.u32 %s99, %s100
    %p102 = scmp.eq.s32.totalorder %s101, 0
    %s104 = sadd.s32 %s103, 1
    %s105 = scalar_select %p102, %s103, %s104
    %p108 = pneg %p102
    %p109 = scmp.eq.s32.totalorder %s11, 1
    %p110 = por %p108, %p109
    %p111 = scmp.ne.s32.totalorder %s103, %s106
    %p112 = scmp.eq.s32.totalorder %s11, 0
    %p113 = por %p111, %p112
    %p114 = scmp.ne.s32.totalorder %s103, %s106
    %p115 = scmp.eq.s32.totalorder %s16, 1
    %p116 = por %p114, %p115
    %p117 = scmp.ne.s32.totalorder %s106, %s107
    %p118 = scmp.eq.s32.totalorder %s16, 0
    %p119 = por %p117, %p118
    %p120 = scmp.ne.s32.totalorder %s106, %s107
    %p121 = scmp.eq.s32.totalorder %s17, 1
    %p122 = por %p120, %p121
    %p124 = scmp.ne.s32.totalorder %s107, %s123
    %p125 = scmp.eq.s32.totalorder %s17, 0
    %p126 = por %p124, %p125
    %s127 = ssub.s32 %s18, %s30
    %p128 = scmp.eq.s32.totalorder %s127, 0
    %s130 = sadd.s32 %s129, 1
    %s131 = scalar_select %p128, %s129, %s130
    %p134 = pneg %p128
    %p135 = scmp.eq.s32.totalorder %s11, 1
    %p136 = por %p134, %p135
    %p137 = scmp.ne.s32.totalorder %s129, %s132
    %p138 = scmp.eq.s32.totalorder %s11, 0
    %p139 = por %p137, %p138
    %p140 = scmp.ne.s32.totalorder %s129, %s132
    %p141 = scmp.eq.s32.totalorder %s16, 1
    %p142 = por %p140, %p141
    %p143 = scmp.ne.s32.totalorder %s132, %s133
    %p144 = scmp.eq.s32.totalorder %s16, 0
    %p145 = por %p143, %p144
    %p146 = scmp.ne.s32.totalorder %s132, %s133
    %p147 = scmp.eq.s32.totalorder %s17, 1
    %p148 = por %p146, %p147
    %p150 = scmp.ne.s32.totalorder %s133, %s149
    %p151 = scmp.eq.s32.totalorder %s17, 0
    %p152 = por %p150, %p151
    %p153 = scmp.le.s32.totalorder 1, %s11
    %p154 = scmp.lt.s32.totalorder %s11, 3
    %p155 = pnand %p153, %p154
    %p156 = pneg %p155
    // Predicated region
    $region9: #{encoder3d_forward.8} parent=5 // pred_check
      _
    $region10: #{encoder3d_forward.8} parent=5 // pred_check_branch
      %158 = sbr.rel (%p155) target = $region12
    $region11: #{encoder3d_forward.8} parent=5 // pred_region
      %s159 = ssub.s32 %s11, 1
      // Predicated region
      $region13: #{encoder3d_forward.8} parent=11 // pred_check
        %p160 = pneg %p70
      $region14: #{encoder3d_forward.8} parent=11 // pred_check_branch
        %162 = sbr.rel (%p160) target = $region16
      $region15: #{encoder3d_forward.8} parent=11 // pred_region
        _
      $region16: #{encoder3d_forward.8} parent=11 // pred_fallthru
        _
      // Predicated region
      $region17: #{encoder3d_forward.8} parent=11 // pred_check
        %p163 = pneg %p91
      $region18: #{encoder3d_forward.8} parent=11 // pred_check_branch
        %165 = sbr.rel (%p163) target = $region20
      $region19: #{encoder3d_forward.8} parent=11 // pred_region
        _
      $region20: #{encoder3d_forward.8} parent=11 // pred_fallthru
        _
    $region12: #{encoder3d_forward.8} parent=5 // pred_fallthru
      _
    %p166 = scmp.lt.s32.totalorder %s11, 2
    // Predicated region
    $region21: #{encoder3d_forward.8} parent=5 // pred_check
      %p167 = pneg %p166
    $region22: #{encoder3d_forward.8} parent=5 // pred_check_branch
      %169 = sbr.rel (%p167) target = $region24
    $region23: #{encoder3d_forward.8} parent=5 // pred_region
      // Predicated region
      $region25: #{encoder3d_forward.8} parent=23 // pred_check
        %p170 = pneg %p43
      $region26: #{encoder3d_forward.8} parent=23 // pred_check_branch
        %172 = sbr.rel (%p170) target = $region28
      $region27: #{encoder3d_forward.8} parent=23 // pred_region
        %p173 = scmp.lt.s32.totalorder %s18, 1
        %s174 = scalar_select %p173, %s18, 1
        %s175 = smul.addr %s174, 48
        %s176 = smul.addr %s175, 4
        %s177 = scalar_lea.vmem %s0, %s176
      $region28: #{encoder3d_forward.8} parent=23 // pred_fallthru
        _
    $region24: #{encoder3d_forward.8} parent=5 // pred_fallthru
      _
    %p178 = scmp.le.s32.totalorder 1, %s11
    %p179 = scmp.lt.s32.totalorder %s11, 3
    %p180 = pnand %p178, %p179
    %p181 = pneg %p180
    // Predicated region
    $region29: #{encoder3d_forward.8} parent=5 // pred_check
      _
    $region30: #{encoder3d_forward.8} parent=5 // pred_check_branch
      %183 = sbr.rel (%p180) target = $region32
    $region31: #{encoder3d_forward.8} parent=5 // pred_region
      %s184 = ssub.s32 %s11, 1
      %p185 = scmp.lt.s32.totalorder %s20, 1
      %s186 = scalar_select %p185, %s20, 1
      %s187 = smul.addr %s186, 48
      %s188 = smul.addr %s187, 4
      %s189 = scalar_lea.vmem %s0, %s188
      %p190 = pneg %p49
      %p191 = pneg %p46
      %p192 = pneg %p70
      %p193 = pneg %p67
      %p194 = pneg %p91
      %p195 = pneg %p88
      %p196 = pneg %p119
      %p197 = pneg %p116
      %s198 = smul.u32 4, %s21
      %p199 = scmp.lt.s32.totalorder %s20, 1
      %s200 = scalar_select %p199, %s20, 1
      %p201 = scmp.lt.s32.totalorder %s198, 3
      %s202 = scalar_select %p201, %s198, 3
      %s203 = smul.addr %s202, 6
      %s204 = smul.addr %s200, 24
      %s205 = sadd.s32 %s203, %s204
      %s206 = smul.addr %s205, 4
      %s207 = scalar_lea.vmem %s3, %s206
      %p208 = pneg %p145
      %p209 = pneg %p142
      %p210 = scmp.lt.s32.totalorder %s20, 1
      %s211 = scalar_select %p210, %s20, 1
      %s212 = smul.addr %s211, 2
      %s213 = smul.addr %s212, 8
      %s214 = scalar_lea.vmem %s4, %s213
      %p215 = scmp.lt.s32.totalorder %s20, 1
      %s216 = scalar_select %p215, %s20, 1
      %s217 = smul.addr %s216, 48
      %s218 = smul.addr %s217, 4
      %s219 = scalar_lea.vmem %s0, %s218
      %s220 = smul.u32 4, %s21
      %p221 = scmp.lt.s32.totalorder %s20, 1
      %s222 = scalar_select %p221, %s20, 1
      %p223 = scmp.lt.s32.totalorder %s220, 3
      %s224 = scalar_select %p223, %s220, 3
      %s225 = smul.addr %s224, 6
      %s226 = smul.addr %s222, 24
      %s227 = sadd.s32 %s225, %s226
      %s228 = smul.addr %s227, 4
      %s229 = scalar_lea.vmem %s3, %s228
      %s230 = smul.u32 4, %s21
      %p231 = scmp.lt.s32.totalorder %s20, 1
      %s232 = scalar_select %p231, %s20, 1
      %s233 = smul.addr %s232, 2
      %s234 = smul.addr %s233, 8
      %s235 = scalar_lea.vmem %s4, %s234
      %s237 = smul.u32 %s21, 4
      %s238 = smul.u32 %s237, 8
      %s239 = smul.addr %s238, 4
      %s240 = scalar_lea.vmem %s219, %s239
      %v241 = vld [vmem:[%s240] sm:$0xff]
      %v242 = vld [vmem:[%s240 + $0x8] sm:$0xff]
      %v243 = vld [vmem:[%s240 + $0x10] sm:$0xff]
      %v244 = vld [vmem:[%s240 + $0x18] sm:$0xff]
      %245 = vst [vmem:[#allocation2] sm:$0xff] %v241
      %246 = vst [vmem:[#allocation2 + $0x8] sm:$0xf] %v242
      %247 = vst [vmem:[#allocation2 + $0xc] sm:$0xff] %v243
      %248 = vst [vmem:[#allocation2 + $0x14] sm:$0xf] %v244
      %253 = vrot.lane.b32.xlu0 %v241, 127
      %v254 = vpop.permute.xlu0 %253
      %255 = vrot.lane.b32.xlu0 %v242, 127
      %v256 = vpop.permute.xlu0 %255
      %257 = vrot.lane.b32.xlu0 %v243, 127
      %v258 = vpop.permute.xlu0 %257
      %259 = vrot.lane.b32.xlu0 %v244, 127
      %v260 = vpop.permute.xlu0 %259
      %v261 = vrot.slane %v254, 4
      %v262 = vrot.slane %v256, 4
      %v263 = vrot.slane %v258, 4
      %v264 = vrot.slane %v260, 4
      %vm265 = vcmask 1043456
      %v266 = vsel %vm265, %v261, %v262
      %vm267 = vcmask 1039360
      %v268 = vsel %vm267, %v254, %v266
      %v269 = vsel %vm267, %v256, %v262
      %v270 = vsel %vm265, %v263, %v264
      %v271 = vsel %vm267, %v258, %v270
      %v272 = vsel %vm267, %v260, %v264
      %277 = vst [vmem:[#allocation2 + $0x18] sm:$0xff] %v268
      %278 = vst [vmem:[#allocation2 + $0x20] sm:$0xf] %v269
      %279 = vst [vmem:[#allocation2 + $0x24] sm:$0xff] %v271
      %280 = vst [vmem:[#allocation2 + $0x2c] sm:$0xf] %v272
      %281 = vrot.lane.b32.xlu0 %v241, 126
      %v282 = vpop.permute.xlu0 %281
      %283 = vrot.lane.b32.xlu0 %v242, 126
      %v284 = vpop.permute.xlu0 %283
      %285 = vrot.lane.b32.xlu0 %v243, 126
      %v286 = vpop.permute.xlu0 %285
      %287 = vrot.lane.b32.xlu0 %v244, 126
      %v288 = vpop.permute.xlu0 %287
      %v289 = vrot.slane %v282, 4
      %v290 = vrot.slane %v284, 4
      %v291 = vrot.slane %v286, 4
      %v292 = vrot.slane %v288, 4
      %v293 = vsel %vm265, %v289, %v290
      %vm294 = vcmask 1031168
      %v295 = vsel %vm294, %v282, %v293
      %v296 = vsel %vm294, %v284, %v290
      %v297 = vsel %vm265, %v291, %v292
      %v298 = vsel %vm294, %v286, %v297
      %v299 = vsel %vm294, %v288, %v292
      %304 = vst [vmem:[#allocation2 + $0x30] sm:$0xff] %v295
      %305 = vst [vmem:[#allocation2 + $0x38] sm:$0xf] %v296
      %306 = vst [vmem:[#allocation2 + $0x3c] sm:$0xff] %v298
      %307 = vst [vmem:[#allocation2 + $0x44] sm:$0xf] %v299
      %308 = vrot.lane.b32.xlu0 %v241, 110
      %v309 = vpop.permute.xlu0 %308
      %310 = vrot.lane.b32.xlu0 %v242, 110
      %v311 = vpop.permute.xlu0 %310
      %312 = vrot.lane.b32.xlu0 %v243, 110
      %v313 = vpop.permute.xlu0 %312
      %314 = vrot.lane.b32.xlu0 %v244, 110
      %v315 = vpop.permute.xlu0 %314
      %v316 = vrot.slane %v309, 4
      %v317 = vrot.slane %v311, 4
      %v318 = vrot.slane %v313, 4
      %v319 = vrot.slane %v315, 4
      %v320 = vsel %vm265, %v316, %v317
      %vm321 = vcmask 900096
      %v322 = vsel %vm321, %v309, %v320
      %v323 = vsel %vm321, %v311, %v317
      %v324 = vsel %vm265, %v318, %v319
      %v325 = vsel %vm321, %v313, %v324
      %v326 = vsel %vm321, %v315, %v319
      %331 = vst [vmem:[#allocation2 + $0x48] sm:$0xff] %v322
      %332 = vst [vmem:[#allocation2 + $0x50] sm:$0xf] %v323
      %333 = vst [vmem:[#allocation2 + $0x54] sm:$0xff] %v325
      %334 = vst [vmem:[#allocation2 + $0x5c] sm:$0xf] %v326
      %335 = vrot.lane.b32.xlu0 %v241, 109
      %v336 = vpop.permute.xlu0 %335
      %337 = vrot.lane.b32.xlu0 %v242, 109
      %v338 = vpop.permute.xlu0 %337
      %339 = vrot.lane.b32.xlu0 %v243, 109
      %v340 = vpop.permute.xlu0 %339
      %341 = vrot.lane.b32.xlu0 %v244, 109
      %v342 = vpop.permute.xlu0 %341
      %v343 = vrot.slane %v336, 4
      %v344 = vrot.slane %v338, 4
      %v345 = vrot.slane %v340, 4
      %v346 = vrot.slane %v342, 4
      %v347 = vsel %vm265, %v343, %v344
      %vm348 = vcmask 891904
      %v349 = vsel %vm348, %v336, %v347
      %v350 = vsel %vm348, %v338, %v344
      %v351 = vsel %vm265, %v345, %v346
      %v352 = vsel %vm348, %v340, %v351
      %v353 = vsel %vm348, %v342, %v346
      %358 = vst [vmem:[#allocation2 + $0x60] sm:$0xff] %v349
      %359 = vst [vmem:[#allocation2 + $0x68] sm:$0xf] %v350
      %360 = vst [vmem:[#allocation2 + $0x6c] sm:$0xff] %v352
      %361 = vst [vmem:[#allocation2 + $0x74] sm:$0xf] %v353
      %362 = vrot.lane.b32.xlu0 %v241, 108
      %v363 = vpop.permute.xlu0 %362
      %364 = vrot.lane.b32.xlu0 %v242, 108
      %v365 = vpop.permute.xlu0 %364
      %366 = vrot.lane.b32.xlu0 %v243, 108
      %v367 = vpop.permute.xlu0 %366
      %368 = vrot.lane.b32.xlu0 %v244, 108
      %v369 = vpop.permute.xlu0 %368
      %v370 = vrot.slane %v363, 4
      %v371 = vrot.slane %v365, 4
      %v372 = vrot.slane %v367, 4
      %v373 = vrot.slane %v369, 4
      %v374 = vsel %vm265, %v370, %v371
      %vm375 = vcmask 883712
      %v376 = vsel %vm375, %v363, %v374
      %v377 = vsel %vm375, %v365, %v371
      %v378 = vsel %vm265, %v372, %v373
      %v379 = vsel %vm375, %v367, %v378
      %v380 = vsel %vm375, %v369, %v373
      %385 = vst [vmem:[#allocation2 + $0x78] sm:$0xff] %v376
      %386 = vst [vmem:[#allocation2 + $0x80] sm:$0xf] %v377
      %387 = vst [vmem:[#allocation2 + $0x84] sm:$0xff] %v379
      %388 = vst [vmem:[#allocation2 + $0x8c] sm:$0xf] %v380
      %389 = vrot.lane.b32.xlu0 %v241, 92
      %v390 = vpop.permute.xlu0 %389
      %391 = vrot.lane.b32.xlu0 %v242, 92
      %v392 = vpop.permute.xlu0 %391
      %393 = vrot.lane.b32.xlu0 %v243, 92
      %v394 = vpop.permute.xlu0 %393
      %395 = vrot.lane.b32.xlu0 %v244, 92
      %v396 = vpop.permute.xlu0 %395
      %v397 = vrot.slane %v390, 4
      %v398 = vrot.slane %v392, 4
      %v399 = vrot.slane %v394, 4
      %v400 = vrot.slane %v396, 4
      %v401 = vsel %vm265, %v397, %v398
      %vm402 = vcmask 752640
      %v403 = vsel %vm402, %v390, %v401
      %v404 = vsel %vm402, %v392, %v398
      %v405 = vsel %vm265, %v399, %v400
      %v406 = vsel %vm402, %v394, %v405
      %v407 = vsel %vm402, %v396, %v400
      %412 = vst [vmem:[#allocation2 + $0x90] sm:$0xff] %v403
      %413 = vst [vmem:[#allocation2 + $0x98] sm:$0xf] %v404
      %414 = vst [vmem:[#allocation2 + $0x9c] sm:$0xff] %v406
      %415 = vst [vmem:[#allocation2 + $0xa4] sm:$0xf] %v407
      %416 = vrot.lane.b32.xlu0 %v241, 91
      %v417 = vpop.permute.xlu0 %416
      %418 = vrot.lane.b32.xlu0 %v242, 91
      %v419 = vpop.permute.xlu0 %418
      %420 = vrot.lane.b32.xlu0 %v243, 91
      %v421 = vpop.permute.xlu0 %420
      %422 = vrot.lane.b32.xlu0 %v244, 91
      %v423 = vpop.permute.xlu0 %422
      %v424 = vrot.slane %v417, 4
      %v425 = vrot.slane %v419, 4
      %v426 = vrot.slane %v421, 4
      %v427 = vrot.slane %v423, 4
      %v428 = vsel %vm265, %v424, %v425
      %vm429 = vcmask 744448
      %v430 = vsel %vm429, %v417, %v428
      %v431 = vsel %vm429, %v419, %v425
      %v432 = vsel %vm265, %v426, %v427
      %v433 = vsel %vm429, %v421, %v432
      %v434 = vsel %vm429, %v423, %v427
      %439 = vst [vmem:[#allocation2 + $0xa8] sm:$0xff] %v430
      %440 = vst [vmem:[#allocation2 + $0xb0] sm:$0xf] %v431
      %441 = vst [vmem:[#allocation2 + $0xb4] sm:$0xff] %v433
      %442 = vst [vmem:[#allocation2 + $0xbc] sm:$0xf] %v434
      %443 = vrot.lane.b32.xlu0 %v241, 90
      %v444 = vpop.permute.xlu0 %443
      %445 = vrot.lane.b32.xlu0 %v242, 90
      %v446 = vpop.permute.xlu0 %445
      %447 = vrot.lane.b32.xlu0 %v243, 90
      %v448 = vpop.permute.xlu0 %447
      %449 = vrot.lane.b32.xlu0 %v244, 90
      %v450 = vpop.permute.xlu0 %449
      %v451 = vrot.slane %v444, 4
      %v452 = vrot.slane %v446, 4
      %v453 = vrot.slane %v448, 4
      %v454 = vrot.slane %v450, 4
      %v455 = vsel %vm265, %v451, %v452
      %vm456 = vcmask 736256
      %v457 = vsel %vm456, %v444, %v455
      %v458 = vsel %vm456, %v446, %v452
      %v459 = vsel %vm265, %v453, %v454
      %v460 = vsel %vm456, %v448, %v459
      %v461 = vsel %vm456, %v450, %v454
      %466 = vst [vmem:[#allocation2 + $0xc0] sm:$0xff] %v457
      %467 = vst [vmem:[#allocation2 + $0xc8] sm:$0xf] %v458
      %468 = vst [vmem:[#allocation2 + $0xcc] sm:$0xff] %v460
      %469 = vst [vmem:[#allocation2 + $0xd4] sm:$0xf] %v461
      %s470 = sadd.s32 %s237, 1
      %s471 = smul.u32 %s470, 8
      %s472 = smul.addr %s471, 4
      %s473 = scalar_lea.vmem %s219, %s472
      %v474 = vld [vmem:[%s473] sm:$0xff]
      %v475 = vld [vmem:[%s473 + $0x8] sm:$0xff]
      %v476 = vld [vmem:[%s473 + $0x10] sm:$0xff]
      %v477 = vld [vmem:[%s473 + $0x18] sm:$0xff]
      %478 = vst [vmem:[#allocation2 + $0xd8] sm:$0xff] %v474
      %479 = vst [vmem:[#allocation2 + $0xe0] sm:$0xf] %v475
      %480 = vst [vmem:[#allocation2 + $0xe4] sm:$0xff] %v476
      %481 = vst [vmem:[#allocation2 + $0xec] sm:$0xf] %v477
      %486 = vrot.lane.b32.xlu0 %v474, 127
      %v487 = vpop.permute.xlu0 %486
      %488 = vrot.lane.b32.xlu0 %v475, 127
      %v489 = vpop.permute.xlu0 %488
      %490 = vrot.lane.b32.xlu0 %v476, 127
      %v491 = vpop.permute.xlu0 %490
      %492 = vrot.lane.b32.xlu0 %v477, 127
      %v493 = vpop.permute.xlu0 %492
      %v494 = vrot.slane %v487, 4
      %v495 = vrot.slane %v489, 4
      %v496 = vrot.slane %v491, 4
      %v497 = vrot.slane %v493, 4
      %v498 = vsel %vm265, %v494, %v495
      %v499 = vsel %vm267, %v487, %v498
      %v500 = vsel %vm267, %v489, %v495
      %v501 = vsel %vm265, %v496, %v497
      %v502 = vsel %vm267, %v491, %v501
      %v503 = vsel %vm267, %v493, %v497
      %508 = vst [vmem:[#allocation2 + $0xf0] sm:$0xff] %v499
      %509 = vst [vmem:[#allocation2 + $0xf8] sm:$0xf] %v500
      %510 = vst [vmem:[#allocation2 + $0xfc] sm:$0xff] %v502
      %511 = vst [vmem:[#allocation2 + $0x104] sm:$0xf] %v503
      %512 = vrot.lane.b32.xlu0 %v474, 126
      %v513 = vpop.permute.xlu0 %512
      %514 = vrot.lane.b32.xlu0 %v475, 126
      %v515 = vpop.permute.xlu0 %514
      %516 = vrot.lane.b32.xlu0 %v476, 126
      %v517 = vpop.permute.xlu0 %516
      %518 = vrot.lane.b32.xlu0 %v477, 126
      %v519 = vpop.permute.xlu0 %518
      %v520 = vrot.slane %v513, 4
      %v521 = vrot.slane %v515, 4
      %v522 = vrot.slane %v517, 4
      %v523 = vrot.slane %v519, 4
      %v524 = vsel %vm265, %v520, %v521
      %v525 = vsel %vm294, %v513, %v524
      %v526 = vsel %vm294, %v515, %v521
      %v527 = vsel %vm265, %v522, %v523
      %v528 = vsel %vm294, %v517, %v527
      %v529 = vsel %vm294, %v519, %v523
      %534 = vst [vmem:[#allocation2 + $0x108] sm:$0xff] %v525
      %535 = vst [vmem:[#allocation2 + $0x110] sm:$0xf] %v526
      %536 = vst [vmem:[#allocation2 + $0x114] sm:$0xff] %v528
      %537 = vst [vmem:[#allocation2 + $0x11c] sm:$0xf] %v529
      %538 = vrot.lane.b32.xlu0 %v474, 110
      %v539 = vpop.permute.xlu0 %538
      %540 = vrot.lane.b32.xlu0 %v475, 110
      %v541 = vpop.permute.xlu0 %540
      %542 = vrot.lane.b32.xlu0 %v476, 110
      %v543 = vpop.permute.xlu0 %542
      %544 = vrot.lane.b32.xlu0 %v477, 110
      %v545 = vpop.permute.xlu0 %544
      %v546 = vrot.slane %v539, 4
      %v547 = vrot.slane %v541, 4
      %v548 = vrot.slane %v543, 4
      %v549 = vrot.slane %v545, 4
      %v550 = vsel %vm265, %v546, %v547
      %v551 = vsel %vm321, %v539, %v550
      %v552 = vsel %vm321, %v541, %v547
      %v553 = vsel %vm265, %v548, %v549
      %v554 = vsel %vm321, %v543, %v553
      %v555 = vsel %vm321, %v545, %v549
      %560 = vst [vmem:[#allocation2 + $0x120] sm:$0xff] %v551
      %561 = vst [vmem:[#allocation2 + $0x128] sm:$0xf] %v552
      %562 = vst [vmem:[#allocation2 + $0x12c] sm:$0xff] %v554
      %563 = vst [vmem:[#allocation2 + $0x134] sm:$0xf] %v555
      %564 = vrot.lane.b32.xlu0 %v474, 109
      %v565 = vpop.permute.xlu0 %564
      %566 = vrot.lane.b32.xlu0 %v475, 109
      %v567 = vpop.permute.xlu0 %566
      %568 = vrot.lane.b32.xlu0 %v476, 109
      %v569 = vpop.permute.xlu0 %568
      %570 = vrot.lane.b32.xlu0 %v477, 109
      %v571 = vpop.permute.xlu0 %570
      %v572 = vrot.slane %v565, 4
      %v573 = vrot.slane %v567, 4
      %v574 = vrot.slane %v569, 4
      %v575 = vrot.slane %v571, 4
      %v576 = vsel %vm265, %v572, %v573
      %v577 = vsel %vm348, %v565, %v576
      %v578 = vsel %vm348, %v567, %v573
      %v579 = vsel %vm265, %v574, %v575
      %v580 = vsel %vm348, %v569, %v579
      %v581 = vsel %vm348, %v571, %v575
      %586 = vst [vmem:[#allocation2 + $0x138] sm:$0xff] %v577
      %587 = vst [vmem:[#allocation2 + $0x140] sm:$0xf] %v578
      %588 = vst [vmem:[#allocation2 + $0x144] sm:$0xff] %v580
      %589 = vst [vmem:[#allocation2 + $0x14c] sm:$0xf] %v581
      %590 = vrot.lane.b32.xlu0 %v474, 108
      %v591 = vpop.permute.xlu0 %590
      %592 = vrot.lane.b32.xlu0 %v475, 108
      %v593 = vpop.permute.xlu0 %592
      %594 = vrot.lane.b32.xlu0 %v476, 108
      %v595 = vpop.permute.xlu0 %594
      %596 = vrot.lane.b32.xlu0 %v477, 108
      %v597 = vpop.permute.xlu0 %596
      %v598 = vrot.slane %v591, 4
      %v599 = vrot.slane %v593, 4
      %v600 = vrot.slane %v595, 4
      %v601 = vrot.slane %v597, 4
      %v602 = vsel %vm265, %v598, %v599
      %v603 = vsel %vm375, %v591, %v602
      %v604 = vsel %vm375, %v593, %v599
      %v605 = vsel %vm265, %v600, %v601
      %v606 = vsel %vm375, %v595, %v605
      %v607 = vsel %vm375, %v597, %v601
      %612 = vst [vmem:[#allocation2 + $0x150] sm:$0xff] %v603
      %613 = vst [vmem:[#allocation2 + $0x158] sm:$0xf] %v604
      %614 = vst [vmem:[#allocation2 + $0x15c] sm:$0xff] %v606
      %615 = vst [vmem:[#allocation2 + $0x164] sm:$0xf] %v607
      %616 = vrot.lane.b32.xlu0 %v474, 92
      %v617 = vpop.permute.xlu0 %616
      %618 = vrot.lane.b32.xlu0 %v475, 92
      %v619 = vpop.permute.xlu0 %618
      %620 = vrot.lane.b32.xlu0 %v476, 92
      %v621 = vpop.permute.xlu0 %620
      %622 = vrot.lane.b32.xlu0 %v477, 92
      %v623 = vpop.permute.xlu0 %622
      %v624 = vrot.slane %v617, 4
      %v625 = vrot.slane %v619, 4
      %v626 = vrot.slane %v621, 4
      %v627 = vrot.slane %v623, 4
      %v628 = vsel %vm265, %v624, %v625
      %v629 = vsel %vm402, %v617, %v628
      %v630 = vsel %vm402, %v619, %v625
      %v631 = vsel %vm265, %v626, %v627
      %v632 = vsel %vm402, %v621, %v631
      %v633 = vsel %vm402, %v623, %v627
      %638 = vst [vmem:[#allocation2 + $0x168] sm:$0xff] %v629
      %639 = vst [vmem:[#allocation2 + $0x170] sm:$0xf] %v630
      %640 = vst [vmem:[#allocation2 + $0x174] sm:$0xff] %v632
      %641 = vst [vmem:[#allocation2 + $0x17c] sm:$0xf] %v633
      %642 = vrot.lane.b32.xlu0 %v474, 91
      %v643 = vpop.permute.xlu0 %642
      %644 = vrot.lane.b32.xlu0 %v475, 91
      %v645 = vpop.permute.xlu0 %644
      %646 = vrot.lane.b32.xlu0 %v476, 91
      %v647 = vpop.permute.xlu0 %646
      %648 = vrot.lane.b32.xlu0 %v477, 91
      %v649 = vpop.permute.xlu0 %648
      %v650 = vrot.slane %v643, 4
      %v651 = vrot.slane %v645, 4
      %v652 = vrot.slane %v647, 4
      %v653 = vrot.slane %v649, 4
      %v654 = vsel %vm265, %v650, %v651
      %v655 = vsel %vm429, %v643, %v654
      %v656 = vsel %vm429, %v645, %v651
      %v657 = vsel %vm265, %v652, %v653
      %v658 = vsel %vm429, %v647, %v657
      %v659 = vsel %vm429, %v649, %v653
      %664 = vst [vmem:[#allocation2 + $0x180] sm:$0xff] %v655
      %665 = vst [vmem:[#allocation2 + $0x188] sm:$0xf] %v656
      %666 = vst [vmem:[#allocation2 + $0x18c] sm:$0xff] %v658
      %667 = vst [vmem:[#allocation2 + $0x194] sm:$0xf] %v659
      %668 = vrot.lane.b32.xlu0 %v474, 90
      %v669 = vpop.permute.xlu0 %668
      %670 = vrot.lane.b32.xlu0 %v475, 90
      %v671 = vpop.permute.xlu0 %670
      %672 = vrot.lane.b32.xlu0 %v476, 90
      %v673 = vpop.permute.xlu0 %672
      %674 = vrot.lane.b32.xlu0 %v477, 90
      %v675 = vpop.permute.xlu0 %674
      %v676 = vrot.slane %v669, 4
      %v677 = vrot.slane %v671, 4
      %v678 = vrot.slane %v673, 4
      %v679 = vrot.slane %v675, 4
      %v680 = vsel %vm265, %v676, %v677
      %v681 = vsel %vm456, %v669, %v680
      %v682 = vsel %vm456, %v671, %v677
      %v683 = vsel %vm265, %v678, %v679
      %v684 = vsel %vm456, %v673, %v683
      %v685 = vsel %vm456, %v675, %v679
      %690 = vst [vmem:[#allocation2 + $0x198] sm:$0xff] %v681
      %691 = vst [vmem:[#allocation2 + $0x1a0] sm:$0xf] %v682
      %692 = vst [vmem:[#allocation2 + $0x1a4] sm:$0xff] %v684
      %693 = vst [vmem:[#allocation2 + $0x1ac] sm:$0xf] %v685
      %s694 = sadd.s32 %s237, 2
      %s695 = smul.u32 %s694, 8
      %s696 = smul.addr %s695, 4
      %s697 = scalar_lea.vmem %s219, %s696
      %v698 = vld [vmem:[%s697] sm:$0xff]
      %v699 = vld [vmem:[%s697 + $0x8] sm:$0xff]
      %v700 = vld [vmem:[%s697 + $0x10] sm:$0xff]
      %v701 = vld [vmem:[%s697 + $0x18] sm:$0xff]
      %702 = vst [vmem:[#allocation2 + $0x1b0] sm:$0xff] %v698
      %703 = vst [vmem:[#allocation2 + $0x1b8] sm:$0xf] %v699
      %704 = vst [vmem:[#allocation2 + $0x1bc] sm:$0xff] %v700
      %705 = vst [vmem:[#allocation2 + $0x1c4] sm:$0xf] %v701
      %710 = vrot.lane.b32.xlu0 %v698, 127
      %v711 = vpop.permute.xlu0 %710
      %712 = vrot.lane.b32.xlu0 %v699, 127
      %v713 = vpop.permute.xlu0 %712
      %714 = vrot.lane.b32.xlu0 %v700, 127
      %v715 = vpop.permute.xlu0 %714
      %716 = vrot.lane.b32.xlu0 %v701, 127
      %v717 = vpop.permute.xlu0 %716
      %v718 = vrot.slane %v711, 4
      %v719 = vrot.slane %v713, 4
      %v720 = vrot.slane %v715, 4
      %v721 = vrot.slane %v717, 4
      %v722 = vsel %vm265, %v718, %v719
      %v723 = vsel %vm267, %v711, %v722
      %v724 = vsel %vm267, %v713, %v719
      %v725 = vsel %vm265, %v720, %v721
      %v726 = vsel %vm267, %v715, %v725
      %v727 = vsel %vm267, %v717, %v721
      %732 = vst [vmem:[#allocation2 + $0x1c8] sm:$0xff] %v723
      %733 = vst [vmem:[#allocation2 + $0x1d0] sm:$0xf] %v724
      %734 = vst [vmem:[#allocation2 + $0x1d4] sm:$0xff] %v726
      %735 = vst [vmem:[#allocation2 + $0x1dc] sm:$0xf] %v727
      %736 = vrot.lane.b32.xlu0 %v698, 126
      %v737 = vpop.permute.xlu0 %736
      %738 = vrot.lane.b32.xlu0 %v699, 126
      %v739 = vpop.permute.xlu0 %738
      %740 = vrot.lane.b32.xlu0 %v700, 126
      %v741 = vpop.permute.xlu0 %740
      %742 = vrot.lane.b32.xlu0 %v701, 126
      %v743 = vpop.permute.xlu0 %742
      %v744 = vrot.slane %v737, 4
      %v745 = vrot.slane %v739, 4
      %v746 = vrot.slane %v741, 4
      %v747 = vrot.slane %v743, 4
      %v748 = vsel %vm265, %v744, %v745
      %v749 = vsel %vm294, %v737, %v748
      %v750 = vsel %vm294, %v739, %v745
      %v751 = vsel %vm265, %v746, %v747
      %v752 = vsel %vm294, %v741, %v751
      %v753 = vsel %vm294, %v743, %v747
      %758 = vst [vmem:[#allocation2 + $0x1e0] sm:$0xff] %v749
      %759 = vst [vmem:[#allocation2 + $0x1e8] sm:$0xf] %v750
      %760 = vst [vmem:[#allocation2 + $0x1ec] sm:$0xff] %v752
      %761 = vst [vmem:[#allocation2 + $0x1f4] sm:$0xf] %v753
      %762 = vrot.lane.b32.xlu0 %v698, 110
      %v763 = vpop.permute.xlu0 %762
      %764 = vrot.lane.b32.xlu0 %v699, 110
      %v765 = vpop.permute.xlu0 %764
      %766 = vrot.lane.b32.xlu0 %v700, 110
      %v767 = vpop.permute.xlu0 %766
      %768 = vrot.lane.b32.xlu0 %v701, 110
      %v769 = vpop.permute.xlu0 %768
      %v770 = vrot.slane %v763, 4
      %v771 = vrot.slane %v765, 4
      %v772 = vrot.slane %v767, 4
      %v773 = vrot.slane %v769, 4
      %v774 = vsel %vm265, %v770, %v771
      %v775 = vsel %vm321, %v763, %v774
      %v776 = vsel %vm321, %v765, %v771
      %v777 = vsel %vm265, %v772, %v773
      %v778 = vsel %vm321, %v767, %v777
      %v779 = vsel %vm321, %v769, %v773
      %784 = vst [vmem:[#allocation2 + $0x1f8] sm:$0xff] %v775
      %785 = vst [vmem:[#allocation2 + $0x200] sm:$0xf] %v776
      %786 = vst [vmem:[#allocation2 + $0x204] sm:$0xff] %v778
      %787 = vst [vmem:[#allocation2 + $0x20c] sm:$0xf] %v779
      %788 = vrot.lane.b32.xlu0 %v698, 109
      %v789 = vpop.permute.xlu0 %788
      %790 = vrot.lane.b32.xlu0 %v699, 109
      %v791 = vpop.permute.xlu0 %790
      %792 = vrot.lane.b32.xlu0 %v700, 109
      %v793 = vpop.permute.xlu0 %792
      %794 = vrot.lane.b32.xlu0 %v701, 109
      %v795 = vpop.permute.xlu0 %794
      %v796 = vrot.slane %v789, 4
      %v797 = vrot.slane %v791, 4
      %v798 = vrot.slane %v793, 4
      %v799 = vrot.slane %v795, 4
      %v800 = vsel %vm265, %v796, %v797
      %v801 = vsel %vm348, %v789, %v800
      %v802 = vsel %vm348, %v791, %v797
      %v803 = vsel %vm265, %v798, %v799
      %v804 = vsel %vm348, %v793, %v803
      %v805 = vsel %vm348, %v795, %v799
      %810 = vst [vmem:[#allocation2 + $0x210] sm:$0xff] %v801
      %811 = vst [vmem:[#allocation2 + $0x218] sm:$0xf] %v802
      %812 = vst [vmem:[#allocation2 + $0x21c] sm:$0xff] %v804
      %813 = vst [vmem:[#allocation2 + $0x224] sm:$0xf] %v805
      %814 = vrot.lane.b32.xlu0 %v698, 108
      %v815 = vpop.permute.xlu0 %814
      %816 = vrot.lane.b32.xlu0 %v699, 108
      %v817 = vpop.permute.xlu0 %816
      %818 = vrot.lane.b32.xlu0 %v700, 108
      %v819 = vpop.permute.xlu0 %818
      %820 = vrot.lane.b32.xlu0 %v701, 108
      %v821 = vpop.permute.xlu0 %820
      %v822 = vrot.slane %v815, 4
      %v823 = vrot.slane %v817, 4
      %v824 = vrot.slane %v819, 4
      %v825 = vrot.slane %v821, 4
      %v826 = vsel %vm265, %v822, %v823
      %v827 = vsel %vm375, %v815, %v826
      %v828 = vsel %vm375, %v817, %v823
      %v829 = vsel %vm265, %v824, %v825
      %v830 = vsel %vm375, %v819, %v829
      %v831 = vsel %vm375, %v821, %v825
      %836 = vst [vmem:[#allocation2 + $0x228] sm:$0xff] %v827
      %837 = vst [vmem:[#allocation2 + $0x230] sm:$0xf] %v828
      %838 = vst [vmem:[#allocation2 + $0x234] sm:$0xff] %v830
      %839 = vst [vmem:[#allocation2 + $0x23c] sm:$0xf] %v831
      %840 = vrot.lane.b32.xlu0 %v698, 92
      %v841 = vpop.permute.xlu0 %840
      %842 = vrot.lane.b32.xlu0 %v699, 92
      %v843 = vpop.permute.xlu0 %842
      %844 = vrot.lane.b32.xlu0 %v700, 92
      %v845 = vpop.permute.xlu0 %844
      %846 = vrot.lane.b32.xlu0 %v701, 92
      %v847 = vpop.permute.xlu0 %846
      %v848 = vrot.slane %v841, 4
      %v849 = vrot.slane %v843, 4
      %v850 = vrot.slane %v845, 4
      %v851 = vrot.slane %v847, 4
      %v852 = vsel %vm265, %v848, %v849
      %v853 = vsel %vm402, %v841, %v852
      %v854 = vsel %vm402, %v843, %v849
      %v855 = vsel %vm265, %v850, %v851
      %v856 = vsel %vm402, %v845, %v855
      %v857 = vsel %vm402, %v847, %v851
      %862 = vst [vmem:[#allocation2 + $0x240] sm:$0xff] %v853
      %863 = vst [vmem:[#allocation2 + $0x248] sm:$0xf] %v854
      %864 = vst [vmem:[#allocation2 + $0x24c] sm:$0xff] %v856
      %865 = vst [vmem:[#allocation2 + $0x254] sm:$0xf] %v857
      %866 = vrot.lane.b32.xlu0 %v698, 91
      %v867 = vpop.permute.xlu0 %866
      %868 = vrot.lane.b32.xlu0 %v699, 91
      %v869 = vpop.permute.xlu0 %868
      %870 = vrot.lane.b32.xlu0 %v700, 91
      %v871 = vpop.permute.xlu0 %870
      %872 = vrot.lane.b32.xlu0 %v701, 91
      %v873 = vpop.permute.xlu0 %872
      %v874 = vrot.slane %v867, 4
      %v875 = vrot.slane %v869, 4
      %v876 = vrot.slane %v871, 4
      %v877 = vrot.slane %v873, 4
      %v878 = vsel %vm265, %v874, %v875
      %v879 = vsel %vm429, %v867, %v878
      %v880 = vsel %vm429, %v869, %v875
      %v881 = vsel %vm265, %v876, %v877
      %v882 = vsel %vm429, %v871, %v881
      %v883 = vsel %vm429, %v873, %v877
      %888 = vst [vmem:[#allocation2 + $0x258] sm:$0xff] %v879
      %889 = vst [vmem:[#allocation2 + $0x260] sm:$0xf] %v880
      %890 = vst [vmem:[#allocation2 + $0x264] sm:$0xff] %v882
      %891 = vst [vmem:[#allocation2 + $0x26c] sm:$0xf] %v883
      %892 = vrot.lane.b32.xlu0 %v698, 90
      %v893 = vpop.permute.xlu0 %892
      %894 = vrot.lane.b32.xlu0 %v699, 90
      %v895 = vpop.permute.xlu0 %894
      %896 = vrot.lane.b32.xlu0 %v700, 90
      %v897 = vpop.permute.xlu0 %896
      %898 = vrot.lane.b32.xlu0 %v701, 90
      %v899 = vpop.permute.xlu0 %898
      %v900 = vrot.slane %v893, 4
      %v901 = vrot.slane %v895, 4
      %v902 = vrot.slane %v897, 4
      %v903 = vrot.slane %v899, 4
      %v904 = vsel %vm265, %v900, %v901
      %v905 = vsel %vm456, %v893, %v904
      %v906 = vsel %vm456, %v895, %v901
      %v907 = vsel %vm265, %v902, %v903
      %v908 = vsel %vm456, %v897, %v907
      %v909 = vsel %vm456, %v899, %v903
      %914 = vst [vmem:[#allocation2 + $0x270] sm:$0xff] %v905
      %915 = vst [vmem:[#allocation2 + $0x278] sm:$0xf] %v906
      %916 = vst [vmem:[#allocation2 + $0x27c] sm:$0xff] %v908
      %917 = vst [vmem:[#allocation2 + $0x284] sm:$0xf] %v909
      %s918 = sadd.s32 %s237, 3
      %s919 = smul.u32 %s918, 8
      %s920 = smul.addr %s919, 4
      %s921 = scalar_lea.vmem %s219, %s920
      %v922 = vld [vmem:[%s921] sm:$0xff]
      %v923 = vld [vmem:[%s921 + $0x8] sm:$0xff]
      %v924 = vld [vmem:[%s921 + $0x10] sm:$0xff]
      %v925 = vld [vmem:[%s921 + $0x18] sm:$0xff]
      %926 = vst [vmem:[#allocation2 + $0x288] sm:$0xff] %v922
      %927 = vst [vmem:[#allocation2 + $0x290] sm:$0xf] %v923
      %928 = vst [vmem:[#allocation2 + $0x294] sm:$0xff] %v924
      %929 = vst [vmem:[#allocation2 + $0x29c] sm:$0xf] %v925
      %934 = vrot.lane.b32.xlu0 %v922, 127
      %v935 = vpop.permute.xlu0 %934
      %936 = vrot.lane.b32.xlu0 %v923, 127
      %v937 = vpop.permute.xlu0 %936
      %938 = vrot.lane.b32.xlu0 %v924, 127
      %v939 = vpop.permute.xlu0 %938
      %940 = vrot.lane.b32.xlu0 %v925, 127
      %v941 = vpop.permute.xlu0 %940
      %v942 = vrot.slane %v935, 4
      %v943 = vrot.slane %v937, 4
      %v944 = vrot.slane %v939, 4
      %v945 = vrot.slane %v941, 4
      %v946 = vsel %vm265, %v942, %v943
      %v947 = vsel %vm267, %v935, %v946
      %v948 = vsel %vm267, %v937, %v943
      %v949 = vsel %vm265, %v944, %v945
      %v950 = vsel %vm267, %v939, %v949
      %v951 = vsel %vm267, %v941, %v945
      %956 = vst [vmem:[#allocation2 + $0x2a0] sm:$0xff] %v947
      %957 = vst [vmem:[#allocation2 + $0x2a8] sm:$0xf] %v948
      %958 = vst [vmem:[#allocation2 + $0x2ac] sm:$0xff] %v950
      %959 = vst [vmem:[#allocation2 + $0x2b4] sm:$0xf] %v951
      %960 = vrot.lane.b32.xlu0 %v922, 126
      %v961 = vpop.permute.xlu0 %960
      %962 = vrot.lane.b32.xlu0 %v923, 126
      %v963 = vpop.permute.xlu0 %962
      %964 = vrot.lane.b32.xlu0 %v924, 126
      %v965 = vpop.permute.xlu0 %964
      %966 = vrot.lane.b32.xlu0 %v925, 126
      %v967 = vpop.permute.xlu0 %966
      %v968 = vrot.slane %v961, 4
      %v969 = vrot.slane %v963, 4
      %v970 = vrot.slane %v965, 4
      %v971 = vrot.slane %v967, 4
      %v972 = vsel %vm265, %v968, %v969
      %v973 = vsel %vm294, %v961, %v972
      %v974 = vsel %vm294, %v963, %v969
      %v975 = vsel %vm265, %v970, %v971
      %v976 = vsel %vm294, %v965, %v975
      %v977 = vsel %vm294, %v967, %v971
      %982 = vst [vmem:[#allocation2 + $0x2b8] sm:$0xff] %v973
      %983 = vst [vmem:[#allocation2 + $0x2c0] sm:$0xf] %v974
      %984 = vst [vmem:[#allocation2 + $0x2c4] sm:$0xff] %v976
      %985 = vst [vmem:[#allocation2 + $0x2cc] sm:$0xf] %v977
      %986 = vrot.lane.b32.xlu0 %v922, 110
      %v987 = vpop.permute.xlu0 %986
      %988 = vrot.lane.b32.xlu0 %v923, 110
      %v989 = vpop.permute.xlu0 %988
      %990 = vrot.lane.b32.xlu0 %v924, 110
      %v991 = vpop.permute.xlu0 %990
      %992 = vrot.lane.b32.xlu0 %v925, 110
      %v993 = vpop.permute.xlu0 %992
      %v994 = vrot.slane %v987, 4
      %v995 = vrot.slane %v989, 4
      %v996 = vrot.slane %v991, 4
      %v997 = vrot.slane %v993, 4
      %v998 = vsel %vm265, %v994, %v995
      %v999 = vsel %vm321, %v987, %v998
      %v1000 = vsel %vm321, %v989, %v995
      %v1001 = vsel %vm265, %v996, %v997
      %v1002 = vsel %vm321, %v991, %v1001
      %v1003 = vsel %vm321, %v993, %v997
      %1008 = vst [vmem:[#allocation2 + $0x2d0] sm:$0xff] %v999
      %1009 = vst [vmem:[#allocation2 + $0x2d8] sm:$0xf] %v1000
      %1010 = vst [vmem:[#allocation2 + $0x2dc] sm:$0xff] %v1002
      %1011 = vst [vmem:[#allocation2 + $0x2e4] sm:$0xf] %v1003
      %1012 = vrot.lane.b32.xlu0 %v922, 109
      %v1013 = vpop.permute.xlu0 %1012
      %1014 = vrot.lane.b32.xlu0 %v923, 109
      %v1015 = vpop.permute.xlu0 %1014
      %1016 = vrot.lane.b32.xlu0 %v924, 109
      %v1017 = vpop.permute.xlu0 %1016
      %1018 = vrot.lane.b32.xlu0 %v925, 109
      %v1019 = vpop.permute.xlu0 %1018
      %v1020 = vrot.slane %v1013, 4
      %v1021 = vrot.slane %v1015, 4
      %v1022 = vrot.slane %v1017, 4
      %v1023 = vrot.slane %v1019, 4
      %v1024 = vsel %vm265, %v1020, %v1021
      %v1025 = vsel %vm348, %v1013, %v1024
      %v1026 = vsel %vm348, %v1015, %v1021
      %v1027 = vsel %vm265, %v1022, %v1023
      %v1028 = vsel %vm348, %v1017, %v1027
      %v1029 = vsel %vm348, %v1019, %v1023
      %1034 = vst [vmem:[#allocation2 + $0x2e8] sm:$0xff] %v1025
      %1035 = vst [vmem:[#allocation2 + $0x2f0] sm:$0xf] %v1026
      %1036 = vst [vmem:[#allocation2 + $0x2f4] sm:$0xff] %v1028
      %1037 = vst [vmem:[#allocation2 + $0x2fc] sm:$0xf] %v1029
      %1038 = vrot.lane.b32.xlu0 %v922, 108
      %v1039 = vpop.permute.xlu0 %1038
      %1040 = vrot.lane.b32.xlu0 %v923, 108
      %v1041 = vpop.permute.xlu0 %1040
      %1042 = vrot.lane.b32.xlu0 %v924, 108
      %v1043 = vpop.permute.xlu0 %1042
      %1044 = vrot.lane.b32.xlu0 %v925, 108
      %v1045 = vpop.permute.xlu0 %1044
      %v1046 = vrot.slane %v1039, 4
      %v1047 = vrot.slane %v1041, 4
      %v1048 = vrot.slane %v1043, 4
      %v1049 = vrot.slane %v1045, 4
      %v1050 = vsel %vm265, %v1046, %v1047
      %v1051 = vsel %vm375, %v1039, %v1050
      %v1052 = vsel %vm375, %v1041, %v1047
      %v1053 = vsel %vm265, %v1048, %v1049
      %v1054 = vsel %vm375, %v1043, %v1053
      %v1055 = vsel %vm375, %v1045, %v1049
      %1060 = vst [vmem:[#allocation2 + $0x300] sm:$0xff] %v1051
      %1061 = vst [vmem:[#allocation2 + $0x308] sm:$0xf] %v1052
      %1062 = vst [vmem:[#allocation2 + $0x30c] sm:$0xff] %v1054
      %1063 = vst [vmem:[#allocation2 + $0x314] sm:$0xf] %v1055
      %1064 = vrot.lane.b32.xlu0 %v922, 92
      %v1065 = vpop.permute.xlu0 %1064
      %1066 = vrot.lane.b32.xlu0 %v923, 92
      %v1067 = vpop.permute.xlu0 %1066
      %1068 = vrot.lane.b32.xlu0 %v924, 92
      %v1069 = vpop.permute.xlu0 %1068
      %1070 = vrot.lane.b32.xlu0 %v925, 92
      %v1071 = vpop.permute.xlu0 %1070
      %v1072 = vrot.slane %v1065, 4
      %v1073 = vrot.slane %v1067, 4
      %v1074 = vrot.slane %v1069, 4
      %v1075 = vrot.slane %v1071, 4
      %v1076 = vsel %vm265, %v1072, %v1073
      %v1077 = vsel %vm402, %v1065, %v1076
      %v1078 = vsel %vm402, %v1067, %v1073
      %v1079 = vsel %vm265, %v1074, %v1075
      %v1080 = vsel %vm402, %v1069, %v1079
      %v1081 = vsel %vm402, %v1071, %v1075
      %1086 = vst [vmem:[#allocation2 + $0x318] sm:$0xff] %v1077
      %1087 = vst [vmem:[#allocation2 + $0x320] sm:$0xf] %v1078
      %1088 = vst [vmem:[#allocation2 + $0x324] sm:$0xff] %v1080
      %1089 = vst [vmem:[#allocation2 + $0x32c] sm:$0xf] %v1081
      %1090 = vrot.lane.b32.xlu0 %v922, 91
      %v1091 = vpop.permute.xlu0 %1090
      %1092 = vrot.lane.b32.xlu0 %v923, 91
      %v1093 = vpop.permute.xlu0 %1092
      %1094 = vrot.lane.b32.xlu0 %v924, 91
      %v1095 = vpop.permute.xlu0 %1094
      %1096 = vrot.lane.b32.xlu0 %v925, 91
      %v1097 = vpop.permute.xlu0 %1096
      %v1098 = vrot.slane %v1091, 4
      %v1099 = vrot.slane %v1093, 4
      %v1100 = vrot.slane %v1095, 4
      %v1101 = vrot.slane %v1097, 4
      %v1102 = vsel %vm265, %v1098, %v1099
      %v1103 = vsel %vm429, %v1091, %v1102
      %v1104 = vsel %vm429, %v1093, %v1099
      %v1105 = vsel %vm265, %v1100, %v1101
      %v1106 = vsel %vm429, %v1095, %v1105
      %v1107 = vsel %vm429, %v1097, %v1101
      %1112 = vst [vmem:[#allocation2 + $0x330] sm:$0xff] %v1103
      %1113 = vst [vmem:[#allocation2 + $0x338] sm:$0xf] %v1104
      %1114 = vst [vmem:[#allocation2 + $0x33c] sm:$0xff] %v1106
      %1115 = vst [vmem:[#allocation2 + $0x344] sm:$0xf] %v1107
      %1116 = vrot.lane.b32.xlu0 %v922, 90
      %v1117 = vpop.permute.xlu0 %1116
      %1118 = vrot.lane.b32.xlu0 %v923, 90
      %v1119 = vpop.permute.xlu0 %1118
      %1120 = vrot.lane.b32.xlu0 %v924, 90
      %v1121 = vpop.permute.xlu0 %1120
      %1122 = vrot.lane.b32.xlu0 %v925, 90
      %v1123 = vpop.permute.xlu0 %1122
      %v1124 = vrot.slane %v1117, 4
      %v1125 = vrot.slane %v1119, 4
      %v1126 = vrot.slane %v1121, 4
      %v1127 = vrot.slane %v1123, 4
      %v1128 = vsel %vm265, %v1124, %v1125
      %v1129 = vsel %vm456, %v1117, %v1128
      %v1130 = vsel %vm456, %v1119, %v1125
      %v1131 = vsel %vm265, %v1126, %v1127
      %v1132 = vsel %vm456, %v1121, %v1131
      %v1133 = vsel %vm456, %v1123, %v1127
      %1138 = vst [vmem:[#allocation2 + $0x348] sm:$0xff] %v1129
      %1139 = vst [vmem:[#allocation2 + $0x350] sm:$0xf] %v1130
      %1140 = vst [vmem:[#allocation2 + $0x354] sm:$0xff] %v1132
      %1141 = vst [vmem:[#allocation2 + $0x35c] sm:$0xf] %v1133
      %s1142 = sadd.s32 %s237, 4
      %s1143 = smul.u32 %s1142, 8
      %s1144 = smul.addr %s1143, 4
      %s1145 = scalar_lea.vmem %s219, %s1144
      %v1146 = vld [vmem:[%s1145] sm:$0xff]
      %v1147 = vld [vmem:[%s1145 + $0x8] sm:$0xff]
      %v1148 = vld [vmem:[%s1145 + $0x10] sm:$0xff]
      %v1149 = vld [vmem:[%s1145 + $0x18] sm:$0xff]
      %1150 = vst [vmem:[#allocation2 + $0x360] sm:$0xff] %v1146
      %1151 = vst [vmem:[#allocation2 + $0x368] sm:$0xf] %v1147
      %1152 = vst [vmem:[#allocation2 + $0x36c] sm:$0xff] %v1148
      %1153 = vst [vmem:[#allocation2 + $0x374] sm:$0xf] %v1149
      %1158 = vrot.lane.b32.xlu0 %v1146, 127
      %v1159 = vpop.permute.xlu0 %1158
      %1160 = vrot.lane.b32.xlu0 %v1147, 127
      %v1161 = vpop.permute.xlu0 %1160
      %1162 = vrot.lane.b32.xlu0 %v1148, 127
      %v1163 = vpop.permute.xlu0 %1162
      %1164 = vrot.lane.b32.xlu0 %v1149, 127
      %v1165 = vpop.permute.xlu0 %1164
      %v1166 = vrot.slane %v1159, 4
      %v1167 = vrot.slane %v1161, 4
      %v1168 = vrot.slane %v1163, 4
      %v1169 = vrot.slane %v1165, 4
      %v1170 = vsel %vm265, %v1166, %v1167
      %v1171 = vsel %vm267, %v1159, %v1170
      %v1172 = vsel %vm267, %v1161, %v1167
      %v1173 = vsel %vm265, %v1168, %v1169
      %v1174 = vsel %vm267, %v1163, %v1173
      %v1175 = vsel %vm267, %v1165, %v1169
      %1180 = vst [vmem:[#allocation2 + $0x378] sm:$0xff] %v1171
      %1181 = vst [vmem:[#allocation2 + $0x380] sm:$0xf] %v1172
      %1182 = vst [vmem:[#allocation2 + $0x384] sm:$0xff] %v1174
      %1183 = vst [vmem:[#allocation2 + $0x38c] sm:$0xf] %v1175
      %1184 = vrot.lane.b32.xlu0 %v1146, 126
      %v1185 = vpop.permute.xlu0 %1184
      %1186 = vrot.lane.b32.xlu0 %v1147, 126
      %v1187 = vpop.permute.xlu0 %1186
      %1188 = vrot.lane.b32.xlu0 %v1148, 126
      %v1189 = vpop.permute.xlu0 %1188
      %1190 = vrot.lane.b32.xlu0 %v1149, 126
      %v1191 = vpop.permute.xlu0 %1190
      %v1192 = vrot.slane %v1185, 4
      %v1193 = vrot.slane %v1187, 4
      %v1194 = vrot.slane %v1189, 4
      %v1195 = vrot.slane %v1191, 4
      %v1196 = vsel %vm265, %v1192, %v1193
      %v1197 = vsel %vm294, %v1185, %v1196
      %v1198 = vsel %vm294, %v1187, %v1193
      %v1199 = vsel %vm265, %v1194, %v1195
      %v1200 = vsel %vm294, %v1189, %v1199
      %v1201 = vsel %vm294, %v1191, %v1195
      %1206 = vst [vmem:[#allocation2 + $0x390] sm:$0xff] %v1197
      %1207 = vst [vmem:[#allocation2 + $0x398] sm:$0xf] %v1198
      %1208 = vst [vmem:[#allocation2 + $0x39c] sm:$0xff] %v1200
      %1209 = vst [vmem:[#allocation2 + $0x3a4] sm:$0xf] %v1201
      %1210 = vrot.lane.b32.xlu0 %v1146, 110
      %v1211 = vpop.permute.xlu0 %1210
      %1212 = vrot.lane.b32.xlu0 %v1147, 110
      %v1213 = vpop.permute.xlu0 %1212
      %1214 = vrot.lane.b32.xlu0 %v1148, 110
      %v1215 = vpop.permute.xlu0 %1214
      %1216 = vrot.lane.b32.xlu0 %v1149, 110
      %v1217 = vpop.permute.xlu0 %1216
      %v1218 = vrot.slane %v1211, 4
      %v1219 = vrot.slane %v1213, 4
      %v1220 = vrot.slane %v1215, 4
      %v1221 = vrot.slane %v1217, 4
      %v1222 = vsel %vm265, %v1218, %v1219
      %v1223 = vsel %vm321, %v1211, %v1222
      %v1224 = vsel %vm321, %v1213, %v1219
      %v1225 = vsel %vm265, %v1220, %v1221
      %v1226 = vsel %vm321, %v1215, %v1225
      %v1227 = vsel %vm321, %v1217, %v1221
      %1232 = vst [vmem:[#allocation2 + $0x3a8] sm:$0xff] %v1223
      %1233 = vst [vmem:[#allocation2 + $0x3b0] sm:$0xf] %v1224
      %1234 = vst [vmem:[#allocation2 + $0x3b4] sm:$0xff] %v1226
      %1235 = vst [vmem:[#allocation2 + $0x3bc] sm:$0xf] %v1227
      %1236 = vrot.lane.b32.xlu0 %v1146, 109
      %v1237 = vpop.permute.xlu0 %1236
      %1238 = vrot.lane.b32.xlu0 %v1147, 109
      %v1239 = vpop.permute.xlu0 %1238
      %1240 = vrot.lane.b32.xlu0 %v1148, 109
      %v1241 = vpop.permute.xlu0 %1240
      %1242 = vrot.lane.b32.xlu0 %v1149, 109
      %v1243 = vpop.permute.xlu0 %1242
      %v1244 = vrot.slane %v1237, 4
      %v1245 = vrot.slane %v1239, 4
      %v1246 = vrot.slane %v1241, 4
      %v1247 = vrot.slane %v1243, 4
      %v1248 = vsel %vm265, %v1244, %v1245
      %v1249 = vsel %vm348, %v1237, %v1248
      %v1250 = vsel %vm348, %v1239, %v1245
      %v1251 = vsel %vm265, %v1246, %v1247
      %v1252 = vsel %vm348, %v1241, %v1251
      %v1253 = vsel %vm348, %v1243, %v1247
      %1258 = vst [vmem:[#allocation2 + $0x3c0] sm:$0xff] %v1249
      %1259 = vst [vmem:[#allocation2 + $0x3c8] sm:$0xf] %v1250
      %1260 = vst [vmem:[#allocation2 + $0x3cc] sm:$0xff] %v1252
      %1261 = vst [vmem:[#allocation2 + $0x3d4] sm:$0xf] %v1253
      %1262 = vrot.lane.b32.xlu0 %v1146, 108
      %v1263 = vpop.permute.xlu0 %1262
      %1264 = vrot.lane.b32.xlu0 %v1147, 108
      %v1265 = vpop.permute.xlu0 %1264
      %1266 = vrot.lane.b32.xlu0 %v1148, 108
      %v1267 = vpop.permute.xlu0 %1266
      %1268 = vrot.lane.b32.xlu0 %v1149, 108
      %v1269 = vpop.permute.xlu0 %1268
      %v1270 = vrot.slane %v1263, 4
      %v1271 = vrot.slane %v1265, 4
      %v1272 = vrot.slane %v1267, 4
      %v1273 = vrot.slane %v1269, 4
      %v1274 = vsel %vm265, %v1270, %v1271
      %v1275 = vsel %vm375, %v1263, %v1274
      %v1276 = vsel %vm375, %v1265, %v1271
      %v1277 = vsel %vm265, %v1272, %v1273
      %v1278 = vsel %vm375, %v1267, %v1277
      %v1279 = vsel %vm375, %v1269, %v1273
      %1284 = vst [vmem:[#allocation2 + $0x3d8] sm:$0xff] %v1275
      %1285 = vst [vmem:[#allocation2 + $0x3e0] sm:$0xf] %v1276
      %1286 = vst [vmem:[#allocation2 + $0x3e4] sm:$0xff] %v1278
      %1287 = vst [vmem:[#allocation2 + $0x3ec] sm:$0xf] %v1279
      %1288 = vrot.lane.b32.xlu0 %v1146, 92
      %v1289 = vpop.permute.xlu0 %1288
      %1290 = vrot.lane.b32.xlu0 %v1147, 92
      %v1291 = vpop.permute.xlu0 %1290
      %1292 = vrot.lane.b32.xlu0 %v1148, 92
      %v1293 = vpop.permute.xlu0 %1292
      %1294 = vrot.lane.b32.xlu0 %v1149, 92
      %v1295 = vpop.permute.xlu0 %1294
      %v1296 = vrot.slane %v1289, 4
      %v1297 = vrot.slane %v1291, 4
      %v1298 = vrot.slane %v1293, 4
      %v1299 = vrot.slane %v1295, 4
      %v1300 = vsel %vm265, %v1296, %v1297
      %v1301 = vsel %vm402, %v1289, %v1300
      %v1302 = vsel %vm402, %v1291, %v1297
      %v1303 = vsel %vm265, %v1298, %v1299
      %v1304 = vsel %vm402, %v1293, %v1303
      %v1305 = vsel %vm402, %v1295, %v1299
      %1310 = vst [vmem:[#allocation2 + $0x3f0] sm:$0xff] %v1301
      %1311 = vst [vmem:[#allocation2 + $0x3f8] sm:$0xf] %v1302
      %1312 = vst [vmem:[#allocation2 + $0x3fc] sm:$0xff] %v1304
      %1313 = vst [vmem:[#allocation2 + $0x404] sm:$0xf] %v1305
      %1314 = vrot.lane.b32.xlu0 %v1146, 91
      %v1315 = vpop.permute.xlu0 %1314
      %1316 = vrot.lane.b32.xlu0 %v1147, 91
      %v1317 = vpop.permute.xlu0 %1316
      %1318 = vrot.lane.b32.xlu0 %v1148, 91
      %v1319 = vpop.permute.xlu0 %1318
      %1320 = vrot.lane.b32.xlu0 %v1149, 91
      %v1321 = vpop.permute.xlu0 %1320
      %v1322 = vrot.slane %v1315, 4
      %v1323 = vrot.slane %v1317, 4
      %v1324 = vrot.slane %v1319, 4
      %v1325 = vrot.slane %v1321, 4
      %v1326 = vsel %vm265, %v1322, %v1323
      %v1327 = vsel %vm429, %v1315, %v1326
      %v1328 = vsel %vm429, %v1317, %v1323
      %v1329 = vsel %vm265, %v1324, %v1325
      %v1330 = vsel %vm429, %v1319, %v1329
      %v1331 = vsel %vm429, %v1321, %v1325
      %1336 = vst [vmem:[#allocation2 + $0x408] sm:$0xff] %v1327
      %1337 = vst [vmem:[#allocation2 + $0x410] sm:$0xf] %v1328
      %1338 = vst [vmem:[#allocation2 + $0x414] sm:$0xff] %v1330
      %1339 = vst [vmem:[#allocation2 + $0x41c] sm:$0xf] %v1331
      %1340 = vrot.lane.b32.xlu0 %v1146, 90
      %v1341 = vpop.permute.xlu0 %1340
      %1342 = vrot.lane.b32.xlu0 %v1147, 90
      %v1343 = vpop.permute.xlu0 %1342
      %1344 = vrot.lane.b32.xlu0 %v1148, 90
      %v1345 = vpop.permute.xlu0 %1344
      %1346 = vrot.lane.b32.xlu0 %v1149, 90
      %v1347 = vpop.permute.xlu0 %1346
      %v1348 = vrot.slane %v1341, 4
      %v1349 = vrot.slane %v1343, 4
      %v1350 = vrot.slane %v1345, 4
      %v1351 = vrot.slane %v1347, 4
      %v1352 = vsel %vm265, %v1348, %v1349
      %v1353 = vsel %vm456, %v1341, %v1352
      %v1354 = vsel %vm456, %v1343, %v1349
      %v1355 = vsel %vm265, %v1350, %v1351
      %v1356 = vsel %vm456, %v1345, %v1355
      %v1357 = vsel %vm456, %v1347, %v1351
      %1362 = vst [vmem:[#allocation2 + $0x420] sm:$0xff] %v1353
      %1363 = vst [vmem:[#allocation2 + $0x428] sm:$0xf] %v1354
      %1364 = vst [vmem:[#allocation2 + $0x42c] sm:$0xff] %v1356
      %1365 = vst [vmem:[#allocation2 + $0x434] sm:$0xf] %v1357
      %s1366 = sadd.s32 %s237, 5
      %s1367 = smul.u32 %s1366, 8
      %s1368 = smul.addr %s1367, 4
      %s1369 = scalar_lea.vmem %s219, %s1368
      %v1370 = vld [vmem:[%s1369] sm:$0xff]
      %v1371 = vld [vmem:[%s1369 + $0x8] sm:$0xff]
      %v1372 = vld [vmem:[%s1369 + $0x10] sm:$0xff]
      %v1373 = vld [vmem:[%s1369 + $0x18] sm:$0xff]
      %1374 = vst [vmem:[#allocation2 + $0x438] sm:$0xff] %v1370
      %1375 = vst [vmem:[#allocation2 + $0x440] sm:$0xf] %v1371
      %1376 = vst [vmem:[#allocation2 + $0x444] sm:$0xff] %v1372
      %1377 = vst [vmem:[#allocation2 + $0x44c] sm:$0xf] %v1373
      %1382 = vrot.lane.b32.xlu0 %v1370, 127
      %v1383 = vpop.permute.xlu0 %1382
      %1384 = vrot.lane.b32.xlu0 %v1371, 127
      %v1385 = vpop.permute.xlu0 %1384
      %1386 = vrot.lane.b32.xlu0 %v1372, 127
      %v1387 = vpop.permute.xlu0 %1386
      %1388 = vrot.lane.b32.xlu0 %v1373, 127
      %v1389 = vpop.permute.xlu0 %1388
      %v1390 = vrot.slane %v1383, 4
      %v1391 = vrot.slane %v1385, 4
      %v1392 = vrot.slane %v1387, 4
      %v1393 = vrot.slane %v1389, 4
      %v1394 = vsel %vm265, %v1390, %v1391
      %v1395 = vsel %vm267, %v1383, %v1394
      %v1396 = vsel %vm267, %v1385, %v1391
      %v1397 = vsel %vm265, %v1392, %v1393
      %v1398 = vsel %vm267, %v1387, %v1397
      %v1399 = vsel %vm267, %v1389, %v1393
      %1404 = vst [vmem:[#allocation2 + $0x450] sm:$0xff] %v1395
      %1405 = vst [vmem:[#allocation2 + $0x458] sm:$0xf] %v1396
      %1406 = vst [vmem:[#allocation2 + $0x45c] sm:$0xff] %v1398
      %1407 = vst [vmem:[#allocation2 + $0x464] sm:$0xf] %v1399
      %1408 = vrot.lane.b32.xlu0 %v1370, 126
      %v1409 = vpop.permute.xlu0 %1408
      %1410 = vrot.lane.b32.xlu0 %v1371, 126
      %v1411 = vpop.permute.xlu0 %1410
      %1412 = vrot.lane.b32.xlu0 %v1372, 126
      %v1413 = vpop.permute.xlu0 %1412
      %1414 = vrot.lane.b32.xlu0 %v1373, 126
      %v1415 = vpop.permute.xlu0 %1414
      %v1416 = vrot.slane %v1409, 4
      %v1417 = vrot.slane %v1411, 4
      %v1418 = vrot.slane %v1413, 4
      %v1419 = vrot.slane %v1415, 4
      %v1420 = vsel %vm265, %v1416, %v1417
      %v1421 = vsel %vm294, %v1409, %v1420
      %v1422 = vsel %vm294, %v1411, %v1417
      %v1423 = vsel %vm265, %v1418, %v1419
      %v1424 = vsel %vm294, %v1413, %v1423
      %v1425 = vsel %vm294, %v1415, %v1419
      %1430 = vst [vmem:[#allocation2 + $0x468] sm:$0xff] %v1421
      %1431 = vst [vmem:[#allocation2 + $0x470] sm:$0xf] %v1422
      %1432 = vst [vmem:[#allocation2 + $0x474] sm:$0xff] %v1424
      %1433 = vst [vmem:[#allocation2 + $0x47c] sm:$0xf] %v1425
      %1434 = vrot.lane.b32.xlu0 %v1370, 110
      %v1435 = vpop.permute.xlu0 %1434
      %1436 = vrot.lane.b32.xlu0 %v1371, 110
      %v1437 = vpop.permute.xlu0 %1436
      %1438 = vrot.lane.b32.xlu0 %v1372, 110
      %v1439 = vpop.permute.xlu0 %1438
      %1440 = vrot.lane.b32.xlu0 %v1373, 110
      %v1441 = vpop.permute.xlu0 %1440
      %v1442 = vrot.slane %v1435, 4
      %v1443 = vrot.slane %v1437, 4
      %v1444 = vrot.slane %v1439, 4
      %v1445 = vrot.slane %v1441, 4
      %v1446 = vsel %vm265, %v1442, %v1443
      %v1447 = vsel %vm321, %v1435, %v1446
      %v1448 = vsel %vm321, %v1437, %v1443
      %v1449 = vsel %vm265, %v1444, %v1445
      %v1450 = vsel %vm321, %v1439, %v1449
      %v1451 = vsel %vm321, %v1441, %v1445
      %1456 = vst [vmem:[#allocation2 + $0x480] sm:$0xff] %v1447
      %1457 = vst [vmem:[#allocation2 + $0x488] sm:$0xf] %v1448
      %1458 = vst [vmem:[#allocation2 + $0x48c] sm:$0xff] %v1450
      %1459 = vst [vmem:[#allocation2 + $0x494] sm:$0xf] %v1451
      %1460 = vrot.lane.b32.xlu0 %v1370, 109
      %v1461 = vpop.permute.xlu0 %1460
      %1462 = vrot.lane.b32.xlu0 %v1371, 109
      %v1463 = vpop.permute.xlu0 %1462
      %1464 = vrot.lane.b32.xlu0 %v1372, 109
      %v1465 = vpop.permute.xlu0 %1464
      %1466 = vrot.lane.b32.xlu0 %v1373, 109
      %v1467 = vpop.permute.xlu0 %1466
      %v1468 = vrot.slane %v1461, 4
      %v1469 = vrot.slane %v1463, 4
      %v1470 = vrot.slane %v1465, 4
      %v1471 = vrot.slane %v1467, 4
      %v1472 = vsel %vm265, %v1468, %v1469
      %v1473 = vsel %vm348, %v1461, %v1472
      %v1474 = vsel %vm348, %v1463, %v1469
      %v1475 = vsel %vm265, %v1470, %v1471
      %v1476 = vsel %vm348, %v1465, %v1475
      %v1477 = vsel %vm348, %v1467, %v1471
      %1482 = vst [vmem:[#allocation2 + $0x498] sm:$0xff] %v1473
      %1483 = vst [vmem:[#allocation2 + $0x4a0] sm:$0xf] %v1474
      %1484 = vst [vmem:[#allocation2 + $0x4a4] sm:$0xff] %v1476
      %1485 = vst [vmem:[#allocation2 + $0x4ac] sm:$0xf] %v1477
      %1486 = vrot.lane.b32.xlu0 %v1370, 108
      %v1487 = vpop.permute.xlu0 %1486
      %1488 = vrot.lane.b32.xlu0 %v1371, 108
      %v1489 = vpop.permute.xlu0 %1488
      %1490 = vrot.lane.b32.xlu0 %v1372, 108
      %v1491 = vpop.permute.xlu0 %1490
      %1492 = vrot.lane.b32.xlu0 %v1373, 108
      %v1493 = vpop.permute.xlu0 %1492
      %v1494 = vrot.slane %v1487, 4
      %v1495 = vrot.slane %v1489, 4
      %v1496 = vrot.slane %v1491, 4
      %v1497 = vrot.slane %v1493, 4
      %v1498 = vsel %vm265, %v1494, %v1495
      %v1499 = vsel %vm375, %v1487, %v1498
      %v1500 = vsel %vm375, %v1489, %v1495
      %v1501 = vsel %vm265, %v1496, %v1497
      %v1502 = vsel %vm375, %v1491, %v1501
      %v1503 = vsel %vm375, %v1493, %v1497
      %1508 = vst [vmem:[#allocation2 + $0x4b0] sm:$0xff] %v1499
      %1509 = vst [vmem:[#allocation2 + $0x4b8] sm:$0xf] %v1500
      %1510 = vst [vmem:[#allocation2 + $0x4bc] sm:$0xff] %v1502
      %1511 = vst [vmem:[#allocation2 + $0x4c4] sm:$0xf] %v1503
      %1512 = vrot.lane.b32.xlu0 %v1370, 92
      %v1513 = vpop.permute.xlu0 %1512
      %1514 = vrot.lane.b32.xlu0 %v1371, 92
      %v1515 = vpop.permute.xlu0 %1514
      %1516 = vrot.lane.b32.xlu0 %v1372, 92
      %v1517 = vpop.permute.xlu0 %1516
      %1518 = vrot.lane.b32.xlu0 %v1373, 92
      %v1519 = vpop.permute.xlu0 %1518
      %v1520 = vrot.slane %v1513, 4
      %v1521 = vrot.slane %v1515, 4
      %v1522 = vrot.slane %v1517, 4
      %v1523 = vrot.slane %v1519, 4
      %v1524 = vsel %vm265, %v1520, %v1521
      %v1525 = vsel %vm402, %v1513, %v1524
      %v1526 = vsel %vm402, %v1515, %v1521
      %v1527 = vsel %vm265, %v1522, %v1523
      %v1528 = vsel %vm402, %v1517, %v1527
      %v1529 = vsel %vm402, %v1519, %v1523
      %1534 = vst [vmem:[#allocation2 + $0x4c8] sm:$0xff] %v1525
      %1535 = vst [vmem:[#allocation2 + $0x4d0] sm:$0xf] %v1526
      %1536 = vst [vmem:[#allocation2 + $0x4d4] sm:$0xff] %v1528
      %1537 = vst [vmem:[#allocation2 + $0x4dc] sm:$0xf] %v1529
      %1538 = vrot.lane.b32.xlu0 %v1370, 91
      %v1539 = vpop.permute.xlu0 %1538
      %1540 = vrot.lane.b32.xlu0 %v1371, 91
      %v1541 = vpop.permute.xlu0 %1540
      %1542 = vrot.lane.b32.xlu0 %v1372, 91
      %v1543 = vpop.permute.xlu0 %1542
      %1544 = vrot.lane.b32.xlu0 %v1373, 91
      %v1545 = vpop.permute.xlu0 %1544
      %v1546 = vrot.slane %v1539, 4
      %v1547 = vrot.slane %v1541, 4
      %v1548 = vrot.slane %v1543, 4
      %v1549 = vrot.slane %v1545, 4
      %v1550 = vsel %vm265, %v1546, %v1547
      %v1551 = vsel %vm429, %v1539, %v1550
      %v1552 = vsel %vm429, %v1541, %v1547
      %v1553 = vsel %vm265, %v1548, %v1549
      %v1554 = vsel %vm429, %v1543, %v1553
      %v1555 = vsel %vm429, %v1545, %v1549
      %1560 = vst [vmem:[#allocation2 + $0x4e0] sm:$0xff] %v1551
      %1561 = vst [vmem:[#allocation2 + $0x4e8] sm:$0xf] %v1552
      %1562 = vst [vmem:[#allocation2 + $0x4ec] sm:$0xff] %v1554
      %1563 = vst [vmem:[#allocation2 + $0x4f4] sm:$0xf] %v1555
      %1564 = vrot.lane.b32.xlu0 %v1370, 90
      %v1565 = vpop.permute.xlu0 %1564
      %1566 = vrot.lane.b32.xlu0 %v1371, 90
      %v1567 = vpop.permute.xlu0 %1566
      %1568 = vrot.lane.b32.xlu0 %v1372, 90
      %v1569 = vpop.permute.xlu0 %1568
      %1570 = vrot.lane.b32.xlu0 %v1373, 90
      %v1571 = vpop.permute.xlu0 %1570
      %v1572 = vrot.slane %v1565, 4
      %v1573 = vrot.slane %v1567, 4
      %v1574 = vrot.slane %v1569, 4
      %v1575 = vrot.slane %v1571, 4
      %v1576 = vsel %vm265, %v1572, %v1573
      %v1577 = vsel %vm456, %v1565, %v1576
      %v1578 = vsel %vm456, %v1567, %v1573
      %v1579 = vsel %vm265, %v1574, %v1575
      %v1580 = vsel %vm456, %v1569, %v1579
      %v1581 = vsel %vm456, %v1571, %v1575
      %1586 = vst [vmem:[#allocation2 + $0x4f8] sm:$0xff] %v1577
      %1587 = vst [vmem:[#allocation2 + $0x500] sm:$0xf] %v1578
      %1588 = vst [vmem:[#allocation2 + $0x504] sm:$0xff] %v1580
      %1589 = vst [vmem:[#allocation2 + $0x50c] sm:$0xf] %v1581
      %p1590 = scmp.eq.s32.totalorder %s21, 0
      // Predicated region
      $region33: #{encoder3d_forward.8} parent=31 // pred_check
        %p1591 = pneg %p1590
      $region34: #{encoder3d_forward.8} parent=31 // pred_check_branch
        %1593 = sbr.rel (%p1591) target = $region36
      $region35: #{encoder3d_forward.8} parent=31 // pred_region
        %vm1594 = vcmask 15360
        %1595 = vst.msk [vmem:[%s235] sm:$0xff] %vm1594, 0.0
        %1596 = vst.msk [vmem:[%s235 + $0x8] sm:$0xff] %vm1594, 0.0
      $region36: #{encoder3d_forward.8} parent=31 // pred_fallthru
        _
      %v1597 = vld [vmem:[%s1] sm:$0xff]
      %v1598 = vld [vmem:[%s1 + $0x8] sm:$0xff]
      %v1599 = vld [vmem:[%s1 + $0x10] sm:$0xff]
      %v1600 = vld [vmem:[%s1 + $0x18] sm:$0xff]
      %v1601 = vld [vmem:[%s2] sm:$0x7]
      %v1602 = vld [vmem:[#allocation2] sm:$0xff]
      %v1603 = vld [vmem:[#allocation2 + $0x8] sm:$0xf]
      %v1604 = vld [vmem:[#allocation2 + $0xc] sm:$0xff]
      %v1605 = vld [vmem:[#allocation2 + $0x14] sm:$0xf]
      %v1606 = vld [vmem:[#allocation2 + $0x18] sm:$0xff]
      %v1607 = vld [vmem:[#allocation2 + $0x20] sm:$0xf]
      %v1608 = vld [vmem:[#allocation2 + $0x24] sm:$0xff]
      %v1609 = vld [vmem:[#allocation2 + $0x2c] sm:$0xf]
      %v1610 = vld [vmem:[#allocation2 + $0x30] sm:$0xff]
      %v1611 = vld [vmem:[#allocation2 + $0x38] sm:$0xf]
      %v1612 = vld [vmem:[#allocation2 + $0x3c] sm:$0xff]
      %v1613 = vld [vmem:[#allocation2 + $0x44] sm:$0xf]
      %v1614 = vld [vmem:[#allocation2 + $0x48] sm:$0xff]
      %v1615 = vld [vmem:[#allocation2 + $0x50] sm:$0xf]
      %v1616 = vld [vmem:[#allocation2 + $0x54] sm:$0xff]
      %v1617 = vld [vmem:[#allocation2 + $0x5c] sm:$0xf]
      %v1618 = vld [vmem:[#allocation2 + $0x60] sm:$0xff]
      %v1619 = vld [vmem:[#allocation2 + $0x68] sm:$0xf]
      %v1620 = vld [vmem:[#allocation2 + $0x6c] sm:$0xff]
      %v1621 = vld [vmem:[#allocation2 + $0x74] sm:$0xf]
      %v1622 = vld [vmem:[#allocation2 + $0x78] sm:$0xff]
      %v1623 = vld [vmem:[#allocation2 + $0x80] sm:$0xf]
      %v1624 = vld [vmem:[#allocation2 + $0x84] sm:$0xff]
      %v1625 = vld [vmem:[#allocation2 + $0x8c] sm:$0xf]
      %v1626 = vld [vmem:[#allocation2 + $0x90] sm:$0xff]
      %v1627 = vld [vmem:[#allocation2 + $0x98] sm:$0xf]
      %v1628 = vld [vmem:[#allocation2 + $0x9c] sm:$0xff]
      %v1629 = vld [vmem:[#allocation2 + $0xa4] sm:$0xf]
      %v1630 = vld [vmem:[#allocation2 + $0xa8] sm:$0xff]
      %v1631 = vld [vmem:[#allocation2 + $0xb0] sm:$0xf]
      %v1632 = vld [vmem:[#allocation2 + $0xb4] sm:$0xff]
      %v1633 = vld [vmem:[#allocation2 + $0xbc] sm:$0xf]
      %v1634 = vld [vmem:[#allocation2 + $0xc0] sm:$0xff]
      %v1635 = vld [vmem:[#allocation2 + $0xc8] sm:$0xf]
      %v1636 = vld [vmem:[#allocation2 + $0xcc] sm:$0xff]
      %v1637 = vld [vmem:[#allocation2 + $0xd4] sm:$0xf]
      %v1638 = vld [vmem:[#allocation2 + $0xd8] sm:$0xff]
      %v1639 = vld [vmem:[#allocation2 + $0xe0] sm:$0xf]
      %v1640 = vld [vmem:[#allocation2 + $0xe4] sm:$0xff]
      %v1641 = vld [vmem:[#allocation2 + $0xec] sm:$0xf]
      %v1642 = vld [vmem:[#allocation2 + $0xf0] sm:$0xff]
      %v1643 = vld [vmem:[#allocation2 + $0xf8] sm:$0xf]
      %v1644 = vld [vmem:[#allocation2 + $0xfc] sm:$0xff]
      %v1645 = vld [vmem:[#allocation2 + $0x104] sm:$0xf]
      %v1646 = vld [vmem:[#allocation2 + $0x108] sm:$0xff]
      %v1647 = vld [vmem:[#allocation2 + $0x110] sm:$0xf]
      %v1648 = vld [vmem:[#allocation2 + $0x114] sm:$0xff]
      %v1649 = vld [vmem:[#allocation2 + $0x11c] sm:$0xf]
      %v1650 = vld [vmem:[#allocation2 + $0x120] sm:$0xff]
      %v1651 = vld [vmem:[#allocation2 + $0x128] sm:$0xf]
      %v1652 = vld [vmem:[#allocation2 + $0x12c] sm:$0xff]
      %v1653 = vld [vmem:[#allocation2 + $0x134] sm:$0xf]
      %v1654 = vld [vmem:[#allocation2 + $0x138] sm:$0xff]
      %v1655 = vld [vmem:[#allocation2 + $0x140] sm:$0xf]
      %v1656 = vld [vmem:[#allocation2 + $0x144] sm:$0xff]
      %v1657 = vld [vmem:[#allocation2 + $0x14c] sm:$0xf]
      %v1658 = vld [vmem:[#allocation2 + $0x150] sm:$0xff]
      %v1659 = vld [vmem:[#allocation2 + $0x158] sm:$0xf]
      %v1660 = vld [vmem:[#allocation2 + $0x15c] sm:$0xff]
      %v1661 = vld [vmem:[#allocation2 + $0x164] sm:$0xf]
      %v1662 = vld [vmem:[#allocation2 + $0x168] sm:$0xff]
      %v1663 = vld [vmem:[#allocation2 + $0x170] sm:$0xf]
      %v1664 = vld [vmem:[#allocation2 + $0x174] sm:$0xff]
      %v1665 = vld [vmem:[#allocation2 + $0x17c] sm:$0xf]
      %v1666 = vld [vmem:[#allocation2 + $0x180] sm:$0xff]
      %v1667 = vld [vmem:[#allocation2 + $0x188] sm:$0xf]
      %v1668 = vld [vmem:[#allocation2 + $0x18c] sm:$0xff]
      %v1669 = vld [vmem:[#allocation2 + $0x194] sm:$0xf]
      %v1670 = vld [vmem:[#allocation2 + $0x198] sm:$0xff]
      %v1671 = vld [vmem:[#allocation2 + $0x1a0] sm:$0xf]
      %v1672 = vld [vmem:[#allocation2 + $0x1a4] sm:$0xff]
      %v1673 = vld [vmem:[#allocation2 + $0x1ac] sm:$0xf]
      %v1674 = vld [vmem:[#allocation2 + $0x1b0] sm:$0xff]
      %v1675 = vld [vmem:[#allocation2 + $0x1b8] sm:$0xf]
      %v1676 = vld [vmem:[#allocation2 + $0x1bc] sm:$0xff]
      %v1677 = vld [vmem:[#allocation2 + $0x1c4] sm:$0xf]
      %v1678 = vld [vmem:[#allocation2 + $0x1c8] sm:$0xff]
      %v1679 = vld [vmem:[#allocation2 + $0x1d0] sm:$0xf]
      %v1680 = vld [vmem:[#allocation2 + $0x1d4] sm:$0xff]
      %v1681 = vld [vmem:[#allocation2 + $0x1dc] sm:$0xf]
      %v1682 = vld [vmem:[#allocation2 + $0x1e0] sm:$0xff]
      %v1683 = vld [vmem:[#allocation2 + $0x1e8] sm:$0xf]
      %v1684 = vld [vmem:[#allocation2 + $0x1ec] sm:$0xff]
      %v1685 = vld [vmem:[#allocation2 + $0x1f4] sm:$0xf]
      %v1686 = vld [vmem:[#allocation2 + $0x1f8] sm:$0xff]
      %v1687 = vld [vmem:[#allocation2 + $0x200] sm:$0xf]
      %v1688 = vld [vmem:[#allocation2 + $0x204] sm:$0xff]
      %v1689 = vld [vmem:[#allocation2 + $0x20c] sm:$0xf]
      %v1690 = vld [vmem:[#allocation2 + $0x210] sm:$0xff]
      %v1691 = vld [vmem:[#allocation2 + $0x218] sm:$0xf]
      %v1692 = vld [vmem:[#allocation2 + $0x21c] sm:$0xff]
      %v1693 = vld [vmem:[#allocation2 + $0x224] sm:$0xf]
      %v1694 = vld [vmem:[#allocation2 + $0x228] sm:$0xff]
      %v1695 = vld [vmem:[#allocation2 + $0x230] sm:$0xf]
      %v1696 = vld [vmem:[#allocation2 + $0x234] sm:$0xff]
      %v1697 = vld [vmem:[#allocation2 + $0x23c] sm:$0xf]
      %v1698 = vld [vmem:[#allocation2 + $0x240] sm:$0xff]
      %v1699 = vld [vmem:[#allocation2 + $0x248] sm:$0xf]
      %v1700 = vld [vmem:[#allocation2 + $0x24c] sm:$0xff]
      %v1701 = vld [vmem:[#allocation2 + $0x254] sm:$0xf]
      %v1702 = vld [vmem:[#allocation2 + $0x258] sm:$0xff]
      %v1703 = vld [vmem:[#allocation2 + $0x260] sm:$0xf]
      %v1704 = vld [vmem:[#allocation2 + $0x264] sm:$0xff]
      %v1705 = vld [vmem:[#allocation2 + $0x26c] sm:$0xf]
      %v1706 = vld [vmem:[#allocation2 + $0x270] sm:$0xff]
      %v1707 = vld [vmem:[#allocation2 + $0x278] sm:$0xf]
      %v1708 = vld [vmem:[#allocation2 + $0x27c] sm:$0xff]
      %v1709 = vld [vmem:[#allocation2 + $0x284] sm:$0xf]
      %v1714 = vunpack.c.l.b16 %v1597
      %v1715 = vunpack.c.h.b16 %v1597
      %v1716 = vunpack.c.l.b16 %v1598
      %v1717 = vunpack.c.h.b16 %v1598
      %v1718 = vunpack.c.l.b16 %v1599
      %v1719 = vunpack.c.h.b16 %v1599
      %v1720 = vunpack.c.l.b16 %v1600
      %v1721 = vunpack.c.h.b16 %v1600
      %v1722 = vpack.c.b16 %v1718, %v1714
      %v1723 = vpack.c.b16 %v1719, %v1715
      %v1724 = vpack.c.b16 %v1720, %v1716
      %v1725 = vpack.c.b16 %v1721, %v1717
      %v1837 = vunpack.c.l.b16 %v1602
      %v1838 = vunpack.c.h.b16 %v1602
      %v1839 = vunpack.c.l.b16 %v1603
      %v1840 = vunpack.c.l.b16 %v1604
      %v1841 = vunpack.c.h.b16 %v1604
      %v1842 = vunpack.c.l.b16 %v1605
      %v1843 = vunpack.c.l.b16 %v1606
      %v1844 = vunpack.c.h.b16 %v1606
      %v1845 = vunpack.c.l.b16 %v1607
      %v1846 = vunpack.c.l.b16 %v1608
      %v1847 = vunpack.c.h.b16 %v1608
      %v1848 = vunpack.c.l.b16 %v1609
      %v1849 = vunpack.c.l.b16 %v1610
      %v1850 = vunpack.c.h.b16 %v1610
      %v1851 = vunpack.c.l.b16 %v1611
      %v1852 = vunpack.c.l.b16 %v1612
      %v1853 = vunpack.c.h.b16 %v1612
      %v1854 = vunpack.c.l.b16 %v1613
      %v1855 = vunpack.c.l.b16 %v1614
      %v1856 = vunpack.c.h.b16 %v1614
      %v1857 = vunpack.c.l.b16 %v1615
      %v1858 = vunpack.c.l.b16 %v1616
      %v1859 = vunpack.c.h.b16 %v1616
      %v1860 = vunpack.c.l.b16 %v1617
      %v1861 = vunpack.c.l.b16 %v1618
      %v1862 = vunpack.c.h.b16 %v1618
      %v1863 = vunpack.c.l.b16 %v1619
      %v1864 = vunpack.c.l.b16 %v1620
      %v1865 = vunpack.c.h.b16 %v1620
      %v1866 = vunpack.c.l.b16 %v1621
      %v1867 = vunpack.c.l.b16 %v1622
      %v1868 = vunpack.c.h.b16 %v1622
      %v1869 = vunpack.c.l.b16 %v1623
      %v1870 = vunpack.c.l.b16 %v1624
      %v1871 = vunpack.c.h.b16 %v1624
      %v1872 = vunpack.c.l.b16 %v1625
      %v1873 = vunpack.c.l.b16 %v1626
      %v1874 = vunpack.c.h.b16 %v1626
      %v1875 = vunpack.c.l.b16 %v1627
      %v1876 = vunpack.c.l.b16 %v1628
      %v1877 = vunpack.c.h.b16 %v1628
      %v1878 = vunpack.c.l.b16 %v1629
      %v1879 = vunpack.c.l.b16 %v1630
      %v1880 = vunpack.c.h.b16 %v1630
      %v1881 = vunpack.c.l.b16 %v1631
      %v1882 = vunpack.c.l.b16 %v1632
      %v1883 = vunpack.c.h.b16 %v1632
      %v1884 = vunpack.c.l.b16 %v1633
      %v1885 = vunpack.c.l.b16 %v1634
      %v1886 = vunpack.c.h.b16 %v1634
      %v1887 = vunpack.c.l.b16 %v1635
      %v1888 = vunpack.c.l.b16 %v1636
      %v1889 = vunpack.c.h.b16 %v1636
      %v1890 = vunpack.c.l.b16 %v1637
      %v1891 = vunpack.c.l.b16 %v1638
      %v1892 = vunpack.c.h.b16 %v1638
      %v1893 = vunpack.c.l.b16 %v1639
      %v1894 = vunpack.c.l.b16 %v1640
      %v1895 = vunpack.c.h.b16 %v1640
      %v1896 = vunpack.c.l.b16 %v1641
      %v1897 = vunpack.c.l.b16 %v1642
      %v1898 = vunpack.c.h.b16 %v1642
      %v1899 = vunpack.c.l.b16 %v1643
      %v1900 = vunpack.c.l.b16 %v1644
      %v1901 = vunpack.c.h.b16 %v1644
      %v1902 = vunpack.c.l.b16 %v1645
      %v1903 = vunpack.c.l.b16 %v1646
      %v1904 = vunpack.c.h.b16 %v1646
      %v1905 = vunpack.c.l.b16 %v1647
      %v1906 = vunpack.c.l.b16 %v1648
      %v1907 = vunpack.c.h.b16 %v1648
      %v1908 = vunpack.c.l.b16 %v1649
      %v1909 = vunpack.c.l.b16 %v1650
      %v1910 = vunpack.c.h.b16 %v1650
      %v1911 = vunpack.c.l.b16 %v1651
      %v1912 = vunpack.c.l.b16 %v1652
      %v1913 = vunpack.c.h.b16 %v1652
      %v1914 = vunpack.c.l.b16 %v1653
      %v1915 = vunpack.c.l.b16 %v1654
      %v1916 = vunpack.c.h.b16 %v1654
      %v1917 = vunpack.c.l.b16 %v1655
      %v1918 = vunpack.c.l.b16 %v1656
      %v1919 = vunpack.c.h.b16 %v1656
      %v1920 = vunpack.c.l.b16 %v1657
      %v1921 = vunpack.c.l.b16 %v1658
      %v1922 = vunpack.c.h.b16 %v1658
      %v1923 = vunpack.c.l.b16 %v1659
      %v1924 = vunpack.c.l.b16 %v1660
      %v1925 = vunpack.c.h.b16 %v1660
      %v1926 = vunpack.c.l.b16 %v1661
      %v1927 = vunpack.c.l.b16 %v1662
      %v1928 = vunpack.c.h.b16 %v1662
      %v1929 = vunpack.c.l.b16 %v1663
      %v1930 = vunpack.c.l.b16 %v1664
      %v1931 = vunpack.c.h.b16 %v1664
      %v1932 = vunpack.c.l.b16 %v1665
      %v1933 = vunpack.c.l.b16 %v1666
      %v1934 = vunpack.c.h.b16 %v1666
      %v1935 = vunpack.c.l.b16 %v1667
      %v1936 = vunpack.c.l.b16 %v1668
      %v1937 = vunpack.c.h.b16 %v1668
      %v1938 = vunpack.c.l.b16 %v1669
      %v1939 = vunpack.c.l.b16 %v1670
      %v1940 = vunpack.c.h.b16 %v1670
      %v1941 = vunpack.c.l.b16 %v1671
      %v1942 = vunpack.c.l.b16 %v1672
      %v1943 = vunpack.c.h.b16 %v1672
      %v1944 = vunpack.c.l.b16 %v1673
      %v1945 = vunpack.c.l.b16 %v1674
      %v1946 = vunpack.c.h.b16 %v1674
      %v1947 = vunpack.c.l.b16 %v1675
      %v1948 = vunpack.c.l.b16 %v1676
      %v1949 = vunpack.c.h.b16 %v1676
      %v1950 = vunpack.c.l.b16 %v1677
      %v1951 = vunpack.c.l.b16 %v1678
      %v1952 = vunpack.c.h.b16 %v1678
      %v1953 = vunpack.c.l.b16 %v1679
      %v1954 = vunpack.c.l.b16 %v1680
      %v1955 = vunpack.c.h.b16 %v1680
      %v1956 = vunpack.c.l.b16 %v1681
      %v1957 = vunpack.c.l.b16 %v1682
      %v1958 = vunpack.c.h.b16 %v1682
      %v1959 = vunpack.c.l.b16 %v1683
      %v1960 = vunpack.c.l.b16 %v1684
      %v1961 = vunpack.c.h.b16 %v1684
      %v1962 = vunpack.c.l.b16 %v1685
      %v1963 = vunpack.c.l.b16 %v1686
      %v1964 = vunpack.c.h.b16 %v1686
      %v1965 = vunpack.c.l.b16 %v1687
      %v1966 = vunpack.c.l.b16 %v1688
      %v1967 = vunpack.c.h.b16 %v1688
      %v1968 = vunpack.c.l.b16 %v1689
      %v1969 = vunpack.c.l.b16 %v1690
      %v1970 = vunpack.c.h.b16 %v1690
      %v1971 = vunpack.c.l.b16 %v1691
      %v1972 = vunpack.c.l.b16 %v1692
      %v1973 = vunpack.c.h.b16 %v1692
      %v1974 = vunpack.c.l.b16 %v1693
      %v1975 = vunpack.c.l.b16 %v1694
      %v1976 = vunpack.c.h.b16 %v1694
      %v1977 = vunpack.c.l.b16 %v1695
      %v1978 = vunpack.c.l.b16 %v1696
      %v1979 = vunpack.c.h.b16 %v1696
      %v1980 = vunpack.c.l.b16 %v1697
      %v1981 = vunpack.c.l.b16 %v1698
      %v1982 = vunpack.c.h.b16 %v1698
      %v1983 = vunpack.c.l.b16 %v1699
      %v1984 = vunpack.c.l.b16 %v1700
      %v1985 = vunpack.c.h.b16 %v1700
      %v1986 = vunpack.c.l.b16 %v1701
      %v1987 = vunpack.c.l.b16 %v1702
      %v1988 = vunpack.c.h.b16 %v1702
      %v1989 = vunpack.c.l.b16 %v1703
      %v1990 = vunpack.c.l.b16 %v1704
      %v1991 = vunpack.c.h.b16 %v1704
      %v1992 = vunpack.c.l.b16 %v1705
      %v1993 = vunpack.c.l.b16 %v1706
      %v1994 = vunpack.c.h.b16 %v1706
      %v1995 = vunpack.c.l.b16 %v1707
      %v1996 = vunpack.c.l.b16 %v1708
      %v1997 = vunpack.c.h.b16 %v1708
      %v1998 = vunpack.c.l.b16 %v1709
      %v1999 = vpack.c.b16 %v1840, %v1837
      %v2000 = vpack.c.b16 %v1841, %v1838
      %v2001 = vpack.c.b16 %v1842, %v1839
      %v2002 = vpack.c.b16 %v1846, %v1843
      %v2003 = vpack.c.b16 %v1847, %v1844
      %v2004 = vpack.c.b16 %v1848, %v1845
      %v2005 = vpack.c.b16 %v1852, %v1849
      %v2006 = vpack.c.b16 %v1853, %v1850
      %v2007 = vpack.c.b16 %v1854, %v1851
      %v2008 = vpack.c.b16 %v1858, %v1855
      %v2009 = vpack.c.b16 %v1859, %v1856
      %v2010 = vpack.c.b16 %v1860, %v1857
      %v2011 = vpack.c.b16 %v1864, %v1861
      %v2012 = vpack.c.b16 %v1865, %v1862
      %v2013 = vpack.c.b16 %v1866, %v1863
      %v2014 = vpack.c.b16 %v1870, %v1867
      %v2015 = vpack.c.b16 %v1871, %v1868
      %v2016 = vpack.c.b16 %v1872, %v1869
      %v2017 = vpack.c.b16 %v1876, %v1873
      %v2018 = vpack.c.b16 %v1877, %v1874
      %v2019 = vpack.c.b16 %v1878, %v1875
      %v2020 = vpack.c.b16 %v1882, %v1879
      %v2021 = vpack.c.b16 %v1883, %v1880
      %v2022 = vpack.c.b16 %v1884, %v1881
      %v2023 = vpack.c.b16 %v1888, %v1885
      %v2024 = vpack.c.b16 %v1889, %v1886
      %v2025 = vpack.c.b16 %v1890, %v1887
      %v2026 = vpack.c.b16 %v1894, %v1891
      %v2027 = vpack.c.b16 %v1895, %v1892
      %v2028 = vpack.c.b16 %v1896, %v1893
      %v2029 = vpack.c.b16 %v1900, %v1897
      %v2030 = vpack.c.b16 %v1901, %v1898
      %v2031 = vpack.c.b16 %v1902, %v1899
      %v2032 = vpack.c.b16 %v1906, %v1903
      %v2033 = vpack.c.b16 %v1907, %v1904
      %v2034 = vpack.c.b16 %v1908, %v1905
      %v2035 = vpack.c.b16 %v1912, %v1909
      %v2036 = vpack.c.b16 %v1913, %v1910
      %v2037 = vpack.c.b16 %v1914, %v1911
      %v2038 = vpack.c.b16 %v1918, %v1915
      %v2039 = vpack.c.b16 %v1919, %v1916
      %v2040 = vpack.c.b16 %v1920, %v1917
      %v2041 = vpack.c.b16 %v1924, %v1921
      %v2042 = vpack.c.b16 %v1925, %v1922
      %v2043 = vpack.c.b16 %v1926, %v1923
      %v2044 = vpack.c.b16 %v1930, %v1927
      %v2045 = vpack.c.b16 %v1931, %v1928
      %v2046 = vpack.c.b16 %v1932, %v1929
      %v2047 = vpack.c.b16 %v1936, %v1933
      %v2048 = vpack.c.b16 %v1937, %v1934
      %v2049 = vpack.c.b16 %v1938, %v1935
      %v2050 = vpack.c.b16 %v1942, %v1939
      %v2051 = vpack.c.b16 %v1943, %v1940
      %v2052 = vpack.c.b16 %v1944, %v1941
      %v2053 = vpack.c.b16 %v1948, %v1945
      %v2054 = vpack.c.b16 %v1949, %v1946
      %v2055 = vpack.c.b16 %v1950, %v1947
      %v2056 = vpack.c.b16 %v1954, %v1951
      %v2057 = vpack.c.b16 %v1955, %v1952
      %v2058 = vpack.c.b16 %v1956, %v1953
      %v2059 = vpack.c.b16 %v1960, %v1957
      %v2060 = vpack.c.b16 %v1961, %v1958
      %v2061 = vpack.c.b16 %v1962, %v1959
      %v2062 = vpack.c.b16 %v1966, %v1963
      %v2063 = vpack.c.b16 %v1967, %v1964
      %v2064 = vpack.c.b16 %v1968, %v1965
      %v2065 = vpack.c.b16 %v1972, %v1969
      %v2066 = vpack.c.b16 %v1973, %v1970
      %v2067 = vpack.c.b16 %v1974, %v1971
      %v2068 = vpack.c.b16 %v1978, %v1975
      %v2069 = vpack.c.b16 %v1979, %v1976
      %v2070 = vpack.c.b16 %v1980, %v1977
      %v2071 = vpack.c.b16 %v1984, %v1981
      %v2072 = vpack.c.b16 %v1985, %v1982
      %v2073 = vpack.c.b16 %v1986, %v1983
      %v2074 = vpack.c.b16 %v1990, %v1987
      %v2075 = vpack.c.b16 %v1991, %v1988
      %v2076 = vpack.c.b16 %v1992, %v1989
      %v2077 = vpack.c.b16 %v1996, %v1993
      %v2078 = vpack.c.b16 %v1997, %v1994
      %v2079 = vpack.c.b16 %v1998, %v1995
      %vm2161 = vcmask 392192
      %v2163 = vsel %vm2161, %v1725, 0
      %2165 = vmatpush.bf16.msra.mxu0 %v2020
      %2166 = vmatpush.bf16.msra.mxu0 %v2017
      %2167 = vmatpush.bf16.msra.mxu0 %v2014
      %2168 = vmatpush.bf16.msra.mxu0 %v2011
      %2169 = vmatpush.bf16.msra.mxu0 %v2008
      %2170 = vmatpush.bf16.msra.mxu0 %v2005
      %2171 = vmatpush.bf16.msra.mxu0 %v2002
      %2172 = vmatpush.bf16.msra.mxu0 %v1999
      %2173 = vmatmul.bf16.gmra.mxu0 %v1722
      %v2174 = vpop.f32.mrf.mxu0
      %v2175 = vadd.f32 0.0, %v2174
      %v2176 = vpop.f32.mrf.mxu0
      %v2177 = vadd.f32 0.0, %v2176
      %2178 = vdwg.mxu0
      %2179 = vmatpush.bf16.msra.mxu0 %v2044
      %2180 = vmatpush.bf16.msra.mxu0 %v2041
      %2181 = vmatpush.bf16.msra.mxu0 %v2038
      %2182 = vmatpush.bf16.msra.mxu0 %v2035
      %2183 = vmatpush.bf16.msra.mxu0 %v2032
      %2184 = vmatpush.bf16.msra.mxu0 %v2029
      %2185 = vmatpush.bf16.msra.mxu0 %v2026
      %2186 = vmatpush.bf16.msra.mxu0 %v2023
      %2187 = vmatmul.bf16.gmra.mxu0 %v1723
      %v2188 = vpop.f32.mrf.mxu0
      %v2189 = vadd.f32 %v2175, %v2188
      %v2190 = vpop.f32.mrf.mxu0
      %v2191 = vadd.f32 %v2177, %v2190
      %2192 = vdwg.mxu0
      %2193 = vmatpush.bf16.msra.mxu0 %v2068
      %2194 = vmatpush.bf16.msra.mxu0 %v2065
      %2195 = vmatpush.bf16.msra.mxu0 %v2062
      %2196 = vmatpush.bf16.msra.mxu0 %v2059
      %2197 = vmatpush.bf16.msra.mxu0 %v2056
      %2198 = vmatpush.bf16.msra.mxu0 %v2053
      %2199 = vmatpush.bf16.msra.mxu0 %v2050
      %2200 = vmatpush.bf16.msra.mxu0 %v2047
      %2201 = vmatmul.bf16.gmra.mxu0 %v1724
      %v2202 = vpop.f32.mrf.mxu0
      %v2203 = vadd.f32 %v2189, %v2202
      %v2204 = vpop.f32.mrf.mxu0
      %v2205 = vadd.f32 %v2191, %v2204
      %2206 = vdwg.mxu0
      %2207 = vmatpush.bf16.msra.mxu0 0
      %2208 = vmatpush.bf16.msra.mxu0 0
      %2209 = vmatpush.bf16.msra.mxu0 0
      %2210 = vmatpush.bf16.msra.mxu0 0
      %2211 = vmatpush.bf16.msra.mxu0 0
      %2212 = vmatpush.bf16.msra.mxu0 %v2077
      %2213 = vmatpush.bf16.msra.mxu0 %v2074
      %2214 = vmatpush.bf16.msra.mxu0 %v2071
      %2215 = vmatmul.bf16.gmra.mxu0 %v2163
      %v2216 = vpop.f32.mrf.mxu0
      %v2217 = vadd.f32 %v2203, %v2216
      %v2218 = vpop.f32.mrf.mxu0
      %v2219 = vadd.f32 %v2205, %v2218
      %2220 = vdwg.mxu0
      %2221 = vmatpush.bf16.msra.mxu0 %v2021
      %2222 = vmatpush.bf16.msra.mxu0 %v2018
      %2223 = vmatpush.bf16.msra.mxu0 %v2015
      %2224 = vmatpush.bf16.msra.mxu0 %v2012
      %2225 = vmatpush.bf16.msra.mxu0 %v2009
      %2226 = vmatpush.bf16.msra.mxu0 %v2006
      %2227 = vmatpush.bf16.msra.mxu0 %v2003
      %2228 = vmatpush.bf16.msra.mxu0 %v2000
      %2229 = vmatmul.bf16.gmra.mxu0 %v1722
      %v2230 = vpop.f32.mrf.mxu0
      %v2231 = vadd.f32 0.0, %v2230
      %v2232 = vpop.f32.mrf.mxu0
      %v2233 = vadd.f32 0.0, %v2232
      %2234 = vdwg.mxu0
      %2235 = vmatpush.bf16.msra.mxu0 %v2045
      %2236 = vmatpush.bf16.msra.mxu0 %v2042
      %2237 = vmatpush.bf16.msra.mxu0 %v2039
      %2238 = vmatpush.bf16.msra.mxu0 %v2036
      %2239 = vmatpush.bf16.msra.mxu0 %v2033
      %2240 = vmatpush.bf16.msra.mxu0 %v2030
      %2241 = vmatpush.bf16.msra.mxu0 %v2027
      %2242 = vmatpush.bf16.msra.mxu0 %v2024
      %2243 = vmatmul.bf16.gmra.mxu0 %v1723
      %v2244 = vpop.f32.mrf.mxu0
      %v2245 = vadd.f32 %v2231, %v2244
      %v2246 = vpop.f32.mrf.mxu0
      %v2247 = vadd.f32 %v2233, %v2246
      %2248 = vdwg.mxu0
      %2249 = vmatpush.bf16.msra.mxu0 %v2069
      %2250 = vmatpush.bf16.msra.mxu0 %v2066
      %2251 = vmatpush.bf16.msra.mxu0 %v2063
      %2252 = vmatpush.bf16.msra.mxu0 %v2060
      %2253 = vmatpush.bf16.msra.mxu0 %v2057
      %2254 = vmatpush.bf16.msra.mxu0 %v2054
      %2255 = vmatpush.bf16.msra.mxu0 %v2051
      %2256 = vmatpush.bf16.msra.mxu0 %v2048
      %2257 = vmatmul.bf16.gmra.mxu0 %v1724
      %v2258 = vpop.f32.mrf.mxu0
      %v2259 = vadd.f32 %v2245, %v2258
      %v2260 = vpop.f32.mrf.mxu0
      %v2261 = vadd.f32 %v2247, %v2260
      %2262 = vdwg.mxu0
      %2263 = vmatpush.bf16.msra.mxu0 0
      %2264 = vmatpush.bf16.msra.mxu0 0
      %2265 = vmatpush.bf16.msra.mxu0 0
      %2266 = vmatpush.bf16.msra.mxu0 0
      %2267 = vmatpush.bf16.msra.mxu0 0
      %2268 = vmatpush.bf16.msra.mxu0 %v2078
      %2269 = vmatpush.bf16.msra.mxu0 %v2075
      %2270 = vmatpush.bf16.msra.mxu0 %v2072
      %2271 = vmatmul.bf16.gmra.mxu0 %v2163
      %v2272 = vpop.f32.mrf.mxu0
      %v2273 = vadd.f32 %v2259, %v2272
      %v2274 = vpop.f32.mrf.mxu0
      %v2275 = vadd.f32 %v2261, %v2274
      %2276 = vdwg.mxu0
      %2277 = vmatpush.bf16.msra.mxu0 %v2022
      %2278 = vmatpush.bf16.msra.mxu0 %v2019
      %2279 = vmatpush.bf16.msra.mxu0 %v2016
      %2280 = vmatpush.bf16.msra.mxu0 %v2013
      %2281 = vmatpush.bf16.msra.mxu0 %v2010
      %2282 = vmatpush.bf16.msra.mxu0 %v2007
      %2283 = vmatpush.bf16.msra.mxu0 %v2004
      %2284 = vmatpush.bf16.msra.mxu0 %v2001
      %2285 = vmatmul.bf16.gmra.mxu0 %v1722
      %v2286 = vpop.f32.mrf.mxu0
      %v2287 = vadd.f32 0.0, %v2286
      %v2288 = vpop.f32.mrf.mxu0
      %v2289 = vadd.f32 0.0, %v2288
      %2290 = vdwg.mxu0
      %2291 = vmatpush.bf16.msra.mxu0 %v2046
      %2292 = vmatpush.bf16.msra.mxu0 %v2043
      %2293 = vmatpush.bf16.msra.mxu0 %v2040
      %2294 = vmatpush.bf16.msra.mxu0 %v2037
      %2295 = vmatpush.bf16.msra.mxu0 %v2034
      %2296 = vmatpush.bf16.msra.mxu0 %v2031
      %2297 = vmatpush.bf16.msra.mxu0 %v2028
      %2298 = vmatpush.bf16.msra.mxu0 %v2025
      %2299 = vmatmul.bf16.gmra.mxu0 %v1723
      %v2300 = vpop.f32.mrf.mxu0
      %v2301 = vadd.f32 %v2287, %v2300
      %v2302 = vpop.f32.mrf.mxu0
      %v2303 = vadd.f32 %v2289, %v2302
      %2304 = vdwg.mxu0
      %2305 = vmatpush.bf16.msra.mxu0 %v2070
      %2306 = vmatpush.bf16.msra.mxu0 %v2067
      %2307 = vmatpush.bf16.msra.mxu0 %v2064
      %2308 = vmatpush.bf16.msra.mxu0 %v2061
      %2309 = vmatpush.bf16.msra.mxu0 %v2058
      %2310 = vmatpush.bf16.msra.mxu0 %v2055
      %2311 = vmatpush.bf16.msra.mxu0 %v2052
      %2312 = vmatpush.bf16.msra.mxu0 %v2049
      %2313 = vmatmul.bf16.gmra.mxu0 %v1724
      %v2314 = vpop.f32.mrf.mxu0
      %v2315 = vadd.f32 %v2301, %v2314
      %v2316 = vpop.f32.mrf.mxu0
      %v2317 = vadd.f32 %v2303, %v2316
      %2318 = vdwg.mxu0
      %2319 = vmatpush.bf16.msra.mxu0 0
      %2320 = vmatpush.bf16.msra.mxu0 0
      %2321 = vmatpush.bf16.msra.mxu0 0
      %2322 = vmatpush.bf16.msra.mxu0 0
      %2323 = vmatpush.bf16.msra.mxu0 0
      %2324 = vmatpush.bf16.msra.mxu0 %v2079
      %2325 = vmatpush.bf16.msra.mxu0 %v2076
      %2326 = vmatpush.bf16.msra.mxu0 %v2073
      %2327 = vmatmul.bf16.gmra.mxu0 %v2163
      %v2328 = vpop.f32.mrf.mxu0
      %v2329 = vadd.f32 %v2315, %v2328
      %v2330 = vpop.f32.mrf.mxu0
      %v2331 = vadd.f32 %v2317, %v2330
      %2332 = vdwg.mxu0
      %v2333 = vpack.c.bf16 %v2273, %v2217
      %v2334 = vpack.c.bf16 %v2329, %v2329
      %v2335 = vpack.c.bf16 %v2275, %v2219
      %v2336 = vpack.c.bf16 %v2331, %v2331
      %2337 = vst [vmem:[%s229] sm:$0xff] %v2333
      %2338 = vst [vmem:[%s229 + $0x8] sm:$0xf] %v2334
      %2339 = vst [vmem:[%s229 + $0xc] sm:$0xff] %v2335
      %2340 = vst [vmem:[%s229 + $0x14] sm:$0xf] %v2336
      %v2342 = vperm.slane %v1601, 0
      %v2343 = vperm.slane %v1601, 1
      %v2344 = vperm.slane %v1601, 2
      %v2348 = vmul.f32 %v2217, %v2342
      %v2349 = vmul.f32 %v2273, %v2343
      %v2350 = vmul.f32 %v2329, %v2344
      %v2351 = vmul.f32 %v2219, %v2342
      %v2352 = vmul.f32 %v2275, %v2343
      %v2353 = vmul.f32 %v2331, %v2344
      %v2354 = vadd.f32 %v2348, %v2349
      %v2355 = vadd.f32 %v2354, %v2350
      %2356 = vadd.xlane.f32.xlu0 %v2355
      %v2357 = vpop.xlane.xlu0 %2356
      %v2358 = vadd.f32 %v2351, %v2352
      %v2359 = vadd.f32 %v2358, %v2353
      %2360 = vadd.xlane.f32.xlu0 %v2359
      %v2361 = vpop.xlane.xlu0 %2360
      %v2362 = vadd.f32 %v2357, 0.0
      %v2363 = vadd.f32 %v2361, 0.0
      %v2364 = vmul.f32 %v2348, %v2348
      %v2365 = vmul.f32 %v2349, %v2349
      %v2366 = vmul.f32 %v2350, %v2350
      %v2367 = vmul.f32 %v2351, %v2351
      %v2368 = vmul.f32 %v2352, %v2352
      %v2369 = vmul.f32 %v2353, %v2353
      %v2370 = vadd.f32 %v2364, %v2365
      %v2371 = vadd.f32 %v2370, %v2366
      %2372 = vadd.xlane.f32.xlu0 %v2371
      %v2373 = vpop.xlane.xlu0 %2372
      %v2374 = vadd.f32 %v2367, %v2368
      %v2375 = vadd.f32 %v2374, %v2369
      %2376 = vadd.xlane.f32.xlu0 %v2375
      %v2377 = vpop.xlane.xlu0 %2376
      %v2378 = vadd.f32 %v2373, 0.0
      %v2379 = vadd.f32 %v2377, 0.0
      %v2380 = vld [vmem:[#allocation2 + $0xd8] sm:$0xff]
      %v2381 = vld [vmem:[#allocation2 + $0xe0] sm:$0xf]
      %v2382 = vld [vmem:[#allocation2 + $0xe4] sm:$0xff]
      %v2383 = vld [vmem:[#allocation2 + $0xec] sm:$0xf]
      %v2384 = vld [vmem:[#allocation2 + $0xf0] sm:$0xff]
      %v2385 = vld [vmem:[#allocation2 + $0xf8] sm:$0xf]
      %v2386 = vld [vmem:[#allocation2 + $0xfc] sm:$0xff]
      %v2387 = vld [vmem:[#allocation2 + $0x104] sm:$0xf]
      %v2388 = vld [vmem:[#allocation2 + $0x108] sm:$0xff]
      %v2389 = vld [vmem:[#allocation2 + $0x110] sm:$0xf]
      %v2390 = vld [vmem:[#allocation2 + $0x114] sm:$0xff]
      %v2391 = vld [vmem:[#allocation2 + $0x11c] sm:$0xf]
      %v2392 = vld [vmem:[#allocation2 + $0x120] sm:$0xff]
      %v2393 = vld [vmem:[#allocation2 + $0x128] sm:$0xf]
      %v2394 = vld [vmem:[#allocation2 + $0x12c] sm:$0xff]
      %v2395 = vld [vmem:[#allocation2 + $0x134] sm:$0xf]
      %v2396 = vld [vmem:[#allocation2 + $0x138] sm:$0xff]
      %v2397 = vld [vmem:[#allocation2 + $0x140] sm:$0xf]
      %v2398 = vld [vmem:[#allocation2 + $0x144] sm:$0xff]
      %v2399 = vld [vmem:[#allocation2 + $0x14c] sm:$0xf]
      %v2400 = vld [vmem:[#allocation2 + $0x150] sm:$0xff]
      %v2401 = vld [vmem:[#allocation2 + $0x158] sm:$0xf]
      %v2402 = vld [vmem:[#allocation2 + $0x15c] sm:$0xff]
      %v2403 = vld [vmem:[#allocation2 + $0x164] sm:$0xf]
      %v2404 = vld [vmem:[#allocation2 + $0x168] sm:$0xff]
      %v2405 = vld [vmem:[#allocation2 + $0x170] sm:$0xf]
      %v2406 = vld [vmem:[#allocation2 + $0x174] sm:$0xff]
      %v2407 = vld [vmem:[#allocation2 + $0x17c] sm:$0xf]
      %v2408 = vld [vmem:[#allocation2 + $0x180] sm:$0xff]
      %v2409 = vld [vmem:[#allocation2 + $0x188] sm:$0xf]
      %v2410 = vld [vmem:[#allocation2 + $0x18c] sm:$0xff]
      %v2411 = vld [vmem:[#allocation2 + $0x194] sm:$0xf]
      %v2412 = vld [vmem:[#allocation2 + $0x198] sm:$0xff]
      %v2413 = vld [vmem:[#allocation2 + $0x1a0] sm:$0xf]
      %v2414 = vld [vmem:[#allocation2 + $0x1a4] sm:$0xff]
      %v2415 = vld [vmem:[#allocation2 + $0x1ac] sm:$0xf]
      %v2416 = vld [vmem:[#allocation2 + $0x1b0] sm:$0xff]
      %v2417 = vld [vmem:[#allocation2 + $0x1b8] sm:$0xf]
      %v2418 = vld [vmem:[#allocation2 + $0x1bc] sm:$0xff]
      %v2419 = vld [vmem:[#allocation2 + $0x1c4] sm:$0xf]
      %v2420 = vld [vmem:[#allocation2 + $0x1c8] sm:$0xff]
      %v2421 = vld [vmem:[#allocation2 + $0x1d0] sm:$0xf]
      %v2422 = vld [vmem:[#allocation2 + $0x1d4] sm:$0xff]
      %v2423 = vld [vmem:[#allocation2 + $0x1dc] sm:$0xf]
      %v2424 = vld [vmem:[#allocation2 + $0x1e0] sm:$0xff]
      %v2425 = vld [vmem:[#allocation2 + $0x1e8] sm:$0xf]
      %v2426 = vld [vmem:[#allocation2 + $0x1ec] sm:$0xff]
      %v2427 = vld [vmem:[#allocation2 + $0x1f4] sm:$0xf]
      %v2428 = vld [vmem:[#allocation2 + $0x1f8] sm:$0xff]
      %v2429 = vld [vmem:[#allocation2 + $0x200] sm:$0xf]
      %v2430 = vld [vmem:[#allocation2 + $0x204] sm:$0xff]
      %v2431 = vld [vmem:[#allocation2 + $0x20c] sm:$0xf]
      %v2432 = vld [vmem:[#allocation2 + $0x210] sm:$0xff]
      %v2433 = vld [vmem:[#allocation2 + $0x218] sm:$0xf]
      %v2434 = vld [vmem:[#allocation2 + $0x21c] sm:$0xff]
      %v2435 = vld [vmem:[#allocation2 + $0x224] sm:$0xf]
      %v2436 = vld [vmem:[#allocation2 + $0x228] sm:$0xff]
      %v2437 = vld [vmem:[#allocation2 + $0x230] sm:$0xf]
      %v2438 = vld [vmem:[#allocation2 + $0x234] sm:$0xff]
      %v2439 = vld [vmem:[#allocation2 + $0x23c] sm:$0xf]
      %v2440 = vld [vmem:[#allocation2 + $0x240] sm:$0xff]
      %v2441 = vld [vmem:[#allocation2 + $0x248] sm:$0xf]
      %v2442 = vld [vmem:[#allocation2 + $0x24c] sm:$0xff]
      %v2443 = vld [vmem:[#allocation2 + $0x254] sm:$0xf]
      %v2444 = vld [vmem:[#allocation2 + $0x258] sm:$0xff]
      %v2445 = vld [vmem:[#allocation2 + $0x260] sm:$0xf]
      %v2446 = vld [vmem:[#allocation2 + $0x264] sm:$0xff]
      %v2447 = vld [vmem:[#allocation2 + $0x26c] sm:$0xf]
      %v2448 = vld [vmem:[#allocation2 + $0x270] sm:$0xff]
      %v2449 = vld [vmem:[#allocation2 + $0x278] sm:$0xf]
      %v2450 = vld [vmem:[#allocation2 + $0x27c] sm:$0xff]
      %v2451 = vld [vmem:[#allocation2 + $0x284] sm:$0xf]
      %v2452 = vld [vmem:[#allocation2 + $0x288] sm:$0xff]
      %v2453 = vld [vmem:[#allocation2 + $0x290] sm:$0xf]
      %v2454 = vld [vmem:[#allocation2 + $0x294] sm:$0xff]
      %v2455 = vld [vmem:[#allocation2 + $0x29c] sm:$0xf]
      %v2456 = vld [vmem:[#allocation2 + $0x2a0] sm:$0xff]
      %v2457 = vld [vmem:[#allocation2 + $0x2a8] sm:$0xf]
      %v2458 = vld [vmem:[#allocation2 + $0x2ac] sm:$0xff]
      %v2459 = vld [vmem:[#allocation2 + $0x2b4] sm:$0xf]
      %v2460 = vld [vmem:[#allocation2 + $0x2b8] sm:$0xff]
      %v2461 = vld [vmem:[#allocation2 + $0x2c0] sm:$0xf]
      %v2462 = vld [vmem:[#allocation2 + $0x2c4] sm:$0xff]
      %v2463 = vld [vmem:[#allocation2 + $0x2cc] sm:$0xf]
      %v2464 = vld [vmem:[#allocation2 + $0x2d0] sm:$0xff]
      %v2465 = vld [vmem:[#allocation2 + $0x2d8] sm:$0xf]
      %v2466 = vld [vmem:[#allocation2 + $0x2dc] sm:$0xff]
      %v2467 = vld [vmem:[#allocation2 + $0x2e4] sm:$0xf]
      %v2468 = vld [vmem:[#allocation2 + $0x2e8] sm:$0xff]
      %v2469 = vld [vmem:[#allocation2 + $0x2f0] sm:$0xf]
      %v2470 = vld [vmem:[#allocation2 + $0x2f4] sm:$0xff]
      %v2471 = vld [vmem:[#allocation2 + $0x2fc] sm:$0xf]
      %v2472 = vld [vmem:[#allocation2 + $0x300] sm:$0xff]
      %v2473 = vld [vmem:[#allocation2 + $0x308] sm:$0xf]
      %v2474 = vld [vmem:[#allocation2 + $0x30c] sm:$0xff]
      %v2475 = vld [vmem:[#allocation2 + $0x314] sm:$0xf]
      %v2476 = vld [vmem:[#allocation2 + $0x318] sm:$0xff]
      %v2477 = vld [vmem:[#allocation2 + $0x320] sm:$0xf]
      %v2478 = vld [vmem:[#allocation2 + $0x324] sm:$0xff]
      %v2479 = vld [vmem:[#allocation2 + $0x32c] sm:$0xf]
      %v2480 = vld [vmem:[#allocation2 + $0x330] sm:$0xff]
      %v2481 = vld [vmem:[#allocation2 + $0x338] sm:$0xf]
      %v2482 = vld [vmem:[#allocation2 + $0x33c] sm:$0xff]
      %v2483 = vld [vmem:[#allocation2 + $0x344] sm:$0xf]
      %v2484 = vld [vmem:[#allocation2 + $0x348] sm:$0xff]
      %v2485 = vld [vmem:[#allocation2 + $0x350] sm:$0xf]
      %v2486 = vld [vmem:[#allocation2 + $0x354] sm:$0xff]
      %v2487 = vld [vmem:[#allocation2 + $0x35c] sm:$0xf]
      %v2596 = vunpack.c.l.b16 %v2380
      %v2597 = vunpack.c.h.b16 %v2380
      %v2598 = vunpack.c.l.b16 %v2381
      %v2599 = vunpack.c.l.b16 %v2382
      %v2600 = vunpack.c.h.b16 %v2382
      %v2601 = vunpack.c.l.b16 %v2383
      %v2602 = vunpack.c.l.b16 %v2384
      %v2603 = vunpack.c.h.b16 %v2384
      %v2604 = vunpack.c.l.b16 %v2385
      %v2605 = vunpack.c.l.b16 %v2386
      %v2606 = vunpack.c.h.b16 %v2386
      %v2607 = vunpack.c.l.b16 %v2387
      %v2608 = vunpack.c.l.b16 %v2388
      %v2609 = vunpack.c.h.b16 %v2388
      %v2610 = vunpack.c.l.b16 %v2389
      %v2611 = vunpack.c.l.b16 %v2390
      %v2612 = vunpack.c.h.b16 %v2390
      %v2613 = vunpack.c.l.b16 %v2391
      %v2614 = vunpack.c.l.b16 %v2392
      %v2615 = vunpack.c.h.b16 %v2392
      %v2616 = vunpack.c.l.b16 %v2393
      %v2617 = vunpack.c.l.b16 %v2394
      %v2618 = vunpack.c.h.b16 %v2394
      %v2619 = vunpack.c.l.b16 %v2395
      %v2620 = vunpack.c.l.b16 %v2396
      %v2621 = vunpack.c.h.b16 %v2396
      %v2622 = vunpack.c.l.b16 %v2397
      %v2623 = vunpack.c.l.b16 %v2398
      %v2624 = vunpack.c.h.b16 %v2398
      %v2625 = vunpack.c.l.b16 %v2399
      %v2626 = vunpack.c.l.b16 %v2400
      %v2627 = vunpack.c.h.b16 %v2400
      %v2628 = vunpack.c.l.b16 %v2401
      %v2629 = vunpack.c.l.b16 %v2402
      %v2630 = vunpack.c.h.b16 %v2402
      %v2631 = vunpack.c.l.b16 %v2403
      %v2632 = vunpack.c.l.b16 %v2404
      %v2633 = vunpack.c.h.b16 %v2404
      %v2634 = vunpack.c.l.b16 %v2405
      %v2635 = vunpack.c.l.b16 %v2406
      %v2636 = vunpack.c.h.b16 %v2406
      %v2637 = vunpack.c.l.b16 %v2407
      %v2638 = vunpack.c.l.b16 %v2408
      %v2639 = vunpack.c.h.b16 %v2408
      %v2640 = vunpack.c.l.b16 %v2409
      %v2641 = vunpack.c.l.b16 %v2410
      %v2642 = vunpack.c.h.b16 %v2410
      %v2643 = vunpack.c.l.b16 %v2411
      %v2644 = vunpack.c.l.b16 %v2412
      %v2645 = vunpack.c.h.b16 %v2412
      %v2646 = vunpack.c.l.b16 %v2413
      %v2647 = vunpack.c.l.b16 %v2414
      %v2648 = vunpack.c.h.b16 %v2414
      %v2649 = vunpack.c.l.b16 %v2415
      %v2650 = vunpack.c.l.b16 %v2416
      %v2651 = vunpack.c.h.b16 %v2416
      %v2652 = vunpack.c.l.b16 %v2417
      %v2653 = vunpack.c.l.b16 %v2418
      %v2654 = vunpack.c.h.b16 %v2418
      %v2655 = vunpack.c.l.b16 %v2419
      %v2656 = vunpack.c.l.b16 %v2420
      %v2657 = vunpack.c.h.b16 %v2420
      %v2658 = vunpack.c.l.b16 %v2421
      %v2659 = vunpack.c.l.b16 %v2422
      %v2660 = vunpack.c.h.b16 %v2422
      %v2661 = vunpack.c.l.b16 %v2423
      %v2662 = vunpack.c.l.b16 %v2424
      %v2663 = vunpack.c.h.b16 %v2424
      %v2664 = vunpack.c.l.b16 %v2425
      %v2665 = vunpack.c.l.b16 %v2426
      %v2666 = vunpack.c.h.b16 %v2426
      %v2667 = vunpack.c.l.b16 %v2427
      %v2668 = vunpack.c.l.b16 %v2428
      %v2669 = vunpack.c.h.b16 %v2428
      %v2670 = vunpack.c.l.b16 %v2429
      %v2671 = vunpack.c.l.b16 %v2430
      %v2672 = vunpack.c.h.b16 %v2430
      %v2673 = vunpack.c.l.b16 %v2431
      %v2674 = vunpack.c.l.b16 %v2432
      %v2675 = vunpack.c.h.b16 %v2432
      %v2676 = vunpack.c.l.b16 %v2433
      %v2677 = vunpack.c.l.b16 %v2434
      %v2678 = vunpack.c.h.b16 %v2434
      %v2679 = vunpack.c.l.b16 %v2435
      %v2680 = vunpack.c.l.b16 %v2436
      %v2681 = vunpack.c.h.b16 %v2436
      %v2682 = vunpack.c.l.b16 %v2437
      %v2683 = vunpack.c.l.b16 %v2438
      %v2684 = vunpack.c.h.b16 %v2438
      %v2685 = vunpack.c.l.b16 %v2439
      %v2686 = vunpack.c.l.b16 %v2440
      %v2687 = vunpack.c.h.b16 %v2440
      %v2688 = vunpack.c.l.b16 %v2441
      %v2689 = vunpack.c.l.b16 %v2442
      %v2690 = vunpack.c.h.b16 %v2442
      %v2691 = vunpack.c.l.b16 %v2443
      %v2692 = vunpack.c.l.b16 %v2444
      %v2693 = vunpack.c.h.b16 %v2444
      %v2694 = vunpack.c.l.b16 %v2445
      %v2695 = vunpack.c.l.b16 %v2446
      %v2696 = vunpack.c.h.b16 %v2446
      %v2697 = vunpack.c.l.b16 %v2447
      %v2698 = vunpack.c.l.b16 %v2448
      %v2699 = vunpack.c.h.b16 %v2448
      %v2700 = vunpack.c.l.b16 %v2449
      %v2701 = vunpack.c.l.b16 %v2450
      %v2702 = vunpack.c.h.b16 %v2450
      %v2703 = vunpack.c.l.b16 %v2451
      %v2704 = vunpack.c.l.b16 %v2452
      %v2705 = vunpack.c.h.b16 %v2452
      %v2706 = vunpack.c.l.b16 %v2453
      %v2707 = vunpack.c.l.b16 %v2454
      %v2708 = vunpack.c.h.b16 %v2454
      %v2709 = vunpack.c.l.b16 %v2455
      %v2710 = vunpack.c.l.b16 %v2456
      %v2711 = vunpack.c.h.b16 %v2456
      %v2712 = vunpack.c.l.b16 %v2457
      %v2713 = vunpack.c.l.b16 %v2458
      %v2714 = vunpack.c.h.b16 %v2458
      %v2715 = vunpack.c.l.b16 %v2459
      %v2716 = vunpack.c.l.b16 %v2460
      %v2717 = vunpack.c.h.b16 %v2460
      %v2718 = vunpack.c.l.b16 %v2461
      %v2719 = vunpack.c.l.b16 %v2462
      %v2720 = vunpack.c.h.b16 %v2462
      %v2721 = vunpack.c.l.b16 %v2463
      %v2722 = vunpack.c.l.b16 %v2464
      %v2723 = vunpack.c.h.b16 %v2464
      %v2724 = vunpack.c.l.b16 %v2465
      %v2725 = vunpack.c.l.b16 %v2466
      %v2726 = vunpack.c.h.b16 %v2466
      %v2727 = vunpack.c.l.b16 %v2467
      %v2728 = vunpack.c.l.b16 %v2468
      %v2729 = vunpack.c.h.b16 %v2468
      %v2730 = vunpack.c.l.b16 %v2469
      %v2731 = vunpack.c.l.b16 %v2470
      %v2732 = vunpack.c.h.b16 %v2470
      %v2733 = vunpack.c.l.b16 %v2471
      %v2734 = vunpack.c.l.b16 %v2472
      %v2735 = vunpack.c.h.b16 %v2472
      %v2736 = vunpack.c.l.b16 %v2473
      %v2737 = vunpack.c.l.b16 %v2474
      %v2738 = vunpack.c.h.b16 %v2474
      %v2739 = vunpack.c.l.b16 %v2475
      %v2740 = vunpack.c.l.b16 %v2476
      %v2741 = vunpack.c.h.b16 %v2476
      %v2742 = vunpack.c.l.b16 %v2477
      %v2743 = vunpack.c.l.b16 %v2478
      %v2744 = vunpack.c.h.b16 %v2478
      %v2745 = vunpack.c.l.b16 %v2479
      %v2746 = vunpack.c.l.b16 %v2480
      %v2747 = vunpack.c.h.b16 %v2480
      %v2748 = vunpack.c.l.b16 %v2481
      %v2749 = vunpack.c.l.b16 %v2482
      %v2750 = vunpack.c.h.b16 %v2482
      %v2751 = vunpack.c.l.b16 %v2483
      %v2752 = vunpack.c.l.b16 %v2484
      %v2753 = vunpack.c.h.b16 %v2484
      %v2754 = vunpack.c.l.b16 %v2485
      %v2755 = vunpack.c.l.b16 %v2486
      %v2756 = vunpack.c.h.b16 %v2486
      %v2757 = vunpack.c.l.b16 %v2487
      %v2758 = vpack.c.b16 %v2599, %v2596
      %v2759 = vpack.c.b16 %v2600, %v2597
      %v2760 = vpack.c.b16 %v2601, %v2598
      %v2761 = vpack.c.b16 %v2605, %v2602
      %v2762 = vpack.c.b16 %v2606, %v2603
      %v2763 = vpack.c.b16 %v2607, %v2604
      %v2764 = vpack.c.b16 %v2611, %v2608
      %v2765 = vpack.c.b16 %v2612, %v2609
      %v2766 = vpack.c.b16 %v2613, %v2610
      %v2767 = vpack.c.b16 %v2617, %v2614
      %v2768 = vpack.c.b16 %v2618, %v2615
      %v2769 = vpack.c.b16 %v2619, %v2616
      %v2770 = vpack.c.b16 %v2623, %v2620
      %v2771 = vpack.c.b16 %v2624, %v2621
      %v2772 = vpack.c.b16 %v2625, %v2622
      %v2773 = vpack.c.b16 %v2629, %v2626
      %v2774 = vpack.c.b16 %v2630, %v2627
      %v2775 = vpack.c.b16 %v2631, %v2628
      %v2776 = vpack.c.b16 %v2635, %v2632
      %v2777 = vpack.c.b16 %v2636, %v2633
      %v2778 = vpack.c.b16 %v2637, %v2634
      %v2779 = vpack.c.b16 %v2641, %v2638
      %v2780 = vpack.c.b16 %v2642, %v2639
      %v2781 = vpack.c.b16 %v2643, %v2640
      %v2782 = vpack.c.b16 %v2647, %v2644
      %v2783 = vpack.c.b16 %v2648, %v2645
      %v2784 = vpack.c.b16 %v2649, %v2646
      %v2785 = vpack.c.b16 %v2653, %v2650
      %v2786 = vpack.c.b16 %v2654, %v2651
      %v2787 = vpack.c.b16 %v2655, %v2652
      %v2788 = vpack.c.b16 %v2659, %v2656
      %v2789 = vpack.c.b16 %v2660, %v2657
      %v2790 = vpack.c.b16 %v2661, %v2658
      %v2791 = vpack.c.b16 %v2665, %v2662
      %v2792 = vpack.c.b16 %v2666, %v2663
      %v2793 = vpack.c.b16 %v2667, %v2664
      %v2794 = vpack.c.b16 %v2671, %v2668
      %v2795 = vpack.c.b16 %v2672, %v2669
      %v2796 = vpack.c.b16 %v2673, %v2670
      %v2797 = vpack.c.b16 %v2677, %v2674
      %v2798 = vpack.c.b16 %v2678, %v2675
      %v2799 = vpack.c.b16 %v2679, %v2676
      %v2800 = vpack.c.b16 %v2683, %v2680
      %v2801 = vpack.c.b16 %v2684, %v2681
      %v2802 = vpack.c.b16 %v2685, %v2682
      %v2803 = vpack.c.b16 %v2689, %v2686
      %v2804 = vpack.c.b16 %v2690, %v2687
      %v2805 = vpack.c.b16 %v2691, %v2688
      %v2806 = vpack.c.b16 %v2695, %v2692
      %v2807 = vpack.c.b16 %v2696, %v2693
      %v2808 = vpack.c.b16 %v2697, %v2694
      %v2809 = vpack.c.b16 %v2701, %v2698
      %v2810 = vpack.c.b16 %v2702, %v2699
      %v2811 = vpack.c.b16 %v2703, %v2700
      %v2812 = vpack.c.b16 %v2707, %v2704
      %v2813 = vpack.c.b16 %v2708, %v2705
      %v2814 = vpack.c.b16 %v2709, %v2706
      %v2815 = vpack.c.b16 %v2713, %v2710
      %v2816 = vpack.c.b16 %v2714, %v2711
      %v2817 = vpack.c.b16 %v2715, %v2712
      %v2818 = vpack.c.b16 %v2719, %v2716
      %v2819 = vpack.c.b16 %v2720, %v2717
      %v2820 = vpack.c.b16 %v2721, %v2718
      %v2821 = vpack.c.b16 %v2725, %v2722
      %v2822 = vpack.c.b16 %v2726, %v2723
      %v2823 = vpack.c.b16 %v2727, %v2724
      %v2824 = vpack.c.b16 %v2731, %v2728
      %v2825 = vpack.c.b16 %v2732, %v2729
      %v2826 = vpack.c.b16 %v2733, %v2730
      %v2827 = vpack.c.b16 %v2737, %v2734
      %v2828 = vpack.c.b16 %v2738, %v2735
      %v2829 = vpack.c.b16 %v2739, %v2736
      %v2830 = vpack.c.b16 %v2743, %v2740
      %v2831 = vpack.c.b16 %v2744, %v2741
      %v2832 = vpack.c.b16 %v2745, %v2742
      %v2833 = vpack.c.b16 %v2749, %v2746
      %v2834 = vpack.c.b16 %v2750, %v2747
      %v2835 = vpack.c.b16 %v2751, %v2748
      %v2836 = vpack.c.b16 %v2755, %v2752
      %v2837 = vpack.c.b16 %v2756, %v2753
      %v2838 = vpack.c.b16 %v2757, %v2754
      %2920 = vmatpush.bf16.msra.mxu0 %v2779
      %2921 = vmatpush.bf16.msra.mxu0 %v2776
      %2922 = vmatpush.bf16.msra.mxu0 %v2773
      %2923 = vmatpush.bf16.msra.mxu0 %v2770
      %2924 = vmatpush.bf16.msra.mxu0 %v2767
      %2925 = vmatpush.bf16.msra.mxu0 %v2764
      %2926 = vmatpush.bf16.msra.mxu0 %v2761
      %2927 = vmatpush.bf16.msra.mxu0 %v2758
      %2928 = vmatmul.bf16.gmra.mxu0 %v1722
      %v2929 = vpop.f32.mrf.mxu0
      %v2930 = vadd.f32 0.0, %v2929
      %v2931 = vpop.f32.mrf.mxu0
      %v2932 = vadd.f32 0.0, %v2931
      %2933 = vdwg.mxu0
      %2934 = vmatpush.bf16.msra.mxu0 %v2803
      %2935 = vmatpush.bf16.msra.mxu0 %v2800
      %2936 = vmatpush.bf16.msra.mxu0 %v2797
      %2937 = vmatpush.bf16.msra.mxu0 %v2794
      %2938 = vmatpush.bf16.msra.mxu0 %v2791
      %2939 = vmatpush.bf16.msra.mxu0 %v2788
      %2940 = vmatpush.bf16.msra.mxu0 %v2785
      %2941 = vmatpush.bf16.msra.mxu0 %v2782
      %2942 = vmatmul.bf16.gmra.mxu0 %v1723
      %v2943 = vpop.f32.mrf.mxu0
      %v2944 = vadd.f32 %v2930, %v2943
      %v2945 = vpop.f32.mrf.mxu0
      %v2946 = vadd.f32 %v2932, %v2945
      %2947 = vdwg.mxu0
      %2948 = vmatpush.bf16.msra.mxu0 %v2827
      %2949 = vmatpush.bf16.msra.mxu0 %v2824
      %2950 = vmatpush.bf16.msra.mxu0 %v2821
      %2951 = vmatpush.bf16.msra.mxu0 %v2818
      %2952 = vmatpush.bf16.msra.mxu0 %v2815
      %2953 = vmatpush.bf16.msra.mxu0 %v2812
      %2954 = vmatpush.bf16.msra.mxu0 %v2809
      %2955 = vmatpush.bf16.msra.mxu0 %v2806
      %2956 = vmatmul.bf16.gmra.mxu0 %v1724
      %v2957 = vpop.f32.mrf.mxu0
      %v2958 = vadd.f32 %v2944, %v2957
      %v2959 = vpop.f32.mrf.mxu0
      %v2960 = vadd.f32 %v2946, %v2959
      %2961 = vdwg.mxu0
      %2962 = vmatpush.bf16.msra.mxu0 0
      %2963 = vmatpush.bf16.msra.mxu0 0
      %2964 = vmatpush.bf16.msra.mxu0 0
      %2965 = vmatpush.bf16.msra.mxu0 0
      %2966 = vmatpush.bf16.msra.mxu0 0
      %2967 = vmatpush.bf16.msra.mxu0 %v2836
      %2968 = vmatpush.bf16.msra.mxu0 %v2833
      %2969 = vmatpush.bf16.msra.mxu0 %v2830
      %2970 = vmatmul.bf16.gmra.mxu0 %v2163
      %v2971 = vpop.f32.mrf.mxu0
      %v2972 = vadd.f32 %v2958, %v2971
      %v2973 = vpop.f32.mrf.mxu0
      %v2974 = vadd.f32 %v2960, %v2973
      %2975 = vdwg.mxu0
      %2976 = vmatpush.bf16.msra.mxu0 %v2780
      %2977 = vmatpush.bf16.msra.mxu0 %v2777
      %2978 = vmatpush.bf16.msra.mxu0 %v2774
      %2979 = vmatpush.bf16.msra.mxu0 %v2771
      %2980 = vmatpush.bf16.msra.mxu0 %v2768
      %2981 = vmatpush.bf16.msra.mxu0 %v2765
      %2982 = vmatpush.bf16.msra.mxu0 %v2762
      %2983 = vmatpush.bf16.msra.mxu0 %v2759
      %2984 = vmatmul.bf16.gmra.mxu0 %v1722
      %v2985 = vpop.f32.mrf.mxu0
      %v2986 = vadd.f32 0.0, %v2985
      %v2987 = vpop.f32.mrf.mxu0
      %v2988 = vadd.f32 0.0, %v2987
      %2989 = vdwg.mxu0
      %2990 = vmatpush.bf16.msra.mxu0 %v2804
      %2991 = vmatpush.bf16.msra.mxu0 %v2801
      %2992 = vmatpush.bf16.msra.mxu0 %v2798
      %2993 = vmatpush.bf16.msra.mxu0 %v2795
      %2994 = vmatpush.bf16.msra.mxu0 %v2792
      %2995 = vmatpush.bf16.msra.mxu0 %v2789
      %2996 = vmatpush.bf16.msra.mxu0 %v2786
      %2997 = vmatpush.bf16.msra.mxu0 %v2783
      %2998 = vmatmul.bf16.gmra.mxu0 %v1723
      %v2999 = vpop.f32.mrf.mxu0
      %v3000 = vadd.f32 %v2986, %v2999
      %v3001 = vpop.f32.mrf.mxu0
      %v3002 = vadd.f32 %v2988, %v3001
      %3003 = vdwg.mxu0
      %3004 = vmatpush.bf16.msra.mxu0 %v2828
      %3005 = vmatpush.bf16.msra.mxu0 %v2825
      %3006 = vmatpush.bf16.msra.mxu0 %v2822
      %3007 = vmatpush.bf16.msra.mxu0 %v2819
      %3008 = vmatpush.bf16.msra.mxu0 %v2816
      %3009 = vmatpush.bf16.msra.mxu0 %v2813
      %3010 = vmatpush.bf16.msra.mxu0 %v2810
      %3011 = vmatpush.bf16.msra.mxu0 %v2807
      %3012 = vmatmul.bf16.gmra.mxu0 %v1724
      %v3013 = vpop.f32.mrf.mxu0
      %v3014 = vadd.f32 %v3000, %v3013
      %v3015 = vpop.f32.mrf.mxu0
      %v3016 = vadd.f32 %v3002, %v3015
      %3017 = vdwg.mxu0
      %3018 = vmatpush.bf16.msra.mxu0 0
      %3019 = vmatpush.bf16.msra.mxu0 0
      %3020 = vmatpush.bf16.msra.mxu0 0
      %3021 = vmatpush.bf16.msra.mxu0 0
      %3022 = vmatpush.bf16.msra.mxu0 0
      %3023 = vmatpush.bf16.msra.mxu0 %v2837
      %3024 = vmatpush.bf16.msra.mxu0 %v2834
      %3025 = vmatpush.bf16.msra.mxu0 %v2831
      %3026 = vmatmul.bf16.gmra.mxu0 %v2163
      %v3027 = vpop.f32.mrf.mxu0
      %v3028 = vadd.f32 %v3014, %v3027
      %v3029 = vpop.f32.mrf.mxu0
      %v3030 = vadd.f32 %v3016, %v3029
      %3031 = vdwg.mxu0
      %3032 = vmatpush.bf16.msra.mxu0 %v2781
      %3033 = vmatpush.bf16.msra.mxu0 %v2778
      %3034 = vmatpush.bf16.msra.mxu0 %v2775
      %3035 = vmatpush.bf16.msra.mxu0 %v2772
      %3036 = vmatpush.bf16.msra.mxu0 %v2769
      %3037 = vmatpush.bf16.msra.mxu0 %v2766
      %3038 = vmatpush.bf16.msra.mxu0 %v2763
      %3039 = vmatpush.bf16.msra.mxu0 %v2760
      %3040 = vmatmul.bf16.gmra.mxu0 %v1722
      %v3041 = vpop.f32.mrf.mxu0
      %v3042 = vadd.f32 0.0, %v3041
      %v3043 = vpop.f32.mrf.mxu0
      %v3044 = vadd.f32 0.0, %v3043
      %3045 = vdwg.mxu0
      %3046 = vmatpush.bf16.msra.mxu0 %v2805
      %3047 = vmatpush.bf16.msra.mxu0 %v2802
      %3048 = vmatpush.bf16.msra.mxu0 %v2799
      %3049 = vmatpush.bf16.msra.mxu0 %v2796
      %3050 = vmatpush.bf16.msra.mxu0 %v2793
      %3051 = vmatpush.bf16.msra.mxu0 %v2790
      %3052 = vmatpush.bf16.msra.mxu0 %v2787
      %3053 = vmatpush.bf16.msra.mxu0 %v2784
      %3054 = vmatmul.bf16.gmra.mxu0 %v1723
      %v3055 = vpop.f32.mrf.mxu0
      %v3056 = vadd.f32 %v3042, %v3055
      %v3057 = vpop.f32.mrf.mxu0
      %v3058 = vadd.f32 %v3044, %v3057
      %3059 = vdwg.mxu0
      %3060 = vmatpush.bf16.msra.mxu0 %v2829
      %3061 = vmatpush.bf16.msra.mxu0 %v2826
      %3062 = vmatpush.bf16.msra.mxu0 %v2823
      %3063 = vmatpush.bf16.msra.mxu0 %v2820
      %3064 = vmatpush.bf16.msra.mxu0 %v2817
      %3065 = vmatpush.bf16.msra.mxu0 %v2814
      %3066 = vmatpush.bf16.msra.mxu0 %v2811
      %3067 = vmatpush.bf16.msra.mxu0 %v2808
      %3068 = vmatmul.bf16.gmra.mxu0 %v1724
      %v3069 = vpop.f32.mrf.mxu0
      %v3070 = vadd.f32 %v3056, %v3069
      %v3071 = vpop.f32.mrf.mxu0
      %v3072 = vadd.f32 %v3058, %v3071
      %3073 = vdwg.mxu0
      %3074 = vmatpush.bf16.msra.mxu0 0
      %3075 = vmatpush.bf16.msra.mxu0 0
      %3076 = vmatpush.bf16.msra.mxu0 0
      %3077 = vmatpush.bf16.msra.mxu0 0
      %3078 = vmatpush.bf16.msra.mxu0 0
      %3079 = vmatpush.bf16.msra.mxu0 %v2838
      %3080 = vmatpush.bf16.msra.mxu0 %v2835
      %3081 = vmatpush.bf16.msra.mxu0 %v2832
      %3082 = vmatmul.bf16.gmra.mxu0 %v2163
      %v3083 = vpop.f32.mrf.mxu0
      %v3084 = vadd.f32 %v3070, %v3083
      %v3085 = vpop.f32.mrf.mxu0
      %v3086 = vadd.f32 %v3072, %v3085
      %3087 = vdwg.mxu0
      %v3088 = vpack.c.bf16 %v3028, %v2972
      %v3089 = vpack.c.bf16 %v3084, %v3084
      %v3090 = vpack.c.bf16 %v3030, %v2974
      %v3091 = vpack.c.bf16 %v3086, %v3086
      %s3092 = scalar_lea.vmem %s229, 24
      %3093 = vst [vmem:[%s3092] sm:$0xff] %v3088
      %3094 = vst [vmem:[%s3092 + $0x8] sm:$0xf] %v3089
      %3095 = vst [vmem:[%s3092 + $0xc] sm:$0xff] %v3090
      %3096 = vst [vmem:[%s3092 + $0x14] sm:$0xf] %v3091
      %v3097 = vmul.f32 %v2972, %v2342
      %v3098 = vmul.f32 %v3028, %v2343
      %v3099 = vmul.f32 %v3084, %v2344
      %v3100 = vmul.f32 %v2974, %v2342
      %v3101 = vmul.f32 %v3030, %v2343
      %v3102 = vmul.f32 %v3086, %v2344
      %v3103 = vadd.f32 %v3097, %v3098
      %v3104 = vadd.f32 %v3103, %v3099
      %3105 = vadd.xlane.f32.xlu0 %v3104
      %v3106 = vpop.xlane.xlu0 %3105
      %v3107 = vadd.f32 %v3100, %v3101
      %v3108 = vadd.f32 %v3107, %v3102
      %3109 = vadd.xlane.f32.xlu0 %v3108
      %v3110 = vpop.xlane.xlu0 %3109
      %v3111 = vadd.f32 %v2362, %v3106
      %v3112 = vadd.f32 %v2363, %v3110
      %v3113 = vmul.f32 %v3097, %v3097
      %v3114 = vmul.f32 %v3098, %v3098
      %v3115 = vmul.f32 %v3099, %v3099
      %v3116 = vmul.f32 %v3100, %v3100
      %v3117 = vmul.f32 %v3101, %v3101
      %v3118 = vmul.f32 %v3102, %v3102
      %v3119 = vadd.f32 %v3113, %v3114
      %v3120 = vadd.f32 %v3119, %v3115
      %3121 = vadd.xlane.f32.xlu0 %v3120
      %v3122 = vpop.xlane.xlu0 %3121
      %v3123 = vadd.f32 %v3116, %v3117
      %v3124 = vadd.f32 %v3123, %v3118
      %3125 = vadd.xlane.f32.xlu0 %v3124
      %v3126 = vpop.xlane.xlu0 %3125
      %v3127 = vadd.f32 %v2378, %v3122
      %v3128 = vadd.f32 %v2379, %v3126
      %v3129 = vld [vmem:[#allocation2 + $0x1b0] sm:$0xff]
      %v3130 = vld [vmem:[#allocation2 + $0x1b8] sm:$0xf]
      %v3131 = vld [vmem:[#allocation2 + $0x1bc] sm:$0xff]
      %v3132 = vld [vmem:[#allocation2 + $0x1c4] sm:$0xf]
      %v3133 = vld [vmem:[#allocation2 + $0x1c8] sm:$0xff]
      %v3134 = vld [vmem:[#allocation2 + $0x1d0] sm:$0xf]
      %v3135 = vld [vmem:[#allocation2 + $0x1d4] sm:$0xff]
      %v3136 = vld [vmem:[#allocation2 + $0x1dc] sm:$0xf]
      %v3137 = vld [vmem:[#allocation2 + $0x1e0] sm:$0xff]
      %v3138 = vld [vmem:[#allocation2 + $0x1e8] sm:$0xf]
      %v3139 = vld [vmem:[#allocation2 + $0x1ec] sm:$0xff]
      %v3140 = vld [vmem:[#allocation2 + $0x1f4] sm:$0xf]
      %v3141 = vld [vmem:[#allocation2 + $0x1f8] sm:$0xff]
      %v3142 = vld [vmem:[#allocation2 + $0x200] sm:$0xf]
      %v3143 = vld [vmem:[#allocation2 + $0x204] sm:$0xff]
      %v3144 = vld [vmem:[#allocation2 + $0x20c] sm:$0xf]
      %v3145 = vld [vmem:[#allocation2 + $0x210] sm:$0xff]
      %v3146 = vld [vmem:[#allocation2 + $0x218] sm:$0xf]
      %v3147 = vld [vmem:[#allocation2 + $0x21c] sm:$0xff]
      %v3148 = vld [vmem:[#allocation2 + $0x224] sm:$0xf]
      %v3149 = vld [vmem:[#allocation2 + $0x228] sm:$0xff]
      %v3150 = vld [vmem:[#allocation2 + $0x230] sm:$0xf]
      %v3151 = vld [vmem:[#allocation2 + $0x234] sm:$0xff]
      %v3152 = vld [vmem:[#allocation2 + $0x23c] sm:$0xf]
      %v3153 = vld [vmem:[#allocation2 + $0x240] sm:$0xff]
      %v3154 = vld [vmem:[#allocation2 + $0x248] sm:$0xf]
      %v3155 = vld [vmem:[#allocation2 + $0x24c] sm:$0xff]
      %v3156 = vld [vmem:[#allocation2 + $0x254] sm:$0xf]
      %v3157 = vld [vmem:[#allocation2 + $0x258] sm:$0xff]
      %v3158 = vld [vmem:[#allocation2 + $0x260] sm:$0xf]
      %v3159 = vld [vmem:[#allocation2 + $0x264] sm:$0xff]
      %v3160 = vld [vmem:[#allocation2 + $0x26c] sm:$0xf]
      %v3161 = vld [vmem:[#allocation2 + $0x270] sm:$0xff]
      %v3162 = vld [vmem:[#allocation2 + $0x278] sm:$0xf]
      %v3163 = vld [vmem:[#allocation2 + $0x27c] sm:$0xff]
      %v3164 = vld [vmem:[#allocation2 + $0x284] sm:$0xf]
      %v3165 = vld [vmem:[#allocation2 + $0x288] sm:$0xff]
      %v3166 = vld [vmem:[#allocation2 + $0x290] sm:$0xf]
      %v3167 = vld [vmem:[#allocation2 + $0x294] sm:$0xff]
      %v3168 = vld [vmem:[#allocation2 + $0x29c] sm:$0xf]
      %v3169 = vld [vmem:[#allocation2 + $0x2a0] sm:$0xff]
      %v3170 = vld [vmem:[#allocation2 + $0x2a8] sm:$0xf]
      %v3171 = vld [vmem:[#allocation2 + $0x2ac] sm:$0xff]
      %v3172 = vld [vmem:[#allocation2 + $0x2b4] sm:$0xf]
      %v3173 = vld [vmem:[#allocation2 + $0x2b8] sm:$0xff]
      %v3174 = vld [vmem:[#allocation2 + $0x2c0] sm:$0xf]
      %v3175 = vld [vmem:[#allocation2 + $0x2c4] sm:$0xff]
      %v3176 = vld [vmem:[#allocation2 + $0x2cc] sm:$0xf]
      %v3177 = vld [vmem:[#allocation2 + $0x2d0] sm:$0xff]
      %v3178 = vld [vmem:[#allocation2 + $0x2d8] sm:$0xf]
      %v3179 = vld [vmem:[#allocation2 + $0x2dc] sm:$0xff]
      %v3180 = vld [vmem:[#allocation2 + $0x2e4] sm:$0xf]
      %v3181 = vld [vmem:[#allocation2 + $0x2e8] sm:$0xff]
      %v3182 = vld [vmem:[#allocation2 + $0x2f0] sm:$0xf]
      %v3183 = vld [vmem:[#allocation2 + $0x2f4] sm:$0xff]
      %v3184 = vld [vmem:[#allocation2 + $0x2fc] sm:$0xf]
      %v3185 = vld [vmem:[#allocation2 + $0x300] sm:$0xff]
      %v3186 = vld [vmem:[#allocation2 + $0x308] sm:$0xf]
      %v3187 = vld [vmem:[#allocation2 + $0x30c] sm:$0xff]
      %v3188 = vld [vmem:[#allocation2 + $0x314] sm:$0xf]
      %v3189 = vld [vmem:[#allocation2 + $0x318] sm:$0xff]
      %v3190 = vld [vmem:[#allocation2 + $0x320] sm:$0xf]
      %v3191 = vld [vmem:[#allocation2 + $0x324] sm:$0xff]
      %v3192 = vld [vmem:[#allocation2 + $0x32c] sm:$0xf]
      %v3193 = vld [vmem:[#allocation2 + $0x330] sm:$0xff]
      %v3194 = vld [vmem:[#allocation2 + $0x338] sm:$0xf]
      %v3195 = vld [vmem:[#allocation2 + $0x33c] sm:$0xff]
      %v3196 = vld [vmem:[#allocation2 + $0x344] sm:$0xf]
      %v3197 = vld [vmem:[#allocation2 + $0x348] sm:$0xff]
      %v3198 = vld [vmem:[#allocation2 + $0x350] sm:$0xf]
      %v3199 = vld [vmem:[#allocation2 + $0x354] sm:$0xff]
      %v3200 = vld [vmem:[#allocation2 + $0x35c] sm:$0xf]
      %v3201 = vld [vmem:[#allocation2 + $0x360] sm:$0xff]
      %v3202 = vld [vmem:[#allocation2 + $0x368] sm:$0xf]
      %v3203 = vld [vmem:[#allocation2 + $0x36c] sm:$0xff]
      %v3204 = vld [vmem:[#allocation2 + $0x374] sm:$0xf]
      %v3205 = vld [vmem:[#allocation2 + $0x378] sm:$0xff]
      %v3206 = vld [vmem:[#allocation2 + $0x380] sm:$0xf]
      %v3207 = vld [vmem:[#allocation2 + $0x384] sm:$0xff]
      %v3208 = vld [vmem:[#allocation2 + $0x38c] sm:$0xf]
      %v3209 = vld [vmem:[#allocation2 + $0x390] sm:$0xff]
      %v3210 = vld [vmem:[#allocation2 + $0x398] sm:$0xf]
      %v3211 = vld [vmem:[#allocation2 + $0x39c] sm:$0xff]
      %v3212 = vld [vmem:[#allocation2 + $0x3a4] sm:$0xf]
      %v3213 = vld [vmem:[#allocation2 + $0x3a8] sm:$0xff]
      %v3214 = vld [vmem:[#allocation2 + $0x3b0] sm:$0xf]
      %v3215 = vld [vmem:[#allocation2 + $0x3b4] sm:$0xff]
      %v3216 = vld [vmem:[#allocation2 + $0x3bc] sm:$0xf]
      %v3217 = vld [vmem:[#allocation2 + $0x3c0] sm:$0xff]
      %v3218 = vld [vmem:[#allocation2 + $0x3c8] sm:$0xf]
      %v3219 = vld [vmem:[#allocation2 + $0x3cc] sm:$0xff]
      %v3220 = vld [vmem:[#allocation2 + $0x3d4] sm:$0xf]
      %v3221 = vld [vmem:[#allocation2 + $0x3d8] sm:$0xff]
      %v3222 = vld [vmem:[#allocation2 + $0x3e0] sm:$0xf]
      %v3223 = vld [vmem:[#allocation2 + $0x3e4] sm:$0xff]
      %v3224 = vld [vmem:[#allocation2 + $0x3ec] sm:$0xf]
      %v3225 = vld [vmem:[#allocation2 + $0x3f0] sm:$0xff]
      %v3226 = vld [vmem:[#allocation2 + $0x3f8] sm:$0xf]
      %v3227 = vld [vmem:[#allocation2 + $0x3fc] sm:$0xff]
      %v3228 = vld [vmem:[#allocation2 + $0x404] sm:$0xf]
      %v3229 = vld [vmem:[#allocation2 + $0x408] sm:$0xff]
      %v3230 = vld [vmem:[#allocation2 + $0x410] sm:$0xf]
      %v3231 = vld [vmem:[#allocation2 + $0x414] sm:$0xff]
      %v3232 = vld [vmem:[#allocation2 + $0x41c] sm:$0xf]
      %v3233 = vld [vmem:[#allocation2 + $0x420] sm:$0xff]
      %v3234 = vld [vmem:[#allocation2 + $0x428] sm:$0xf]
      %v3235 = vld [vmem:[#allocation2 + $0x42c] sm:$0xff]
      %v3236 = vld [vmem:[#allocation2 + $0x434] sm:$0xf]
      %v3345 = vunpack.c.l.b16 %v3129
      %v3346 = vunpack.c.h.b16 %v3129
      %v3347 = vunpack.c.l.b16 %v3130
      %v3348 = vunpack.c.l.b16 %v3131
      %v3349 = vunpack.c.h.b16 %v3131
      %v3350 = vunpack.c.l.b16 %v3132
      %v3351 = vunpack.c.l.b16 %v3133
      %v3352 = vunpack.c.h.b16 %v3133
      %v3353 = vunpack.c.l.b16 %v3134
      %v3354 = vunpack.c.l.b16 %v3135
      %v3355 = vunpack.c.h.b16 %v3135
      %v3356 = vunpack.c.l.b16 %v3136
      %v3357 = vunpack.c.l.b16 %v3137
      %v3358 = vunpack.c.h.b16 %v3137
      %v3359 = vunpack.c.l.b16 %v3138
      %v3360 = vunpack.c.l.b16 %v3139
      %v3361 = vunpack.c.h.b16 %v3139
      %v3362 = vunpack.c.l.b16 %v3140
      %v3363 = vunpack.c.l.b16 %v3141
      %v3364 = vunpack.c.h.b16 %v3141
      %v3365 = vunpack.c.l.b16 %v3142
      %v3366 = vunpack.c.l.b16 %v3143
      %v3367 = vunpack.c.h.b16 %v3143
      %v3368 = vunpack.c.l.b16 %v3144
      %v3369 = vunpack.c.l.b16 %v3145
      %v3370 = vunpack.c.h.b16 %v3145
      %v3371 = vunpack.c.l.b16 %v3146
      %v3372 = vunpack.c.l.b16 %v3147
      %v3373 = vunpack.c.h.b16 %v3147
      %v3374 = vunpack.c.l.b16 %v3148
      %v3375 = vunpack.c.l.b16 %v3149
      %v3376 = vunpack.c.h.b16 %v3149
      %v3377 = vunpack.c.l.b16 %v3150
      %v3378 = vunpack.c.l.b16 %v3151
      %v3379 = vunpack.c.h.b16 %v3151
      %v3380 = vunpack.c.l.b16 %v3152
      %v3381 = vunpack.c.l.b16 %v3153
      %v3382 = vunpack.c.h.b16 %v3153
      %v3383 = vunpack.c.l.b16 %v3154
      %v3384 = vunpack.c.l.b16 %v3155
      %v3385 = vunpack.c.h.b16 %v3155
      %v3386 = vunpack.c.l.b16 %v3156
      %v3387 = vunpack.c.l.b16 %v3157
      %v3388 = vunpack.c.h.b16 %v3157
      %v3389 = vunpack.c.l.b16 %v3158
      %v3390 = vunpack.c.l.b16 %v3159
      %v3391 = vunpack.c.h.b16 %v3159
      %v3392 = vunpack.c.l.b16 %v3160
      %v3393 = vunpack.c.l.b16 %v3161
      %v3394 = vunpack.c.h.b16 %v3161
      %v3395 = vunpack.c.l.b16 %v3162
      %v3396 = vunpack.c.l.b16 %v3163
      %v3397 = vunpack.c.h.b16 %v3163
      %v3398 = vunpack.c.l.b16 %v3164
      %v3399 = vunpack.c.l.b16 %v3165
      %v3400 = vunpack.c.h.b16 %v3165
      %v3401 = vunpack.c.l.b16 %v3166
      %v3402 = vunpack.c.l.b16 %v3167
      %v3403 = vunpack.c.h.b16 %v3167
      %v3404 = vunpack.c.l.b16 %v3168
      %v3405 = vunpack.c.l.b16 %v3169
      %v3406 = vunpack.c.h.b16 %v3169
      %v3407 = vunpack.c.l.b16 %v3170
      %v3408 = vunpack.c.l.b16 %v3171
      %v3409 = vunpack.c.h.b16 %v3171
      %v3410 = vunpack.c.l.b16 %v3172
      %v3411 = vunpack.c.l.b16 %v3173
      %v3412 = vunpack.c.h.b16 %v3173
      %v3413 = vunpack.c.l.b16 %v3174
      %v3414 = vunpack.c.l.b16 %v3175
      %v3415 = vunpack.c.h.b16 %v3175
      %v3416 = vunpack.c.l.b16 %v3176
      %v3417 = vunpack.c.l.b16 %v3177
      %v3418 = vunpack.c.h.b16 %v3177
      %v3419 = vunpack.c.l.b16 %v3178
      %v3420 = vunpack.c.l.b16 %v3179
      %v3421 = vunpack.c.h.b16 %v3179
      %v3422 = vunpack.c.l.b16 %v3180
      %v3423 = vunpack.c.l.b16 %v3181
      %v3424 = vunpack.c.h.b16 %v3181
      %v3425 = vunpack.c.l.b16 %v3182
      %v3426 = vunpack.c.l.b16 %v3183
      %v3427 = vunpack.c.h.b16 %v3183
      %v3428 = vunpack.c.l.b16 %v3184
      %v3429 = vunpack.c.l.b16 %v3185
      %v3430 = vunpack.c.h.b16 %v3185
      %v3431 = vunpack.c.l.b16 %v3186
      %v3432 = vunpack.c.l.b16 %v3187
      %v3433 = vunpack.c.h.b16 %v3187
      %v3434 = vunpack.c.l.b16 %v3188
      %v3435 = vunpack.c.l.b16 %v3189
      %v3436 = vunpack.c.h.b16 %v3189
      %v3437 = vunpack.c.l.b16 %v3190
      %v3438 = vunpack.c.l.b16 %v3191
      %v3439 = vunpack.c.h.b16 %v3191
      %v3440 = vunpack.c.l.b16 %v3192
      %v3441 = vunpack.c.l.b16 %v3193
      %v3442 = vunpack.c.h.b16 %v3193
      %v3443 = vunpack.c.l.b16 %v3194
      %v3444 = vunpack.c.l.b16 %v3195
      %v3445 = vunpack.c.h.b16 %v3195
      %v3446 = vunpack.c.l.b16 %v3196
      %v3447 = vunpack.c.l.b16 %v3197
      %v3448 = vunpack.c.h.b16 %v3197
      %v3449 = vunpack.c.l.b16 %v3198
      %v3450 = vunpack.c.l.b16 %v3199
      %v3451 = vunpack.c.h.b16 %v3199
      %v3452 = vunpack.c.l.b16 %v3200
      %v3453 = vunpack.c.l.b16 %v3201
      %v3454 = vunpack.c.h.b16 %v3201
      %v3455 = vunpack.c.l.b16 %v3202
      %v3456 = vunpack.c.l.b16 %v3203
      %v3457 = vunpack.c.h.b16 %v3203
      %v3458 = vunpack.c.l.b16 %v3204
      %v3459 = vunpack.c.l.b16 %v3205
      %v3460 = vunpack.c.h.b16 %v3205
      %v3461 = vunpack.c.l.b16 %v3206
      %v3462 = vunpack.c.l.b16 %v3207
      %v3463 = vunpack.c.h.b16 %v3207
      %v3464 = vunpack.c.l.b16 %v3208
      %v3465 = vunpack.c.l.b16 %v3209
      %v3466 = vunpack.c.h.b16 %v3209
      %v3467 = vunpack.c.l.b16 %v3210
      %v3468 = vunpack.c.l.b16 %v3211
      %v3469 = vunpack.c.h.b16 %v3211
      %v3470 = vunpack.c.l.b16 %v3212
      %v3471 = vunpack.c.l.b16 %v3213
      %v3472 = vunpack.c.h.b16 %v3213
      %v3473 = vunpack.c.l.b16 %v3214
      %v3474 = vunpack.c.l.b16 %v3215
      %v3475 = vunpack.c.h.b16 %v3215
      %v3476 = vunpack.c.l.b16 %v3216
      %v3477 = vunpack.c.l.b16 %v3217
      %v3478 = vunpack.c.h.b16 %v3217
      %v3479 = vunpack.c.l.b16 %v3218
      %v3480 = vunpack.c.l.b16 %v3219
      %v3481 = vunpack.c.h.b16 %v3219
      %v3482 = vunpack.c.l.b16 %v3220
      %v3483 = vunpack.c.l.b16 %v3221
      %v3484 = vunpack.c.h.b16 %v3221
      %v3485 = vunpack.c.l.b16 %v3222
      %v3486 = vunpack.c.l.b16 %v3223
      %v3487 = vunpack.c.h.b16 %v3223
      %v3488 = vunpack.c.l.b16 %v3224
      %v3489 = vunpack.c.l.b16 %v3225
      %v3490 = vunpack.c.h.b16 %v3225
      %v3491 = vunpack.c.l.b16 %v3226
      %v3492 = vunpack.c.l.b16 %v3227
      %v3493 = vunpack.c.h.b16 %v3227
      %v3494 = vunpack.c.l.b16 %v3228
      %v3495 = vunpack.c.l.b16 %v3229
      %v3496 = vunpack.c.h.b16 %v3229
      %v3497 = vunpack.c.l.b16 %v3230
      %v3498 = vunpack.c.l.b16 %v3231
      %v3499 = vunpack.c.h.b16 %v3231
      %v3500 = vunpack.c.l.b16 %v3232
      %v3501 = vunpack.c.l.b16 %v3233
      %v3502 = vunpack.c.h.b16 %v3233
      %v3503 = vunpack.c.l.b16 %v3234
      %v3504 = vunpack.c.l.b16 %v3235
      %v3505 = vunpack.c.h.b16 %v3235
      %v3506 = vunpack.c.l.b16 %v3236
      %v3507 = vpack.c.b16 %v3348, %v3345
      %v3508 = vpack.c.b16 %v3349, %v3346
      %v3509 = vpack.c.b16 %v3350, %v3347
      %v3510 = vpack.c.b16 %v3354, %v3351
      %v3511 = vpack.c.b16 %v3355, %v3352
      %v3512 = vpack.c.b16 %v3356, %v3353
      %v3513 = vpack.c.b16 %v3360, %v3357
      %v3514 = vpack.c.b16 %v3361, %v3358
      %v3515 = vpack.c.b16 %v3362, %v3359
      %v3516 = vpack.c.b16 %v3366, %v3363
      %v3517 = vpack.c.b16 %v3367, %v3364
      %v3518 = vpack.c.b16 %v3368, %v3365
      %v3519 = vpack.c.b16 %v3372, %v3369
      %v3520 = vpack.c.b16 %v3373, %v3370
      %v3521 = vpack.c.b16 %v3374, %v3371
      %v3522 = vpack.c.b16 %v3378, %v3375
      %v3523 = vpack.c.b16 %v3379, %v3376
      %v3524 = vpack.c.b16 %v3380, %v3377
      %v3525 = vpack.c.b16 %v3384, %v3381
      %v3526 = vpack.c.b16 %v3385, %v3382
      %v3527 = vpack.c.b16 %v3386, %v3383
      %v3528 = vpack.c.b16 %v3390, %v3387
      %v3529 = vpack.c.b16 %v3391, %v3388
      %v3530 = vpack.c.b16 %v3392, %v3389
      %v3531 = vpack.c.b16 %v3396, %v3393
      %v3532 = vpack.c.b16 %v3397, %v3394
      %v3533 = vpack.c.b16 %v3398, %v3395
      %v3534 = vpack.c.b16 %v3402, %v3399
      %v3535 = vpack.c.b16 %v3403, %v3400
      %v3536 = vpack.c.b16 %v3404, %v3401
      %v3537 = vpack.c.b16 %v3408, %v3405
      %v3538 = vpack.c.b16 %v3409, %v3406
      %v3539 = vpack.c.b16 %v3410, %v3407
      %v3540 = vpack.c.b16 %v3414, %v3411
      %v3541 = vpack.c.b16 %v3415, %v3412
      %v3542 = vpack.c.b16 %v3416, %v3413
      %v3543 = vpack.c.b16 %v3420, %v3417
      %v3544 = vpack.c.b16 %v3421, %v3418
      %v3545 = vpack.c.b16 %v3422, %v3419
      %v3546 = vpack.c.b16 %v3426, %v3423
      %v3547 = vpack.c.b16 %v3427, %v3424
      %v3548 = vpack.c.b16 %v3428, %v3425
      %v3549 = vpack.c.b16 %v3432, %v3429
      %v3550 = vpack.c.b16 %v3433, %v3430
      %v3551 = vpack.c.b16 %v3434, %v3431
      %v3552 = vpack.c.b16 %v3438, %v3435
      %v3553 = vpack.c.b16 %v3439, %v3436
      %v3554 = vpack.c.b16 %v3440, %v3437
      %v3555 = vpack.c.b16 %v3444, %v3441
      %v3556 = vpack.c.b16 %v3445, %v3442
      %v3557 = vpack.c.b16 %v3446, %v3443
      %v3558 = vpack.c.b16 %v3450, %v3447
      %v3559 = vpack.c.b16 %v3451, %v3448
      %v3560 = vpack.c.b16 %v3452, %v3449
      %v3561 = vpack.c.b16 %v3456, %v3453
      %v3562 = vpack.c.b16 %v3457, %v3454
      %v3563 = vpack.c.b16 %v3458, %v3455
      %v3564 = vpack.c.b16 %v3462, %v3459
      %v3565 = vpack.c.b16 %v3463, %v3460
      %v3566 = vpack.c.b16 %v3464, %v3461
      %v3567 = vpack.c.b16 %v3468, %v3465
      %v3568 = vpack.c.b16 %v3469, %v3466
      %v3569 = vpack.c.b16 %v3470, %v3467
      %v3570 = vpack.c.b16 %v3474, %v3471
      %v3571 = vpack.c.b16 %v3475, %v3472
      %v3572 = vpack.c.b16 %v3476, %v3473
      %v3573 = vpack.c.b16 %v3480, %v3477
      %v3574 = vpack.c.b16 %v3481, %v3478
      %v3575 = vpack.c.b16 %v3482, %v3479
      %v3576 = vpack.c.b16 %v3486, %v3483
      %v3577 = vpack.c.b16 %v3487, %v3484
      %v3578 = vpack.c.b16 %v3488, %v3485
      %v3579 = vpack.c.b16 %v3492, %v3489
      %v3580 = vpack.c.b16 %v3493, %v3490
      %v3581 = vpack.c.b16 %v3494, %v3491
      %v3582 = vpack.c.b16 %v3498, %v3495
      %v3583 = vpack.c.b16 %v3499, %v3496
      %v3584 = vpack.c.b16 %v3500, %v3497
      %v3585 = vpack.c.b16 %v3504, %v3501
      %v3586 = vpack.c.b16 %v3505, %v3502
      %v3587 = vpack.c.b16 %v3506, %v3503
      %3669 = vmatpush.bf16.msra.mxu0 %v3528
      %3670 = vmatpush.bf16.msra.mxu0 %v3525
      %3671 = vmatpush.bf16.msra.mxu0 %v3522
      %3672 = vmatpush.bf16.msra.mxu0 %v3519
      %3673 = vmatpush.bf16.msra.mxu0 %v3516
      %3674 = vmatpush.bf16.msra.mxu0 %v3513
      %3675 = vmatpush.bf16.msra.mxu0 %v3510
      %3676 = vmatpush.bf16.msra.mxu0 %v3507
      %3677 = vmatmul.bf16.gmra.mxu0 %v1722
      %v3678 = vpop.f32.mrf.mxu0
      %v3679 = vadd.f32 0.0, %v3678
      %v3680 = vpop.f32.mrf.mxu0
      %v3681 = vadd.f32 0.0, %v3680
      %3682 = vdwg.mxu0
      %3683 = vmatpush.bf16.msra.mxu0 %v3552
      %3684 = vmatpush.bf16.msra.mxu0 %v3549
      %3685 = vmatpush.bf16.msra.mxu0 %v3546
      %3686 = vmatpush.bf16.msra.mxu0 %v3543
      %3687 = vmatpush.bf16.msra.mxu0 %v3540
      %3688 = vmatpush.bf16.msra.mxu0 %v3537
      %3689 = vmatpush.bf16.msra.mxu0 %v3534
      %3690 = vmatpush.bf16.msra.mxu0 %v3531
      %3691 = vmatmul.bf16.gmra.mxu0 %v1723
      %v3692 = vpop.f32.mrf.mxu0
      %v3693 = vadd.f32 %v3679, %v3692
      %v3694 = vpop.f32.mrf.mxu0
      %v3695 = vadd.f32 %v3681, %v3694
      %3696 = vdwg.mxu0
      %3697 = vmatpush.bf16.msra.mxu0 %v3576
      %3698 = vmatpush.bf16.msra.mxu0 %v3573
      %3699 = vmatpush.bf16.msra.mxu0 %v3570
      %3700 = vmatpush.bf16.msra.mxu0 %v3567
      %3701 = vmatpush.bf16.msra.mxu0 %v3564
      %3702 = vmatpush.bf16.msra.mxu0 %v3561
      %3703 = vmatpush.bf16.msra.mxu0 %v3558
      %3704 = vmatpush.bf16.msra.mxu0 %v3555
      %3705 = vmatmul.bf16.gmra.mxu0 %v1724
      %v3706 = vpop.f32.mrf.mxu0
      %v3707 = vadd.f32 %v3693, %v3706
      %v3708 = vpop.f32.mrf.mxu0
      %v3709 = vadd.f32 %v3695, %v3708
      %3710 = vdwg.mxu0
      %3711 = vmatpush.bf16.msra.mxu0 0
      %3712 = vmatpush.bf16.msra.mxu0 0
      %3713 = vmatpush.bf16.msra.mxu0 0
      %3714 = vmatpush.bf16.msra.mxu0 0
      %3715 = vmatpush.bf16.msra.mxu0 0
      %3716 = vmatpush.bf16.msra.mxu0 %v3585
      %3717 = vmatpush.bf16.msra.mxu0 %v3582
      %3718 = vmatpush.bf16.msra.mxu0 %v3579
      %3719 = vmatmul.bf16.gmra.mxu0 %v2163
      %v3720 = vpop.f32.mrf.mxu0
      %v3721 = vadd.f32 %v3707, %v3720
      %v3722 = vpop.f32.mrf.mxu0
      %v3723 = vadd.f32 %v3709, %v3722
      %3724 = vdwg.mxu0
      %3725 = vmatpush.bf16.msra.mxu0 %v3529
      %3726 = vmatpush.bf16.msra.mxu0 %v3526
      %3727 = vmatpush.bf16.msra.mxu0 %v3523
      %3728 = vmatpush.bf16.msra.mxu0 %v3520
      %3729 = vmatpush.bf16.msra.mxu0 %v3517
      %3730 = vmatpush.bf16.msra.mxu0 %v3514
      %3731 = vmatpush.bf16.msra.mxu0 %v3511
      %3732 = vmatpush.bf16.msra.mxu0 %v3508
      %3733 = vmatmul.bf16.gmra.mxu0 %v1722
      %v3734 = vpop.f32.mrf.mxu0
      %v3735 = vadd.f32 0.0, %v3734
      %v3736 = vpop.f32.mrf.mxu0
      %v3737 = vadd.f32 0.0, %v3736
      %3738 = vdwg.mxu0
      %3739 = vmatpush.bf16.msra.mxu0 %v3553
      %3740 = vmatpush.bf16.msra.mxu0 %v3550
      %3741 = vmatpush.bf16.msra.mxu0 %v3547
      %3742 = vmatpush.bf16.msra.mxu0 %v3544
      %3743 = vmatpush.bf16.msra.mxu0 %v3541
      %3744 = vmatpush.bf16.msra.mxu0 %v3538
      %3745 = vmatpush.bf16.msra.mxu0 %v3535
      %3746 = vmatpush.bf16.msra.mxu0 %v3532
      %3747 = vmatmul.bf16.gmra.mxu0 %v1723
      %v3748 = vpop.f32.mrf.mxu0
      %v3749 = vadd.f32 %v3735, %v3748
      %v3750 = vpop.f32.mrf.mxu0
      %v3751 = vadd.f32 %v3737, %v3750
      %3752 = vdwg.mxu0
      %3753 = vmatpush.bf16.msra.mxu0 %v3577
      %3754 = vmatpush.bf16.msra.mxu0 %v3574
      %3755 = vmatpush.bf16.msra.mxu0 %v3571
      %3756 = vmatpush.bf16.msra.mxu0 %v3568
      %3757 = vmatpush.bf16.msra.mxu0 %v3565
      %3758 = vmatpush.bf16.msra.mxu0 %v3562
      %3759 = vmatpush.bf16.msra.mxu0 %v3559
      %3760 = vmatpush.bf16.msra.mxu0 %v3556
      %3761 = vmatmul.bf16.gmra.mxu0 %v1724
      %v3762 = vpop.f32.mrf.mxu0
      %v3763 = vadd.f32 %v3749, %v3762
      %v3764 = vpop.f32.mrf.mxu0
      %v3765 = vadd.f32 %v3751, %v3764
      %3766 = vdwg.mxu0
      %3767 = vmatpush.bf16.msra.mxu0 0
      %3768 = vmatpush.bf16.msra.mxu0 0
      %3769 = vmatpush.bf16.msra.mxu0 0
      %3770 = vmatpush.bf16.msra.mxu0 0
      %3771 = vmatpush.bf16.msra.mxu0 0
      %3772 = vmatpush.bf16.msra.mxu0 %v3586
      %3773 = vmatpush.bf16.msra.mxu0 %v3583
      %3774 = vmatpush.bf16.msra.mxu0 %v3580
      %3775 = vmatmul.bf16.gmra.mxu0 %v2163
      %v3776 = vpop.f32.mrf.mxu0
      %v3777 = vadd.f32 %v3763, %v3776
      %v3778 = vpop.f32.mrf.mxu0
      %v3779 = vadd.f32 %v3765, %v3778
      %3780 = vdwg.mxu0
      %3781 = vmatpush.bf16.msra.mxu0 %v3530
      %3782 = vmatpush.bf16.msra.mxu0 %v3527
      %3783 = vmatpush.bf16.msra.mxu0 %v3524
      %3784 = vmatpush.bf16.msra.mxu0 %v3521
      %3785 = vmatpush.bf16.msra.mxu0 %v3518
      %3786 = vmatpush.bf16.msra.mxu0 %v3515
      %3787 = vmatpush.bf16.msra.mxu0 %v3512
      %3788 = vmatpush.bf16.msra.mxu0 %v3509
      %3789 = vmatmul.bf16.gmra.mxu0 %v1722
      %v3790 = vpop.f32.mrf.mxu0
      %v3791 = vadd.f32 0.0, %v3790
      %v3792 = vpop.f32.mrf.mxu0
      %v3793 = vadd.f32 0.0, %v3792
      %3794 = vdwg.mxu0
      %3795 = vmatpush.bf16.msra.mxu0 %v3554
      %3796 = vmatpush.bf16.msra.mxu0 %v3551
      %3797 = vmatpush.bf16.msra.mxu0 %v3548
      %3798 = vmatpush.bf16.msra.mxu0 %v3545
      %3799 = vmatpush.bf16.msra.mxu0 %v3542
      %3800 = vmatpush.bf16.msra.mxu0 %v3539
      %3801 = vmatpush.bf16.msra.mxu0 %v3536
      %3802 = vmatpush.bf16.msra.mxu0 %v3533
      %3803 = vmatmul.bf16.gmra.mxu0 %v1723
      %v3804 = vpop.f32.mrf.mxu0
      %v3805 = vadd.f32 %v3791, %v3804
      %v3806 = vpop.f32.mrf.mxu0
      %v3807 = vadd.f32 %v3793, %v3806
      %3808 = vdwg.mxu0
      %3809 = vmatpush.bf16.msra.mxu0 %v3578
      %3810 = vmatpush.bf16.msra.mxu0 %v3575
      %3811 = vmatpush.bf16.msra.mxu0 %v3572
      %3812 = vmatpush.bf16.msra.mxu0 %v3569
      %3813 = vmatpush.bf16.msra.mxu0 %v3566
      %3814 = vmatpush.bf16.msra.mxu0 %v3563
      %3815 = vmatpush.bf16.msra.mxu0 %v3560
      %3816 = vmatpush.bf16.msra.mxu0 %v3557
      %3817 = vmatmul.bf16.gmra.mxu0 %v1724
      %v3818 = vpop.f32.mrf.mxu0
      %v3819 = vadd.f32 %v3805, %v3818
      %v3820 = vpop.f32.mrf.mxu0
      %v3821 = vadd.f32 %v3807, %v3820
      %3822 = vdwg.mxu0
      %3823 = vmatpush.bf16.msra.mxu0 0
      %3824 = vmatpush.bf16.msra.mxu0 0
      %3825 = vmatpush.bf16.msra.mxu0 0
      %3826 = vmatpush.bf16.msra.mxu0 0
      %3827 = vmatpush.bf16.msra.mxu0 0
      %3828 = vmatpush.bf16.msra.mxu0 %v3587
      %3829 = vmatpush.bf16.msra.mxu0 %v3584
      %3830 = vmatpush.bf16.msra.mxu0 %v3581
      %3831 = vmatmul.bf16.gmra.mxu0 %v2163
      %v3832 = vpop.f32.mrf.mxu0
      %v3833 = vadd.f32 %v3819, %v3832
      %v3834 = vpop.f32.mrf.mxu0
      %v3835 = vadd.f32 %v3821, %v3834
      %3836 = vdwg.mxu0
      %v3837 = vpack.c.bf16 %v3777, %v3721
      %v3838 = vpack.c.bf16 %v3833, %v3833
      %v3839 = vpack.c.bf16 %v3779, %v3723
      %v3840 = vpack.c.bf16 %v3835, %v3835
      %s3841 = scalar_lea.vmem %s229, 48
      %3842 = vst [vmem:[%s3841] sm:$0xff] %v3837
      %3843 = vst [vmem:[%s3841 + $0x8] sm:$0xf] %v3838
      %3844 = vst [vmem:[%s3841 + $0xc] sm:$0xff] %v3839
      %3845 = vst [vmem:[%s3841 + $0x14] sm:$0xf] %v3840
      %v3846 = vmul.f32 %v3721, %v2342
      %v3847 = vmul.f32 %v3777, %v2343
      %v3848 = vmul.f32 %v3833, %v2344
      %v3849 = vmul.f32 %v3723, %v2342
      %v3850 = vmul.f32 %v3779, %v2343
      %v3851 = vmul.f32 %v3835, %v2344
      %v3852 = vadd.f32 %v3846, %v3847
      %v3853 = vadd.f32 %v3852, %v3848
      %3854 = vadd.xlane.f32.xlu0 %v3853
      %v3855 = vpop.xlane.xlu0 %3854
      %v3856 = vadd.f32 %v3849, %v3850
      %v3857 = vadd.f32 %v3856, %v3851
      %3858 = vadd.xlane.f32.xlu0 %v3857
      %v3859 = vpop.xlane.xlu0 %3858
      %v3860 = vadd.f32 %v3111, %v3855
      %v3861 = vadd.f32 %v3112, %v3859
      %v3862 = vmul.f32 %v3846, %v3846
      %v3863 = vmul.f32 %v3847, %v3847
      %v3864 = vmul.f32 %v3848, %v3848
      %v3865 = vmul.f32 %v3849, %v3849
      %v3866 = vmul.f32 %v3850, %v3850
      %v3867 = vmul.f32 %v3851, %v3851
      %v3868 = vadd.f32 %v3862, %v3863
      %v3869 = vadd.f32 %v3868, %v3864
      %3870 = vadd.xlane.f32.xlu0 %v3869
      %v3871 = vpop.xlane.xlu0 %3870
      %v3872 = vadd.f32 %v3865, %v3866
      %v3873 = vadd.f32 %v3872, %v3867
      %3874 = vadd.xlane.f32.xlu0 %v3873
      %v3875 = vpop.xlane.xlu0 %3874
      %v3876 = vadd.f32 %v3127, %v3871
      %v3877 = vadd.f32 %v3128, %v3875
      %v3878 = vld [vmem:[#allocation2 + $0x288] sm:$0xff]
      %v3879 = vld [vmem:[#allocation2 + $0x290] sm:$0xf]
      %v3880 = vld [vmem:[#allocation2 + $0x294] sm:$0xff]
      %v3881 = vld [vmem:[#allocation2 + $0x29c] sm:$0xf]
      %v3882 = vld [vmem:[#allocation2 + $0x2a0] sm:$0xff]
      %v3883 = vld [vmem:[#allocation2 + $0x2a8] sm:$0xf]
      %v3884 = vld [vmem:[#allocation2 + $0x2ac] sm:$0xff]
      %v3885 = vld [vmem:[#allocation2 + $0x2b4] sm:$0xf]
      %v3886 = vld [vmem:[#allocation2 + $0x2b8] sm:$0xff]
      %v3887 = vld [vmem:[#allocation2 + $0x2c0] sm:$0xf]
      %v3888 = vld [vmem:[#allocation2 + $0x2c4] sm:$0xff]
      %v3889 = vld [vmem:[#allocation2 + $0x2cc] sm:$0xf]
      %v3890 = vld [vmem:[#allocation2 + $0x2d0] sm:$0xff]
      %v3891 = vld [vmem:[#allocation2 + $0x2d8] sm:$0xf]
      %v3892 = vld [vmem:[#allocation2 + $0x2dc] sm:$0xff]
      %v3893 = vld [vmem:[#allocation2 + $0x2e4] sm:$0xf]
      %v3894 = vld [vmem:[#allocation2 + $0x2e8] sm:$0xff]
      %v3895 = vld [vmem:[#allocation2 + $0x2f0] sm:$0xf]
      %v3896 = vld [vmem:[#allocation2 + $0x2f4] sm:$0xff]
      %v3897 = vld [vmem:[#allocation2 + $0x2fc] sm:$0xf]
      %v3898 = vld [vmem:[#allocation2 + $0x300] sm:$0xff]
      %v3899 = vld [vmem:[#allocation2 + $0x308] sm:$0xf]
      %v3900 = vld [vmem:[#allocation2 + $0x30c] sm:$0xff]
      %v3901 = vld [vmem:[#allocation2 + $0x314] sm:$0xf]
      %v3902 = vld [vmem:[#allocation2 + $0x318] sm:$0xff]
      %v3903 = vld [vmem:[#allocation2 + $0x320] sm:$0xf]
      %v3904 = vld [vmem:[#allocation2 + $0x324] sm:$0xff]
      %v3905 = vld [vmem:[#allocation2 + $0x32c] sm:$0xf]
      %v3906 = vld [vmem:[#allocation2 + $0x330] sm:$0xff]
      %v3907 = vld [vmem:[#allocation2 + $0x338] sm:$0xf]
      %v3908 = vld [vmem:[#allocation2 + $0x33c] sm:$0xff]
      %v3909 = vld [vmem:[#allocation2 + $0x344] sm:$0xf]
      %v3910 = vld [vmem:[#allocation2 + $0x348] sm:$0xff]
      %v3911 = vld [vmem:[#allocation2 + $0x350] sm:$0xf]
      %v3912 = vld [vmem:[#allocation2 + $0x354] sm:$0xff]
      %v3913 = vld [vmem:[#allocation2 + $0x35c] sm:$0xf]
      %v3914 = vld [vmem:[#allocation2 + $0x360] sm:$0xff]
      %v3915 = vld [vmem:[#allocation2 + $0x368] sm:$0xf]
      %v3916 = vld [vmem:[#allocation2 + $0x36c] sm:$0xff]
      %v3917 = vld [vmem:[#allocation2 + $0x374] sm:$0xf]
      %v3918 = vld [vmem:[#allocation2 + $0x378] sm:$0xff]
      %v3919 = vld [vmem:[#allocation2 + $0x380] sm:$0xf]
      %v3920 = vld [vmem:[#allocation2 + $0x384] sm:$0xff]
      %v3921 = vld [vmem:[#allocation2 + $0x38c] sm:$0xf]
      %v3922 = vld [vmem:[#allocation2 + $0x390] sm:$0xff]
      %v3923 = vld [vmem:[#allocation2 + $0x398] sm:$0xf]
      %v3924 = vld [vmem:[#allocation2 + $0x39c] sm:$0xff]
      %v3925 = vld [vmem:[#allocation2 + $0x3a4] sm:$0xf]
      %v3926 = vld [vmem:[#allocation2 + $0x3a8] sm:$0xff]
      %v3927 = vld [vmem:[#allocation2 + $0x3b0] sm:$0xf]
      %v3928 = vld [vmem:[#allocation2 + $0x3b4] sm:$0xff]
      %v3929 = vld [vmem:[#allocation2 + $0x3bc] sm:$0xf]
      %v3930 = vld [vmem:[#allocation2 + $0x3c0] sm:$0xff]
      %v3931 = vld [vmem:[#allocation2 + $0x3c8] sm:$0xf]
      %v3932 = vld [vmem:[#allocation2 + $0x3cc] sm:$0xff]
      %v3933 = vld [vmem:[#allocation2 + $0x3d4] sm:$0xf]
      %v3934 = vld [vmem:[#allocation2 + $0x3d8] sm:$0xff]
      %v3935 = vld [vmem:[#allocation2 + $0x3e0] sm:$0xf]
      %v3936 = vld [vmem:[#allocation2 + $0x3e4] sm:$0xff]
      %v3937 = vld [vmem:[#allocation2 + $0x3ec] sm:$0xf]
      %v3938 = vld [vmem:[#allocation2 + $0x3f0] sm:$0xff]
      %v3939 = vld [vmem:[#allocation2 + $0x3f8] sm:$0xf]
      %v3940 = vld [vmem:[#allocation2 + $0x3fc] sm:$0xff]
      %v3941 = vld [vmem:[#allocation2 + $0x404] sm:$0xf]
      %v3942 = vld [vmem:[#allocation2 + $0x408] sm:$0xff]
      %v3943 = vld [vmem:[#allocation2 + $0x410] sm:$0xf]
      %v3944 = vld [vmem:[#allocation2 + $0x414] sm:$0xff]
      %v3945 = vld [vmem:[#allocation2 + $0x41c] sm:$0xf]
      %v3946 = vld [vmem:[#allocation2 + $0x420] sm:$0xff]
      %v3947 = vld [vmem:[#allocation2 + $0x428] sm:$0xf]
      %v3948 = vld [vmem:[#allocation2 + $0x42c] sm:$0xff]
      %v3949 = vld [vmem:[#allocation2 + $0x434] sm:$0xf]
      %v3950 = vld [vmem:[#allocation2 + $0x438] sm:$0xff]
      %v3951 = vld [vmem:[#allocation2 + $0x440] sm:$0xf]
      %v3952 = vld [vmem:[#allocation2 + $0x444] sm:$0xff]
      %v3953 = vld [vmem:[#allocation2 + $0x44c] sm:$0xf]
      %v3954 = vld [vmem:[#allocation2 + $0x450] sm:$0xff]
      %v3955 = vld [vmem:[#allocation2 + $0x458] sm:$0xf]
      %v3956 = vld [vmem:[#allocation2 + $0x45c] sm:$0xff]
      %v3957 = vld [vmem:[#allocation2 + $0x464] sm:$0xf]
      %v3958 = vld [vmem:[#allocation2 + $0x468] sm:$0xff]
      %v3959 = vld [vmem:[#allocation2 + $0x470] sm:$0xf]
      %v3960 = vld [vmem:[#allocation2 + $0x474] sm:$0xff]
      %v3961 = vld [vmem:[#allocation2 + $0x47c] sm:$0xf]
      %v3962 = vld [vmem:[#allocation2 + $0x480] sm:$0xff]
      %v3963 = vld [vmem:[#allocation2 + $0x488] sm:$0xf]
      %v3964 = vld [vmem:[#allocation2 + $0x48c] sm:$0xff]
      %v3965 = vld [vmem:[#allocation2 + $0x494] sm:$0xf]
      %v3966 = vld [vmem:[#allocation2 + $0x498] sm:$0xff]
      %v3967 = vld [vmem:[#allocation2 + $0x4a0] sm:$0xf]
      %v3968 = vld [vmem:[#allocation2 + $0x4a4] sm:$0xff]
      %v3969 = vld [vmem:[#allocation2 + $0x4ac] sm:$0xf]
      %v3970 = vld [vmem:[#allocation2 + $0x4b0] sm:$0xff]
      %v3971 = vld [vmem:[#allocation2 + $0x4b8] sm:$0xf]
      %v3972 = vld [vmem:[#allocation2 + $0x4bc] sm:$0xff]
      %v3973 = vld [vmem:[#allocation2 + $0x4c4] sm:$0xf]
      %v3974 = vld [vmem:[#allocation2 + $0x4c8] sm:$0xff]
      %v3975 = vld [vmem:[#allocation2 + $0x4d0] sm:$0xf]
      %v3976 = vld [vmem:[#allocation2 + $0x4d4] sm:$0xff]
      %v3977 = vld [vmem:[#allocation2 + $0x4dc] sm:$0xf]
      %v3978 = vld [vmem:[#allocation2 + $0x4e0] sm:$0xff]
      %v3979 = vld [vmem:[#allocation2 + $0x4e8] sm:$0xf]
      %v3980 = vld [vmem:[#allocation2 + $0x4ec] sm:$0xff]
      %v3981 = vld [vmem:[#allocation2 + $0x4f4] sm:$0xf]
      %v3982 = vld [vmem:[#allocation2 + $0x4f8] sm:$0xff]
      %v3983 = vld [vmem:[#allocation2 + $0x500] sm:$0xf]
      %v3984 = vld [vmem:[#allocation2 + $0x504] sm:$0xff]
      %v3985 = vld [vmem:[#allocation2 + $0x50c] sm:$0xf]
      %v4094 = vunpack.c.l.b16 %v3878
      %v4095 = vunpack.c.h.b16 %v3878
      %v4096 = vunpack.c.l.b16 %v3879
      %v4097 = vunpack.c.l.b16 %v3880
      %v4098 = vunpack.c.h.b16 %v3880
      %v4099 = vunpack.c.l.b16 %v3881
      %v4100 = vunpack.c.l.b16 %v3882
      %v4101 = vunpack.c.h.b16 %v3882
      %v4102 = vunpack.c.l.b16 %v3883
      %v4103 = vunpack.c.l.b16 %v3884
      %v4104 = vunpack.c.h.b16 %v3884
      %v4105 = vunpack.c.l.b16 %v3885
      %v4106 = vunpack.c.l.b16 %v3886
      %v4107 = vunpack.c.h.b16 %v3886
      %v4108 = vunpack.c.l.b16 %v3887
      %v4109 = vunpack.c.l.b16 %v3888
      %v4110 = vunpack.c.h.b16 %v3888
      %v4111 = vunpack.c.l.b16 %v3889
      %v4112 = vunpack.c.l.b16 %v3890
      %v4113 = vunpack.c.h.b16 %v3890
      %v4114 = vunpack.c.l.b16 %v3891
      %v4115 = vunpack.c.l.b16 %v3892
      %v4116 = vunpack.c.h.b16 %v3892
      %v4117 = vunpack.c.l.b16 %v3893
      %v4118 = vunpack.c.l.b16 %v3894
      %v4119 = vunpack.c.h.b16 %v3894
      %v4120 = vunpack.c.l.b16 %v3895
      %v4121 = vunpack.c.l.b16 %v3896
      %v4122 = vunpack.c.h.b16 %v3896
      %v4123 = vunpack.c.l.b16 %v3897
      %v4124 = vunpack.c.l.b16 %v3898
      %v4125 = vunpack.c.h.b16 %v3898
      %v4126 = vunpack.c.l.b16 %v3899
      %v4127 = vunpack.c.l.b16 %v3900
      %v4128 = vunpack.c.h.b16 %v3900
      %v4129 = vunpack.c.l.b16 %v3901
      %v4130 = vunpack.c.l.b16 %v3902
      %v4131 = vunpack.c.h.b16 %v3902
      %v4132 = vunpack.c.l.b16 %v3903
      %v4133 = vunpack.c.l.b16 %v3904
      %v4134 = vunpack.c.h.b16 %v3904
      %v4135 = vunpack.c.l.b16 %v3905
      %v4136 = vunpack.c.l.b16 %v3906
      %v4137 = vunpack.c.h.b16 %v3906
      %v4138 = vunpack.c.l.b16 %v3907
      %v4139 = vunpack.c.l.b16 %v3908
      %v4140 = vunpack.c.h.b16 %v3908
      %v4141 = vunpack.c.l.b16 %v3909
      %v4142 = vunpack.c.l.b16 %v3910
      %v4143 = vunpack.c.h.b16 %v3910
      %v4144 = vunpack.c.l.b16 %v3911
      %v4145 = vunpack.c.l.b16 %v3912
      %v4146 = vunpack.c.h.b16 %v3912
      %v4147 = vunpack.c.l.b16 %v3913
      %v4148 = vunpack.c.l.b16 %v3914
      %v4149 = vunpack.c.h.b16 %v3914
      %v4150 = vunpack.c.l.b16 %v3915
      %v4151 = vunpack.c.l.b16 %v3916
      %v4152 = vunpack.c.h.b16 %v3916
      %v4153 = vunpack.c.l.b16 %v3917
      %v4154 = vunpack.c.l.b16 %v3918
      %v4155 = vunpack.c.h.b16 %v3918
      %v4156 = vunpack.c.l.b16 %v3919
      %v4157 = vunpack.c.l.b16 %v3920
      %v4158 = vunpack.c.h.b16 %v3920
      %v4159 = vunpack.c.l.b16 %v3921
      %v4160 = vunpack.c.l.b16 %v3922
      %v4161 = vunpack.c.h.b16 %v3922
      %v4162 = vunpack.c.l.b16 %v3923
      %v4163 = vunpack.c.l.b16 %v3924
      %v4164 = vunpack.c.h.b16 %v3924
      %v4165 = vunpack.c.l.b16 %v3925
      %v4166 = vunpack.c.l.b16 %v3926
      %v4167 = vunpack.c.h.b16 %v3926
      %v4168 = vunpack.c.l.b16 %v3927
      %v4169 = vunpack.c.l.b16 %v3928
      %v4170 = vunpack.c.h.b16 %v3928
      %v4171 = vunpack.c.l.b16 %v3929
      %v4172 = vunpack.c.l.b16 %v3930
      %v4173 = vunpack.c.h.b16 %v3930
      %v4174 = vunpack.c.l.b16 %v3931
      %v4175 = vunpack.c.l.b16 %v3932
      %v4176 = vunpack.c.h.b16 %v3932
      %v4177 = vunpack.c.l.b16 %v3933
      %v4178 = vunpack.c.l.b16 %v3934
      %v4179 = vunpack.c.h.b16 %v3934
      %v4180 = vunpack.c.l.b16 %v3935
      %v4181 = vunpack.c.l.b16 %v3936
      %v4182 = vunpack.c.h.b16 %v3936
      %v4183 = vunpack.c.l.b16 %v3937
      %v4184 = vunpack.c.l.b16 %v3938
      %v4185 = vunpack.c.h.b16 %v3938
      %v4186 = vunpack.c.l.b16 %v3939
      %v4187 = vunpack.c.l.b16 %v3940
      %v4188 = vunpack.c.h.b16 %v3940
      %v4189 = vunpack.c.l.b16 %v3941
      %v4190 = vunpack.c.l.b16 %v3942
      %v4191 = vunpack.c.h.b16 %v3942
      %v4192 = vunpack.c.l.b16 %v3943
      %v4193 = vunpack.c.l.b16 %v3944
      %v4194 = vunpack.c.h.b16 %v3944
      %v4195 = vunpack.c.l.b16 %v3945
      %v4196 = vunpack.c.l.b16 %v3946
      %v4197 = vunpack.c.h.b16 %v3946
      %v4198 = vunpack.c.l.b16 %v3947
      %v4199 = vunpack.c.l.b16 %v3948
      %v4200 = vunpack.c.h.b16 %v3948
      %v4201 = vunpack.c.l.b16 %v3949
      %v4202 = vunpack.c.l.b16 %v3950
      %v4203 = vunpack.c.h.b16 %v3950
      %v4204 = vunpack.c.l.b16 %v3951
      %v4205 = vunpack.c.l.b16 %v3952
      %v4206 = vunpack.c.h.b16 %v3952
      %v4207 = vunpack.c.l.b16 %v3953
      %v4208 = vunpack.c.l.b16 %v3954
      %v4209 = vunpack.c.h.b16 %v3954
      %v4210 = vunpack.c.l.b16 %v3955
      %v4211 = vunpack.c.l.b16 %v3956
      %v4212 = vunpack.c.h.b16 %v3956
      %v4213 = vunpack.c.l.b16 %v3957
      %v4214 = vunpack.c.l.b16 %v3958
      %v4215 = vunpack.c.h.b16 %v3958
      %v4216 = vunpack.c.l.b16 %v3959
      %v4217 = vunpack.c.l.b16 %v3960
      %v4218 = vunpack.c.h.b16 %v3960
      %v4219 = vunpack.c.l.b16 %v3961
      %v4220 = vunpack.c.l.b16 %v3962
      %v4221 = vunpack.c.h.b16 %v3962
      %v4222 = vunpack.c.l.b16 %v3963
      %v4223 = vunpack.c.l.b16 %v3964
      %v4224 = vunpack.c.h.b16 %v3964
      %v4225 = vunpack.c.l.b16 %v3965
      %v4226 = vunpack.c.l.b16 %v3966
      %v4227 = vunpack.c.h.b16 %v3966
      %v4228 = vunpack.c.l.b16 %v3967
      %v4229 = vunpack.c.l.b16 %v3968
      %v4230 = vunpack.c.h.b16 %v3968
      %v4231 = vunpack.c.l.b16 %v3969
      %v4232 = vunpack.c.l.b16 %v3970
      %v4233 = vunpack.c.h.b16 %v3970
      %v4234 = vunpack.c.l.b16 %v3971
      %v4235 = vunpack.c.l.b16 %v3972
      %v4236 = vunpack.c.h.b16 %v3972
      %v4237 = vunpack.c.l.b16 %v3973
      %v4238 = vunpack.c.l.b16 %v3974
      %v4239 = vunpack.c.h.b16 %v3974
      %v4240 = vunpack.c.l.b16 %v3975
      %v4241 = vunpack.c.l.b16 %v3976
      %v4242 = vunpack.c.h.b16 %v3976
      %v4243 = vunpack.c.l.b16 %v3977
      %v4244 = vunpack.c.l.b16 %v3978
      %v4245 = vunpack.c.h.b16 %v3978
      %v4246 = vunpack.c.l.b16 %v3979
      %v4247 = vunpack.c.l.b16 %v3980
      %v4248 = vunpack.c.h.b16 %v3980
      %v4249 = vunpack.c.l.b16 %v3981
      %v4250 = vunpack.c.l.b16 %v3982
      %v4251 = vunpack.c.h.b16 %v3982
      %v4252 = vunpack.c.l.b16 %v3983
      %v4253 = vunpack.c.l.b16 %v3984
      %v4254 = vunpack.c.h.b16 %v3984
      %v4255 = vunpack.c.l.b16 %v3985
      %v4256 = vpack.c.b16 %v4097, %v4094
      %v4257 = vpack.c.b16 %v4098, %v4095
      %v4258 = vpack.c.b16 %v4099, %v4096
      %v4259 = vpack.c.b16 %v4103, %v4100
      %v4260 = vpack.c.b16 %v4104, %v4101
      %v4261 = vpack.c.b16 %v4105, %v4102
      %v4262 = vpack.c.b16 %v4109, %v4106
      %v4263 = vpack.c.b16 %v4110, %v4107
      %v4264 = vpack.c.b16 %v4111, %v4108
      %v4265 = vpack.c.b16 %v4115, %v4112
      %v4266 = vpack.c.b16 %v4116, %v4113
      %v4267 = vpack.c.b16 %v4117, %v4114
      %v4268 = vpack.c.b16 %v4121, %v4118
      %v4269 = vpack.c.b16 %v4122, %v4119
      %v4270 = vpack.c.b16 %v4123, %v4120
      %v4271 = vpack.c.b16 %v4127, %v4124
      %v4272 = vpack.c.b16 %v4128, %v4125
      %v4273 = vpack.c.b16 %v4129, %v4126
      %v4274 = vpack.c.b16 %v4133, %v4130
      %v4275 = vpack.c.b16 %v4134, %v4131
      %v4276 = vpack.c.b16 %v4135, %v4132
      %v4277 = vpack.c.b16 %v4139, %v4136
      %v4278 = vpack.c.b16 %v4140, %v4137
      %v4279 = vpack.c.b16 %v4141, %v4138
      %v4280 = vpack.c.b16 %v4145, %v4142
      %v4281 = vpack.c.b16 %v4146, %v4143
      %v4282 = vpack.c.b16 %v4147, %v4144
      %v4283 = vpack.c.b16 %v4151, %v4148
      %v4284 = vpack.c.b16 %v4152, %v4149
      %v4285 = vpack.c.b16 %v4153, %v4150
      %v4286 = vpack.c.b16 %v4157, %v4154
      %v4287 = vpack.c.b16 %v4158, %v4155
      %v4288 = vpack.c.b16 %v4159, %v4156
      %v4289 = vpack.c.b16 %v4163, %v4160
      %v4290 = vpack.c.b16 %v4164, %v4161
      %v4291 = vpack.c.b16 %v4165, %v4162
      %v4292 = vpack.c.b16 %v4169, %v4166
      %v4293 = vpack.c.b16 %v4170, %v4167
      %v4294 = vpack.c.b16 %v4171, %v4168
      %v4295 = vpack.c.b16 %v4175, %v4172
      %v4296 = vpack.c.b16 %v4176, %v4173
      %v4297 = vpack.c.b16 %v4177, %v4174
      %v4298 = vpack.c.b16 %v4181, %v4178
      %v4299 = vpack.c.b16 %v4182, %v4179
      %v4300 = vpack.c.b16 %v4183, %v4180
      %v4301 = vpack.c.b16 %v4187, %v4184
      %v4302 = vpack.c.b16 %v4188, %v4185
      %v4303 = vpack.c.b16 %v4189, %v4186
      %v4304 = vpack.c.b16 %v4193, %v4190
      %v4305 = vpack.c.b16 %v4194, %v4191
      %v4306 = vpack.c.b16 %v4195, %v4192
      %v4307 = vpack.c.b16 %v4199, %v4196
      %v4308 = vpack.c.b16 %v4200, %v4197
      %v4309 = vpack.c.b16 %v4201, %v4198
      %v4310 = vpack.c.b16 %v4205, %v4202
      %v4311 = vpack.c.b16 %v4206, %v4203
      %v4312 = vpack.c.b16 %v4207, %v4204
      %v4313 = vpack.c.b16 %v4211, %v4208
      %v4314 = vpack.c.b16 %v4212, %v4209
      %v4315 = vpack.c.b16 %v4213, %v4210
      %v4316 = vpack.c.b16 %v4217, %v4214
      %v4317 = vpack.c.b16 %v4218, %v4215
      %v4318 = vpack.c.b16 %v4219, %v4216
      %v4319 = vpack.c.b16 %v4223, %v4220
      %v4320 = vpack.c.b16 %v4224, %v4221
      %v4321 = vpack.c.b16 %v4225, %v4222
      %v4322 = vpack.c.b16 %v4229, %v4226
      %v4323 = vpack.c.b16 %v4230, %v4227
      %v4324 = vpack.c.b16 %v4231, %v4228
      %v4325 = vpack.c.b16 %v4235, %v4232
      %v4326 = vpack.c.b16 %v4236, %v4233
      %v4327 = vpack.c.b16 %v4237, %v4234
      %v4328 = vpack.c.b16 %v4241, %v4238
      %v4329 = vpack.c.b16 %v4242, %v4239
      %v4330 = vpack.c.b16 %v4243, %v4240
      %v4331 = vpack.c.b16 %v4247, %v4244
      %v4332 = vpack.c.b16 %v4248, %v4245
      %v4333 = vpack.c.b16 %v4249, %v4246
      %v4334 = vpack.c.b16 %v4253, %v4250
      %v4335 = vpack.c.b16 %v4254, %v4251
      %v4336 = vpack.c.b16 %v4255, %v4252
      %4418 = vmatpush.bf16.msra.mxu0 %v4277
      %4419 = vmatpush.bf16.msra.mxu0 %v4274
      %4420 = vmatpush.bf16.msra.mxu0 %v4271
      %4421 = vmatpush.bf16.msra.mxu0 %v4268
      %4422 = vmatpush.bf16.msra.mxu0 %v4265
      %4423 = vmatpush.bf16.msra.mxu0 %v4262
      %4424 = vmatpush.bf16.msra.mxu0 %v4259
      %4425 = vmatpush.bf16.msra.mxu0 %v4256
      %4426 = vmatmul.bf16.gmra.mxu0 %v1722
      %v4427 = vpop.f32.mrf.mxu0
      %v4428 = vadd.f32 0.0, %v4427
      %v4429 = vpop.f32.mrf.mxu0
      %v4430 = vadd.f32 0.0, %v4429
      %4431 = vdwg.mxu0
      %4432 = vmatpush.bf16.msra.mxu0 %v4301
      %4433 = vmatpush.bf16.msra.mxu0 %v4298
      %4434 = vmatpush.bf16.msra.mxu0 %v4295
      %4435 = vmatpush.bf16.msra.mxu0 %v4292
      %4436 = vmatpush.bf16.msra.mxu0 %v4289
      %4437 = vmatpush.bf16.msra.mxu0 %v4286
      %4438 = vmatpush.bf16.msra.mxu0 %v4283
      %4439 = vmatpush.bf16.msra.mxu0 %v4280
      %4440 = vmatmul.bf16.gmra.mxu0 %v1723
      %v4441 = vpop.f32.mrf.mxu0
      %v4442 = vadd.f32 %v4428, %v4441
      %v4443 = vpop.f32.mrf.mxu0
      %v4444 = vadd.f32 %v4430, %v4443
      %4445 = vdwg.mxu0
      %4446 = vmatpush.bf16.msra.mxu0 %v4325
      %4447 = vmatpush.bf16.msra.mxu0 %v4322
      %4448 = vmatpush.bf16.msra.mxu0 %v4319
      %4449 = vmatpush.bf16.msra.mxu0 %v4316
      %4450 = vmatpush.bf16.msra.mxu0 %v4313
      %4451 = vmatpush.bf16.msra.mxu0 %v4310
      %4452 = vmatpush.bf16.msra.mxu0 %v4307
      %4453 = vmatpush.bf16.msra.mxu0 %v4304
      %4454 = vmatmul.bf16.gmra.mxu0 %v1724
      %v4455 = vpop.f32.mrf.mxu0
      %v4456 = vadd.f32 %v4442, %v4455
      %v4457 = vpop.f32.mrf.mxu0
      %v4458 = vadd.f32 %v4444, %v4457
      %4459 = vdwg.mxu0
      %4460 = vmatpush.bf16.msra.mxu0 0
      %4461 = vmatpush.bf16.msra.mxu0 0
      %4462 = vmatpush.bf16.msra.mxu0 0
      %4463 = vmatpush.bf16.msra.mxu0 0
      %4464 = vmatpush.bf16.msra.mxu0 0
      %4465 = vmatpush.bf16.msra.mxu0 %v4334
      %4466 = vmatpush.bf16.msra.mxu0 %v4331
      %4467 = vmatpush.bf16.msra.mxu0 %v4328
      %4468 = vmatmul.bf16.gmra.mxu0 %v2163
      %v4469 = vpop.f32.mrf.mxu0
      %v4470 = vadd.f32 %v4456, %v4469
      %v4471 = vpop.f32.mrf.mxu0
      %v4472 = vadd.f32 %v4458, %v4471
      %4473 = vdwg.mxu0
      %4474 = vmatpush.bf16.msra.mxu0 %v4278
      %4475 = vmatpush.bf16.msra.mxu0 %v4275
      %4476 = vmatpush.bf16.msra.mxu0 %v4272
      %4477 = vmatpush.bf16.msra.mxu0 %v4269
      %4478 = vmatpush.bf16.msra.mxu0 %v4266
      %4479 = vmatpush.bf16.msra.mxu0 %v4263
      %4480 = vmatpush.bf16.msra.mxu0 %v4260
      %4481 = vmatpush.bf16.msra.mxu0 %v4257
      %4482 = vmatmul.bf16.gmra.mxu0 %v1722
      %v4483 = vpop.f32.mrf.mxu0
      %v4484 = vadd.f32 0.0, %v4483
      %v4485 = vpop.f32.mrf.mxu0
      %v4486 = vadd.f32 0.0, %v4485
      %4487 = vdwg.mxu0
      %4488 = vmatpush.bf16.msra.mxu0 %v4302
      %4489 = vmatpush.bf16.msra.mxu0 %v4299
      %4490 = vmatpush.bf16.msra.mxu0 %v4296
      %4491 = vmatpush.bf16.msra.mxu0 %v4293
      %4492 = vmatpush.bf16.msra.mxu0 %v4290
      %4493 = vmatpush.bf16.msra.mxu0 %v4287
      %4494 = vmatpush.bf16.msra.mxu0 %v4284
      %4495 = vmatpush.bf16.msra.mxu0 %v4281
      %4496 = vmatmul.bf16.gmra.mxu0 %v1723
      %v4497 = vpop.f32.mrf.mxu0
      %v4498 = vadd.f32 %v4484, %v4497
      %v4499 = vpop.f32.mrf.mxu0
      %v4500 = vadd.f32 %v4486, %v4499
      %4501 = vdwg.mxu0
      %4502 = vmatpush.bf16.msra.mxu0 %v4326
      %4503 = vmatpush.bf16.msra.mxu0 %v4323
      %4504 = vmatpush.bf16.msra.mxu0 %v4320
      %4505 = vmatpush.bf16.msra.mxu0 %v4317
      %4506 = vmatpush.bf16.msra.mxu0 %v4314
      %4507 = vmatpush.bf16.msra.mxu0 %v4311
      %4508 = vmatpush.bf16.msra.mxu0 %v4308
      %4509 = vmatpush.bf16.msra.mxu0 %v4305
      %4510 = vmatmul.bf16.gmra.mxu0 %v1724
      %v4511 = vpop.f32.mrf.mxu0
      %v4512 = vadd.f32 %v4498, %v4511
      %v4513 = vpop.f32.mrf.mxu0
      %v4514 = vadd.f32 %v4500, %v4513
      %4515 = vdwg.mxu0
      %4516 = vmatpush.bf16.msra.mxu0 0
      %4517 = vmatpush.bf16.msra.mxu0 0
      %4518 = vmatpush.bf16.msra.mxu0 0
      %4519 = vmatpush.bf16.msra.mxu0 0
      %4520 = vmatpush.bf16.msra.mxu0 0
      %4521 = vmatpush.bf16.msra.mxu0 %v4335
      %4522 = vmatpush.bf16.msra.mxu0 %v4332
      %4523 = vmatpush.bf16.msra.mxu0 %v4329
      %4524 = vmatmul.bf16.gmra.mxu0 %v2163
      %v4525 = vpop.f32.mrf.mxu0
      %v4526 = vadd.f32 %v4512, %v4525
      %v4527 = vpop.f32.mrf.mxu0
      %v4528 = vadd.f32 %v4514, %v4527
      %4529 = vdwg.mxu0
      %4530 = vmatpush.bf16.msra.mxu0 %v4279
      %4531 = vmatpush.bf16.msra.mxu0 %v4276
      %4532 = vmatpush.bf16.msra.mxu0 %v4273
      %4533 = vmatpush.bf16.msra.mxu0 %v4270
      %4534 = vmatpush.bf16.msra.mxu0 %v4267
      %4535 = vmatpush.bf16.msra.mxu0 %v4264
      %4536 = vmatpush.bf16.msra.mxu0 %v4261
      %4537 = vmatpush.bf16.msra.mxu0 %v4258
      %4538 = vmatmul.bf16.gmra.mxu0 %v1722
      %v4539 = vpop.f32.mrf.mxu0
      %v4540 = vadd.f32 0.0, %v4539
      %v4541 = vpop.f32.mrf.mxu0
      %v4542 = vadd.f32 0.0, %v4541
      %4543 = vdwg.mxu0
      %4544 = vmatpush.bf16.msra.mxu0 %v4303
      %4545 = vmatpush.bf16.msra.mxu0 %v4300
      %4546 = vmatpush.bf16.msra.mxu0 %v4297
      %4547 = vmatpush.bf16.msra.mxu0 %v4294
      %4548 = vmatpush.bf16.msra.mxu0 %v4291
      %4549 = vmatpush.bf16.msra.mxu0 %v4288
      %4550 = vmatpush.bf16.msra.mxu0 %v4285
      %4551 = vmatpush.bf16.msra.mxu0 %v4282
      %4552 = vmatmul.bf16.gmra.mxu0 %v1723
      %v4553 = vpop.f32.mrf.mxu0
      %v4554 = vadd.f32 %v4540, %v4553
      %v4555 = vpop.f32.mrf.mxu0
      %v4556 = vadd.f32 %v4542, %v4555
      %4557 = vdwg.mxu0
      %4558 = vmatpush.bf16.msra.mxu0 %v4327
      %4559 = vmatpush.bf16.msra.mxu0 %v4324
      %4560 = vmatpush.bf16.msra.mxu0 %v4321
      %4561 = vmatpush.bf16.msra.mxu0 %v4318
      %4562 = vmatpush.bf16.msra.mxu0 %v4315
      %4563 = vmatpush.bf16.msra.mxu0 %v4312
      %4564 = vmatpush.bf16.msra.mxu0 %v4309
      %4565 = vmatpush.bf16.msra.mxu0 %v4306
      %4566 = vmatmul.bf16.gmra.mxu0 %v1724
      %v4567 = vpop.f32.mrf.mxu0
      %v4568 = vadd.f32 %v4554, %v4567
      %v4569 = vpop.f32.mrf.mxu0
      %v4570 = vadd.f32 %v4556, %v4569
      %4571 = vdwg.mxu0
      %4572 = vmatpush.bf16.msra.mxu0 0
      %4573 = vmatpush.bf16.msra.mxu0 0
      %4574 = vmatpush.bf16.msra.mxu0 0
      %4575 = vmatpush.bf16.msra.mxu0 0
      %4576 = vmatpush.bf16.msra.mxu0 0
      %4577 = vmatpush.bf16.msra.mxu0 %v4336
      %4578 = vmatpush.bf16.msra.mxu0 %v4333
      %4579 = vmatpush.bf16.msra.mxu0 %v4330
      %4580 = vmatmul.bf16.gmra.mxu0 %v2163
      %v4581 = vpop.f32.mrf.mxu0
      %v4582 = vadd.f32 %v4568, %v4581
      %v4583 = vpop.f32.mrf.mxu0
      %v4584 = vadd.f32 %v4570, %v4583
      %4585 = vdwg.mxu0
      %v4586 = vpack.c.bf16 %v4526, %v4470
      %v4587 = vpack.c.bf16 %v4582, %v4582
      %v4588 = vpack.c.bf16 %v4528, %v4472
      %v4589 = vpack.c.bf16 %v4584, %v4584
      %s4590 = scalar_lea.vmem %s229, 72
      %4591 = vst [vmem:[%s4590] sm:$0xff] %v4586
      %4592 = vst [vmem:[%s4590 + $0x8] sm:$0xf] %v4587
      %4593 = vst [vmem:[%s4590 + $0xc] sm:$0xff] %v4588
      %4594 = vst [vmem:[%s4590 + $0x14] sm:$0xf] %v4589
      %v4595 = vmul.f32 %v4470, %v2342
      %v4596 = vmul.f32 %v4526, %v2343
      %v4597 = vmul.f32 %v4582, %v2344
      %v4598 = vmul.f32 %v4472, %v2342
      %v4599 = vmul.f32 %v4528, %v2343
      %v4600 = vmul.f32 %v4584, %v2344
      %v4601 = vadd.f32 %v4595, %v4596
      %v4602 = vadd.f32 %v4601, %v4597
      %4603 = vadd.xlane.f32.xlu0 %v4602
      %v4604 = vpop.xlane.xlu0 %4603
      %v4605 = vadd.f32 %v4598, %v4599
      %v4606 = vadd.f32 %v4605, %v4600
      %4607 = vadd.xlane.f32.xlu0 %v4606
      %v4608 = vpop.xlane.xlu0 %4607
      %v4609 = vadd.f32 %v3860, %v4604
      %v4610 = vadd.f32 %v3861, %v4608
      %v4611 = vmul.f32 %v4595, %v4595
      %v4612 = vmul.f32 %v4596, %v4596
      %v4613 = vmul.f32 %v4597, %v4597
      %v4614 = vmul.f32 %v4598, %v4598
      %v4615 = vmul.f32 %v4599, %v4599
      %v4616 = vmul.f32 %v4600, %v4600
      %v4617 = vadd.f32 %v4611, %v4612
      %v4618 = vadd.f32 %v4617, %v4613
      %4619 = vadd.xlane.f32.xlu0 %v4618
      %v4620 = vpop.xlane.xlu0 %4619
      %v4621 = vadd.f32 %v4614, %v4615
      %v4622 = vadd.f32 %v4621, %v4616
      %4623 = vadd.xlane.f32.xlu0 %v4622
      %v4624 = vpop.xlane.xlu0 %4623
      %v4625 = vadd.f32 %v3876, %v4620
      %v4626 = vadd.f32 %v3877, %v4624
      %v4627 = vld [vmem:[%s235] sm:$0xff]
      %v4628 = vld [vmem:[%s235 + $0x8] sm:$0xff]
      %v4629 = vadd.f32 %v4627, %v4609
      %v4630 = vadd.f32 %v4628, %v4610
      %vm4631 = vcmask 7168
      %4632 = vst.msk [vmem:[%s235] sm:$0xff] %vm4631, %v4629
      %4633 = vst.msk [vmem:[%s235 + $0x8] sm:$0xff] %vm4631, %v4630
      %v4634 = vld [vmem:[%s235] sm:$0xff]
      %v4635 = vld [vmem:[%s235 + $0x8] sm:$0xff]
      %v4636 = vadd.f32 %v4634, %v4625
      %v4637 = vadd.f32 %v4635, %v4626
      %vm4638 = vcmask 15368
      %4639 = vst.msk [vmem:[%s235] sm:$0xff] %vm4638, %v4636
      %4640 = vst.msk [vmem:[%s235 + $0x8] sm:$0xff] %vm4638, %v4637
      %s4641 = smul.u32 4, %s21
      %p4642 = scmp.lt.s32.totalorder %s20, 1
      %s4643 = scalar_select %p4642, %s20, 1
      %p4644 = scmp.lt.s32.totalorder %s4641, 3
      %s4645 = scalar_select %p4644, %s4641, 3
      %s4646 = smul.addr %s4645, 6
      %s4647 = smul.addr %s4643, 24
      %s4648 = sadd.s32 %s4646, %s4647
      %s4649 = smul.addr %s4648, 4
      %s4650 = scalar_lea.vmem %s3, %s4649
      %p4651 = scmp.lt.s32.totalorder %s20, 1
      %s4652 = scalar_select %p4651, %s20, 1
      %s4653 = smul.addr %s4652, 2
      %s4654 = smul.addr %s4653, 8
      %s4655 = scalar_lea.vmem %s4, %s4654
      // Predicated region
      $region37: #{encoder3d_forward.8} parent=31 // pred_check
        %p4656 = pneg %p116
      $region38: #{encoder3d_forward.8} parent=31 // pred_check_branch
        %4658 = sbr.rel (%p4656) target = $region40
      $region39: #{encoder3d_forward.8} parent=31 // pred_region
        %s4659 = smul.u32 4, %s21
      $region40: #{encoder3d_forward.8} parent=31 // pred_fallthru
        _
      // Predicated region
      $region41: #{encoder3d_forward.8} parent=31 // pred_check
        %p4660 = pneg %p142
      $region42: #{encoder3d_forward.8} parent=31 // pred_check_branch
        %4662 = sbr.rel (%p4660) target = $region44
      $region43: #{encoder3d_forward.8} parent=31 // pred_region
        _
      $region44: #{encoder3d_forward.8} parent=31 // pred_fallthru
        _
    $region32: #{encoder3d_forward.8} parent=5 // pred_fallthru
      _
    %p4663 = scmp.le.s32.totalorder 2, %s11
    // Predicated region
    $region45: #{encoder3d_forward.8} parent=5 // pred_check
      %p4664 = pneg %p4663
    $region46: #{encoder3d_forward.8} parent=5 // pred_check_branch
      %4666 = sbr.rel (%p4664) target = $region48
    $region47: #{encoder3d_forward.8} parent=5 // pred_region
      %s4667 = ssub.s32 %s11, 2
      // Predicated region
      $region49: #{encoder3d_forward.8} parent=47 // pred_check
        %p4668 = pneg %p122
      $region50: #{encoder3d_forward.8} parent=47 // pred_check_branch
        %4670 = sbr.rel (%p4668) target = $region52
      $region51: #{encoder3d_forward.8} parent=47 // pred_region
        %s4671 = smul.u32 4, %s23
        %p4672 = scmp.lt.s32.totalorder %s22, 1
        %s4673 = scalar_select %p4672, %s22, 1
        %p4674 = scmp.lt.s32.totalorder %s4671, 3
        %s4675 = scalar_select %p4674, %s4671, 3
        %s4676 = smul.addr %s4675, 6
        %s4677 = smul.addr %s4673, 24
        %s4678 = sadd.s32 %s4676, %s4677
        %s4679 = smul.addr %s4678, 4
        %s4680 = scalar_lea.vmem %s3, %s4679
      $region52: #{encoder3d_forward.8} parent=47 // pred_fallthru
        _
      // Predicated region
      $region53: #{encoder3d_forward.8} parent=47 // pred_check
        %p4681 = pneg %p148
      $region54: #{encoder3d_forward.8} parent=47 // pred_check_branch
        %4683 = sbr.rel (%p4681) target = $region56
      $region55: #{encoder3d_forward.8} parent=47 // pred_region
        %p4684 = scmp.lt.s32.totalorder %s22, 1
        %s4685 = scalar_select %p4684, %s22, 1
        %s4686 = smul.addr %s4685, 2
        %s4687 = smul.addr %s4686, 8
        %s4688 = scalar_lea.vmem %s4, %s4687
      $region56: #{encoder3d_forward.8} parent=47 // pred_fallthru
        _
    $region48: #{encoder3d_forward.8} parent=5 // pred_fallthru
      _
  $region6: #{encoder3d_forward.8} parent=0 // loop_footer
    %s15 = sadd.s32 1, %s11
  $region7: #{encoder3d_forward.8} parent=0 // loop_footer_branch
    %10 = sbr.rel target = $region3
  $region8: #{encoder3d_forward.8} parent=0 // loop_exit
    _

// kernel: encoder3d_forward.15
$region0: #{encoder3d_forward.15}
  #allocation0 [shape = 'u32[]', space=smem, size = 0x4, offset = 0x4, fixed_abs, tag = 'smem constant byte address 0x4 - core index']
  #allocation1 [shape = 'u32[72,128]{1,0:T(1,128)}', space=vmem, size = 0x9000, scoped, tag = 'internal scratch']
  %s0 = inlined_call_operand.vmem [shape: bf16[2,4,16,128], index: 0, kind: input, shape index: {}]
  %s1 = inlined_call_operand.vmem [shape: f32[16,1], index: 1, kind: input, shape index: {}]
  %s2 = inlined_call_operand.vmem [shape: f32[16,1], index: 2, kind: input, shape index: {}]
  %s3 = inlined_call_operand.vmem [shape: f32[2,4,16,128], index: 3, kind: output, shape index: {}]
  %s4 = sld [smem:[#allocation0]]
  $region45: #{encoder3d_forward.15} parent=0
    _
  %s6 = ssub.s32 1, %s4
  %s7 = scalar_select 0, %s6, %s4
  loop: start=0, step=1, limit=4
  $region2: #{encoder3d_forward.15} parent=0 // loop_pre_header
    _
  $region3: #{encoder3d_forward.15} parent=0 // loop_header
    %s9 = sphi 0, %s13
    %p10 = scmp.ge.s32.totalorder %s9, 4
    %s19 = sphi 0, %s21
    %s22 = sphi 0, %s19
    %s23 = sphi 0, %s22
    %s39 = sphi 0, %s23
    %s43 = sphi 0, %s43
    %s45 = sphi 0, %s43
    %s46 = sphi 0, %s45
    %s60 = sphi 0, %s46
    %s64 = sphi 0, %s64
    %s66 = sphi 0, %s64
    %s67 = sphi 0, %s66
    %s81 = sphi 0, %s67
    %s87 = sphi 0, %s89
    %s90 = sphi 0, %s87
    %s91 = sphi 0, %s90
    %s107 = sphi 0, %s91
  $region4: #{encoder3d_forward.15} parent=0 // loop_header_branch
    %12 = sbr.rel (%p10) target = $region8
  $region5: #{encoder3d_forward.15} parent=0 // loop_body
    %s14 = ssub.s32 %s9, 1
    %s15 = ssub.s32 %s9, 2
    %s16 = sadd.s32 %s9, 1
    %s17 = ssub.s32 %s9, %s16
    %p18 = scmp.eq.s32.totalorder %s17, 0
    %s20 = sadd.s32 %s19, 1
    %s21 = scalar_select %p18, %s19, %s20
    %p24 = pneg %p18
    %p25 = scmp.eq.s32.totalorder %s9, 1
    %p26 = por %p24, %p25
    %p27 = scmp.ne.s32.totalorder %s19, %s22
    %p28 = scmp.eq.s32.totalorder %s9, 0
    %p29 = por %p27, %p28
    %p30 = scmp.ne.s32.totalorder %s19, %s22
    %p31 = scmp.eq.s32.totalorder %s14, 1
    %p32 = por %p30, %p31
    %p33 = scmp.ne.s32.totalorder %s22, %s23
    %p34 = scmp.eq.s32.totalorder %s14, 0
    %p35 = por %p33, %p34
    %p36 = scmp.ne.s32.totalorder %s22, %s23
    %p37 = scmp.eq.s32.totalorder %s15, 1
    %p38 = por %p36, %p37
    %p40 = scmp.ne.s32.totalorder %s23, %s39
    %p41 = scmp.eq.s32.totalorder %s15, 0
    %p42 = por %p40, %p41
    %s44 = sadd.s32 %s43, 1
    %p47 = scmp.eq.s32.totalorder %s9, 1
    %p48 = scmp.ne.s32.totalorder %s43, %s45
    %p49 = scmp.eq.s32.totalorder %s9, 0
    %p50 = por %p48, %p49
    %p51 = scmp.ne.s32.totalorder %s43, %s45
    %p52 = scmp.eq.s32.totalorder %s14, 1
    %p53 = por %p51, %p52
    %p54 = scmp.ne.s32.totalorder %s45, %s46
    %p55 = scmp.eq.s32.totalorder %s14, 0
    %p56 = por %p54, %p55
    %p57 = scmp.ne.s32.totalorder %s45, %s46
    %p58 = scmp.eq.s32.totalorder %s15, 1
    %p59 = por %p57, %p58
    %p61 = scmp.ne.s32.totalorder %s46, %s60
    %p62 = scmp.eq.s32.totalorder %s15, 0
    %p63 = por %p61, %p62
    %s65 = sadd.s32 %s64, 1
    %p68 = scmp.eq.s32.totalorder %s9, 1
    %p69 = scmp.ne.s32.totalorder %s64, %s66
    %p70 = scmp.eq.s32.totalorder %s9, 0
    %p71 = por %p69, %p70
    %p72 = scmp.ne.s32.totalorder %s64, %s66
    %p73 = scmp.eq.s32.totalorder %s14, 1
    %p74 = por %p72, %p73
    %p75 = scmp.ne.s32.totalorder %s66, %s67
    %p76 = scmp.eq.s32.totalorder %s14, 0
    %p77 = por %p75, %p76
    %p78 = scmp.ne.s32.totalorder %s66, %s67
    %p79 = scmp.eq.s32.totalorder %s15, 1
    %p80 = por %p78, %p79
    %p82 = scmp.ne.s32.totalorder %s67, %s81
    %p83 = scmp.eq.s32.totalorder %s15, 0
    %p84 = por %p82, %p83
    %s85 = ssub.s32 %s9, %s16
    %p86 = scmp.eq.s32.totalorder %s85, 0
    %s88 = sadd.s32 %s87, 1
    %s89 = scalar_select %p86, %s87, %s88
    %p92 = pneg %p86
    %p93 = scmp.eq.s32.totalorder %s9, 1
    %p94 = por %p92, %p93
    %p95 = scmp.ne.s32.totalorder %s87, %s90
    %p96 = scmp.eq.s32.totalorder %s9, 0
    %p97 = por %p95, %p96
    %p98 = scmp.ne.s32.totalorder %s87, %s90
    %p99 = scmp.eq.s32.totalorder %s14, 1
    %p100 = por %p98, %p99
    %p101 = scmp.ne.s32.totalorder %s90, %s91
    %p102 = scmp.eq.s32.totalorder %s14, 0
    %p103 = por %p101, %p102
    %p104 = scmp.ne.s32.totalorder %s90, %s91
    %p105 = scmp.eq.s32.totalorder %s15, 1
    %p106 = por %p104, %p105
    %p108 = scmp.ne.s32.totalorder %s91, %s107
    %p109 = scmp.eq.s32.totalorder %s15, 0
    %p110 = por %p108, %p109
    %p111 = scmp.le.s32.totalorder 1, %s9
    %p112 = scmp.lt.s32.totalorder %s9, 3
    %p113 = pnand %p111, %p112
    %p114 = pneg %p113
    // Predicated region
    $region9: #{encoder3d_forward.15} parent=5 // pred_check
      _
    $region10: #{encoder3d_forward.15} parent=5 // pred_check_branch
      %116 = sbr.rel (%p113) target = $region12
    $region11: #{encoder3d_forward.15} parent=5 // pred_region
      %s117 = ssub.s32 %s9, 1
      // Predicated region
      $region13: #{encoder3d_forward.15} parent=11 // pred_check
        %p118 = pneg %p56
      $region14: #{encoder3d_forward.15} parent=11 // pred_check_branch
        %120 = sbr.rel (%p118) target = $region16
      $region15: #{encoder3d_forward.15} parent=11 // pred_region
        _
      $region16: #{encoder3d_forward.15} parent=11 // pred_fallthru
        _
      // Predicated region
      $region17: #{encoder3d_forward.15} parent=11 // pred_check
        %p121 = pneg %p77
      $region18: #{encoder3d_forward.15} parent=11 // pred_check_branch
        %123 = sbr.rel (%p121) target = $region20
      $region19: #{encoder3d_forward.15} parent=11 // pred_region
        _
      $region20: #{encoder3d_forward.15} parent=11 // pred_fallthru
        _
    $region12: #{encoder3d_forward.15} parent=5 // pred_fallthru
      _
    %p124 = scmp.lt.s32.totalorder %s9, 2
    // Predicated region
    $region21: #{encoder3d_forward.15} parent=5 // pred_check
      %p125 = pneg %p124
    $region22: #{encoder3d_forward.15} parent=5 // pred_check_branch
      %127 = sbr.rel (%p125) target = $region24
    $region23: #{encoder3d_forward.15} parent=5 // pred_region
      // Predicated region
      $region25: #{encoder3d_forward.15} parent=23 // pred_check
        %p128 = pneg %p29
      $region26: #{encoder3d_forward.15} parent=23 // pred_check_branch
        %130 = sbr.rel (%p128) target = $region28
      $region27: #{encoder3d_forward.15} parent=23 // pred_region
        %p131 = scmp.lt.s32.totalorder %s9, 1
        %s132 = scalar_select %p131, %s9, 1
        %s133 = smul.addr %s132, 8
        %s134 = smul.addr %s133, 4
        %s135 = scalar_lea.vmem %s0, %s134
      $region28: #{encoder3d_forward.15} parent=23 // pred_fallthru
        _
    $region24: #{encoder3d_forward.15} parent=5 // pred_fallthru
      _
    %p136 = scmp.le.s32.totalorder 1, %s9
    %p137 = scmp.lt.s32.totalorder %s9, 3
    %p138 = pnand %p136, %p137
    %p139 = pneg %p138
    // Predicated region
    $region29: #{encoder3d_forward.15} parent=5 // pred_check
      _
    $region30: #{encoder3d_forward.15} parent=5 // pred_check_branch
      %141 = sbr.rel (%p138) target = $region32
    $region31: #{encoder3d_forward.15} parent=5 // pred_region
      %s142 = ssub.s32 %s9, 1
      %p143 = scmp.lt.s32.totalorder %s14, 1
      %s144 = scalar_select %p143, %s14, 1
      %s145 = smul.addr %s144, 8
      %s146 = smul.addr %s145, 4
      %s147 = scalar_lea.vmem %s0, %s146
      %p148 = pneg %p35
      %p149 = pneg %p32
      %p150 = pneg %p56
      %p151 = pneg %p53
      %p152 = pneg %p77
      %p153 = pneg %p74
      %p154 = pneg %p103
      %p155 = pneg %p100
      %p156 = scmp.lt.s32.totalorder %s14, 1
      %s157 = scalar_select %p156, %s14, 1
      %s158 = smul.addr %s157, 8
      %s159 = smul.addr %s158, 8
      %s160 = scalar_lea.vmem %s3, %s159
      %p161 = scmp.lt.s32.totalorder %s14, 1
      %s162 = scalar_select %p161, %s14, 1
      %s163 = smul.addr %s162, 8
      %s164 = smul.addr %s163, 4
      %s165 = scalar_lea.vmem %s0, %s164
      %p166 = scmp.lt.s32.totalorder %s14, 1
      %s167 = scalar_select %p166, %s14, 1
      %s168 = smul.addr %s167, 8
      %s169 = smul.addr %s168, 8
      %s170 = scalar_lea.vmem %s3, %s169
      %v171 = vld [vmem:[%s1] sm:$0xff]
      %v172 = vld [vmem:[%s1 + $0x8] sm:$0xff]
      %v173 = vld [vmem:[%s2] sm:$0xff]
      %v174 = vld [vmem:[%s2 + $0x8] sm:$0xff]
      %v175 = vld [vmem:[%s165] sm:$0xf]
      %v176 = vld [vmem:[%s165 + $0x4] sm:$0xf]
      %v177 = vunpack.c.l.bf16 %v175
      %v178 = vunpack.c.l.bf16 %v176
      %180 = vset.pattern.permute.xlu0 0
      %181 = vperm.xlu0 %180, %v171
      %v182 = vpop.permute.xlu0 %181
      %185 = vset.pattern.permute.xlu0 0
      %186 = vperm.xlu0 %185, %v172
      %v187 = vpop.permute.xlu0 %186
      %v189 = vmul.f32 %v177, %v182
      %v190 = vmul.f32 %v178, %v187
      %192 = vset.pattern.permute.xlu0 0
      %193 = vperm.xlu0 %192, %v173
      %v194 = vpop.permute.xlu0 %193
      %197 = vset.pattern.permute.xlu0 0
      %198 = vperm.xlu0 %197, %v174
      %v199 = vpop.permute.xlu0 %198
      %v201 = vadd.f32 %v189, %v194
      %v202 = vadd.f32 %v190, %v199
      %v203 = vmax.f32 %v201, 0.0
      %v204 = vmax.f32 %v202, 0.0
      %205 = vst [vmem:[%s170] sm:$0xff] %v203
      %206 = vst [vmem:[%s170 + $0x8] sm:$0xff] %v204
      %s207 = scalar_lea.vmem %s165, 8
      %v208 = vld [vmem:[%s207] sm:$0xf]
      %v209 = vld [vmem:[%s207 + $0x4] sm:$0xf]
      %v210 = vunpack.c.l.bf16 %v208
      %v211 = vunpack.c.l.bf16 %v209
      %v212 = vmul.f32 %v210, %v182
      %v213 = vmul.f32 %v211, %v187
      %v214 = vadd.f32 %v212, %v194
      %v215 = vadd.f32 %v213, %v199
      %v216 = vmax.f32 %v214, 0.0
      %v217 = vmax.f32 %v215, 0.0
      %s218 = scalar_lea.vmem %s170, 16
      %219 = vst [vmem:[%s218] sm:$0xff] %v216
      %220 = vst [vmem:[%s218 + $0x8] sm:$0xff] %v217
      %s221 = scalar_lea.vmem %s165, 16
      %v222 = vld [vmem:[%s221] sm:$0xf]
      %v223 = vld [vmem:[%s221 + $0x4] sm:$0xf]
      %v224 = vunpack.c.l.bf16 %v222
      %v225 = vunpack.c.l.bf16 %v223
      %v226 = vmul.f32 %v224, %v182
      %v227 = vmul.f32 %v225, %v187
      %v228 = vadd.f32 %v226, %v194
      %v229 = vadd.f32 %v227, %v199
      %v230 = vmax.f32 %v228, 0.0
      %v231 = vmax.f32 %v229, 0.0
      %s232 = scalar_lea.vmem %s170, 32
      %233 = vst [vmem:[%s232] sm:$0xff] %v230
      %234 = vst [vmem:[%s232 + $0x8] sm:$0xff] %v231
      %s235 = scalar_lea.vmem %s165, 24
      %v236 = vld [vmem:[%s235] sm:$0xf]
      %v237 = vld [vmem:[%s235 + $0x4] sm:$0xf]
      %v238 = vunpack.c.l.bf16 %v236
      %v239 = vunpack.c.l.bf16 %v237
      %v240 = vmul.f32 %v238, %v182
      %v241 = vmul.f32 %v239, %v187
      %v242 = vadd.f32 %v240, %v194
      %v243 = vadd.f32 %v241, %v199
      %v244 = vmax.f32 %v242, 0.0
      %v245 = vmax.f32 %v243, 0.0
      %s246 = scalar_lea.vmem %s170, 48
      %247 = vst [vmem:[%s246] sm:$0xff] %v244
      %248 = vst [vmem:[%s246 + $0x8] sm:$0xff] %v245
      %p249 = scmp.lt.s32.totalorder %s14, 1
      %s250 = scalar_select %p249, %s14, 1
      %s251 = smul.addr %s250, 8
      %s252 = smul.addr %s251, 8
      %s253 = scalar_lea.vmem %s3, %s252
      // Predicated region
      $region33: #{encoder3d_forward.15} parent=31 // pred_check
        %p254 = pneg %p100
      $region34: #{encoder3d_forward.15} parent=31 // pred_check_branch
        %256 = sbr.rel (%p254) target = $region36
      $region35: #{encoder3d_forward.15} parent=31 // pred_region
        _
      $region36: #{encoder3d_forward.15} parent=31 // pred_fallthru
        _
    $region32: #{encoder3d_forward.15} parent=5 // pred_fallthru
      _
    %p257 = scmp.le.s32.totalorder 2, %s9
    // Predicated region
    $region37: #{encoder3d_forward.15} parent=5 // pred_check
      %p258 = pneg %p257
    $region38: #{encoder3d_forward.15} parent=5 // pred_check_branch
      %260 = sbr.rel (%p258) target = $region40
    $region39: #{encoder3d_forward.15} parent=5 // pred_region
      %s261 = ssub.s32 %s9, 2
      // Predicated region
      $region41: #{encoder3d_forward.15} parent=39 // pred_check
        %p262 = pneg %p106
      $region42: #{encoder3d_forward.15} parent=39 // pred_check_branch
        %264 = sbr.rel (%p262) target = $region44
      $region43: #{encoder3d_forward.15} parent=39 // pred_region
        %p265 = scmp.lt.s32.totalorder %s15, 1
        %s266 = scalar_select %p265, %s15, 1
        %s267 = smul.addr %s266, 8
        %s268 = smul.addr %s267, 8
        %s269 = scalar_lea.vmem %s3, %s268
      $region44: #{encoder3d_forward.15} parent=39 // pred_fallthru
        _
    $region40: #{encoder3d_forward.15} parent=5 // pred_fallthru
      _
  $region6: #{encoder3d_forward.15} parent=0 // loop_footer
    %s13 = sadd.s32 1, %s9
  $region7: #{encoder3d_forward.15} parent=0 // loop_footer_branch
    %8 = sbr.rel target = $region3
  $region8: #{encoder3d_forward.15} parent=0 // loop_exit
    _

// kernel: encoder3d_forward.13
$region0: #{encoder3d_forward.13}
  #allocation0 [shape = 'u32[]', space=smem, size = 0x4, offset = 0x4, fixed_abs, tag = 'smem constant byte address 0x4 - core index']
  #allocation1 [shape = 'u32[72,128]{1,0:T(1,128)}', space=vmem, size = 0x9000, scoped, tag = 'internal scratch']
  %s0 = inlined_call_operand.vmem [shape: bf16[2,4,16,128], index: 0, kind: input, shape index: {}]
  %s1 = inlined_call_operand.vmem [shape: f32[16,1], index: 1, kind: input, shape index: {}]
  %s2 = inlined_call_operand.vmem [shape: f32[16,1], index: 2, kind: input, shape index: {}]
  %s3 = inlined_call_operand.vmem [shape: f32[1,128], index: 3, kind: input, shape index: {}]
  %s4 = inlined_call_operand.vmem [shape: bf16[2,6,16,256], index: 4, kind: output, shape index: {}]
  %s5 = sld [smem:[#allocation0]]
  $region49: #{encoder3d_forward.13} parent=0
    _
  %s7 = ssub.s32 1, %s5
  %s8 = scalar_select 0, %s7, %s5
  loop: start=0, step=1, limit=4
  $region2: #{encoder3d_forward.13} parent=0 // loop_pre_header
    _
  $region3: #{encoder3d_forward.13} parent=0 // loop_header
    %s10 = sphi 0, %s14
    %p11 = scmp.ge.s32.totalorder %s10, 4
    %s20 = sphi 0, %s22
    %s23 = sphi 0, %s20
    %s24 = sphi 0, %s23
    %s40 = sphi 0, %s24
    %s44 = sphi 0, %s44
    %s46 = sphi 0, %s44
    %s47 = sphi 0, %s46
    %s61 = sphi 0, %s47
    %s65 = sphi 0, %s65
    %s67 = sphi 0, %s65
    %s68 = sphi 0, %s67
    %s82 = sphi 0, %s68
    %s86 = sphi 0, %s86
    %s88 = sphi 0, %s86
    %s89 = sphi 0, %s88
    %s103 = sphi 0, %s89
    %s109 = sphi 0, %s111
    %s112 = sphi 0, %s109
    %s113 = sphi 0, %s112
    %s129 = sphi 0, %s113
  $region4: #{encoder3d_forward.13} parent=0 // loop_header_branch
    %13 = sbr.rel (%p11) target = $region8
  $region5: #{encoder3d_forward.13} parent=0 // loop_body
    %s15 = ssub.s32 %s10, 1
    %s16 = ssub.s32 %s10, 2
    %s17 = sadd.s32 %s10, 1
    %s18 = ssub.s32 %s10, %s17
    %p19 = scmp.eq.s32.totalorder %s18, 0
    %s21 = sadd.s32 %s20, 1
    %s22 = scalar_select %p19, %s20, %s21
    %p25 = pneg %p19
    %p26 = scmp.eq.s32.totalorder %s10, 1
    %p27 = por %p25, %p26
    %p28 = scmp.ne.s32.totalorder %s20, %s23
    %p29 = scmp.eq.s32.totalorder %s10, 0
    %p30 = por %p28, %p29
    %p31 = scmp.ne.s32.totalorder %s20, %s23
    %p32 = scmp.eq.s32.totalorder %s15, 1
    %p33 = por %p31, %p32
    %p34 = scmp.ne.s32.totalorder %s23, %s24
    %p35 = scmp.eq.s32.totalorder %s15, 0
    %p36 = por %p34, %p35
    %p37 = scmp.ne.s32.totalorder %s23, %s24
    %p38 = scmp.eq.s32.totalorder %s16, 1
    %p39 = por %p37, %p38
    %p41 = scmp.ne.s32.totalorder %s24, %s40
    %p42 = scmp.eq.s32.totalorder %s16, 0
    %p43 = por %p41, %p42
    %s45 = sadd.s32 %s44, 1
    %p48 = scmp.eq.s32.totalorder %s10, 1
    %p49 = scmp.ne.s32.totalorder %s44, %s46
    %p50 = scmp.eq.s32.totalorder %s10, 0
    %p51 = por %p49, %p50
    %p52 = scmp.ne.s32.totalorder %s44, %s46
    %p53 = scmp.eq.s32.totalorder %s15, 1
    %p54 = por %p52, %p53
    %p55 = scmp.ne.s32.totalorder %s46, %s47
    %p56 = scmp.eq.s32.totalorder %s15, 0
    %p57 = por %p55, %p56
    %p58 = scmp.ne.s32.totalorder %s46, %s47
    %p59 = scmp.eq.s32.totalorder %s16, 1
    %p60 = por %p58, %p59
    %p62 = scmp.ne.s32.totalorder %s47, %s61
    %p63 = scmp.eq.s32.totalorder %s16, 0
    %p64 = por %p62, %p63
    %s66 = sadd.s32 %s65, 1
    %p69 = scmp.eq.s32.totalorder %s10, 1
    %p70 = scmp.ne.s32.totalorder %s65, %s67
    %p71 = scmp.eq.s32.totalorder %s10, 0
    %p72 = por %p70, %p71
    %p73 = scmp.ne.s32.totalorder %s65, %s67
    %p74 = scmp.eq.s32.totalorder %s15, 1
    %p75 = por %p73, %p74
    %p76 = scmp.ne.s32.totalorder %s67, %s68
    %p77 = scmp.eq.s32.totalorder %s15, 0
    %p78 = por %p76, %p77
    %p79 = scmp.ne.s32.totalorder %s67, %s68
    %p80 = scmp.eq.s32.totalorder %s16, 1
    %p81 = por %p79, %p80
    %p83 = scmp.ne.s32.totalorder %s68, %s82
    %p84 = scmp.eq.s32.totalorder %s16, 0
    %p85 = por %p83, %p84
    %s87 = sadd.s32 %s86, 1
    %p90 = scmp.eq.s32.totalorder %s10, 1
    %p91 = scmp.ne.s32.totalorder %s86, %s88
    %p92 = scmp.eq.s32.totalorder %s10, 0
    %p93 = por %p91, %p92
    %p94 = scmp.ne.s32.totalorder %s86, %s88
    %p95 = scmp.eq.s32.totalorder %s15, 1
    %p96 = por %p94, %p95
    %p97 = scmp.ne.s32.totalorder %s88, %s89
    %p98 = scmp.eq.s32.totalorder %s15, 0
    %p99 = por %p97, %p98
    %p100 = scmp.ne.s32.totalorder %s88, %s89
    %p101 = scmp.eq.s32.totalorder %s16, 1
    %p102 = por %p100, %p101
    %p104 = scmp.ne.s32.totalorder %s89, %s103
    %p105 = scmp.eq.s32.totalorder %s16, 0
    %p106 = por %p104, %p105
    %s107 = ssub.s32 %s10, %s17
    %p108 = scmp.eq.s32.totalorder %s107, 0
    %s110 = sadd.s32 %s109, 1
    %s111 = scalar_select %p108, %s109, %s110
    %p114 = pneg %p108
    %p115 = scmp.eq.s32.totalorder %s10, 1
    %p116 = por %p114, %p115
    %p117 = scmp.ne.s32.totalorder %s109, %s112
    %p118 = scmp.eq.s32.totalorder %s10, 0
    %p119 = por %p117, %p118
    %p120 = scmp.ne.s32.totalorder %s109, %s112
    %p121 = scmp.eq.s32.totalorder %s15, 1
    %p122 = por %p120, %p121
    %p123 = scmp.ne.s32.totalorder %s112, %s113
    %p124 = scmp.eq.s32.totalorder %s15, 0
    %p125 = por %p123, %p124
    %p126 = scmp.ne.s32.totalorder %s112, %s113
    %p127 = scmp.eq.s32.totalorder %s16, 1
    %p128 = por %p126, %p127
    %p130 = scmp.ne.s32.totalorder %s113, %s129
    %p131 = scmp.eq.s32.totalorder %s16, 0
    %p132 = por %p130, %p131
    %p133 = scmp.le.s32.totalorder 1, %s10
    %p134 = scmp.lt.s32.totalorder %s10, 3
    %p135 = pnand %p133, %p134
    %p136 = pneg %p135
    // Predicated region
    $region9: #{encoder3d_forward.13} parent=5 // pred_check
      _
    $region10: #{encoder3d_forward.13} parent=5 // pred_check_branch
      %138 = sbr.rel (%p135) target = $region12
    $region11: #{encoder3d_forward.13} parent=5 // pred_region
      %s139 = ssub.s32 %s10, 1
      // Predicated region
      $region13: #{encoder3d_forward.13} parent=11 // pred_check
        %p140 = pneg %p57
      $region14: #{encoder3d_forward.13} parent=11 // pred_check_branch
        %142 = sbr.rel (%p140) target = $region16
      $region15: #{encoder3d_forward.13} parent=11 // pred_region
        _
      $region16: #{encoder3d_forward.13} parent=11 // pred_fallthru
        _
      // Predicated region
      $region17: #{encoder3d_forward.13} parent=11 // pred_check
        %p143 = pneg %p78
      $region18: #{encoder3d_forward.13} parent=11 // pred_check_branch
        %145 = sbr.rel (%p143) target = $region20
      $region19: #{encoder3d_forward.13} parent=11 // pred_region
        _
      $region20: #{encoder3d_forward.13} parent=11 // pred_fallthru
        _
      // Predicated region
      $region21: #{encoder3d_forward.13} parent=11 // pred_check
        %p146 = pneg %p99
      $region22: #{encoder3d_forward.13} parent=11 // pred_check_branch
        %148 = sbr.rel (%p146) target = $region24
      $region23: #{encoder3d_forward.13} parent=11 // pred_region
        _
      $region24: #{encoder3d_forward.13} parent=11 // pred_fallthru
        _
    $region12: #{encoder3d_forward.13} parent=5 // pred_fallthru
      _
    %p149 = scmp.lt.s32.totalorder %s10, 2
    // Predicated region
    $region25: #{encoder3d_forward.13} parent=5 // pred_check
      %p150 = pneg %p149
    $region26: #{encoder3d_forward.13} parent=5 // pred_check_branch
      %152 = sbr.rel (%p150) target = $region28
    $region27: #{encoder3d_forward.13} parent=5 // pred_region
      // Predicated region
      $region29: #{encoder3d_forward.13} parent=27 // pred_check
        %p153 = pneg %p30
      $region30: #{encoder3d_forward.13} parent=27 // pred_check_branch
        %155 = sbr.rel (%p153) target = $region32
      $region31: #{encoder3d_forward.13} parent=27 // pred_region
        %p156 = scmp.lt.s32.totalorder %s10, 1
        %s157 = scalar_select %p156, %s10, 1
        %s158 = smul.addr %s157, 8
        %s159 = smul.addr %s158, 4
        %s160 = scalar_lea.vmem %s0, %s159
      $region32: #{encoder3d_forward.13} parent=27 // pred_fallthru
        _
    $region28: #{encoder3d_forward.13} parent=5 // pred_fallthru
      _
    %p161 = scmp.le.s32.totalorder 1, %s10
    %p162 = scmp.lt.s32.totalorder %s10, 3
    %p163 = pnand %p161, %p162
    %p164 = pneg %p163
    // Predicated region
    $region33: #{encoder3d_forward.13} parent=5 // pred_check
      _
    $region34: #{encoder3d_forward.13} parent=5 // pred_check_branch
      %166 = sbr.rel (%p163) target = $region36
    $region35: #{encoder3d_forward.13} parent=5 // pred_region
      %s167 = ssub.s32 %s10, 1
      %p168 = scmp.lt.s32.totalorder %s15, 1
      %s169 = scalar_select %p168, %s15, 1
      %s170 = smul.addr %s169, 8
      %s171 = smul.addr %s170, 4
      %s172 = scalar_lea.vmem %s0, %s171
      %p173 = pneg %p36
      %p174 = pneg %p33
      %p175 = pneg %p57
      %p176 = pneg %p54
      %p177 = pneg %p78
      %p178 = pneg %p75
      %p179 = pneg %p99
      %p180 = pneg %p96
      %p181 = pneg %p125
      %p182 = pneg %p122
      %p183 = scmp.lt.s32.totalorder %s15, 1
      %s184 = scalar_select %p183, %s15, 1
      %s185 = smul.addr %s184, 24
      %s186 = smul.addr %s185, 4
      %s187 = scalar_lea.vmem %s4, %s186
      %p188 = scmp.lt.s32.totalorder %s15, 1
      %s189 = scalar_select %p188, %s15, 1
      %s190 = smul.addr %s189, 8
      %s191 = smul.addr %s190, 4
      %s192 = scalar_lea.vmem %s0, %s191
      %p193 = scmp.lt.s32.totalorder %s15, 1
      %s194 = scalar_select %p193, %s15, 1
      %s195 = smul.addr %s194, 24
      %s196 = smul.addr %s195, 4
      %s197 = scalar_lea.vmem %s4, %s196
      %199 = vst [vmem:[%s197] sm:$0xff] 0
      %200 = vst [vmem:[%s197 + $0x8] sm:$0xff] 0
      %201 = vst [vmem:[%s197 + $0x10] sm:$0xff] 0
      %202 = vst [vmem:[%s197 + $0x18] sm:$0xff] 0
      %203 = vst [vmem:[%s197 + $0x20] sm:$0xff] 0
      %204 = vst [vmem:[%s197 + $0x28] sm:$0xff] 0
      %205 = vst [vmem:[%s197 + $0x30] sm:$0xff] 0
      %206 = vst [vmem:[%s197 + $0x38] sm:$0xff] 0
      %207 = vst [vmem:[%s197 + $0x40] sm:$0xff] 0
      %208 = vst [vmem:[%s197 + $0x48] sm:$0xff] 0
      %209 = vst [vmem:[%s197 + $0x50] sm:$0xff] 0
      %210 = vst [vmem:[%s197 + $0x58] sm:$0xff] 0
      %v211 = vld [vmem:[%s1] sm:$0xff]
      %v212 = vld [vmem:[%s1 + $0x8] sm:$0xff]
      %v213 = vld [vmem:[%s2] sm:$0xff]
      %v214 = vld [vmem:[%s2 + $0x8] sm:$0xff]
      %v215 = vld [vmem:[%s3] sm:$0x1]
      %v216 = vld [vmem:[%s192] sm:$0xf]
      %v217 = vld [vmem:[%s192 + $0x4] sm:$0xf]
      %v218 = vunpack.c.l.bf16 %v216
      %v219 = vunpack.c.l.bf16 %v217
      %221 = vset.pattern.permute.xlu0 0
      %222 = vperm.xlu0 %221, %v211
      %v223 = vpop.permute.xlu0 %222
      %226 = vset.pattern.permute.xlu0 0
      %227 = vperm.xlu0 %226, %v212
      %v228 = vpop.permute.xlu0 %227
      %v230 = vmul.f32 %v218, %v223
      %v231 = vmul.f32 %v219, %v228
      %233 = vset.pattern.permute.xlu0 0
      %234 = vperm.xlu0 %233, %v213
      %v235 = vpop.permute.xlu0 %234
      %238 = vset.pattern.permute.xlu0 0
      %239 = vperm.xlu0 %238, %v214
      %v240 = vpop.permute.xlu0 %239
      %v242 = vadd.f32 %v230, %v235
      %v243 = vadd.f32 %v231, %v240
      %v244 = vmax.f32 %v242, 0.0
      %v245 = vmax.f32 %v243, 0.0
      %v247 = vperm.slane %v215, 0
      %v249 = vmul.f32 %v244, %v247
      %v250 = vmul.f32 %v245, %v247
      %v251 = vpack.c.bf16 %v249, %v249
      %v252 = vpack.c.bf16 %v250, %v250
      %255 = vrot.lane.b32.xlu0 %v251, 11
      %v256 = vpop.permute.xlu0 %255
      %257 = vrot.lane.b32.xlu0 %v252, 11
      %v258 = vpop.permute.xlu0 %257
      %v259 = vrot.slane %v256, 4
      %v260 = vrot.slane %v258, 4
      %vm261 = vcmask 89088
      %v262 = vsel %vm261, %v259, %v256
      %v263 = vsel %vm261, %v260, %v258
      %s266 = scalar_lea.vmem %s197, 16
      %vm267 = vcmask 1043544
      %vm268 = vcmask 89092
      %vm269 = vmor %vm268, %vm267
      %270 = vst.msk [vmem:[%s266] sm:$0xff] %vm269, %v262
      %271 = vst.msk [vmem:[%s266 + $0x8] sm:$0xff] %vm269, %v263
      %s272 = scalar_lea.vmem %s192, 8
      %v273 = vld [vmem:[%s272] sm:$0xf]
      %v274 = vld [vmem:[%s272 + $0x4] sm:$0xf]
      %v275 = vunpack.c.l.bf16 %v273
      %v276 = vunpack.c.l.bf16 %v274
      %v277 = vmul.f32 %v275, %v223
      %v278 = vmul.f32 %v276, %v228
      %v279 = vadd.f32 %v277, %v235
      %v280 = vadd.f32 %v278, %v240
      %v281 = vmax.f32 %v279, 0.0
      %v282 = vmax.f32 %v280, 0.0
      %v283 = vmul.f32 %v281, %v247
      %v284 = vmul.f32 %v282, %v247
      %v285 = vpack.c.bf16 %v283, %v283
      %v286 = vpack.c.bf16 %v284, %v284
      %289 = vrot.lane.b32.xlu0 %v285, 11
      %v290 = vpop.permute.xlu0 %289
      %291 = vrot.lane.b32.xlu0 %v286, 11
      %v292 = vpop.permute.xlu0 %291
      %v293 = vrot.slane %v290, 4
      %v294 = vrot.slane %v292, 4
      %v295 = vsel %vm261, %v293, %v290
      %v296 = vsel %vm261, %v294, %v292
      %s299 = scalar_lea.vmem %s197, 32
      %300 = vst.msk [vmem:[%s299] sm:$0xff] %vm269, %v295
      %301 = vst.msk [vmem:[%s299 + $0x8] sm:$0xff] %vm269, %v296
      %s302 = scalar_lea.vmem %s192, 16
      %v303 = vld [vmem:[%s302] sm:$0xf]
      %v304 = vld [vmem:[%s302 + $0x4] sm:$0xf]
      %v305 = vunpack.c.l.bf16 %v303
      %v306 = vunpack.c.l.bf16 %v304
      %v307 = vmul.f32 %v305, %v223
      %v308 = vmul.f32 %v306, %v228
      %v309 = vadd.f32 %v307, %v235
      %v310 = vadd.f32 %v308, %v240
      %v311 = vmax.f32 %v309, 0.0
      %v312 = vmax.f32 %v310, 0.0
      %v313 = vmul.f32 %v311, %v247
      %v314 = vmul.f32 %v312, %v247
      %v315 = vpack.c.bf16 %v313, %v313
      %v316 = vpack.c.bf16 %v314, %v314
      %319 = vrot.lane.b32.xlu0 %v315, 11
      %v320 = vpop.permute.xlu0 %319
      %321 = vrot.lane.b32.xlu0 %v316, 11
      %v322 = vpop.permute.xlu0 %321
      %v323 = vrot.slane %v320, 4
      %v324 = vrot.slane %v322, 4
      %v325 = vsel %vm261, %v323, %v320
      %v326 = vsel %vm261, %v324, %v322
      %s329 = scalar_lea.vmem %s197, 48
      %330 = vst.msk [vmem:[%s329] sm:$0xff] %vm269, %v325
      %331 = vst.msk [vmem:[%s329 + $0x8] sm:$0xff] %vm269, %v326
      %s332 = scalar_lea.vmem %s192, 24
      %v333 = vld [vmem:[%s332] sm:$0xf]
      %v334 = vld [vmem:[%s332 + $0x4] sm:$0xf]
      %v335 = vunpack.c.l.bf16 %v333
      %v336 = vunpack.c.l.bf16 %v334
      %v337 = vmul.f32 %v335, %v223
      %v338 = vmul.f32 %v336, %v228
      %v339 = vadd.f32 %v337, %v235
      %v340 = vadd.f32 %v338, %v240
      %v341 = vmax.f32 %v339, 0.0
      %v342 = vmax.f32 %v340, 0.0
      %v343 = vmul.f32 %v341, %v247
      %v344 = vmul.f32 %v342, %v247
      %v345 = vpack.c.bf16 %v343, %v343
      %v346 = vpack.c.bf16 %v344, %v344
      %349 = vrot.lane.b32.xlu0 %v345, 11
      %v350 = vpop.permute.xlu0 %349
      %351 = vrot.lane.b32.xlu0 %v346, 11
      %v352 = vpop.permute.xlu0 %351
      %v353 = vrot.slane %v350, 4
      %v354 = vrot.slane %v352, 4
      %v355 = vsel %vm261, %v353, %v350
      %v356 = vsel %vm261, %v354, %v352
      %s359 = scalar_lea.vmem %s197, 64
      %360 = vst.msk [vmem:[%s359] sm:$0xff] %vm269, %v355
      %361 = vst.msk [vmem:[%s359 + $0x8] sm:$0xff] %vm269, %v356
      %p362 = scmp.lt.s32.totalorder %s15, 1
      %s363 = scalar_select %p362, %s15, 1
      %s364 = smul.addr %s363, 24
      %s365 = smul.addr %s364, 4
      %s366 = scalar_lea.vmem %s4, %s365
      // Predicated region
      $region37: #{encoder3d_forward.13} parent=35 // pred_check
        %p367 = pneg %p122
      $region38: #{encoder3d_forward.13} parent=35 // pred_check_branch
        %369 = sbr.rel (%p367) target = $region40
      $region39: #{encoder3d_forward.13} parent=35 // pred_region
        _
      $region40: #{encoder3d_forward.13} parent=35 // pred_fallthru
        _
    $region36: #{encoder3d_forward.13} parent=5 // pred_fallthru
      _
    %p370 = scmp.le.s32.totalorder 2, %s10
    // Predicated region
    $region41: #{encoder3d_forward.13} parent=5 // pred_check
      %p371 = pneg %p370
    $region42: #{encoder3d_forward.13} parent=5 // pred_check_branch
      %373 = sbr.rel (%p371) target = $region44
    $region43: #{encoder3d_forward.13} parent=5 // pred_region
      %s374 = ssub.s32 %s10, 2
      // Predicated region
      $region45: #{encoder3d_forward.13} parent=43 // pred_check
        %p375 = pneg %p128
      $region46: #{encoder3d_forward.13} parent=43 // pred_check_branch
        %377 = sbr.rel (%p375) target = $region48
      $region47: #{encoder3d_forward.13} parent=43 // pred_region
        %p378 = scmp.lt.s32.totalorder %s16, 1
        %s379 = scalar_select %p378, %s16, 1
        %s380 = smul.addr %s379, 24
        %s381 = smul.addr %s380, 4
        %s382 = scalar_lea.vmem %s4, %s381
      $region48: #{encoder3d_forward.13} parent=43 // pred_fallthru
        _
    $region44: #{encoder3d_forward.13} parent=5 // pred_fallthru
      _
  $region6: #{encoder3d_forward.13} parent=0 // loop_footer
    %s14 = sadd.s32 1, %s10
  $region7: #{encoder3d_forward.13} parent=0 // loop_footer_branch
    %9 = sbr.rel target = $region3
  $region8: #{encoder3d_forward.13} parent=0 // loop_exit
    _

// kernel: encoder3d_forward.12
$region0: #{encoder3d_forward.12}
  #allocation0 [shape = 'u32[]', space=smem, size = 0x4, offset = 0x4, fixed_abs, tag = 'smem constant byte address 0x4 - core index']
  #allocation1 [shape = 'u32[72,128]{1,0:T(1,128)}', space=vmem, size = 0x9000, scoped, tag = 'internal scratch']
  #allocation2 [shape = 'bf16[864,128]{1,0:T(8,128)(2,1)}', space=vmem, size = 0x36000, scoped, tag = 'scratch operand']
  %s0 = inlined_call_operand.vmem [shape: bf16[2,6,16,256], index: 0, kind: input, shape index: {}]
  %s1 = inlined_call_operand.vmem [shape: bf16[16,432], index: 1, kind: input, shape index: {}]
  %s2 = inlined_call_operand.vmem [shape: f32[1,128], index: 2, kind: input, shape index: {}]
  %s3 = inlined_call_operand.vmem [shape: bf16[2,4,16,128], index: 3, kind: output, shape index: {0}]
  %s4 = inlined_call_operand.vmem [shape: f32[2,16,2], index: 4, kind: output, shape index: {1}]
  %5 = xla_tuple %s3, %s4
  %s6 = sld [smem:[#allocation0]]
  $region57: #{encoder3d_forward.12} parent=0
    _
  %s8 = ssub.s32 1, %s6
  %s9 = scalar_select 0, %s8, %s6
  loop: start=0, step=1, limit=4
  $region2: #{encoder3d_forward.12} parent=0 // loop_pre_header
    _
  $region3: #{encoder3d_forward.12} parent=0 // loop_header
    %s11 = sphi 0, %s15
    %p12 = scmp.ge.s32.totalorder %s11, 4
    %s18 = sphi 0, %s30
    %s19 = sphi 0, %s26
    %s20 = sphi 0, %s18
    %s21 = sphi 0, %s19
    %s22 = sphi 0, %s20
    %s23 = sphi 0, %s21
    %s33 = sphi 0, %s35
    %s36 = sphi 0, %s33
    %s37 = sphi 0, %s36
    %s53 = sphi 0, %s37
    %s57 = sphi 0, %s57
    %s59 = sphi 0, %s57
    %s60 = sphi 0, %s59
    %s74 = sphi 0, %s60
    %s78 = sphi 0, %s78
    %s80 = sphi 0, %s78
    %s81 = sphi 0, %s80
    %s95 = sphi 0, %s81
    %s103 = sphi 0, %s105
    %s106 = sphi 0, %s103
    %s107 = sphi 0, %s106
    %s123 = sphi 0, %s107
    %s129 = sphi 0, %s131
    %s132 = sphi 0, %s129
    %s133 = sphi 0, %s132
    %s149 = sphi 0, %s133
  $region4: #{encoder3d_forward.12} parent=0 // loop_header_branch
    %14 = sbr.rel (%p12) target = $region8
  $region5: #{encoder3d_forward.12} parent=0 // loop_body
    %s16 = ssub.s32 %s11, 1
    %s17 = ssub.s32 %s11, 2
    %s24 = sadd.s32 1, %s19
    %p25 = scmp.ge.s32.totalorder %s24, 1
    %s26 = scalar_select %p25, 0, %s24
    %s27 = sadd.s32 1, %s18
    %s28 = scalar_select %p25, %s27, %s18
    %p29 = scmp.ge.s32.totalorder %s28, 2
    %s30 = scalar_select %p29, 0, %s28
    %s31 = ssub.s32 %s18, %s30
    %p32 = scmp.eq.s32.totalorder %s31, 0
    %s34 = sadd.s32 %s33, 1
    %s35 = scalar_select %p32, %s33, %s34
    %p38 = pneg %p32
    %p39 = scmp.eq.s32.totalorder %s11, 1
    %p40 = por %p38, %p39
    %p41 = scmp.ne.s32.totalorder %s33, %s36
    %p42 = scmp.eq.s32.totalorder %s11, 0
    %p43 = por %p41, %p42
    %p44 = scmp.ne.s32.totalorder %s33, %s36
    %p45 = scmp.eq.s32.totalorder %s16, 1
    %p46 = por %p44, %p45
    %p47 = scmp.ne.s32.totalorder %s36, %s37
    %p48 = scmp.eq.s32.totalorder %s16, 0
    %p49 = por %p47, %p48
    %p50 = scmp.ne.s32.totalorder %s36, %s37
    %p51 = scmp.eq.s32.totalorder %s17, 1
    %p52 = por %p50, %p51
    %p54 = scmp.ne.s32.totalorder %s37, %s53
    %p55 = scmp.eq.s32.totalorder %s17, 0
    %p56 = por %p54, %p55
    %s58 = sadd.s32 %s57, 1
    %p61 = scmp.eq.s32.totalorder %s11, 1
    %p62 = scmp.ne.s32.totalorder %s57, %s59
    %p63 = scmp.eq.s32.totalorder %s11, 0
    %p64 = por %p62, %p63
    %p65 = scmp.ne.s32.totalorder %s57, %s59
    %p66 = scmp.eq.s32.totalorder %s16, 1
    %p67 = por %p65, %p66
    %p68 = scmp.ne.s32.totalorder %s59, %s60
    %p69 = scmp.eq.s32.totalorder %s16, 0
    %p70 = por %p68, %p69
    %p71 = scmp.ne.s32.totalorder %s59, %s60
    %p72 = scmp.eq.s32.totalorder %s17, 1
    %p73 = por %p71, %p72
    %p75 = scmp.ne.s32.totalorder %s60, %s74
    %p76 = scmp.eq.s32.totalorder %s17, 0
    %p77 = por %p75, %p76
    %s79 = sadd.s32 %s78, 1
    %p82 = scmp.eq.s32.totalorder %s11, 1
    %p83 = scmp.ne.s32.totalorder %s78, %s80
    %p84 = scmp.eq.s32.totalorder %s11, 0
    %p85 = por %p83, %p84
    %p86 = scmp.ne.s32.totalorder %s78, %s80
    %p87 = scmp.eq.s32.totalorder %s16, 1
    %p88 = por %p86, %p87
    %p89 = scmp.ne.s32.totalorder %s80, %s81
    %p90 = scmp.eq.s32.totalorder %s16, 0
    %p91 = por %p89, %p90
    %p92 = scmp.ne.s32.totalorder %s80, %s81
    %p93 = scmp.eq.s32.totalorder %s17, 1
    %p94 = por %p92, %p93
    %p96 = scmp.ne.s32.totalorder %s81, %s95
    %p97 = scmp.eq.s32.totalorder %s17, 0
    %p98 = por %p96, %p97
    %s99 = ssub.s32 %s18, %s30
    %s100 = ssub.s32 %s19, %s26
    %s101 = sor.u32 %s99, %s100
    %p102 = scmp.eq.s32.totalorder %s101, 0
    %s104 = sadd.s32 %s103, 1
    %s105 = scalar_select %p102, %s103, %s104
    %p108 = pneg %p102
    %p109 = scmp.eq.s32.totalorder %s11, 1
    %p110 = por %p108, %p109
    %p111 = scmp.ne.s32.totalorder %s103, %s106
    %p112 = scmp.eq.s32.totalorder %s11, 0
    %p113 = por %p111, %p112
    %p114 = scmp.ne.s32.totalorder %s103, %s106
    %p115 = scmp.eq.s32.totalorder %s16, 1
    %p116 = por %p114, %p115
    %p117 = scmp.ne.s32.totalorder %s106, %s107
    %p118 = scmp.eq.s32.totalorder %s16, 0
    %p119 = por %p117, %p118
    %p120 = scmp.ne.s32.totalorder %s106, %s107
    %p121 = scmp.eq.s32.totalorder %s17, 1
    %p122 = por %p120, %p121
    %p124 = scmp.ne.s32.totalorder %s107, %s123
    %p125 = scmp.eq.s32.totalorder %s17, 0
    %p126 = por %p124, %p125
    %s127 = ssub.s32 %s18, %s30
    %p128 = scmp.eq.s32.totalorder %s127, 0
    %s130 = sadd.s32 %s129, 1
    %s131 = scalar_select %p128, %s129, %s130
    %p134 = pneg %p128
    %p135 = scmp.eq.s32.totalorder %s11, 1
    %p136 = por %p134, %p135
    %p137 = scmp.ne.s32.totalorder %s129, %s132
    %p138 = scmp.eq.s32.totalorder %s11, 0
    %p139 = por %p137, %p138
    %p140 = scmp.ne.s32.totalorder %s129, %s132
    %p141 = scmp.eq.s32.totalorder %s16, 1
    %p142 = por %p140, %p141
    %p143 = scmp.ne.s32.totalorder %s132, %s133
    %p144 = scmp.eq.s32.totalorder %s16, 0
    %p145 = por %p143, %p144
    %p146 = scmp.ne.s32.totalorder %s132, %s133
    %p147 = scmp.eq.s32.totalorder %s17, 1
    %p148 = por %p146, %p147
    %p150 = scmp.ne.s32.totalorder %s133, %s149
    %p151 = scmp.eq.s32.totalorder %s17, 0
    %p152 = por %p150, %p151
    %p153 = scmp.le.s32.totalorder 1, %s11
    %p154 = scmp.lt.s32.totalorder %s11, 3
    %p155 = pnand %p153, %p154
    %p156 = pneg %p155
    // Predicated region
    $region9: #{encoder3d_forward.12} parent=5 // pred_check
      _
    $region10: #{encoder3d_forward.12} parent=5 // pred_check_branch
      %158 = sbr.rel (%p155) target = $region12
    $region11: #{encoder3d_forward.12} parent=5 // pred_region
      %s159 = ssub.s32 %s11, 1
      // Predicated region
      $region13: #{encoder3d_forward.12} parent=11 // pred_check
        %p160 = pneg %p70
      $region14: #{encoder3d_forward.12} parent=11 // pred_check_branch
        %162 = sbr.rel (%p160) target = $region16
      $region15: #{encoder3d_forward.12} parent=11 // pred_region
        _
      $region16: #{encoder3d_forward.12} parent=11 // pred_fallthru
        _
      // Predicated region
      $region17: #{encoder3d_forward.12} parent=11 // pred_check
        %p163 = pneg %p91
      $region18: #{encoder3d_forward.12} parent=11 // pred_check_branch
        %165 = sbr.rel (%p163) target = $region20
      $region19: #{encoder3d_forward.12} parent=11 // pred_region
        _
      $region20: #{encoder3d_forward.12} parent=11 // pred_fallthru
        _
    $region12: #{encoder3d_forward.12} parent=5 // pred_fallthru
      _
    %p166 = scmp.lt.s32.totalorder %s11, 2
    // Predicated region
    $region21: #{encoder3d_forward.12} parent=5 // pred_check
      %p167 = pneg %p166
    $region22: #{encoder3d_forward.12} parent=5 // pred_check_branch
      %169 = sbr.rel (%p167) target = $region24
    $region23: #{encoder3d_forward.12} parent=5 // pred_region
      // Predicated region
      $region25: #{encoder3d_forward.12} parent=23 // pred_check
        %p170 = pneg %p43
      $region26: #{encoder3d_forward.12} parent=23 // pred_check_branch
        %172 = sbr.rel (%p170) target = $region28
      $region27: #{encoder3d_forward.12} parent=23 // pred_region
        %p173 = scmp.lt.s32.totalorder %s18, 1
        %s174 = scalar_select %p173, %s18, 1
        %s175 = smul.addr %s174, 24
        %s176 = smul.addr %s175, 4
        %s177 = scalar_lea.vmem %s0, %s176
      $region28: #{encoder3d_forward.12} parent=23 // pred_fallthru
        _
    $region24: #{encoder3d_forward.12} parent=5 // pred_fallthru
      _
    %p178 = scmp.le.s32.totalorder 1, %s11
    %p179 = scmp.lt.s32.totalorder %s11, 3
    %p180 = pnand %p178, %p179
    %p181 = pneg %p180
    // Predicated region
    $region29: #{encoder3d_forward.12} parent=5 // pred_check
      _
    $region30: #{encoder3d_forward.12} parent=5 // pred_check_branch
      %183 = sbr.rel (%p180) target = $region32
    $region31: #{encoder3d_forward.12} parent=5 // pred_region
      %s184 = ssub.s32 %s11, 1
      %p185 = scmp.lt.s32.totalorder %s20, 1
      %s186 = scalar_select %p185, %s20, 1
      %s187 = smul.addr %s186, 24
      %s188 = smul.addr %s187, 4
      %s189 = scalar_lea.vmem %s0, %s188
      %p190 = pneg %p49
      %p191 = pneg %p46
      %p192 = pneg %p70
      %p193 = pneg %p67
      %p194 = pneg %p91
      %p195 = pneg %p88
      %p196 = pneg %p119
      %p197 = pneg %p116
      %s198 = smul.u32 4, %s21
      %p199 = scmp.lt.s32.totalorder %s20, 1
      %s200 = scalar_select %p199, %s20, 1
      %p201 = scmp.lt.s32.totalorder %s198, 3
      %s202 = scalar_select %p201, %s198, 3
      %s203 = smul.addr %s202, 2
      %s204 = smul.addr %s200, 8
      %s205 = sadd.s32 %s203, %s204
      %s206 = smul.addr %s205, 4
      %s207 = scalar_lea.vmem %s3, %s206
      %p208 = pneg %p145
      %p209 = pneg %p142
      %p210 = scmp.lt.s32.totalorder %s20, 1
      %s211 = scalar_select %p210, %s20, 1
      %s212 = smul.addr %s211, 2
      %s213 = smul.addr %s212, 8
      %s214 = scalar_lea.vmem %s4, %s213
      %p215 = scmp.lt.s32.totalorder %s20, 1
      %s216 = scalar_select %p215, %s20, 1
      %s217 = smul.addr %s216, 24
      %s218 = smul.addr %s217, 4
      %s219 = scalar_lea.vmem %s0, %s218
      %s220 = smul.u32 4, %s21
      %p221 = scmp.lt.s32.totalorder %s20, 1
      %s222 = scalar_select %p221, %s20, 1
      %p223 = scmp.lt.s32.totalorder %s220, 3
      %s224 = scalar_select %p223, %s220, 3
      %s225 = smul.addr %s224, 2
      %s226 = smul.addr %s222, 8
      %s227 = sadd.s32 %s225, %s226
      %s228 = smul.addr %s227, 4
      %s229 = scalar_lea.vmem %s3, %s228
      %s230 = smul.u32 4, %s21
      %p231 = scmp.lt.s32.totalorder %s20, 1
      %s232 = scalar_select %p231, %s20, 1
      %s233 = smul.addr %s232, 2
      %s234 = smul.addr %s233, 8
      %s235 = scalar_lea.vmem %s4, %s234
      %s237 = smul.u32 %s21, 4
      %s238 = smul.u32 %s237, 4
      %s239 = smul.addr %s238, 4
      %s240 = scalar_lea.vmem %s219, %s239
      %v241 = vld [vmem:[%s240] sm:$0xff]
      %v242 = vld [vmem:[%s240 + $0x8] sm:$0xff]
      %243 = vst [vmem:[#allocation2] sm:$0xf] %v241
      %244 = vst [vmem:[#allocation2 + $0x4] sm:$0xf] %v242
      %247 = vrot.lane.b32.xlu0 %v241, 127
      %v248 = vpop.permute.xlu0 %247
      %249 = vrot.lane.b32.xlu0 %v242, 127
      %v250 = vpop.permute.xlu0 %249
      %v251 = vrot.slane %v248, 4
      %v252 = vrot.slane %v250, 4
      %vm253 = vcmask 1039360
      %v254 = vsel %vm253, %v248, %v251
      %v255 = vsel %vm253, %v250, %v252
      %258 = vst [vmem:[#allocation2 + $0x8] sm:$0xf] %v254
      %259 = vst [vmem:[#allocation2 + $0xc] sm:$0xf] %v255
      %260 = vrot.lane.b32.xlu0 %v241, 126
      %v261 = vpop.permute.xlu0 %260
      %262 = vrot.lane.b32.xlu0 %v242, 126
      %v263 = vpop.permute.xlu0 %262
      %v264 = vrot.slane %v261, 4
      %v265 = vrot.slane %v263, 4
      %vm266 = vcmask 1031168
      %v267 = vsel %vm266, %v261, %v264
      %v268 = vsel %vm266, %v263, %v265
      %271 = vst [vmem:[#allocation2 + $0x10] sm:$0xf] %v267
      %272 = vst [vmem:[#allocation2 + $0x14] sm:$0xf] %v268
      %273 = vrot.lane.b32.xlu0 %v241, 118
      %v274 = vpop.permute.xlu0 %273
      %275 = vrot.lane.b32.xlu0 %v242, 118
      %v276 = vpop.permute.xlu0 %275
      %v277 = vrot.slane %v274, 4
      %v278 = vrot.slane %v276, 4
      %vm279 = vcmask 965632
      %v280 = vsel %vm279, %v274, %v277
      %v281 = vsel %vm279, %v276, %v278
      %284 = vst [vmem:[#allocation2 + $0x18] sm:$0xf] %v280
      %285 = vst [vmem:[#allocation2 + $0x1c] sm:$0xf] %v281
      %286 = vrot.lane.b32.xlu0 %v241, 117
      %v287 = vpop.permute.xlu0 %286
      %288 = vrot.lane.b32.xlu0 %v242, 117
      %v289 = vpop.permute.xlu0 %288
      %v290 = vrot.slane %v287, 4
      %v291 = vrot.slane %v289, 4
      %vm292 = vcmask 957440
      %v293 = vsel %vm292, %v287, %v290
      %v294 = vsel %vm292, %v289, %v291
      %297 = vst [vmem:[#allocation2 + $0x20] sm:$0xf] %v293
      %298 = vst [vmem:[#allocation2 + $0x24] sm:$0xf] %v294
      %299 = vrot.lane.b32.xlu0 %v241, 116
      %v300 = vpop.permute.xlu0 %299
      %301 = vrot.lane.b32.xlu0 %v242, 116
      %v302 = vpop.permute.xlu0 %301
      %v303 = vrot.slane %v300, 4
      %v304 = vrot.slane %v302, 4
      %vm305 = vcmask 949248
      %v306 = vsel %vm305, %v300, %v303
      %v307 = vsel %vm305, %v302, %v304
      %310 = vst [vmem:[#allocation2 + $0x28] sm:$0xf] %v306
      %311 = vst [vmem:[#allocation2 + $0x2c] sm:$0xf] %v307
      %312 = vrot.lane.b32.xlu0 %v241, 108
      %v313 = vpop.permute.xlu0 %312
      %314 = vrot.lane.b32.xlu0 %v242, 108
      %v315 = vpop.permute.xlu0 %314
      %v316 = vrot.slane %v313, 4
      %v317 = vrot.slane %v315, 4
      %vm318 = vcmask 883712
      %v319 = vsel %vm318, %v313, %v316
      %v320 = vsel %vm318, %v315, %v317
      %323 = vst [vmem:[#allocation2 + $0x30] sm:$0xf] %v319
      %324 = vst [vmem:[#allocation2 + $0x34] sm:$0xf] %v320
      %325 = vrot.lane.b32.xlu0 %v241, 107
      %v326 = vpop.permute.xlu0 %325
      %327 = vrot.lane.b32.xlu0 %v242, 107
      %v328 = vpop.permute.xlu0 %327
      %v329 = vrot.slane %v326, 4
      %v330 = vrot.slane %v328, 4
      %vm331 = vcmask 875520
      %v332 = vsel %vm331, %v326, %v329
      %v333 = vsel %vm331, %v328, %v330
      %336 = vst [vmem:[#allocation2 + $0x38] sm:$0xf] %v332
      %337 = vst [vmem:[#allocation2 + $0x3c] sm:$0xf] %v333
      %338 = vrot.lane.b32.xlu0 %v241, 106
      %v339 = vpop.permute.xlu0 %338
      %340 = vrot.lane.b32.xlu0 %v242, 106
      %v341 = vpop.permute.xlu0 %340
      %v342 = vrot.slane %v339, 4
      %v343 = vrot.slane %v341, 4
      %vm344 = vcmask 867328
      %v345 = vsel %vm344, %v339, %v342
      %v346 = vsel %vm344, %v341, %v343
      %349 = vst [vmem:[#allocation2 + $0x40] sm:$0xf] %v345
      %350 = vst [vmem:[#allocation2 + $0x44] sm:$0xf] %v346
      %s351 = sadd.s32 %s237, 1
      %s352 = smul.u32 %s351, 4
      %s353 = smul.addr %s352, 4
      %s354 = scalar_lea.vmem %s219, %s353
      %v355 = vld [vmem:[%s354] sm:$0xff]
      %v356 = vld [vmem:[%s354 + $0x8] sm:$0xff]
      %357 = vst [vmem:[#allocation2 + $0x48] sm:$0xf] %v355
      %358 = vst [vmem:[#allocation2 + $0x4c] sm:$0xf] %v356
      %361 = vrot.lane.b32.xlu0 %v355, 127
      %v362 = vpop.permute.xlu0 %361
      %363 = vrot.lane.b32.xlu0 %v356, 127
      %v364 = vpop.permute.xlu0 %363
      %v365 = vrot.slane %v362, 4
      %v366 = vrot.slane %v364, 4
      %v367 = vsel %vm253, %v362, %v365
      %v368 = vsel %vm253, %v364, %v366
      %371 = vst [vmem:[#allocation2 + $0x50] sm:$0xf] %v367
      %372 = vst [vmem:[#allocation2 + $0x54] sm:$0xf] %v368
      %373 = vrot.lane.b32.xlu0 %v355, 126
      %v374 = vpop.permute.xlu0 %373
      %375 = vrot.lane.b32.xlu0 %v356, 126
      %v376 = vpop.permute.xlu0 %375
      %v377 = vrot.slane %v374, 4
      %v378 = vrot.slane %v376, 4
      %v379 = vsel %vm266, %v374, %v377
      %v380 = vsel %vm266, %v376, %v378
      %383 = vst [vmem:[#allocation2 + $0x58] sm:$0xf] %v379
      %384 = vst [vmem:[#allocation2 + $0x5c] sm:$0xf] %v380
      %385 = vrot.lane.b32.xlu0 %v355, 118
      %v386 = vpop.permute.xlu0 %385
      %387 = vrot.lane.b32.xlu0 %v356, 118
      %v388 = vpop.permute.xlu0 %387
      %v389 = vrot.slane %v386, 4
      %v390 = vrot.slane %v388, 4
      %v391 = vsel %vm279, %v386, %v389
      %v392 = vsel %vm279, %v388, %v390
      %395 = vst [vmem:[#allocation2 + $0x60] sm:$0xf] %v391
      %396 = vst [vmem:[#allocation2 + $0x64] sm:$0xf] %v392
      %397 = vrot.lane.b32.xlu0 %v355, 117
      %v398 = vpop.permute.xlu0 %397
      %399 = vrot.lane.b32.xlu0 %v356, 117
      %v400 = vpop.permute.xlu0 %399
      %v401 = vrot.slane %v398, 4
      %v402 = vrot.slane %v400, 4
      %v403 = vsel %vm292, %v398, %v401
      %v404 = vsel %vm292, %v400, %v402
      %407 = vst [vmem:[#allocation2 + $0x68] sm:$0xf] %v403
      %408 = vst [vmem:[#allocation2 + $0x6c] sm:$0xf] %v404
      %409 = vrot.lane.b32.xlu0 %v355, 116
      %v410 = vpop.permute.xlu0 %409
      %411 = vrot.lane.b32.xlu0 %v356, 116
      %v412 = vpop.permute.xlu0 %411
      %v413 = vrot.slane %v410, 4
      %v414 = vrot.slane %v412, 4
      %v415 = vsel %vm305, %v410, %v413
      %v416 = vsel %vm305, %v412, %v414
      %419 = vst [vmem:[#allocation2 + $0x70] sm:$0xf] %v415
      %420 = vst [vmem:[#allocation2 + $0x74] sm:$0xf] %v416
      %421 = vrot.lane.b32.xlu0 %v355, 108
      %v422 = vpop.permute.xlu0 %421
      %423 = vrot.lane.b32.xlu0 %v356, 108
      %v424 = vpop.permute.xlu0 %423
      %v425 = vrot.slane %v422, 4
      %v426 = vrot.slane %v424, 4
      %v427 = vsel %vm318, %v422, %v425
      %v428 = vsel %vm318, %v424, %v426
      %431 = vst [vmem:[#allocation2 + $0x78] sm:$0xf] %v427
      %432 = vst [vmem:[#allocation2 + $0x7c] sm:$0xf] %v428
      %433 = vrot.lane.b32.xlu0 %v355, 107
      %v434 = vpop.permute.xlu0 %433
      %435 = vrot.lane.b32.xlu0 %v356, 107
      %v436 = vpop.permute.xlu0 %435
      %v437 = vrot.slane %v434, 4
      %v438 = vrot.slane %v436, 4
      %v439 = vsel %vm331, %v434, %v437
      %v440 = vsel %vm331, %v436, %v438
      %443 = vst [vmem:[#allocation2 + $0x80] sm:$0xf] %v439
      %444 = vst [vmem:[#allocation2 + $0x84] sm:$0xf] %v440
      %445 = vrot.lane.b32.xlu0 %v355, 106
      %v446 = vpop.permute.xlu0 %445
      %447 = vrot.lane.b32.xlu0 %v356, 106
      %v448 = vpop.permute.xlu0 %447
      %v449 = vrot.slane %v446, 4
      %v450 = vrot.slane %v448, 4
      %v451 = vsel %vm344, %v446, %v449
      %v452 = vsel %vm344, %v448, %v450
      %455 = vst [vmem:[#allocation2 + $0x88] sm:$0xf] %v451
      %456 = vst [vmem:[#allocation2 + $0x8c] sm:$0xf] %v452
      %s457 = sadd.s32 %s237, 2
      %s458 = smul.u32 %s457, 4
      %s459 = smul.addr %s458, 4
      %s460 = scalar_lea.vmem %s219, %s459
      %v461 = vld [vmem:[%s460] sm:$0xff]
      %v462 = vld [vmem:[%s460 + $0x8] sm:$0xff]
      %463 = vst [vmem:[#allocation2 + $0x90] sm:$0xf] %v461
      %464 = vst [vmem:[#allocation2 + $0x94] sm:$0xf] %v462
      %467 = vrot.lane.b32.xlu0 %v461, 127
      %v468 = vpop.permute.xlu0 %467
      %469 = vrot.lane.b32.xlu0 %v462, 127
      %v470 = vpop.permute.xlu0 %469
      %v471 = vrot.slane %v468, 4
      %v472 = vrot.slane %v470, 4
      %v473 = vsel %vm253, %v468, %v471
      %v474 = vsel %vm253, %v470, %v472
      %477 = vst [vmem:[#allocation2 + $0x98] sm:$0xf] %v473
      %478 = vst [vmem:[#allocation2 + $0x9c] sm:$0xf] %v474
      %479 = vrot.lane.b32.xlu0 %v461, 126
      %v480 = vpop.permute.xlu0 %479
      %481 = vrot.lane.b32.xlu0 %v462, 126
      %v482 = vpop.permute.xlu0 %481
      %v483 = vrot.slane %v480, 4
      %v484 = vrot.slane %v482, 4
      %v485 = vsel %vm266, %v480, %v483
      %v486 = vsel %vm266, %v482, %v484
      %489 = vst [vmem:[#allocation2 + $0xa0] sm:$0xf] %v485
      %490 = vst [vmem:[#allocation2 + $0xa4] sm:$0xf] %v486
      %491 = vrot.lane.b32.xlu0 %v461, 118
      %v492 = vpop.permute.xlu0 %491
      %493 = vrot.lane.b32.xlu0 %v462, 118
      %v494 = vpop.permute.xlu0 %493
      %v495 = vrot.slane %v492, 4
      %v496 = vrot.slane %v494, 4
      %v497 = vsel %vm279, %v492, %v495
      %v498 = vsel %vm279, %v494, %v496
      %501 = vst [vmem:[#allocation2 + $0xa8] sm:$0xf] %v497
      %502 = vst [vmem:[#allocation2 + $0xac] sm:$0xf] %v498
      %503 = vrot.lane.b32.xlu0 %v461, 117
      %v504 = vpop.permute.xlu0 %503
      %505 = vrot.lane.b32.xlu0 %v462, 117
      %v506 = vpop.permute.xlu0 %505
      %v507 = vrot.slane %v504, 4
      %v508 = vrot.slane %v506, 4
      %v509 = vsel %vm292, %v504, %v507
      %v510 = vsel %vm292, %v506, %v508
      %513 = vst [vmem:[#allocation2 + $0xb0] sm:$0xf] %v509
      %514 = vst [vmem:[#allocation2 + $0xb4] sm:$0xf] %v510
      %515 = vrot.lane.b32.xlu0 %v461, 116
      %v516 = vpop.permute.xlu0 %515
      %517 = vrot.lane.b32.xlu0 %v462, 116
      %v518 = vpop.permute.xlu0 %517
      %v519 = vrot.slane %v516, 4
      %v520 = vrot.slane %v518, 4
      %v521 = vsel %vm305, %v516, %v519
      %v522 = vsel %vm305, %v518, %v520
      %525 = vst [vmem:[#allocation2 + $0xb8] sm:$0xf] %v521
      %526 = vst [vmem:[#allocation2 + $0xbc] sm:$0xf] %v522
      %527 = vrot.lane.b32.xlu0 %v461, 108
      %v528 = vpop.permute.xlu0 %527
      %529 = vrot.lane.b32.xlu0 %v462, 108
      %v530 = vpop.permute.xlu0 %529
      %v531 = vrot.slane %v528, 4
      %v532 = vrot.slane %v530, 4
      %v533 = vsel %vm318, %v528, %v531
      %v534 = vsel %vm318, %v530, %v532
      %537 = vst [vmem:[#allocation2 + $0xc0] sm:$0xf] %v533
      %538 = vst [vmem:[#allocation2 + $0xc4] sm:$0xf] %v534
      %539 = vrot.lane.b32.xlu0 %v461, 107
      %v540 = vpop.permute.xlu0 %539
      %541 = vrot.lane.b32.xlu0 %v462, 107
      %v542 = vpop.permute.xlu0 %541
      %v543 = vrot.slane %v540, 4
      %v544 = vrot.slane %v542, 4
      %v545 = vsel %vm331, %v540, %v543
      %v546 = vsel %vm331, %v542, %v544
      %549 = vst [vmem:[#allocation2 + $0xc8] sm:$0xf] %v545
      %550 = vst [vmem:[#allocation2 + $0xcc] sm:$0xf] %v546
      %551 = vrot.lane.b32.xlu0 %v461, 106
      %v552 = vpop.permute.xlu0 %551
      %553 = vrot.lane.b32.xlu0 %v462, 106
      %v554 = vpop.permute.xlu0 %553
      %v555 = vrot.slane %v552, 4
      %v556 = vrot.slane %v554, 4
      %v557 = vsel %vm344, %v552, %v555
      %v558 = vsel %vm344, %v554, %v556
      %561 = vst [vmem:[#allocation2 + $0xd0] sm:$0xf] %v557
      %562 = vst [vmem:[#allocation2 + $0xd4] sm:$0xf] %v558
      %s563 = sadd.s32 %s237, 3
      %s564 = smul.u32 %s563, 4
      %s565 = smul.addr %s564, 4
      %s566 = scalar_lea.vmem %s219, %s565
      %v567 = vld [vmem:[%s566] sm:$0xff]
      %v568 = vld [vmem:[%s566 + $0x8] sm:$0xff]
      %569 = vst [vmem:[#allocation2 + $0xd8] sm:$0xf] %v567
      %570 = vst [vmem:[#allocation2 + $0xdc] sm:$0xf] %v568
      %573 = vrot.lane.b32.xlu0 %v567, 127
      %v574 = vpop.permute.xlu0 %573
      %575 = vrot.lane.b32.xlu0 %v568, 127
      %v576 = vpop.permute.xlu0 %575
      %v577 = vrot.slane %v574, 4
      %v578 = vrot.slane %v576, 4
      %v579 = vsel %vm253, %v574, %v577
      %v580 = vsel %vm253, %v576, %v578
      %583 = vst [vmem:[#allocation2 + $0xe0] sm:$0xf] %v579
      %584 = vst [vmem:[#allocation2 + $0xe4] sm:$0xf] %v580
      %585 = vrot.lane.b32.xlu0 %v567, 126
      %v586 = vpop.permute.xlu0 %585
      %587 = vrot.lane.b32.xlu0 %v568, 126
      %v588 = vpop.permute.xlu0 %587
      %v589 = vrot.slane %v586, 4
      %v590 = vrot.slane %v588, 4
      %v591 = vsel %vm266, %v586, %v589
      %v592 = vsel %vm266, %v588, %v590
      %595 = vst [vmem:[#allocation2 + $0xe8] sm:$0xf] %v591
      %596 = vst [vmem:[#allocation2 + $0xec] sm:$0xf] %v592
      %597 = vrot.lane.b32.xlu0 %v567, 118
      %v598 = vpop.permute.xlu0 %597
      %599 = vrot.lane.b32.xlu0 %v568, 118
      %v600 = vpop.permute.xlu0 %599
      %v601 = vrot.slane %v598, 4
      %v602 = vrot.slane %v600, 4
      %v603 = vsel %vm279, %v598, %v601
      %v604 = vsel %vm279, %v600, %v602
      %607 = vst [vmem:[#allocation2 + $0xf0] sm:$0xf] %v603
      %608 = vst [vmem:[#allocation2 + $0xf4] sm:$0xf] %v604
      %609 = vrot.lane.b32.xlu0 %v567, 117
      %v610 = vpop.permute.xlu0 %609
      %611 = vrot.lane.b32.xlu0 %v568, 117
      %v612 = vpop.permute.xlu0 %611
      %v613 = vrot.slane %v610, 4
      %v614 = vrot.slane %v612, 4
      %v615 = vsel %vm292, %v610, %v613
      %v616 = vsel %vm292, %v612, %v614
      %619 = vst [vmem:[#allocation2 + $0xf8] sm:$0xf] %v615
      %620 = vst [vmem:[#allocation2 + $0xfc] sm:$0xf] %v616
      %621 = vrot.lane.b32.xlu0 %v567, 116
      %v622 = vpop.permute.xlu0 %621
      %623 = vrot.lane.b32.xlu0 %v568, 116
      %v624 = vpop.permute.xlu0 %623
      %v625 = vrot.slane %v622, 4
      %v626 = vrot.slane %v624, 4
      %v627 = vsel %vm305, %v622, %v625
      %v628 = vsel %vm305, %v624, %v626
      %631 = vst [vmem:[#allocation2 + $0x100] sm:$0xf] %v627
      %632 = vst [vmem:[#allocation2 + $0x104] sm:$0xf] %v628
      %633 = vrot.lane.b32.xlu0 %v567, 108
      %v634 = vpop.permute.xlu0 %633
      %635 = vrot.lane.b32.xlu0 %v568, 108
      %v636 = vpop.permute.xlu0 %635
      %v637 = vrot.slane %v634, 4
      %v638 = vrot.slane %v636, 4
      %v639 = vsel %vm318, %v634, %v637
      %v640 = vsel %vm318, %v636, %v638
      %643 = vst [vmem:[#allocation2 + $0x108] sm:$0xf] %v639
      %644 = vst [vmem:[#allocation2 + $0x10c] sm:$0xf] %v640
      %645 = vrot.lane.b32.xlu0 %v567, 107
      %v646 = vpop.permute.xlu0 %645
      %647 = vrot.lane.b32.xlu0 %v568, 107
      %v648 = vpop.permute.xlu0 %647
      %v649 = vrot.slane %v646, 4
      %v650 = vrot.slane %v648, 4
      %v651 = vsel %vm331, %v646, %v649
      %v652 = vsel %vm331, %v648, %v650
      %655 = vst [vmem:[#allocation2 + $0x110] sm:$0xf] %v651
      %656 = vst [vmem:[#allocation2 + $0x114] sm:$0xf] %v652
      %657 = vrot.lane.b32.xlu0 %v567, 106
      %v658 = vpop.permute.xlu0 %657
      %659 = vrot.lane.b32.xlu0 %v568, 106
      %v660 = vpop.permute.xlu0 %659
      %v661 = vrot.slane %v658, 4
      %v662 = vrot.slane %v660, 4
      %v663 = vsel %vm344, %v658, %v661
      %v664 = vsel %vm344, %v660, %v662
      %667 = vst [vmem:[#allocation2 + $0x118] sm:$0xf] %v663
      %668 = vst [vmem:[#allocation2 + $0x11c] sm:$0xf] %v664
      %s669 = sadd.s32 %s237, 4
      %s670 = smul.u32 %s669, 4
      %s671 = smul.addr %s670, 4
      %s672 = scalar_lea.vmem %s219, %s671
      %v673 = vld [vmem:[%s672] sm:$0xff]
      %v674 = vld [vmem:[%s672 + $0x8] sm:$0xff]
      %675 = vst [vmem:[#allocation2 + $0x120] sm:$0xf] %v673
      %676 = vst [vmem:[#allocation2 + $0x124] sm:$0xf] %v674
      %679 = vrot.lane.b32.xlu0 %v673, 127
      %v680 = vpop.permute.xlu0 %679
      %681 = vrot.lane.b32.xlu0 %v674, 127
      %v682 = vpop.permute.xlu0 %681
      %v683 = vrot.slane %v680, 4
      %v684 = vrot.slane %v682, 4
      %v685 = vsel %vm253, %v680, %v683
      %v686 = vsel %vm253, %v682, %v684
      %689 = vst [vmem:[#allocation2 + $0x128] sm:$0xf] %v685
      %690 = vst [vmem:[#allocation2 + $0x12c] sm:$0xf] %v686
      %691 = vrot.lane.b32.xlu0 %v673, 126
      %v692 = vpop.permute.xlu0 %691
      %693 = vrot.lane.b32.xlu0 %v674, 126
      %v694 = vpop.permute.xlu0 %693
      %v695 = vrot.slane %v692, 4
      %v696 = vrot.slane %v694, 4
      %v697 = vsel %vm266, %v692, %v695
      %v698 = vsel %vm266, %v694, %v696
      %701 = vst [vmem:[#allocation2 + $0x130] sm:$0xf] %v697
      %702 = vst [vmem:[#allocation2 + $0x134] sm:$0xf] %v698
      %703 = vrot.lane.b32.xlu0 %v673, 118
      %v704 = vpop.permute.xlu0 %703
      %705 = vrot.lane.b32.xlu0 %v674, 118
      %v706 = vpop.permute.xlu0 %705
      %v707 = vrot.slane %v704, 4
      %v708 = vrot.slane %v706, 4
      %v709 = vsel %vm279, %v704, %v707
      %v710 = vsel %vm279, %v706, %v708
      %713 = vst [vmem:[#allocation2 + $0x138] sm:$0xf] %v709
      %714 = vst [vmem:[#allocation2 + $0x13c] sm:$0xf] %v710
      %715 = vrot.lane.b32.xlu0 %v673, 117
      %v716 = vpop.permute.xlu0 %715
      %717 = vrot.lane.b32.xlu0 %v674, 117
      %v718 = vpop.permute.xlu0 %717
      %v719 = vrot.slane %v716, 4
      %v720 = vrot.slane %v718, 4
      %v721 = vsel %vm292, %v716, %v719
      %v722 = vsel %vm292, %v718, %v720
      %725 = vst [vmem:[#allocation2 + $0x140] sm:$0xf] %v721
      %726 = vst [vmem:[#allocation2 + $0x144] sm:$0xf] %v722
      %727 = vrot.lane.b32.xlu0 %v673, 116
      %v728 = vpop.permute.xlu0 %727
      %729 = vrot.lane.b32.xlu0 %v674, 116
      %v730 = vpop.permute.xlu0 %729
      %v731 = vrot.slane %v728, 4
      %v732 = vrot.slane %v730, 4
      %v733 = vsel %vm305, %v728, %v731
      %v734 = vsel %vm305, %v730, %v732
      %737 = vst [vmem:[#allocation2 + $0x148] sm:$0xf] %v733
      %738 = vst [vmem:[#allocation2 + $0x14c] sm:$0xf] %v734
      %739 = vrot.lane.b32.xlu0 %v673, 108
      %v740 = vpop.permute.xlu0 %739
      %741 = vrot.lane.b32.xlu0 %v674, 108
      %v742 = vpop.permute.xlu0 %741
      %v743 = vrot.slane %v740, 4
      %v744 = vrot.slane %v742, 4
      %v745 = vsel %vm318, %v740, %v743
      %v746 = vsel %vm318, %v742, %v744
      %749 = vst [vmem:[#allocation2 + $0x150] sm:$0xf] %v745
      %750 = vst [vmem:[#allocation2 + $0x154] sm:$0xf] %v746
      %751 = vrot.lane.b32.xlu0 %v673, 107
      %v752 = vpop.permute.xlu0 %751
      %753 = vrot.lane.b32.xlu0 %v674, 107
      %v754 = vpop.permute.xlu0 %753
      %v755 = vrot.slane %v752, 4
      %v756 = vrot.slane %v754, 4
      %v757 = vsel %vm331, %v752, %v755
      %v758 = vsel %vm331, %v754, %v756
      %761 = vst [vmem:[#allocation2 + $0x158] sm:$0xf] %v757
      %762 = vst [vmem:[#allocation2 + $0x15c] sm:$0xf] %v758
      %763 = vrot.lane.b32.xlu0 %v673, 106
      %v764 = vpop.permute.xlu0 %763
      %765 = vrot.lane.b32.xlu0 %v674, 106
      %v766 = vpop.permute.xlu0 %765
      %v767 = vrot.slane %v764, 4
      %v768 = vrot.slane %v766, 4
      %v769 = vsel %vm344, %v764, %v767
      %v770 = vsel %vm344, %v766, %v768
      %773 = vst [vmem:[#allocation2 + $0x160] sm:$0xf] %v769
      %774 = vst [vmem:[#allocation2 + $0x164] sm:$0xf] %v770
      %s775 = sadd.s32 %s237, 5
      %s776 = smul.u32 %s775, 4
      %s777 = smul.addr %s776, 4
      %s778 = scalar_lea.vmem %s219, %s777
      %v779 = vld [vmem:[%s778] sm:$0xff]
      %v780 = vld [vmem:[%s778 + $0x8] sm:$0xff]
      %781 = vst [vmem:[#allocation2 + $0x168] sm:$0xf] %v779
      %782 = vst [vmem:[#allocation2 + $0x16c] sm:$0xf] %v780
      %785 = vrot.lane.b32.xlu0 %v779, 127
      %v786 = vpop.permute.xlu0 %785
      %787 = vrot.lane.b32.xlu0 %v780, 127
      %v788 = vpop.permute.xlu0 %787
      %v789 = vrot.slane %v786, 4
      %v790 = vrot.slane %v788, 4
      %v791 = vsel %vm253, %v786, %v789
      %v792 = vsel %vm253, %v788, %v790
      %795 = vst [vmem:[#allocation2 + $0x170] sm:$0xf] %v791
      %796 = vst [vmem:[#allocation2 + $0x174] sm:$0xf] %v792
      %797 = vrot.lane.b32.xlu0 %v779, 126
      %v798 = vpop.permute.xlu0 %797
      %799 = vrot.lane.b32.xlu0 %v780, 126
      %v800 = vpop.permute.xlu0 %799
      %v801 = vrot.slane %v798, 4
      %v802 = vrot.slane %v800, 4
      %v803 = vsel %vm266, %v798, %v801
      %v804 = vsel %vm266, %v800, %v802
      %807 = vst [vmem:[#allocation2 + $0x178] sm:$0xf] %v803
      %808 = vst [vmem:[#allocation2 + $0x17c] sm:$0xf] %v804
      %809 = vrot.lane.b32.xlu0 %v779, 118
      %v810 = vpop.permute.xlu0 %809
      %811 = vrot.lane.b32.xlu0 %v780, 118
      %v812 = vpop.permute.xlu0 %811
      %v813 = vrot.slane %v810, 4
      %v814 = vrot.slane %v812, 4
      %v815 = vsel %vm279, %v810, %v813
      %v816 = vsel %vm279, %v812, %v814
      %819 = vst [vmem:[#allocation2 + $0x180] sm:$0xf] %v815
      %820 = vst [vmem:[#allocation2 + $0x184] sm:$0xf] %v816
      %821 = vrot.lane.b32.xlu0 %v779, 117
      %v822 = vpop.permute.xlu0 %821
      %823 = vrot.lane.b32.xlu0 %v780, 117
      %v824 = vpop.permute.xlu0 %823
      %v825 = vrot.slane %v822, 4
      %v826 = vrot.slane %v824, 4
      %v827 = vsel %vm292, %v822, %v825
      %v828 = vsel %vm292, %v824, %v826
      %831 = vst [vmem:[#allocation2 + $0x188] sm:$0xf] %v827
      %832 = vst [vmem:[#allocation2 + $0x18c] sm:$0xf] %v828
      %833 = vrot.lane.b32.xlu0 %v779, 116
      %v834 = vpop.permute.xlu0 %833
      %835 = vrot.lane.b32.xlu0 %v780, 116
      %v836 = vpop.permute.xlu0 %835
      %v837 = vrot.slane %v834, 4
      %v838 = vrot.slane %v836, 4
      %v839 = vsel %vm305, %v834, %v837
      %v840 = vsel %vm305, %v836, %v838
      %843 = vst [vmem:[#allocation2 + $0x190] sm:$0xf] %v839
      %844 = vst [vmem:[#allocation2 + $0x194] sm:$0xf] %v840
      %845 = vrot.lane.b32.xlu0 %v779, 108
      %v846 = vpop.permute.xlu0 %845
      %847 = vrot.lane.b32.xlu0 %v780, 108
      %v848 = vpop.permute.xlu0 %847
      %v849 = vrot.slane %v846, 4
      %v850 = vrot.slane %v848, 4
      %v851 = vsel %vm318, %v846, %v849
      %v852 = vsel %vm318, %v848, %v850
      %855 = vst [vmem:[#allocation2 + $0x198] sm:$0xf] %v851
      %856 = vst [vmem:[#allocation2 + $0x19c] sm:$0xf] %v852
      %857 = vrot.lane.b32.xlu0 %v779, 107
      %v858 = vpop.permute.xlu0 %857
      %859 = vrot.lane.b32.xlu0 %v780, 107
      %v860 = vpop.permute.xlu0 %859
      %v861 = vrot.slane %v858, 4
      %v862 = vrot.slane %v860, 4
      %v863 = vsel %vm331, %v858, %v861
      %v864 = vsel %vm331, %v860, %v862
      %867 = vst [vmem:[#allocation2 + $0x1a0] sm:$0xf] %v863
      %868 = vst [vmem:[#allocation2 + $0x1a4] sm:$0xf] %v864
      %869 = vrot.lane.b32.xlu0 %v779, 106
      %v870 = vpop.permute.xlu0 %869
      %871 = vrot.lane.b32.xlu0 %v780, 106
      %v872 = vpop.permute.xlu0 %871
      %v873 = vrot.slane %v870, 4
      %v874 = vrot.slane %v872, 4
      %v875 = vsel %vm344, %v870, %v873
      %v876 = vsel %vm344, %v872, %v874
      %879 = vst [vmem:[#allocation2 + $0x1a8] sm:$0xf] %v875
      %880 = vst [vmem:[#allocation2 + $0x1ac] sm:$0xf] %v876
      %p881 = scmp.eq.s32.totalorder %s21, 0
      // Predicated region
      $region33: #{encoder3d_forward.12} parent=31 // pred_check
        %p882 = pneg %p881
      $region34: #{encoder3d_forward.12} parent=31 // pred_check_branch
        %884 = sbr.rel (%p882) target = $region36
      $region35: #{encoder3d_forward.12} parent=31 // pred_region
        %vm885 = vcmask 15360
        %886 = vst.msk [vmem:[%s235] sm:$0xff] %vm885, 0.0
        %887 = vst.msk [vmem:[%s235 + $0x8] sm:$0xff] %vm885, 0.0
      $region36: #{encoder3d_forward.12} parent=31 // pred_fallthru
        _
      %v888 = vld [vmem:[%s1] sm:$0xff]
      %v889 = vld [vmem:[%s1 + $0x8] sm:$0xff]
      %v890 = vld [vmem:[%s1 + $0x10] sm:$0xff]
      %v891 = vld [vmem:[%s1 + $0x18] sm:$0xff]
      %v892 = vld [vmem:[%s2] sm:$0x1]
      %v893 = vld [vmem:[#allocation2] sm:$0xf]
      %v894 = vld [vmem:[#allocation2 + $0x4] sm:$0xf]
      %v895 = vld [vmem:[#allocation2 + $0x8] sm:$0xf]
      %v896 = vld [vmem:[#allocation2 + $0xc] sm:$0xf]
      %v897 = vld [vmem:[#allocation2 + $0x10] sm:$0xf]
      %v898 = vld [vmem:[#allocation2 + $0x14] sm:$0xf]
      %v899 = vld [vmem:[#allocation2 + $0x18] sm:$0xf]
      %v900 = vld [vmem:[#allocation2 + $0x1c] sm:$0xf]
      %v901 = vld [vmem:[#allocation2 + $0x20] sm:$0xf]
      %v902 = vld [vmem:[#allocation2 + $0x24] sm:$0xf]
      %v903 = vld [vmem:[#allocation2 + $0x28] sm:$0xf]
      %v904 = vld [vmem:[#allocation2 + $0x2c] sm:$0xf]
      %v905 = vld [vmem:[#allocation2 + $0x30] sm:$0xf]
      %v906 = vld [vmem:[#allocation2 + $0x34] sm:$0xf]
      %v907 = vld [vmem:[#allocation2 + $0x38] sm:$0xf]
      %v908 = vld [vmem:[#allocation2 + $0x3c] sm:$0xf]
      %v909 = vld [vmem:[#allocation2 + $0x40] sm:$0xf]
      %v910 = vld [vmem:[#allocation2 + $0x44] sm:$0xf]
      %v911 = vld [vmem:[#allocation2 + $0x48] sm:$0xf]
      %v912 = vld [vmem:[#allocation2 + $0x4c] sm:$0xf]
      %v913 = vld [vmem:[#allocation2 + $0x50] sm:$0xf]
      %v914 = vld [vmem:[#allocation2 + $0x54] sm:$0xf]
      %v915 = vld [vmem:[#allocation2 + $0x58] sm:$0xf]
      %v916 = vld [vmem:[#allocation2 + $0x5c] sm:$0xf]
      %v917 = vld [vmem:[#allocation2 + $0x60] sm:$0xf]
      %v918 = vld [vmem:[#allocation2 + $0x64] sm:$0xf]
      %v919 = vld [vmem:[#allocation2 + $0x68] sm:$0xf]
      %v920 = vld [vmem:[#allocation2 + $0x6c] sm:$0xf]
      %v921 = vld [vmem:[#allocation2 + $0x70] sm:$0xf]
      %v922 = vld [vmem:[#allocation2 + $0x74] sm:$0xf]
      %v923 = vld [vmem:[#allocation2 + $0x78] sm:$0xf]
      %v924 = vld [vmem:[#allocation2 + $0x7c] sm:$0xf]
      %v925 = vld [vmem:[#allocation2 + $0x80] sm:$0xf]
      %v926 = vld [vmem:[#allocation2 + $0x84] sm:$0xf]
      %v927 = vld [vmem:[#allocation2 + $0x88] sm:$0xf]
      %v928 = vld [vmem:[#allocation2 + $0x8c] sm:$0xf]
      %v929 = vld [vmem:[#allocation2 + $0x90] sm:$0xf]
      %v930 = vld [vmem:[#allocation2 + $0x94] sm:$0xf]
      %v931 = vld [vmem:[#allocation2 + $0x98] sm:$0xf]
      %v932 = vld [vmem:[#allocation2 + $0x9c] sm:$0xf]
      %v933 = vld [vmem:[#allocation2 + $0xa0] sm:$0xf]
      %v934 = vld [vmem:[#allocation2 + $0xa4] sm:$0xf]
      %v935 = vld [vmem:[#allocation2 + $0xa8] sm:$0xf]
      %v936 = vld [vmem:[#allocation2 + $0xac] sm:$0xf]
      %v937 = vld [vmem:[#allocation2 + $0xb0] sm:$0xf]
      %v938 = vld [vmem:[#allocation2 + $0xb4] sm:$0xf]
      %v939 = vld [vmem:[#allocation2 + $0xb8] sm:$0xf]
      %v940 = vld [vmem:[#allocation2 + $0xbc] sm:$0xf]
      %v941 = vld [vmem:[#allocation2 + $0xc0] sm:$0xf]
      %v942 = vld [vmem:[#allocation2 + $0xc4] sm:$0xf]
      %v943 = vld [vmem:[#allocation2 + $0xc8] sm:$0xf]
      %v944 = vld [vmem:[#allocation2 + $0xcc] sm:$0xf]
      %v945 = vld [vmem:[#allocation2 + $0xd0] sm:$0xf]
      %v946 = vld [vmem:[#allocation2 + $0xd4] sm:$0xf]
      %v951 = vunpack.c.l.b16 %v888
      %v952 = vunpack.c.h.b16 %v888
      %v953 = vunpack.c.l.b16 %v889
      %v954 = vunpack.c.h.b16 %v889
      %v955 = vunpack.c.l.b16 %v890
      %v956 = vunpack.c.h.b16 %v890
      %v957 = vunpack.c.l.b16 %v891
      %v958 = vunpack.c.h.b16 %v891
      %v959 = vpack.c.b16 %v955, %v951
      %v960 = vpack.c.b16 %v956, %v952
      %v961 = vpack.c.b16 %v957, %v953
      %v962 = vpack.c.b16 %v958, %v954
      %v1020 = vunpack.c.l.b16 %v893
      %v1021 = vunpack.c.l.b16 %v894
      %v1022 = vunpack.c.l.b16 %v895
      %v1023 = vunpack.c.l.b16 %v896
      %v1024 = vunpack.c.l.b16 %v897
      %v1025 = vunpack.c.l.b16 %v898
      %v1026 = vunpack.c.l.b16 %v899
      %v1027 = vunpack.c.l.b16 %v900
      %v1028 = vunpack.c.l.b16 %v901
      %v1029 = vunpack.c.l.b16 %v902
      %v1030 = vunpack.c.l.b16 %v903
      %v1031 = vunpack.c.l.b16 %v904
      %v1032 = vunpack.c.l.b16 %v905
      %v1033 = vunpack.c.l.b16 %v906
      %v1034 = vunpack.c.l.b16 %v907
      %v1035 = vunpack.c.l.b16 %v908
      %v1036 = vunpack.c.l.b16 %v909
      %v1037 = vunpack.c.l.b16 %v910
      %v1038 = vunpack.c.l.b16 %v911
      %v1039 = vunpack.c.l.b16 %v912
      %v1040 = vunpack.c.l.b16 %v913
      %v1041 = vunpack.c.l.b16 %v914
      %v1042 = vunpack.c.l.b16 %v915
      %v1043 = vunpack.c.l.b16 %v916
      %v1044 = vunpack.c.l.b16 %v917
      %v1045 = vunpack.c.l.b16 %v918
      %v1046 = vunpack.c.l.b16 %v919
      %v1047 = vunpack.c.l.b16 %v920
      %v1048 = vunpack.c.l.b16 %v921
      %v1049 = vunpack.c.l.b16 %v922
      %v1050 = vunpack.c.l.b16 %v923
      %v1051 = vunpack.c.l.b16 %v924
      %v1052 = vunpack.c.l.b16 %v925
      %v1053 = vunpack.c.l.b16 %v926
      %v1054 = vunpack.c.l.b16 %v927
      %v1055 = vunpack.c.l.b16 %v928
      %v1056 = vunpack.c.l.b16 %v929
      %v1057 = vunpack.c.l.b16 %v930
      %v1058 = vunpack.c.l.b16 %v931
      %v1059 = vunpack.c.l.b16 %v932
      %v1060 = vunpack.c.l.b16 %v933
      %v1061 = vunpack.c.l.b16 %v934
      %v1062 = vunpack.c.l.b16 %v935
      %v1063 = vunpack.c.l.b16 %v936
      %v1064 = vunpack.c.l.b16 %v937
      %v1065 = vunpack.c.l.b16 %v938
      %v1066 = vunpack.c.l.b16 %v939
      %v1067 = vunpack.c.l.b16 %v940
      %v1068 = vunpack.c.l.b16 %v941
      %v1069 = vunpack.c.l.b16 %v942
      %v1070 = vunpack.c.l.b16 %v943
      %v1071 = vunpack.c.l.b16 %v944
      %v1072 = vunpack.c.l.b16 %v945
      %v1073 = vunpack.c.l.b16 %v946
      %v1074 = vpack.c.b16 %v1021, %v1020
      %v1075 = vpack.c.b16 %v1023, %v1022
      %v1076 = vpack.c.b16 %v1025, %v1024
      %v1077 = vpack.c.b16 %v1027, %v1026
      %v1078 = vpack.c.b16 %v1029, %v1028
      %v1079 = vpack.c.b16 %v1031, %v1030
      %v1080 = vpack.c.b16 %v1033, %v1032
      %v1081 = vpack.c.b16 %v1035, %v1034
      %v1082 = vpack.c.b16 %v1037, %v1036
      %v1083 = vpack.c.b16 %v1039, %v1038
      %v1084 = vpack.c.b16 %v1041, %v1040
      %v1085 = vpack.c.b16 %v1043, %v1042
      %v1086 = vpack.c.b16 %v1045, %v1044
      %v1087 = vpack.c.b16 %v1047, %v1046
      %v1088 = vpack.c.b16 %v1049, %v1048
      %v1089 = vpack.c.b16 %v1051, %v1050
      %v1090 = vpack.c.b16 %v1053, %v1052
      %v1091 = vpack.c.b16 %v1055, %v1054
      %v1092 = vpack.c.b16 %v1057, %v1056
      %v1093 = vpack.c.b16 %v1059, %v1058
      %v1094 = vpack.c.b16 %v1061, %v1060
      %v1095 = vpack.c.b16 %v1063, %v1062
      %v1096 = vpack.c.b16 %v1065, %v1064
      %v1097 = vpack.c.b16 %v1067, %v1066
      %v1098 = vpack.c.b16 %v1069, %v1068
      %v1099 = vpack.c.b16 %v1071, %v1070
      %v1100 = vpack.c.b16 %v1073, %v1072
      %vm1128 = vcmask 392192
      %v1130 = vsel %vm1128, %v962, 0
      %1132 = vmatpush.bf16.msra.mxu0 %v1081
      %1133 = vmatpush.bf16.msra.mxu0 %v1080
      %1134 = vmatpush.bf16.msra.mxu0 %v1079
      %1135 = vmatpush.bf16.msra.mxu0 %v1078
      %1136 = vmatpush.bf16.msra.mxu0 %v1077
      %1137 = vmatpush.bf16.msra.mxu0 %v1076
      %1138 = vmatpush.bf16.msra.mxu0 %v1075
      %1139 = vmatpush.bf16.msra.mxu0 %v1074
      %1140 = vmatmul.bf16.gmra.mxu0 %v959
      %v1141 = vpop.f32.mrf.mxu0
      %v1142 = vadd.f32 0.0, %v1141
      %v1143 = vpop.f32.mrf.mxu0
      %v1144 = vadd.f32 0.0, %v1143
      %1145 = vdwg.mxu0
      %1146 = vmatpush.bf16.msra.mxu0 %v1089
      %1147 = vmatpush.bf16.msra.mxu0 %v1088
      %1148 = vmatpush.bf16.msra.mxu0 %v1087
      %1149 = vmatpush.bf16.msra.mxu0 %v1086
      %1150 = vmatpush.bf16.msra.mxu0 %v1085
      %1151 = vmatpush.bf16.msra.mxu0 %v1084
      %1152 = vmatpush.bf16.msra.mxu0 %v1083
      %1153 = vmatpush.bf16.msra.mxu0 %v1082
      %1154 = vmatmul.bf16.gmra.mxu0 %v960
      %v1155 = vpop.f32.mrf.mxu0
      %v1156 = vadd.f32 %v1142, %v1155
      %v1157 = vpop.f32.mrf.mxu0
      %v1158 = vadd.f32 %v1144, %v1157
      %1159 = vdwg.mxu0
      %1160 = vmatpush.bf16.msra.mxu0 %v1097
      %1161 = vmatpush.bf16.msra.mxu0 %v1096
      %1162 = vmatpush.bf16.msra.mxu0 %v1095
      %1163 = vmatpush.bf16.msra.mxu0 %v1094
      %1164 = vmatpush.bf16.msra.mxu0 %v1093
      %1165 = vmatpush.bf16.msra.mxu0 %v1092
      %1166 = vmatpush.bf16.msra.mxu0 %v1091
      %1167 = vmatpush.bf16.msra.mxu0 %v1090
      %1168 = vmatmul.bf16.gmra.mxu0 %v961
      %v1169 = vpop.f32.mrf.mxu0
      %v1170 = vadd.f32 %v1156, %v1169
      %v1171 = vpop.f32.mrf.mxu0
      %v1172 = vadd.f32 %v1158, %v1171
      %1173 = vdwg.mxu0
      %1174 = vmatpush.bf16.msra.mxu0 0
      %1175 = vmatpush.bf16.msra.mxu0 0
      %1176 = vmatpush.bf16.msra.mxu0 0
      %1177 = vmatpush.bf16.msra.mxu0 0
      %1178 = vmatpush.bf16.msra.mxu0 0
      %1179 = vmatpush.bf16.msra.mxu0 %v1100
      %1180 = vmatpush.bf16.msra.mxu0 %v1099
      %1181 = vmatpush.bf16.msra.mxu0 %v1098
      %1182 = vmatmul.bf16.gmra.mxu0 %v1130
      %v1183 = vpop.f32.mrf.mxu0
      %v1184 = vadd.f32 %v1170, %v1183
      %v1185 = vpop.f32.mrf.mxu0
      %v1186 = vadd.f32 %v1172, %v1185
      %1187 = vdwg.mxu0
      %v1188 = vpack.c.bf16 %v1184, %v1184
      %v1189 = vpack.c.bf16 %v1186, %v1186
      %1190 = vst [vmem:[%s229] sm:$0xf] %v1188
      %1191 = vst [vmem:[%s229 + $0x4] sm:$0xf] %v1189
      %v1193 = vperm.slane %v892, 0
      %v1195 = vmul.f32 %v1184, %v1193
      %v1196 = vmul.f32 %v1186, %v1193
      %1197 = vadd.xlane.f32.xlu0 %v1195
      %v1198 = vpop.xlane.xlu0 %1197
      %1199 = vadd.xlane.f32.xlu0 %v1196
      %v1200 = vpop.xlane.xlu0 %1199
      %v1201 = vadd.f32 %v1198, 0.0
      %v1202 = vadd.f32 %v1200, 0.0
      %v1203 = vmul.f32 %v1195, %v1195
      %v1204 = vmul.f32 %v1196, %v1196
      %1205 = vadd.xlane.f32.xlu0 %v1203
      %v1206 = vpop.xlane.xlu0 %1205
      %1207 = vadd.xlane.f32.xlu0 %v1204
      %v1208 = vpop.xlane.xlu0 %1207
      %v1209 = vadd.f32 %v1206, 0.0
      %v1210 = vadd.f32 %v1208, 0.0
      %v1211 = vld [vmem:[#allocation2 + $0x48] sm:$0xf]
      %v1212 = vld [vmem:[#allocation2 + $0x4c] sm:$0xf]
      %v1213 = vld [vmem:[#allocation2 + $0x50] sm:$0xf]
      %v1214 = vld [vmem:[#allocation2 + $0x54] sm:$0xf]
      %v1215 = vld [vmem:[#allocation2 + $0x58] sm:$0xf]
      %v1216 = vld [vmem:[#allocation2 + $0x5c] sm:$0xf]
      %v1217 = vld [vmem:[#allocation2 + $0x60] sm:$0xf]
      %v1218 = vld [vmem:[#allocation2 + $0x64] sm:$0xf]
      %v1219 = vld [vmem:[#allocation2 + $0x68] sm:$0xf]
      %v1220 = vld [vmem:[#allocation2 + $0x6c] sm:$0xf]
      %v1221 = vld [vmem:[#allocation2 + $0x70] sm:$0xf]
      %v1222 = vld [vmem:[#allocation2 + $0x74] sm:$0xf]
      %v1223 = vld [vmem:[#allocation2 + $0x78] sm:$0xf]
      %v1224 = vld [vmem:[#allocation2 + $0x7c] sm:$0xf]
      %v1225 = vld [vmem:[#allocation2 + $0x80] sm:$0xf]
      %v1226 = vld [vmem:[#allocation2 + $0x84] sm:$0xf]
      %v1227 = vld [vmem:[#allocation2 + $0x88] sm:$0xf]
      %v1228 = vld [vmem:[#allocation2 + $0x8c] sm:$0xf]
      %v1229 = vld [vmem:[#allocation2 + $0x90] sm:$0xf]
      %v1230 = vld [vmem:[#allocation2 + $0x94] sm:$0xf]
      %v1231 = vld [vmem:[#allocation2 + $0x98] sm:$0xf]
      %v1232 = vld [vmem:[#allocation2 + $0x9c] sm:$0xf]
      %v1233 = vld [vmem:[#allocation2 + $0xa0] sm:$0xf]
      %v1234 = vld [vmem:[#allocation2 + $0xa4] sm:$0xf]
      %v1235 = vld [vmem:[#allocation2 + $0xa8] sm:$0xf]
      %v1236 = vld [vmem:[#allocation2 + $0xac] sm:$0xf]
      %v1237 = vld [vmem:[#allocation2 + $0xb0] sm:$0xf]
      %v1238 = vld [vmem:[#allocation2 + $0xb4] sm:$0xf]
      %v1239 = vld [vmem:[#allocation2 + $0xb8] sm:$0xf]
      %v1240 = vld [vmem:[#allocation2 + $0xbc] sm:$0xf]
      %v1241 = vld [vmem:[#allocation2 + $0xc0] sm:$0xf]
      %v1242 = vld [vmem:[#allocation2 + $0xc4] sm:$0xf]
      %v1243 = vld [vmem:[#allocation2 + $0xc8] sm:$0xf]
      %v1244 = vld [vmem:[#allocation2 + $0xcc] sm:$0xf]
      %v1245 = vld [vmem:[#allocation2 + $0xd0] sm:$0xf]
      %v1246 = vld [vmem:[#allocation2 + $0xd4] sm:$0xf]
      %v1247 = vld [vmem:[#allocation2 + $0xd8] sm:$0xf]
      %v1248 = vld [vmem:[#allocation2 + $0xdc] sm:$0xf]
      %v1249 = vld [vmem:[#allocation2 + $0xe0] sm:$0xf]
      %v1250 = vld [vmem:[#allocation2 + $0xe4] sm:$0xf]
      %v1251 = vld [vmem:[#allocation2 + $0xe8] sm:$0xf]
      %v1252 = vld [vmem:[#allocation2 + $0xec] sm:$0xf]
      %v1253 = vld [vmem:[#allocation2 + $0xf0] sm:$0xf]
      %v1254 = vld [vmem:[#allocation2 + $0xf4] sm:$0xf]
      %v1255 = vld [vmem:[#allocation2 + $0xf8] sm:$0xf]
      %v1256 = vld [vmem:[#allocation2 + $0xfc] sm:$0xf]
      %v1257 = vld [vmem:[#allocation2 + $0x100] sm:$0xf]
      %v1258 = vld [vmem:[#allocation2 + $0x104] sm:$0xf]
      %v1259 = vld [vmem:[#allocation2 + $0x108] sm:$0xf]
      %v1260 = vld [vmem:[#allocation2 + $0x10c] sm:$0xf]
      %v1261 = vld [vmem:[#allocation2 + $0x110] sm:$0xf]
      %v1262 = vld [vmem:[#allocation2 + $0x114] sm:$0xf]
      %v1263 = vld [vmem:[#allocation2 + $0x118] sm:$0xf]
      %v1264 = vld [vmem:[#allocation2 + $0x11c] sm:$0xf]
      %v1319 = vunpack.c.l.b16 %v1211
      %v1320 = vunpack.c.l.b16 %v1212
      %v1321 = vunpack.c.l.b16 %v1213
      %v1322 = vunpack.c.l.b16 %v1214
      %v1323 = vunpack.c.l.b16 %v1215
      %v1324 = vunpack.c.l.b16 %v1216
      %v1325 = vunpack.c.l.b16 %v1217
      %v1326 = vunpack.c.l.b16 %v1218
      %v1327 = vunpack.c.l.b16 %v1219
      %v1328 = vunpack.c.l.b16 %v1220
      %v1329 = vunpack.c.l.b16 %v1221
      %v1330 = vunpack.c.l.b16 %v1222
      %v1331 = vunpack.c.l.b16 %v1223
      %v1332 = vunpack.c.l.b16 %v1224
      %v1333 = vunpack.c.l.b16 %v1225
      %v1334 = vunpack.c.l.b16 %v1226
      %v1335 = vunpack.c.l.b16 %v1227
      %v1336 = vunpack.c.l.b16 %v1228
      %v1337 = vunpack.c.l.b16 %v1229
      %v1338 = vunpack.c.l.b16 %v1230
      %v1339 = vunpack.c.l.b16 %v1231
      %v1340 = vunpack.c.l.b16 %v1232
      %v1341 = vunpack.c.l.b16 %v1233
      %v1342 = vunpack.c.l.b16 %v1234
      %v1343 = vunpack.c.l.b16 %v1235
      %v1344 = vunpack.c.l.b16 %v1236
      %v1345 = vunpack.c.l.b16 %v1237
      %v1346 = vunpack.c.l.b16 %v1238
      %v1347 = vunpack.c.l.b16 %v1239
      %v1348 = vunpack.c.l.b16 %v1240
      %v1349 = vunpack.c.l.b16 %v1241
      %v1350 = vunpack.c.l.b16 %v1242
      %v1351 = vunpack.c.l.b16 %v1243
      %v1352 = vunpack.c.l.b16 %v1244
      %v1353 = vunpack.c.l.b16 %v1245
      %v1354 = vunpack.c.l.b16 %v1246
      %v1355 = vunpack.c.l.b16 %v1247
      %v1356 = vunpack.c.l.b16 %v1248
      %v1357 = vunpack.c.l.b16 %v1249
      %v1358 = vunpack.c.l.b16 %v1250
      %v1359 = vunpack.c.l.b16 %v1251
      %v1360 = vunpack.c.l.b16 %v1252
      %v1361 = vunpack.c.l.b16 %v1253
      %v1362 = vunpack.c.l.b16 %v1254
      %v1363 = vunpack.c.l.b16 %v1255
      %v1364 = vunpack.c.l.b16 %v1256
      %v1365 = vunpack.c.l.b16 %v1257
      %v1366 = vunpack.c.l.b16 %v1258
      %v1367 = vunpack.c.l.b16 %v1259
      %v1368 = vunpack.c.l.b16 %v1260
      %v1369 = vunpack.c.l.b16 %v1261
      %v1370 = vunpack.c.l.b16 %v1262
      %v1371 = vunpack.c.l.b16 %v1263
      %v1372 = vunpack.c.l.b16 %v1264
      %v1373 = vpack.c.b16 %v1320, %v1319
      %v1374 = vpack.c.b16 %v1322, %v1321
      %v1375 = vpack.c.b16 %v1324, %v1323
      %v1376 = vpack.c.b16 %v1326, %v1325
      %v1377 = vpack.c.b16 %v1328, %v1327
      %v1378 = vpack.c.b16 %v1330, %v1329
      %v1379 = vpack.c.b16 %v1332, %v1331
      %v1380 = vpack.c.b16 %v1334, %v1333
      %v1381 = vpack.c.b16 %v1336, %v1335
      %v1382 = vpack.c.b16 %v1338, %v1337
      %v1383 = vpack.c.b16 %v1340, %v1339
      %v1384 = vpack.c.b16 %v1342, %v1341
      %v1385 = vpack.c.b16 %v1344, %v1343
      %v1386 = vpack.c.b16 %v1346, %v1345
      %v1387 = vpack.c.b16 %v1348, %v1347
      %v1388 = vpack.c.b16 %v1350, %v1349
      %v1389 = vpack.c.b16 %v1352, %v1351
      %v1390 = vpack.c.b16 %v1354, %v1353
      %v1391 = vpack.c.b16 %v1356, %v1355
      %v1392 = vpack.c.b16 %v1358, %v1357
      %v1393 = vpack.c.b16 %v1360, %v1359
      %v1394 = vpack.c.b16 %v1362, %v1361
      %v1395 = vpack.c.b16 %v1364, %v1363
      %v1396 = vpack.c.b16 %v1366, %v1365
      %v1397 = vpack.c.b16 %v1368, %v1367
      %v1398 = vpack.c.b16 %v1370, %v1369
      %v1399 = vpack.c.b16 %v1372, %v1371
      %1427 = vmatpush.bf16.msra.mxu0 %v1380
      %1428 = vmatpush.bf16.msra.mxu0 %v1379
      %1429 = vmatpush.bf16.msra.mxu0 %v1378
      %1430 = vmatpush.bf16.msra.mxu0 %v1377
      %1431 = vmatpush.bf16.msra.mxu0 %v1376
      %1432 = vmatpush.bf16.msra.mxu0 %v1375
      %1433 = vmatpush.bf16.msra.mxu0 %v1374
      %1434 = vmatpush.bf16.msra.mxu0 %v1373
      %1435 = vmatmul.bf16.gmra.mxu0 %v959
      %v1436 = vpop.f32.mrf.mxu0
      %v1437 = vadd.f32 0.0, %v1436
      %v1438 = vpop.f32.mrf.mxu0
      %v1439 = vadd.f32 0.0, %v1438
      %1440 = vdwg.mxu0
      %1441 = vmatpush.bf16.msra.mxu0 %v1388
      %1442 = vmatpush.bf16.msra.mxu0 %v1387
      %1443 = vmatpush.bf16.msra.mxu0 %v1386
      %1444 = vmatpush.bf16.msra.mxu0 %v1385
      %1445 = vmatpush.bf16.msra.mxu0 %v1384
      %1446 = vmatpush.bf16.msra.mxu0 %v1383
      %1447 = vmatpush.bf16.msra.mxu0 %v1382
      %1448 = vmatpush.bf16.msra.mxu0 %v1381
      %1449 = vmatmul.bf16.gmra.mxu0 %v960
      %v1450 = vpop.f32.mrf.mxu0
      %v1451 = vadd.f32 %v1437, %v1450
      %v1452 = vpop.f32.mrf.mxu0
      %v1453 = vadd.f32 %v1439, %v1452
      %1454 = vdwg.mxu0
      %1455 = vmatpush.bf16.msra.mxu0 %v1396
      %1456 = vmatpush.bf16.msra.mxu0 %v1395
      %1457 = vmatpush.bf16.msra.mxu0 %v1394
      %1458 = vmatpush.bf16.msra.mxu0 %v1393
      %1459 = vmatpush.bf16.msra.mxu0 %v1392
      %1460 = vmatpush.bf16.msra.mxu0 %v1391
      %1461 = vmatpush.bf16.msra.mxu0 %v1390
      %1462 = vmatpush.bf16.msra.mxu0 %v1389
      %1463 = vmatmul.bf16.gmra.mxu0 %v961
      %v1464 = vpop.f32.mrf.mxu0
      %v1465 = vadd.f32 %v1451, %v1464
      %v1466 = vpop.f32.mrf.mxu0
      %v1467 = vadd.f32 %v1453, %v1466
      %1468 = vdwg.mxu0
      %1469 = vmatpush.bf16.msra.mxu0 0
      %1470 = vmatpush.bf16.msra.mxu0 0
      %1471 = vmatpush.bf16.msra.mxu0 0
      %1472 = vmatpush.bf16.msra.mxu0 0
      %1473 = vmatpush.bf16.msra.mxu0 0
      %1474 = vmatpush.bf16.msra.mxu0 %v1399
      %1475 = vmatpush.bf16.msra.mxu0 %v1398
      %1476 = vmatpush.bf16.msra.mxu0 %v1397
      %1477 = vmatmul.bf16.gmra.mxu0 %v1130
      %v1478 = vpop.f32.mrf.mxu0
      %v1479 = vadd.f32 %v1465, %v1478
      %v1480 = vpop.f32.mrf.mxu0
      %v1481 = vadd.f32 %v1467, %v1480
      %1482 = vdwg.mxu0
      %v1483 = vpack.c.bf16 %v1479, %v1479
      %v1484 = vpack.c.bf16 %v1481, %v1481
      %s1485 = scalar_lea.vmem %s229, 8
      %1486 = vst [vmem:[%s1485] sm:$0xf] %v1483
      %1487 = vst [vmem:[%s1485 + $0x4] sm:$0xf] %v1484
      %v1488 = vmul.f32 %v1479, %v1193
      %v1489 = vmul.f32 %v1481, %v1193
      %1490 = vadd.xlane.f32.xlu0 %v1488
      %v1491 = vpop.xlane.xlu0 %1490
      %1492 = vadd.xlane.f32.xlu0 %v1489
      %v1493 = vpop.xlane.xlu0 %1492
      %v1494 = vadd.f32 %v1201, %v1491
      %v1495 = vadd.f32 %v1202, %v1493
      %v1496 = vmul.f32 %v1488, %v1488
      %v1497 = vmul.f32 %v1489, %v1489
      %1498 = vadd.xlane.f32.xlu0 %v1496
      %v1499 = vpop.xlane.xlu0 %1498
      %1500 = vadd.xlane.f32.xlu0 %v1497
      %v1501 = vpop.xlane.xlu0 %1500
      %v1502 = vadd.f32 %v1209, %v1499
      %v1503 = vadd.f32 %v1210, %v1501
      %v1504 = vld [vmem:[#allocation2 + $0x90] sm:$0xf]
      %v1505 = vld [vmem:[#allocation2 + $0x94] sm:$0xf]
      %v1506 = vld [vmem:[#allocation2 + $0x98] sm:$0xf]
      %v1507 = vld [vmem:[#allocation2 + $0x9c] sm:$0xf]
      %v1508 = vld [vmem:[#allocation2 + $0xa0] sm:$0xf]
      %v1509 = vld [vmem:[#allocation2 + $0xa4] sm:$0xf]
      %v1510 = vld [vmem:[#allocation2 + $0xa8] sm:$0xf]
      %v1511 = vld [vmem:[#allocation2 + $0xac] sm:$0xf]
      %v1512 = vld [vmem:[#allocation2 + $0xb0] sm:$0xf]
      %v1513 = vld [vmem:[#allocation2 + $0xb4] sm:$0xf]
      %v1514 = vld [vmem:[#allocation2 + $0xb8] sm:$0xf]
      %v1515 = vld [vmem:[#allocation2 + $0xbc] sm:$0xf]
      %v1516 = vld [vmem:[#allocation2 + $0xc0] sm:$0xf]
      %v1517 = vld [vmem:[#allocation2 + $0xc4] sm:$0xf]
      %v1518 = vld [vmem:[#allocation2 + $0xc8] sm:$0xf]
      %v1519 = vld [vmem:[#allocation2 + $0xcc] sm:$0xf]
      %v1520 = vld [vmem:[#allocation2 + $0xd0] sm:$0xf]
      %v1521 = vld [vmem:[#allocation2 + $0xd4] sm:$0xf]
      %v1522 = vld [vmem:[#allocation2 + $0xd8] sm:$0xf]
      %v1523 = vld [vmem:[#allocation2 + $0xdc] sm:$0xf]
      %v1524 = vld [vmem:[#allocation2 + $0xe0] sm:$0xf]
      %v1525 = vld [vmem:[#allocation2 + $0xe4] sm:$0xf]
      %v1526 = vld [vmem:[#allocation2 + $0xe8] sm:$0xf]
      %v1527 = vld [vmem:[#allocation2 + $0xec] sm:$0xf]
      %v1528 = vld [vmem:[#allocation2 + $0xf0] sm:$0xf]
      %v1529 = vld [vmem:[#allocation2 + $0xf4] sm:$0xf]
      %v1530 = vld [vmem:[#allocation2 + $0xf8] sm:$0xf]
      %v1531 = vld [vmem:[#allocation2 + $0xfc] sm:$0xf]
      %v1532 = vld [vmem:[#allocation2 + $0x100] sm:$0xf]
      %v1533 = vld [vmem:[#allocation2 + $0x104] sm:$0xf]
      %v1534 = vld [vmem:[#allocation2 + $0x108] sm:$0xf]
      %v1535 = vld [vmem:[#allocation2 + $0x10c] sm:$0xf]
      %v1536 = vld [vmem:[#allocation2 + $0x110] sm:$0xf]
      %v1537 = vld [vmem:[#allocation2 + $0x114] sm:$0xf]
      %v1538 = vld [vmem:[#allocation2 + $0x118] sm:$0xf]
      %v1539 = vld [vmem:[#allocation2 + $0x11c] sm:$0xf]
      %v1540 = vld [vmem:[#allocation2 + $0x120] sm:$0xf]
      %v1541 = vld [vmem:[#allocation2 + $0x124] sm:$0xf]
      %v1542 = vld [vmem:[#allocation2 + $0x128] sm:$0xf]
      %v1543 = vld [vmem:[#allocation2 + $0x12c] sm:$0xf]
      %v1544 = vld [vmem:[#allocation2 + $0x130] sm:$0xf]
      %v1545 = vld [vmem:[#allocation2 + $0x134] sm:$0xf]
      %v1546 = vld [vmem:[#allocation2 + $0x138] sm:$0xf]
      %v1547 = vld [vmem:[#allocation2 + $0x13c] sm:$0xf]
      %v1548 = vld [vmem:[#allocation2 + $0x140] sm:$0xf]
      %v1549 = vld [vmem:[#allocation2 + $0x144] sm:$0xf]
      %v1550 = vld [vmem:[#allocation2 + $0x148] sm:$0xf]
      %v1551 = vld [vmem:[#allocation2 + $0x14c] sm:$0xf]
      %v1552 = vld [vmem:[#allocation2 + $0x150] sm:$0xf]
      %v1553 = vld [vmem:[#allocation2 + $0x154] sm:$0xf]
      %v1554 = vld [vmem:[#allocation2 + $0x158] sm:$0xf]
      %v1555 = vld [vmem:[#allocation2 + $0x15c] sm:$0xf]
      %v1556 = vld [vmem:[#allocation2 + $0x160] sm:$0xf]
      %v1557 = vld [vmem:[#allocation2 + $0x164] sm:$0xf]
      %v1612 = vunpack.c.l.b16 %v1504
      %v1613 = vunpack.c.l.b16 %v1505
      %v1614 = vunpack.c.l.b16 %v1506
      %v1615 = vunpack.c.l.b16 %v1507
      %v1616 = vunpack.c.l.b16 %v1508
      %v1617 = vunpack.c.l.b16 %v1509
      %v1618 = vunpack.c.l.b16 %v1510
      %v1619 = vunpack.c.l.b16 %v1511
      %v1620 = vunpack.c.l.b16 %v1512
      %v1621 = vunpack.c.l.b16 %v1513
      %v1622 = vunpack.c.l.b16 %v1514
      %v1623 = vunpack.c.l.b16 %v1515
      %v1624 = vunpack.c.l.b16 %v1516
      %v1625 = vunpack.c.l.b16 %v1517
      %v1626 = vunpack.c.l.b16 %v1518
      %v1627 = vunpack.c.l.b16 %v1519
      %v1628 = vunpack.c.l.b16 %v1520
      %v1629 = vunpack.c.l.b16 %v1521
      %v1630 = vunpack.c.l.b16 %v1522
      %v1631 = vunpack.c.l.b16 %v1523
      %v1632 = vunpack.c.l.b16 %v1524
      %v1633 = vunpack.c.l.b16 %v1525
      %v1634 = vunpack.c.l.b16 %v1526
      %v1635 = vunpack.c.l.b16 %v1527
      %v1636 = vunpack.c.l.b16 %v1528
      %v1637 = vunpack.c.l.b16 %v1529
      %v1638 = vunpack.c.l.b16 %v1530
      %v1639 = vunpack.c.l.b16 %v1531
      %v1640 = vunpack.c.l.b16 %v1532
      %v1641 = vunpack.c.l.b16 %v1533
      %v1642 = vunpack.c.l.b16 %v1534
      %v1643 = vunpack.c.l.b16 %v1535
      %v1644 = vunpack.c.l.b16 %v1536
      %v1645 = vunpack.c.l.b16 %v1537
      %v1646 = vunpack.c.l.b16 %v1538
      %v1647 = vunpack.c.l.b16 %v1539
      %v1648 = vunpack.c.l.b16 %v1540
      %v1649 = vunpack.c.l.b16 %v1541
      %v1650 = vunpack.c.l.b16 %v1542
      %v1651 = vunpack.c.l.b16 %v1543
      %v1652 = vunpack.c.l.b16 %v1544
      %v1653 = vunpack.c.l.b16 %v1545
      %v1654 = vunpack.c.l.b16 %v1546
      %v1655 = vunpack.c.l.b16 %v1547
      %v1656 = vunpack.c.l.b16 %v1548
      %v1657 = vunpack.c.l.b16 %v1549
      %v1658 = vunpack.c.l.b16 %v1550
      %v1659 = vunpack.c.l.b16 %v1551
      %v1660 = vunpack.c.l.b16 %v1552
      %v1661 = vunpack.c.l.b16 %v1553
      %v1662 = vunpack.c.l.b16 %v1554
      %v1663 = vunpack.c.l.b16 %v1555
      %v1664 = vunpack.c.l.b16 %v1556
      %v1665 = vunpack.c.l.b16 %v1557
      %v1666 = vpack.c.b16 %v1613, %v1612
      %v1667 = vpack.c.b16 %v1615, %v1614
      %v1668 = vpack.c.b16 %v1617, %v1616
      %v1669 = vpack.c.b16 %v1619, %v1618
      %v1670 = vpack.c.b16 %v1621, %v1620
      %v1671 = vpack.c.b16 %v1623, %v1622
      %v1672 = vpack.c.b16 %v1625, %v1624
      %v1673 = vpack.c.b16 %v1627, %v1626
      %v1674 = vpack.c.b16 %v1629, %v1628
      %v1675 = vpack.c.b16 %v1631, %v1630
      %v1676 = vpack.c.b16 %v1633, %v1632
      %v1677 = vpack.c.b16 %v1635, %v1634
      %v1678 = vpack.c.b16 %v1637, %v1636
      %v1679 = vpack.c.b16 %v1639, %v1638
      %v1680 = vpack.c.b16 %v1641, %v1640
      %v1681 = vpack.c.b16 %v1643, %v1642
      %v1682 = vpack.c.b16 %v1645, %v1644
      %v1683 = vpack.c.b16 %v1647, %v1646
      %v1684 = vpack.c.b16 %v1649, %v1648
      %v1685 = vpack.c.b16 %v1651, %v1650
      %v1686 = vpack.c.b16 %v1653, %v1652
      %v1687 = vpack.c.b16 %v1655, %v1654
      %v1688 = vpack.c.b16 %v1657, %v1656
      %v1689 = vpack.c.b16 %v1659, %v1658
      %v1690 = vpack.c.b16 %v1661, %v1660
      %v1691 = vpack.c.b16 %v1663, %v1662
      %v1692 = vpack.c.b16 %v1665, %v1664
      %1720 = vmatpush.bf16.msra.mxu0 %v1673
      %1721 = vmatpush.bf16.msra.mxu0 %v1672
      %1722 = vmatpush.bf16.msra.mxu0 %v1671
      %1723 = vmatpush.bf16.msra.mxu0 %v1670
      %1724 = vmatpush.bf16.msra.mxu0 %v1669
      %1725 = vmatpush.bf16.msra.mxu0 %v1668
      %1726 = vmatpush.bf16.msra.mxu0 %v1667
      %1727 = vmatpush.bf16.msra.mxu0 %v1666
      %1728 = vmatmul.bf16.gmra.mxu0 %v959
      %v1729 = vpop.f32.mrf.mxu0
      %v1730 = vadd.f32 0.0, %v1729
      %v1731 = vpop.f32.mrf.mxu0
      %v1732 = vadd.f32 0.0, %v1731
      %1733 = vdwg.mxu0
      %1734 = vmatpush.bf16.msra.mxu0 %v1681
      %1735 = vmatpush.bf16.msra.mxu0 %v1680
      %1736 = vmatpush.bf16.msra.mxu0 %v1679
      %1737 = vmatpush.bf16.msra.mxu0 %v1678
      %1738 = vmatpush.bf16.msra.mxu0 %v1677
      %1739 = vmatpush.bf16.msra.mxu0 %v1676
      %1740 = vmatpush.bf16.msra.mxu0 %v1675
      %1741 = vmatpush.bf16.msra.mxu0 %v1674
      %1742 = vmatmul.bf16.gmra.mxu0 %v960
      %v1743 = vpop.f32.mrf.mxu0
      %v1744 = vadd.f32 %v1730, %v1743
      %v1745 = vpop.f32.mrf.mxu0
      %v1746 = vadd.f32 %v1732, %v1745
      %1747 = vdwg.mxu0
      %1748 = vmatpush.bf16.msra.mxu0 %v1689
      %1749 = vmatpush.bf16.msra.mxu0 %v1688
      %1750 = vmatpush.bf16.msra.mxu0 %v1687
      %1751 = vmatpush.bf16.msra.mxu0 %v1686
      %1752 = vmatpush.bf16.msra.mxu0 %v1685
      %1753 = vmatpush.bf16.msra.mxu0 %v1684
      %1754 = vmatpush.bf16.msra.mxu0 %v1683
      %1755 = vmatpush.bf16.msra.mxu0 %v1682
      %1756 = vmatmul.bf16.gmra.mxu0 %v961
      %v1757 = vpop.f32.mrf.mxu0
      %v1758 = vadd.f32 %v1744, %v1757
      %v1759 = vpop.f32.mrf.mxu0
      %v1760 = vadd.f32 %v1746, %v1759
      %1761 = vdwg.mxu0
      %1762 = vmatpush.bf16.msra.mxu0 0
      %1763 = vmatpush.bf16.msra.mxu0 0
      %1764 = vmatpush.bf16.msra.mxu0 0
      %1765 = vmatpush.bf16.msra.mxu0 0
      %1766 = vmatpush.bf16.msra.mxu0 0
      %1767 = vmatpush.bf16.msra.mxu0 %v1692
      %1768 = vmatpush.bf16.msra.mxu0 %v1691
      %1769 = vmatpush.bf16.msra.mxu0 %v1690
      %1770 = vmatmul.bf16.gmra.mxu0 %v1130
      %v1771 = vpop.f32.mrf.mxu0
      %v1772 = vadd.f32 %v1758, %v1771
      %v1773 = vpop.f32.mrf.mxu0
      %v1774 = vadd.f32 %v1760, %v1773
      %1775 = vdwg.mxu0
      %v1776 = vpack.c.bf16 %v1772, %v1772
      %v1777 = vpack.c.bf16 %v1774, %v1774
      %s1778 = scalar_lea.vmem %s229, 16
      %1779 = vst [vmem:[%s1778] sm:$0xf] %v1776
      %1780 = vst [vmem:[%s1778 + $0x4] sm:$0xf] %v1777
      %v1781 = vmul.f32 %v1772, %v1193
      %v1782 = vmul.f32 %v1774, %v1193
      %1783 = vadd.xlane.f32.xlu0 %v1781
      %v1784 = vpop.xlane.xlu0 %1783
      %1785 = vadd.xlane.f32.xlu0 %v1782
      %v1786 = vpop.xlane.xlu0 %1785
      %v1787 = vadd.f32 %v1494, %v1784
      %v1788 = vadd.f32 %v1495, %v1786
      %v1789 = vmul.f32 %v1781, %v1781
      %v1790 = vmul.f32 %v1782, %v1782
      %1791 = vadd.xlane.f32.xlu0 %v1789
      %v1792 = vpop.xlane.xlu0 %1791
      %1793 = vadd.xlane.f32.xlu0 %v1790
      %v1794 = vpop.xlane.xlu0 %1793
      %v1795 = vadd.f32 %v1502, %v1792
      %v1796 = vadd.f32 %v1503, %v1794
      %v1797 = vld [vmem:[#allocation2 + $0xd8] sm:$0xf]
      %v1798 = vld [vmem:[#allocation2 + $0xdc] sm:$0xf]
      %v1799 = vld [vmem:[#allocation2 + $0xe0] sm:$0xf]
      %v1800 = vld [vmem:[#allocation2 + $0xe4] sm:$0xf]
      %v1801 = vld [vmem:[#allocation2 + $0xe8] sm:$0xf]
      %v1802 = vld [vmem:[#allocation2 + $0xec] sm:$0xf]
      %v1803 = vld [vmem:[#allocation2 + $0xf0] sm:$0xf]
      %v1804 = vld [vmem:[#allocation2 + $0xf4] sm:$0xf]
      %v1805 = vld [vmem:[#allocation2 + $0xf8] sm:$0xf]
      %v1806 = vld [vmem:[#allocation2 + $0xfc] sm:$0xf]
      %v1807 = vld [vmem:[#allocation2 + $0x100] sm:$0xf]
      %v1808 = vld [vmem:[#allocation2 + $0x104] sm:$0xf]
      %v1809 = vld [vmem:[#allocation2 + $0x108] sm:$0xf]
      %v1810 = vld [vmem:[#allocation2 + $0x10c] sm:$0xf]
      %v1811 = vld [vmem:[#allocation2 + $0x110] sm:$0xf]
      %v1812 = vld [vmem:[#allocation2 + $0x114] sm:$0xf]
      %v1813 = vld [vmem:[#allocation2 + $0x118] sm:$0xf]
      %v1814 = vld [vmem:[#allocation2 + $0x11c] sm:$0xf]
      %v1815 = vld [vmem:[#allocation2 + $0x120] sm:$0xf]
      %v1816 = vld [vmem:[#allocation2 + $0x124] sm:$0xf]
      %v1817 = vld [vmem:[#allocation2 + $0x128] sm:$0xf]
      %v1818 = vld [vmem:[#allocation2 + $0x12c] sm:$0xf]
      %v1819 = vld [vmem:[#allocation2 + $0x130] sm:$0xf]
      %v1820 = vld [vmem:[#allocation2 + $0x134] sm:$0xf]
      %v1821 = vld [vmem:[#allocation2 + $0x138] sm:$0xf]
      %v1822 = vld [vmem:[#allocation2 + $0x13c] sm:$0xf]
      %v1823 = vld [vmem:[#allocation2 + $0x140] sm:$0xf]
      %v1824 = vld [vmem:[#allocation2 + $0x144] sm:$0xf]
      %v1825 = vld [vmem:[#allocation2 + $0x148] sm:$0xf]
      %v1826 = vld [vmem:[#allocation2 + $0x14c] sm:$0xf]
      %v1827 = vld [vmem:[#allocation2 + $0x150] sm:$0xf]
      %v1828 = vld [vmem:[#allocation2 + $0x154] sm:$0xf]
      %v1829 = vld [vmem:[#allocation2 + $0x158] sm:$0xf]
      %v1830 = vld [vmem:[#allocation2 + $0x15c] sm:$0xf]
      %v1831 = vld [vmem:[#allocation2 + $0x160] sm:$0xf]
      %v1832 = vld [vmem:[#allocation2 + $0x164] sm:$0xf]
      %v1833 = vld [vmem:[#allocation2 + $0x168] sm:$0xf]
      %v1834 = vld [vmem:[#allocation2 + $0x16c] sm:$0xf]
      %v1835 = vld [vmem:[#allocation2 + $0x170] sm:$0xf]
      %v1836 = vld [vmem:[#allocation2 + $0x174] sm:$0xf]
      %v1837 = vld [vmem:[#allocation2 + $0x178] sm:$0xf]
      %v1838 = vld [vmem:[#allocation2 + $0x17c] sm:$0xf]
      %v1839 = vld [vmem:[#allocation2 + $0x180] sm:$0xf]
      %v1840 = vld [vmem:[#allocation2 + $0x184] sm:$0xf]
      %v1841 = vld [vmem:[#allocation2 + $0x188] sm:$0xf]
      %v1842 = vld [vmem:[#allocation2 + $0x18c] sm:$0xf]
      %v1843 = vld [vmem:[#allocation2 + $0x190] sm:$0xf]
      %v1844 = vld [vmem:[#allocation2 + $0x194] sm:$0xf]
      %v1845 = vld [vmem:[#allocation2 + $0x198] sm:$0xf]
      %v1846 = vld [vmem:[#allocation2 + $0x19c] sm:$0xf]
      %v1847 = vld [vmem:[#allocation2 + $0x1a0] sm:$0xf]
      %v1848 = vld [vmem:[#allocation2 + $0x1a4] sm:$0xf]
      %v1849 = vld [vmem:[#allocation2 + $0x1a8] sm:$0xf]
      %v1850 = vld [vmem:[#allocation2 + $0x1ac] sm:$0xf]
      %v1905 = vunpack.c.l.b16 %v1797
      %v1906 = vunpack.c.l.b16 %v1798
      %v1907 = vunpack.c.l.b16 %v1799
      %v1908 = vunpack.c.l.b16 %v1800
      %v1909 = vunpack.c.l.b16 %v1801
      %v1910 = vunpack.c.l.b16 %v1802
      %v1911 = vunpack.c.l.b16 %v1803
      %v1912 = vunpack.c.l.b16 %v1804
      %v1913 = vunpack.c.l.b16 %v1805
      %v1914 = vunpack.c.l.b16 %v1806
      %v1915 = vunpack.c.l.b16 %v1807
      %v1916 = vunpack.c.l.b16 %v1808
      %v1917 = vunpack.c.l.b16 %v1809
      %v1918 = vunpack.c.l.b16 %v1810
      %v1919 = vunpack.c.l.b16 %v1811
      %v1920 = vunpack.c.l.b16 %v1812
      %v1921 = vunpack.c.l.b16 %v1813
      %v1922 = vunpack.c.l.b16 %v1814
      %v1923 = vunpack.c.l.b16 %v1815
      %v1924 = vunpack.c.l.b16 %v1816
      %v1925 = vunpack.c.l.b16 %v1817
      %v1926 = vunpack.c.l.b16 %v1818
      %v1927 = vunpack.c.l.b16 %v1819
      %v1928 = vunpack.c.l.b16 %v1820
      %v1929 = vunpack.c.l.b16 %v1821
      %v1930 = vunpack.c.l.b16 %v1822
      %v1931 = vunpack.c.l.b16 %v1823
      %v1932 = vunpack.c.l.b16 %v1824
      %v1933 = vunpack.c.l.b16 %v1825
      %v1934 = vunpack.c.l.b16 %v1826
      %v1935 = vunpack.c.l.b16 %v1827
      %v1936 = vunpack.c.l.b16 %v1828
      %v1937 = vunpack.c.l.b16 %v1829
      %v1938 = vunpack.c.l.b16 %v1830
      %v1939 = vunpack.c.l.b16 %v1831
      %v1940 = vunpack.c.l.b16 %v1832
      %v1941 = vunpack.c.l.b16 %v1833
      %v1942 = vunpack.c.l.b16 %v1834
      %v1943 = vunpack.c.l.b16 %v1835
      %v1944 = vunpack.c.l.b16 %v1836
      %v1945 = vunpack.c.l.b16 %v1837
      %v1946 = vunpack.c.l.b16 %v1838
      %v1947 = vunpack.c.l.b16 %v1839
      %v1948 = vunpack.c.l.b16 %v1840
      %v1949 = vunpack.c.l.b16 %v1841
      %v1950 = vunpack.c.l.b16 %v1842
      %v1951 = vunpack.c.l.b16 %v1843
      %v1952 = vunpack.c.l.b16 %v1844
      %v1953 = vunpack.c.l.b16 %v1845
      %v1954 = vunpack.c.l.b16 %v1846
      %v1955 = vunpack.c.l.b16 %v1847
      %v1956 = vunpack.c.l.b16 %v1848
      %v1957 = vunpack.c.l.b16 %v1849
      %v1958 = vunpack.c.l.b16 %v1850
      %v1959 = vpack.c.b16 %v1906, %v1905
      %v1960 = vpack.c.b16 %v1908, %v1907
      %v1961 = vpack.c.b16 %v1910, %v1909
      %v1962 = vpack.c.b16 %v1912, %v1911
      %v1963 = vpack.c.b16 %v1914, %v1913
      %v1964 = vpack.c.b16 %v1916, %v1915
      %v1965 = vpack.c.b16 %v1918, %v1917
      %v1966 = vpack.c.b16 %v1920, %v1919
      %v1967 = vpack.c.b16 %v1922, %v1921
      %v1968 = vpack.c.b16 %v1924, %v1923
      %v1969 = vpack.c.b16 %v1926, %v1925
      %v1970 = vpack.c.b16 %v1928, %v1927
      %v1971 = vpack.c.b16 %v1930, %v1929
      %v1972 = vpack.c.b16 %v1932, %v1931
      %v1973 = vpack.c.b16 %v1934, %v1933
      %v1974 = vpack.c.b16 %v1936, %v1935
      %v1975 = vpack.c.b16 %v1938, %v1937
      %v1976 = vpack.c.b16 %v1940, %v1939
      %v1977 = vpack.c.b16 %v1942, %v1941
      %v1978 = vpack.c.b16 %v1944, %v1943
      %v1979 = vpack.c.b16 %v1946, %v1945
      %v1980 = vpack.c.b16 %v1948, %v1947
      %v1981 = vpack.c.b16 %v1950, %v1949
      %v1982 = vpack.c.b16 %v1952, %v1951
      %v1983 = vpack.c.b16 %v1954, %v1953
      %v1984 = vpack.c.b16 %v1956, %v1955
      %v1985 = vpack.c.b16 %v1958, %v1957
      %2013 = vmatpush.bf16.msra.mxu0 %v1966
      %2014 = vmatpush.bf16.msra.mxu0 %v1965
      %2015 = vmatpush.bf16.msra.mxu0 %v1964
      %2016 = vmatpush.bf16.msra.mxu0 %v1963
      %2017 = vmatpush.bf16.msra.mxu0 %v1962
      %2018 = vmatpush.bf16.msra.mxu0 %v1961
      %2019 = vmatpush.bf16.msra.mxu0 %v1960
      %2020 = vmatpush.bf16.msra.mxu0 %v1959
      %2021 = vmatmul.bf16.gmra.mxu0 %v959
      %v2022 = vpop.f32.mrf.mxu0
      %v2023 = vadd.f32 0.0, %v2022
      %v2024 = vpop.f32.mrf.mxu0
      %v2025 = vadd.f32 0.0, %v2024
      %2026 = vdwg.mxu0
      %2027 = vmatpush.bf16.msra.mxu0 %v1974
      %2028 = vmatpush.bf16.msra.mxu0 %v1973
      %2029 = vmatpush.bf16.msra.mxu0 %v1972
      %2030 = vmatpush.bf16.msra.mxu0 %v1971
      %2031 = vmatpush.bf16.msra.mxu0 %v1970
      %2032 = vmatpush.bf16.msra.mxu0 %v1969
      %2033 = vmatpush.bf16.msra.mxu0 %v1968
      %2034 = vmatpush.bf16.msra.mxu0 %v1967
      %2035 = vmatmul.bf16.gmra.mxu0 %v960
      %v2036 = vpop.f32.mrf.mxu0
      %v2037 = vadd.f32 %v2023, %v2036
      %v2038 = vpop.f32.mrf.mxu0
      %v2039 = vadd.f32 %v2025, %v2038
      %2040 = vdwg.mxu0
      %2041 = vmatpush.bf16.msra.mxu0 %v1982
      %2042 = vmatpush.bf16.msra.mxu0 %v1981
      %2043 = vmatpush.bf16.msra.mxu0 %v1980
      %2044 = vmatpush.bf16.msra.mxu0 %v1979
      %2045 = vmatpush.bf16.msra.mxu0 %v1978
      %2046 = vmatpush.bf16.msra.mxu0 %v1977
      %2047 = vmatpush.bf16.msra.mxu0 %v1976
      %2048 = vmatpush.bf16.msra.mxu0 %v1975
      %2049 = vmatmul.bf16.gmra.mxu0 %v961
      %v2050 = vpop.f32.mrf.mxu0
      %v2051 = vadd.f32 %v2037, %v2050
      %v2052 = vpop.f32.mrf.mxu0
      %v2053 = vadd.f32 %v2039, %v2052
      %2054 = vdwg.mxu0
      %2055 = vmatpush.bf16.msra.mxu0 0
      %2056 = vmatpush.bf16.msra.mxu0 0
      %2057 = vmatpush.bf16.msra.mxu0 0
      %2058 = vmatpush.bf16.msra.mxu0 0
      %2059 = vmatpush.bf16.msra.mxu0 0
      %2060 = vmatpush.bf16.msra.mxu0 %v1985
      %2061 = vmatpush.bf16.msra.mxu0 %v1984
      %2062 = vmatpush.bf16.msra.mxu0 %v1983
      %2063 = vmatmul.bf16.gmra.mxu0 %v1130
      %v2064 = vpop.f32.mrf.mxu0
      %v2065 = vadd.f32 %v2051, %v2064
      %v2066 = vpop.f32.mrf.mxu0
      %v2067 = vadd.f32 %v2053, %v2066
      %2068 = vdwg.mxu0
      %v2069 = vpack.c.bf16 %v2065, %v2065
      %v2070 = vpack.c.bf16 %v2067, %v2067
      %s2071 = scalar_lea.vmem %s229, 24
      %2072 = vst [vmem:[%s2071] sm:$0xf] %v2069
      %2073 = vst [vmem:[%s2071 + $0x4] sm:$0xf] %v2070
      %v2074 = vmul.f32 %v2065, %v1193
      %v2075 = vmul.f32 %v2067, %v1193
      %2076 = vadd.xlane.f32.xlu0 %v2074
      %v2077 = vpop.xlane.xlu0 %2076
      %2078 = vadd.xlane.f32.xlu0 %v2075
      %v2079 = vpop.xlane.xlu0 %2078
      %v2080 = vadd.f32 %v1787, %v2077
      %v2081 = vadd.f32 %v1788, %v2079
      %v2082 = vmul.f32 %v2074, %v2074
      %v2083 = vmul.f32 %v2075, %v2075
      %2084 = vadd.xlane.f32.xlu0 %v2082
      %v2085 = vpop.xlane.xlu0 %2084
      %2086 = vadd.xlane.f32.xlu0 %v2083
      %v2087 = vpop.xlane.xlu0 %2086
      %v2088 = vadd.f32 %v1795, %v2085
      %v2089 = vadd.f32 %v1796, %v2087
      %v2090 = vld [vmem:[%s235] sm:$0xff]
      %v2091 = vld [vmem:[%s235 + $0x8] sm:$0xff]
      %v2092 = vadd.f32 %v2090, %v2080
      %v2093 = vadd.f32 %v2091, %v2081
      %vm2094 = vcmask 7168
      %2095 = vst.msk [vmem:[%s235] sm:$0xff] %vm2094, %v2092
      %2096 = vst.msk [vmem:[%s235 + $0x8] sm:$0xff] %vm2094, %v2093
      %v2097 = vld [vmem:[%s235] sm:$0xff]
      %v2098 = vld [vmem:[%s235 + $0x8] sm:$0xff]
      %v2099 = vadd.f32 %v2097, %v2088
      %v2100 = vadd.f32 %v2098, %v2089
      %vm2101 = vcmask 15368
      %2102 = vst.msk [vmem:[%s235] sm:$0xff] %vm2101, %v2099
      %2103 = vst.msk [vmem:[%s235 + $0x8] sm:$0xff] %vm2101, %v2100
      %s2104 = smul.u32 4, %s21
      %p2105 = scmp.lt.s32.totalorder %s20, 1
      %s2106 = scalar_select %p2105, %s20, 1
      %p2107 = scmp.lt.s32.totalorder %s2104, 3
      %s2108 = scalar_select %p2107, %s2104, 3
      %s2109 = smul.addr %s2108, 2
      %s2110 = smul.addr %s2106, 8
      %s2111 = sadd.s32 %s2109, %s2110
      %s2112 = smul.addr %s2111, 4
      %s2113 = scalar_lea.vmem %s3, %s2112
      %p2114 = scmp.lt.s32.totalorder %s20, 1
      %s2115 = scalar_select %p2114, %s20, 1
      %s2116 = smul.addr %s2115, 2
      %s2117 = smul.addr %s2116, 8
      %s2118 = scalar_lea.vmem %s4, %s2117
      // Predicated region
      $region37: #{encoder3d_forward.12} parent=31 // pred_check
        %p2119 = pneg %p116
      $region38: #{encoder3d_forward.12} parent=31 // pred_check_branch
        %2121 = sbr.rel (%p2119) target = $region40
      $region39: #{encoder3d_forward.12} parent=31 // pred_region
        %s2122 = smul.u32 4, %s21
      $region40: #{encoder3d_forward.12} parent=31 // pred_fallthru
        _
      // Predicated region
      $region41: #{encoder3d_forward.12} parent=31 // pred_check
        %p2123 = pneg %p142
      $region42: #{encoder3d_forward.12} parent=31 // pred_check_branch
        %2125 = sbr.rel (%p2123) target = $region44
      $region43: #{encoder3d_forward.12} parent=31 // pred_region
        _
      $region44: #{encoder3d_forward.12} parent=31 // pred_fallthru
        _
    $region32: #{encoder3d_forward.12} parent=5 // pred_fallthru
      _
    %p2126 = scmp.le.s32.totalorder 2, %s11
    // Predicated region
    $region45: #{encoder3d_forward.12} parent=5 // pred_check
      %p2127 = pneg %p2126
    $region46: #{encoder3d_forward.12} parent=5 // pred_check_branch
      %2129 = sbr.rel (%p2127) target = $region48
    $region47: #{encoder3d_forward.12} parent=5 // pred_region
      %s2130 = ssub.s32 %s11, 2
      // Predicated region
      $region49: #{encoder3d_forward.12} parent=47 // pred_check
        %p2131 = pneg %p122
      $region50: #{encoder3d_forward.12} parent=47 // pred_check_branch
        %2133 = sbr.rel (%p2131) target = $region52
      $region51: #{encoder3d_forward.12} parent=47 // pred_region
        %s2134 = smul.u32 4, %s23
        %p2135 = scmp.lt.s32.totalorder %s22, 1
        %s2136 = scalar_select %p2135, %s22, 1
        %p2137 = scmp.lt.s32.totalorder %s2134, 3
        %s2138 = scalar_select %p2137, %s2134, 3
        %s2139 = smul.addr %s2138, 2
        %s2140 = smul.addr %s2136, 8
        %s2141 = sadd.s32 %s2139, %s2140
        %s2142 = smul.addr %s2141, 4
        %s2143 = scalar_lea.vmem %s3, %s2142
      $region52: #{encoder3d_forward.12} parent=47 // pred_fallthru
        _
      // Predicated region
      $region53: #{encoder3d_forward.12} parent=47 // pred_check
        %p2144 = pneg %p148
      $region54: #{encoder3d_forward.12} parent=47 // pred_check_branch
        %2146 = sbr.rel (%p2144) target = $region56
      $region55: #{encoder3d_forward.12} parent=47 // pred_region
        %p2147 = scmp.lt.s32.totalorder %s22, 1
        %s2148 = scalar_select %p2147, %s22, 1
        %s2149 = smul.addr %s2148, 2
        %s2150 = smul.addr %s2149, 8
        %s2151 = scalar_lea.vmem %s4, %s2150
      $region56: #{encoder3d_forward.12} parent=47 // pred_fallthru
        _
    $region48: #{encoder3d_forward.12} parent=5 // pred_fallthru
      _
  $region6: #{encoder3d_forward.12} parent=0 // loop_footer
    %s15 = sadd.s32 1, %s11
  $region7: #{encoder3d_forward.12} parent=0 // loop_footer_branch
    %10 = sbr.rel target = $region3
  $region8: #{encoder3d_forward.12} parent=0 // loop_exit
    _

</llo_original>
